<compile_context>
chip_gen: v5e
topology: v5e:2x2
jax: 0.10.0
libtpu: 0.0.40
codegen_flags: <defaults>
</compile_context>

<pallas_src>
import functools
import math

import jax
import jax.numpy as jnp
from jax.experimental import pallas as pl
from jax.experimental.pallas import tpu as pltpu


_VMEM_LIMIT = 32 * 1024 * 1024  # actual per-call use < 4 MiB; safe on v7x (64 MiB)


def _cparams(*semantics):
    return pltpu.CompilerParams(
        dimension_semantics=tuple(semantics),
        vmem_limit_bytes=_VMEM_LIMIT,
    )


def _const_spec(shape):
    """BlockSpec for a weight that is fully resident and identical for every grid step."""
    n = len(shape)
    return pl.BlockSpec(shape, lambda b, n=n: (0,) * n)


# --------------------------------------------------------------------------
# In-kernel building blocks (pure jnp on VMEM-resident values)
# --------------------------------------------------------------------------
def _ln(x, g, b, *, eps):
    mu = jnp.mean(x, axis=-1, keepdims=True)
    var = jnp.mean(jnp.square(x - mu), axis=-1, keepdims=True)
    return (x - mu) * jax.lax.rsqrt(var + eps) * g + b


def _block_body(x, ln1_g, ln1_b, wqkv, bqkv, wo, bo, ln2_g, ln2_b,
                w1, b1, w2, b2, attn_buf, *, nheads, eps):
    """Pre-LN transformer block on the VMEM-resident [Nt, D] slab."""
    _, D = x.shape
    Dh = D // nheads

    # LN1 + fused QKV projection (1/sqrt(Dh) already folded into Q weights)
    h = _ln(x, ln1_g[...], ln1_b[...], eps=eps)
    qkv = jnp.dot(h.astype(jnp.bfloat16), wqkv[...],
                  preferred_element_type=jnp.float32) + bqkv[...]

    # Per-head attention; heads are static lane-aligned slices of the
    # [Nt, 3D] slab, each head's output is written straight into attn_buf.
    # TODO(synk): at real Janus sequence lengths switch to a flash-style
    # query/KV-tiled online softmax instead of the full (Nt,Nt) scores.
    for hd in range(nheads):
        qh = qkv[:, hd * Dh:(hd + 1) * Dh].astype(jnp.bfloat16)
        kh = qkv[:, D + hd * Dh:D + (hd + 1) * Dh].astype(jnp.bfloat16)
        vh = qkv[:, 2 * D + hd * Dh:2 * D + (hd + 1) * Dh].astype(jnp.bfloat16)
        s = jax.lax.dot_general(qh, kh, (((1,), (1,)), ((), ())),
                                preferred_element_type=jnp.float32)
        m = jnp.max(s, axis=-1, keepdims=True)
        p = jnp.exp(s - m)
        p = p * pl.reciprocal(jnp.sum(p, axis=-1, keepdims=True), approx=True)
        attn_buf[:, hd * Dh:(hd + 1) * Dh] = jnp.dot(
            p.astype(jnp.bfloat16), vh, preferred_element_type=jnp.float32)

    # O-projection + residual
    x = x + jnp.dot(attn_buf[...].astype(jnp.bfloat16), wo[...],
                    preferred_element_type=jnp.float32) + bo[...]

    # LN2 -> MLP -> residual
    h2 = _ln(x, ln2_g[...], ln2_b[...], eps=eps)
    u = jnp.dot(h2.astype(jnp.bfloat16), w1[...],
                preferred_element_type=jnp.float32) + b1[...]
    # TODO(synk): tanh-approx GELU; nn.GELU default is exact erf (tiny mismatch).
    u = jax.nn.gelu(u, approximate=True)
    y = jnp.dot(u.astype(jnp.bfloat16), w2[...],
                preferred_element_type=jnp.float32) + b2[...]
    return x + y


# --------------------------------------------------------------------------
# Fused encoder kernel: patch-embed + pos -> block -> latent LayerNorm
# --------------------------------------------------------------------------
def _encoder_kernel(patches_ref, pos_ref, emb_w, emb_b,
                    ln1_g, ln1_b, wqkv, bqkv, wo, bo,
                    ln2_g, ln2_b, w1, b1, w2, b2,
                    lnf_g, lnf_b, o_ref, attn_buf, *, nheads, eps):
    x = jnp.dot(patches_ref[...], emb_w[...],
                preferred_element_type=jnp.float32) + emb_b[...]
    x = x + pos_ref[...]
    x = _block_body(x, ln1_g, ln1_b, wqkv, bqkv, wo, bo, ln2_g, ln2_b,
                    w1, b1, w2, b2, attn_buf, nheads=nheads, eps=eps)
    o_ref[...] = _ln(x, lnf_g[...], lnf_b[...], eps=eps).astype(o_ref.dtype)


def encode(patches, enc, *, D, nheads, eps):
    """patches: [B, Nt, patch_dim] bf16 -> latent tokens [B, Nt, D] f32."""
    B, Nt, patch_dim = patches.shape
    bp = enc["block"]
    H = bp["w1"].shape[1]
    args = [
        patches,
        enc["pos"],
        enc["embed_w"], enc["embed_b"].reshape(1, D),
        bp["ln1_g"].reshape(1, D), bp["ln1_b"].reshape(1, D),
        bp["w_qkv"], bp["b_qkv"].reshape(1, 3 * D),
        bp["wo"], bp["bo"].reshape(1, D),
        bp["ln2_g"].reshape(1, D), bp["ln2_b"].reshape(1, D),
        bp["w1"], bp["b1"].reshape(1, H),
        bp["w2"], bp["b2"].reshape(1, D),
        enc["ln_g"].reshape(1, D), enc["ln_b"].reshape(1, D),
    ]
    in_specs = ([pl.BlockSpec((pl.Squeezed(), Nt, patch_dim), lambda b: (b, 0, 0))]
                + [_const_spec(a.shape) for a in args[1:]])
    return pl.pallas_call(
        functools.partial(_encoder_kernel, nheads=nheads, eps=eps),
        out_shape=jax.ShapeDtypeStruct((B, Nt, D), jnp.float32),
        grid=(B,),
        in_specs=in_specs,
        out_specs=pl.BlockSpec((pl.Squeezed(), Nt, D), lambda b: (b, 0, 0)),
        scratch_shapes=[pltpu.VMEM((Nt, D), jnp.float32)],
        compiler_params=_cparams("parallel"),
    )(*args)


# --------------------------------------------------------------------------
# Fused decoder kernel: block -> LayerNorm -> pixel head
# --------------------------------------------------------------------------
def _decoder_kernel(z_ref, ln1_g, ln1_b, wqkv, bqkv, wo, bo,
                    ln2_g, ln2_b, w1, b1, w2, b2,
                    lnf_g, lnf_b, pix_w, pix_b, o_ref, attn_buf, *, nheads, eps):
    x = z_ref[...]
    x = _block_body(x, ln1_g, ln1_b, wqkv, bqkv, wo, bo, ln2_g, ln2_b,
                    w1, b1, w2, b2, attn_buf, nheads=nheads, eps=eps)
    h = _ln(x, lnf_g[...], lnf_b[...], eps=eps)
    o_ref[...] = (jnp.dot(h.astype(jnp.bfloat16), pix_w[...],
                          preferred_element_type=jnp.float32)
                  + pix_b[...]).astype(o_ref.dtype)


def decode(z, dec, *, patch_dim, nheads, eps):
    """z: [B, Nt, D] f32 latent -> pixel patches [B, Nt, patch_dim] f32."""
    B, Nt, D = z.shape
    bp = dec["block"]
    H = bp["w1"].shape[1]
    args = [
        z,
        bp["ln1_g"].reshape(1, D), bp["ln1_b"].reshape(1, D),
        bp["w_qkv"], bp["b_qkv"].reshape(1, 3 * D),
        bp["wo"], bp["bo"].reshape(1, D),
        bp["ln2_g"].reshape(1, D), bp["ln2_b"].reshape(1, D),
        bp["w1"], bp["b1"].reshape(1, H),
        bp["w2"], bp["b2"].reshape(1, D),
        dec["ln_g"].reshape(1, D), dec["ln_b"].reshape(1, D),
        dec["pix_w"], dec["pix_b"].reshape(1, patch_dim),
    ]
    in_specs = ([pl.BlockSpec((pl.Squeezed(), Nt, D), lambda b: (b, 0, 0))]
                + [_const_spec(a.shape) for a in args[1:]])
    return pl.pallas_call(
        functools.partial(_decoder_kernel, nheads=nheads, eps=eps),
        out_shape=jax.ShapeDtypeStruct((B, Nt, patch_dim), jnp.float32),
        grid=(B,),
        in_specs=in_specs,
        out_specs=pl.BlockSpec((pl.Squeezed(), Nt, patch_dim), lambda b: (b, 0, 0)),
        scratch_shapes=[pltpu.VMEM((Nt, D), jnp.float32)],
        compiler_params=_cparams("parallel"),
    )(*args)


# --------------------------------------------------------------------------
# Model glue (only patchify/unpatchify reshapes live in XLA)
# --------------------------------------------------------------------------
def patchify(x, P):
    B, C, H, W = x.shape
    x = x.reshape(B, C, H // P, P, W // P, P)
    x = x.transpose(0, 2, 4, 3, 5, 1)  # B, Hp, Wp, P, P, C
    return x.reshape(B, (H // P) * (W // P), P * P * C)


def unpatchify(p, B, C, H, W, P):
    Hp, Wp = H // P, W // P
    x = p.reshape(B, Hp, Wp, P, P, C)
    x = x.transpose(0, 5, 1, 3, 2, 4)  # B, C, Hp, P, Wp, P
    return x.reshape(B, C, H, W)


def _dense_init(key, fan_in, fan_out):
    w = (jax.random.normal(key, (fan_in, fan_out), jnp.float32) * 0.02
         ).astype(jnp.bfloat16)                 # bf16 weights for the MXU
    b = jnp.zeros((fan_out,), jnp.float32)
    return w, b


def _block_init(key, D, mlp, nheads):
    ks = jax.random.split(key, 6)
    Dh = D // nheads
    scale = 1.0 / math.sqrt(Dh)
    p = {}
    p["ln1_g"] = jnp.ones((D,), jnp.float32)
    p["ln1_b"] = jnp.zeros((D,), jnp.float32)
    wq, bq = _dense_init(ks[0], D, D)
    wk, bk = _dense_init(ks[1], D, D)
    wv, bv = _dense_init(ks[2], D, D)
    # fold the 1/sqrt(Dh) attention scale into the Q projection at init
    wq = (wq.astype(jnp.float32) * scale).astype(jnp.bfloat16)
    bq = bq * scale
    p["w_qkv"] = jnp.concatenate([wq, wk, wv], axis=1)   # [D, 3D] fused QKV
    p["b_qkv"] = jnp.concatenate([bq, bk, bv], axis=0)   # [3D]
    p["wo"], p["bo"] = _dense_init(ks[3], D, D)
    p["ln2_g"] = jnp.ones((D,), jnp.float32)
    p["ln2_b"] = jnp.zeros((D,), jnp.float32)
    p["w1"], p["b1"] = _dense_init(ks[4], D, mlp)
    p["w2"], p["b2"] = _dense_init(ks[5], mlp, D)
    return p


def init_params(key, *, patch_dim, Nt, D, mlp, nheads):
    k_emb, k_pos, k_eb, k_db, k_pix = jax.random.split(key, 5)
    enc = {}
    enc["embed_w"], enc["embed_b"] = _dense_init(k_emb, patch_dim, D)
    enc["pos"] = jax.random.normal(k_pos, (Nt, D), jnp.float32) * 0.02
    enc["block"] = _block_init(k_eb, D, mlp, nheads)
    enc["ln_g"], enc["ln_b"] = jnp.ones((D,), jnp.float32), jnp.zeros((D,), jnp.float32)

    dec = {}
    dec["block"] = _block_init(k_db, D, mlp, nheads)
    dec["ln_g"], dec["ln_b"] = jnp.ones((D,), jnp.float32), jnp.zeros((D,), jnp.float32)
    dec["pix_w"], dec["pix_b"] = _dense_init(k_pix, D, patch_dim)
    return {"enc": enc, "dec": dec}


def autoencoder_forward(x, params, *, patch, D, nheads, eps=1e-6):
    # TODO(synk): the real module uses pretrained Janus vision weights and the
    # exact VitPixelDecoder; this is a deterministic synthetic stand-in with
    # the same encode->decode ViT structure.
    B, C, H, W = x.shape
    P = patch
    patch_dim = P * P * C
    enc, dec = params["enc"], params["dec"]

    # bf16 patches: the embed matmul consumes bf16 anyway, and it halves the
    # only HBM activation read that isn't already fused.
    patches = patchify(x, P).astype(jnp.bfloat16)          # [B, Nt, patch_dim]
    z = encode(patches, enc, D=D, nheads=nheads, eps=eps)  # [B, Nt, D] latent
    pix = decode(z, dec, patch_dim=patch_dim, nheads=nheads, eps=eps)
    return unpatchify(pix, B, C, H, W, P)


if __name__ == "__main__":
    # Small but lane-dense shapes: D=256 (2 heads, Dh=128), mlp=512,
    # patch_dim = 8*8*4 = 256, tokens = 16/img, batch B=2 (=> grid=(2,),
    # two parallel steps so a v7x megacore gets both TensorCores busy).
    B, C, IMG = 2, 4, 32
    PATCH, D, NHEADS, MLP = 8, 256, 2, 512
    Nt = (IMG // PATCH) ** 2
    patch_dim = PATCH * PATCH * C

    x = jax.random.normal(jax.random.PRNGKey(0), (B, C, IMG, IMG), dtype=jnp.float32)
    params = init_params(jax.random.PRNGKey(1), patch_dim=patch_dim, Nt=Nt,
                         D=D, mlp=MLP, nheads=NHEADS)

    fwd = jax.jit(functools.partial(autoencoder_forward, patch=PATCH, D=D, nheads=NHEADS))
    y = jax.block_until_ready(fwd(x, params))

    assert y.shape == x.shape, (y.shape, x.shape)
    assert y.dtype == jnp.float32
    assert bool(jnp.all(jnp.isfinite(y)))
    print("KERNEL_OK")
</pallas_src>

<mosaic_0001>
module attributes {stable_mosaic.version = 11 : i64} {
  func.func @_encoder_kernel(%arg0: i32, %arg1: memref<1x16x256xbf16, #tpu.memory_space<vmem>>, %arg2: memref<16x256xf32, #tpu.memory_space<vmem>>, %arg3: memref<256x256xbf16, #tpu.memory_space<vmem>>, %arg4: memref<1x256xf32, #tpu.memory_space<vmem>>, %arg5: memref<1x256xf32, #tpu.memory_space<vmem>>, %arg6: memref<1x256xf32, #tpu.memory_space<vmem>>, %arg7: memref<256x768xbf16, #tpu.memory_space<vmem>>, %arg8: memref<1x768xf32, #tpu.memory_space<vmem>>, %arg9: memref<256x256xbf16, #tpu.memory_space<vmem>>, %arg10: memref<1x256xf32, #tpu.memory_space<vmem>>, %arg11: memref<1x256xf32, #tpu.memory_space<vmem>>, %arg12: memref<1x256xf32, #tpu.memory_space<vmem>>, %arg13: memref<256x512xbf16, #tpu.memory_space<vmem>>, %arg14: memref<1x512xf32, #tpu.memory_space<vmem>>, %arg15: memref<512x256xbf16, #tpu.memory_space<vmem>>, %arg16: memref<1x256xf32, #tpu.memory_space<vmem>>, %arg17: memref<1x256xf32, #tpu.memory_space<vmem>>, %arg18: memref<1x256xf32, #tpu.memory_space<vmem>>, %arg19: memref<1x16x256xf32, #tpu.memory_space<vmem>>, %arg20: memref<16x256xf32, #tpu.memory_space<vmem>>) attributes {dimension_semantics = [#tpu.dimension_semantics<parallel>], iteration_bounds = array<i64: 2>, scalar_prefetch = 0 : i64, scratch_operands = 1 : i64, tpu.core_type = #tpu.core_type<tc>, window_params = [{transform_indices = @transform_0, window_bounds = array<i64: 1, 16, 256>}, {pipeline_mode = #tpu.pipeline_mode<synchronous>, transform_indices = @transform_1, window_bounds = array<i64: 16, 256>}, {pipeline_mode = #tpu.pipeline_mode<synchronous>, transform_indices = @transform_2, window_bounds = array<i64: 256, 256>}, {pipeline_mode = #tpu.pipeline_mode<synchronous>, transform_indices = @transform_3, window_bounds = array<i64: 1, 256>}, {pipeline_mode = #tpu.pipeline_mode<synchronous>, transform_indices = @transform_4, window_bounds = array<i64: 1, 256>}, {pipeline_mode = #tpu.pipeline_mode<synchronous>, transform_indices = @transform_5, window_bounds = array<i64: 1, 256>}, {pipeline_mode = #tpu.pipeline_mode<synchronous>, transform_indices = @transform_6, window_bounds = array<i64: 256, 768>}, {pipeline_mode = #tpu.pipeline_mode<synchronous>, transform_indices = @transform_7, window_bounds = array<i64: 1, 768>}, {pipeline_mode = #tpu.pipeline_mode<synchronous>, transform_indices = @transform_8, window_bounds = array<i64: 256, 256>}, {pipeline_mode = #tpu.pipeline_mode<synchronous>, transform_indices = @transform_9, window_bounds = array<i64: 1, 256>}, {pipeline_mode = #tpu.pipeline_mode<synchronous>, transform_indices = @transform_10, window_bounds = array<i64: 1, 256>}, {pipeline_mode = #tpu.pipeline_mode<synchronous>, transform_indices = @transform_11, window_bounds = array<i64: 1, 256>}, {pipeline_mode = #tpu.pipeline_mode<synchronous>, transform_indices = @transform_12, window_bounds = array<i64: 256, 512>}, {pipeline_mode = #tpu.pipeline_mode<synchronous>, transform_indices = @transform_13, window_bounds = array<i64: 1, 512>}, {pipeline_mode = #tpu.pipeline_mode<synchronous>, transform_indices = @transform_14, window_bounds = array<i64: 512, 256>}, {pipeline_mode = #tpu.pipeline_mode<synchronous>, transform_indices = @transform_15, window_bounds = array<i64: 1, 256>}, {pipeline_mode = #tpu.pipeline_mode<synchronous>, transform_indices = @transform_16, window_bounds = array<i64: 1, 256>}, {pipeline_mode = #tpu.pipeline_mode<synchronous>, transform_indices = @transform_17, window_bounds = array<i64: 1, 256>}, {transform_indices = @transform_18, window_bounds = array<i64: 1, 16, 256>}]} {
    %c0 = arith.constant 0 : index
    %c0_0 = arith.constant 0 : index
    %c0_1 = arith.constant 0 : index
    %0 = vector.load %arg1[%c0, %c0_0, %c0_1] : memref<1x16x256xbf16, #tpu.memory_space<vmem>>, vector<1x16x256xbf16>
    %1 = vector.shape_cast %0 : vector<1x16x256xbf16> to vector<16x256xbf16>
    %c0_2 = arith.constant 0 : index
    %c0_3 = arith.constant 0 : index
    %2 = vector.load %arg3[%c0_2, %c0_3] : memref<256x256xbf16, #tpu.memory_space<vmem>>, vector<256x256xbf16>
    %cst = arith.constant dense<0.000000e+00> : vector<16x256xf32>
    %3 = tpu.matmul %1, %2, %cst {dimension_numbers = #tpu.dot_dimension_numbers<[1], [0], [0], [1], [0, 0, 1, 1], [], []>} : vector<16x256xbf16>, vector<256x256xbf16>, vector<16x256xf32> -> vector<16x256xf32>
    %c0_4 = arith.constant 0 : index
    %c0_5 = arith.constant 0 : index
    %4 = vector.load %arg4[%c0_4, %c0_5] : memref<1x256xf32, #tpu.memory_space<vmem>>, vector<1x256xf32>
    %5 = vector.broadcast %4 : vector<1x256xf32> to vector<16x256xf32>
    %6 = arith.addf %3, %5 : vector<16x256xf32>
    %c0_6 = arith.constant 0 : index
    %c0_7 = arith.constant 0 : index
    %7 = vector.load %arg2[%c0_6, %c0_7] : memref<16x256xf32, #tpu.memory_space<vmem>>, vector<16x256xf32>
    %8 = arith.addf %6, %7 : vector<16x256xf32>
    %c0_8 = arith.constant 0 : index
    %c0_9 = arith.constant 0 : index
    %9 = vector.load %arg5[%c0_8, %c0_9] : memref<1x256xf32, #tpu.memory_space<vmem>>, vector<1x256xf32>
    %c0_10 = arith.constant 0 : index
    %c0_11 = arith.constant 0 : index
    %10 = vector.load %arg6[%c0_10, %c0_11] : memref<1x256xf32, #tpu.memory_space<vmem>>, vector<1x256xf32>
    %cst_12 = arith.constant dense<0.000000e+00> : vector<16xf32>
    %11 = vector.multi_reduction <add>, %8, %cst_12 [1] : vector<16x256xf32> to vector<16xf32>
    %12 = vector.shape_cast %11 : vector<16xf32> to vector<16x1xf32>
    %cst_13 = arith.constant 2.560000e+02 : f32
    %13 = vector.broadcast %cst_13 : f32 to vector<16x1xf32>
    %14 = arith.divf %12, %13 : vector<16x1xf32>
    %15 = vector.broadcast %14 : vector<16x1xf32> to vector<16x256xf32>
    %16 = arith.subf %8, %15 : vector<16x256xf32>
    %17 = arith.mulf %16, %16 : vector<16x256xf32>
    %cst_14 = arith.constant dense<0.000000e+00> : vector<16xf32>
    %18 = vector.multi_reduction <add>, %17, %cst_14 [1] : vector<16x256xf32> to vector<16xf32>
    %19 = vector.shape_cast %18 : vector<16xf32> to vector<16x1xf32>
    %cst_15 = arith.constant 2.560000e+02 : f32
    %20 = vector.broadcast %cst_15 : f32 to vector<16x1xf32>
    %21 = arith.divf %19, %20 : vector<16x1xf32>
    %22 = vector.broadcast %14 : vector<16x1xf32> to vector<16x256xf32>
    %23 = arith.subf %8, %22 : vector<16x256xf32>
    %cst_16 = arith.constant 9.99999997E-7 : f32
    %24 = vector.broadcast %cst_16 : f32 to vector<16x1xf32>
    %25 = arith.addf %21, %24 : vector<16x1xf32>
    %26 = math.rsqrt %25 : vector<16x1xf32>
    %27 = vector.broadcast %26 : vector<16x1xf32> to vector<16x256xf32>
    %28 = arith.mulf %23, %27 : vector<16x256xf32>
    %29 = vector.broadcast %9 : vector<1x256xf32> to vector<16x256xf32>
    %30 = arith.mulf %28, %29 : vector<16x256xf32>
    %31 = vector.broadcast %10 : vector<1x256xf32> to vector<16x256xf32>
    %32 = arith.addf %30, %31 : vector<16x256xf32>
    %33 = arith.truncf %32 : vector<16x256xf32> to vector<16x256xbf16>
    %c0_17 = arith.constant 0 : index
    %c0_18 = arith.constant 0 : index
    %34 = vector.load %arg7[%c0_17, %c0_18] : memref<256x768xbf16, #tpu.memory_space<vmem>>, vector<256x768xbf16>
    %cst_19 = arith.constant dense<0.000000e+00> : vector<16x768xf32>
    %35 = tpu.matmul %33, %34, %cst_19 {dimension_numbers = #tpu.dot_dimension_numbers<[1], [0], [0], [1], [0, 0, 1, 1], [], []>} : vector<16x256xbf16>, vector<256x768xbf16>, vector<16x768xf32> -> vector<16x768xf32>
    %c0_20 = arith.constant 0 : index
    %c0_21 = arith.constant 0 : index
    %36 = vector.load %arg8[%c0_20, %c0_21] : memref<1x768xf32, #tpu.memory_space<vmem>>, vector<1x768xf32>
    %37 = vector.broadcast %36 : vector<1x768xf32> to vector<16x768xf32>
    %38 = arith.addf %35, %37 : vector<16x768xf32>
    %39 = vector.extract_strided_slice %38 {offsets = [0, 0], sizes = [16, 128], strides = [1, 1]} : vector<16x768xf32> to vector<16x128xf32>
    %40 = arith.truncf %39 : vector<16x128xf32> to vector<16x128xbf16>
    %41 = vector.extract_strided_slice %38 {offsets = [0, 256], sizes = [16, 128], strides = [1, 1]} : vector<16x768xf32> to vector<16x128xf32>
    %42 = arith.truncf %41 : vector<16x128xf32> to vector<16x128xbf16>
    %43 = vector.extract_strided_slice %38 {offsets = [0, 512], sizes = [16, 128], strides = [1, 1]} : vector<16x768xf32> to vector<16x128xf32>
    %44 = arith.truncf %43 : vector<16x128xf32> to vector<16x128xbf16>
    %cst_22 = arith.constant dense<0.000000e+00> : vector<16x16xf32>
    %45 = tpu.matmul %40, %42, %cst_22 {dimension_numbers = #tpu.dot_dimension_numbers<[1], [1], [0], [0], [0, 0, 1, 0], [], []>} : vector<16x128xbf16>, vector<16x128xbf16>, vector<16x16xf32> -> vector<16x16xf32>
    %cst_23 = arith.constant dense<0xFF800000> : vector<16xf32>
    %46 = vector.multi_reduction <maximumf>, %45, %cst_23 [1] : vector<16x16xf32> to vector<16xf32>
    %47 = vector.shape_cast %46 : vector<16xf32> to vector<16x1xf32>
    %48 = vector.broadcast %47 : vector<16x1xf32> to vector<16x16xf32>
    %49 = arith.subf %45, %48 : vector<16x16xf32>
    %50 = math.exp %49 : vector<16x16xf32>
    %cst_24 = arith.constant dense<0.000000e+00> : vector<16xf32>
    %51 = vector.multi_reduction <add>, %50, %cst_24 [1] : vector<16x16xf32> to vector<16xf32>
    %52 = vector.shape_cast %51 : vector<16xf32> to vector<16x1xf32>
    %53 = tpu.reciprocal %52 {approx = true} : vector<16x1xf32> -> vector<16x1xf32>
    %54 = vector.broadcast %53 : vector<16x1xf32> to vector<16x16xf32>
    %55 = arith.mulf %50, %54 : vector<16x16xf32>
    %56 = arith.truncf %55 : vector<16x16xf32> to vector<16x16xbf16>
    %cst_25 = arith.constant dense<0.000000e+00> : vector<16x128xf32>
    %57 = tpu.matmul %56, %44, %cst_25 {dimension_numbers = #tpu.dot_dimension_numbers<[1], [0], [0], [1], [0, 0, 1, 1], [], []>} : vector<16x16xbf16>, vector<16x128xbf16>, vector<16x128xf32> -> vector<16x128xf32>
    %c0_26 = arith.constant 0 : index
    %c0_27 = arith.constant 0 : index
    %58 = vector.load %arg20[%c0_26, %c0_27] : memref<16x256xf32, #tpu.memory_space<vmem>>, vector<16x128xf32>
    tpu.vector_store %arg20[%c0_26, %c0_27], %57 {strides = array<i32>} : memref<16x256xf32, #tpu.memory_space<vmem>>, vector<16x128xf32>,
    %59 = vector.extract_strided_slice %38 {offsets = [0, 128], sizes = [16, 128], strides = [1, 1]} : vector<16x768xf32> to vector<16x128xf32>
    %60 = arith.truncf %59 : vector<16x128xf32> to vector<16x128xbf16>
    %61 = vector.extract_strided_slice %38 {offsets = [0, 384], sizes = [16, 128], strides = [1, 1]} : vector<16x768xf32> to vector<16x128xf32>
    %62 = arith.truncf %61 : vector<16x128xf32> to vector<16x128xbf16>
    %63 = vector.extract_strided_slice %38 {offsets = [0, 640], sizes = [16, 128], strides = [1, 1]} : vector<16x768xf32> to vector<16x128xf32>
    %64 = arith.truncf %63 : vector<16x128xf32> to vector<16x128xbf16>
    %cst_28 = arith.constant dense<0.000000e+00> : vector<16x16xf32>
    %65 = tpu.matmul %60, %62, %cst_28 {dimension_numbers = #tpu.dot_dimension_numbers<[1], [1], [0], [0], [0, 0, 1, 0], [], []>} : vector<16x128xbf16>, vector<16x128xbf16>, vector<16x16xf32> -> vector<16x16xf32>
    %cst_29 = arith.constant dense<0xFF800000> : vector<16xf32>
    %66 = vector.multi_reduction <maximumf>, %65, %cst_29 [1] : vector<16x16xf32> to vector<16xf32>
    %67 = vector.shape_cast %66 : vector<16xf32> to vector<16x1xf32>
    %68 = vector.broadcast %67 : vector<16x1xf32> to vector<16x16xf32>
    %69 = arith.subf %65, %68 : vector<16x16xf32>
    %70 = math.exp %69 : vector<16x16xf32>
    %cst_30 = arith.constant dense<0.000000e+00> : vector<16xf32>
    %71 = vector.multi_reduction <add>, %70, %cst_30 [1] : vector<16x16xf32> to vector<16xf32>
    %72 = vector.shape_cast %71 : vector<16xf32> to vector<16x1xf32>
    %73 = tpu.reciprocal %72 {approx = true} : vector<16x1xf32> -> vector<16x1xf32>
    %74 = vector.broadcast %73 : vector<16x1xf32> to vector<16x16xf32>
    %75 = arith.mulf %70, %74 : vector<16x16xf32>
    %76 = arith.truncf %75 : vector<16x16xf32> to vector<16x16xbf16>
    %cst_31 = arith.constant dense<0.000000e+00> : vector<16x128xf32>
    %77 = tpu.matmul %76, %64, %cst_31 {dimension_numbers = #tpu.dot_dimension_numbers<[1], [0], [0], [1], [0, 0, 1, 1], [], []>} : vector<16x16xbf16>, vector<16x128xbf16>, vector<16x128xf32> -> vector<16x128xf32>
    %c0_32 = arith.constant 0 : index
    %c128 = arith.constant 128 : index
    %78 = vector.load %arg20[%c0_32, %c128] : memref<16x256xf32, #tpu.memory_space<vmem>>, vector<16x128xf32>
    tpu.vector_store %arg20[%c0_32, %c128], %77 {strides = array<i32>} : memref<16x256xf32, #tpu.memory_space<vmem>>, vector<16x128xf32>,
    %c0_33 = arith.constant 0 : index
    %c0_34 = arith.constant 0 : index
    %79 = vector.load %arg20[%c0_33, %c0_34] : memref<16x256xf32, #tpu.memory_space<vmem>>, vector<16x256xf32>
    %80 = arith.truncf %79 : vector<16x256xf32> to vector<16x256xbf16>
    %c0_35 = arith.constant 0 : index
    %c0_36 = arith.constant 0 : index
    %81 = vector.load %arg9[%c0_35, %c0_36] : memref<256x256xbf16, #tpu.memory_space<vmem>>, vector<256x256xbf16>
    %cst_37 = arith.constant dense<0.000000e+00> : vector<16x256xf32>
    %82 = tpu.matmul %80, %81, %cst_37 {dimension_numbers = #tpu.dot_dimension_numbers<[1], [0], [0], [1], [0, 0, 1, 1], [], []>} : vector<16x256xbf16>, vector<256x256xbf16>, vector<16x256xf32> -> vector<16x256xf32>
    %83 = arith.addf %8, %82 : vector<16x256xf32>
    %c0_38 = arith.constant 0 : index
    %c0_39 = arith.constant 0 : index
    %84 = vector.load %arg10[%c0_38, %c0_39] : memref<1x256xf32, #tpu.memory_space<vmem>>, vector<1x256xf32>
    %85 = vector.broadcast %84 : vector<1x256xf32> to vector<16x256xf32>
    %86 = arith.addf %83, %85 : vector<16x256xf32>
    %c0_40 = arith.constant 0 : index
    %c0_41 = arith.constant 0 : index
    %87 = vector.load %arg11[%c0_40, %c0_41] : memref<1x256xf32, #tpu.memory_space<vmem>>, vector<1x256xf32>
    %c0_42 = arith.constant 0 : index
    %c0_43 = arith.constant 0 : index
    %88 = vector.load %arg12[%c0_42, %c0_43] : memref<1x256xf32, #tpu.memory_space<vmem>>, vector<1x256xf32>
    %cst_44 = arith.constant dense<0.000000e+00> : vector<16xf32>
    %89 = vector.multi_reduction <add>, %86, %cst_44 [1] : vector<16x256xf32> to vector<16xf32>
    %90 = vector.shape_cast %89 : vector<16xf32> to vector<16x1xf32>
    %cst_45 = arith.constant 2.560000e+02 : f32
    %91 = vector.broadcast %cst_45 : f32 to vector<16x1xf32>
    %92 = arith.divf %90, %91 : vector<16x1xf32>
    %93 = vector.broadcast %92 : vector<16x1xf32> to vector<16x256xf32>
    %94 = arith.subf %86, %93 : vector<16x256xf32>
    %95 = arith.mulf %94, %94 : vector<16x256xf32>
    %cst_46 = arith.constant dense<0.000000e+00> : vector<16xf32>
    %96 = vector.multi_reduction <add>, %95, %cst_46 [1] : vector<16x256xf32> to vector<16xf32>
    %97 = vector.shape_cast %96 : vector<16xf32> to vector<16x1xf32>
    %cst_47 = arith.constant 2.560000e+02 : f32
    %98 = vector.broadcast %cst_47 : f32 to vector<16x1xf32>
    %99 = arith.divf %97, %98 : vector<16x1xf32>
    %100 = vector.broadcast %92 : vector<16x1xf32> to vector<16x256xf32>
    %101 = arith.subf %86, %100 : vector<16x256xf32>
    %cst_48 = arith.constant 9.99999997E-7 : f32
    %102 = vector.broadcast %cst_48 : f32 to vector<16x1xf32>
    %103 = arith.addf %99, %102 : vector<16x1xf32>
    %104 = math.rsqrt %103 : vector<16x1xf32>
    %105 = vector.broadcast %104 : vector<16x1xf32> to vector<16x256xf32>
    %106 = arith.mulf %101, %105 : vector<16x256xf32>
    %107 = vector.broadcast %87 : vector<1x256xf32> to vector<16x256xf32>
    %108 = arith.mulf %106, %107 : vector<16x256xf32>
    %109 = vector.broadcast %88 : vector<1x256xf32> to vector<16x256xf32>
    %110 = arith.addf %108, %109 : vector<16x256xf32>
    %111 = arith.truncf %110 : vector<16x256xf32> to vector<16x256xbf16>
    %c0_49 = arith.constant 0 : index
    %c0_50 = arith.constant 0 : index
    %112 = vector.load %arg13[%c0_49, %c0_50] : memref<256x512xbf16, #tpu.memory_space<vmem>>, vector<256x512xbf16>
    %cst_51 = arith.constant dense<0.000000e+00> : vector<16x512xf32>
    %113 = tpu.matmul %111, %112, %cst_51 {dimension_numbers = #tpu.dot_dimension_numbers<[1], [0], [0], [1], [0, 0, 1, 1], [], []>} : vector<16x256xbf16>, vector<256x512xbf16>, vector<16x512xf32> -> vector<16x512xf32>
    %c0_52 = arith.constant 0 : index
    %c0_53 = arith.constant 0 : index
    %114 = vector.load %arg14[%c0_52, %c0_53] : memref<1x512xf32, #tpu.memory_space<vmem>>, vector<1x512xf32>
    %115 = vector.broadcast %114 : vector<1x512xf32> to vector<16x512xf32>
    %116 = arith.addf %113, %115 : vector<16x512xf32>
    %117 = arith.mulf %116, %116 : vector<16x512xf32>
    %118 = arith.mulf %116, %117 : vector<16x512xf32>
    %cst_54 = arith.constant 4.471500e-02 : f32
    %119 = vector.broadcast %cst_54 : f32 to vector<16x512xf32>
    %120 = arith.mulf %119, %118 : vector<16x512xf32>
    %121 = arith.addf %116, %120 : vector<16x512xf32>
    %cst_55 = arith.constant 0.797884583 : f32
    %122 = vector.broadcast %cst_55 : f32 to vector<16x512xf32>
    %123 = arith.mulf %122, %121 : vector<16x512xf32>
    %124 = math.tanh %123 : vector<16x512xf32>
    %cst_56 = arith.constant 1.000000e+00 : f32
    %125 = vector.broadcast %cst_56 : f32 to vector<16x512xf32>
    %126 = arith.addf %125, %124 : vector<16x512xf32>
    %cst_57 = arith.constant 5.000000e-01 : f32
    %127 = vector.broadcast %cst_57 : f32 to vector<16x512xf32>
    %128 = arith.mulf %127, %126 : vector<16x512xf32>
    %129 = arith.mulf %116, %128 : vector<16x512xf32>
    %130 = arith.truncf %129 : vector<16x512xf32> to vector<16x512xbf16>
    %c0_58 = arith.constant 0 : index
    %c0_59 = arith.constant 0 : index
    %131 = vector.load %arg15[%c0_58, %c0_59] : memref<512x256xbf16, #tpu.memory_space<vmem>>, vector<512x256xbf16>
    %cst_60 = arith.constant dense<0.000000e+00> : vector<16x256xf32>
    %132 = tpu.matmul %130, %131, %cst_60 {dimension_numbers = #tpu.dot_dimension_numbers<[1], [0], [0], [1], [0, 0, 1, 1], [], []>} : vector<16x512xbf16>, vector<512x256xbf16>, vector<16x256xf32> -> vector<16x256xf32>
    %c0_61 = arith.constant 0 : index
    %c0_62 = arith.constant 0 : index
    %133 = vector.load %arg16[%c0_61, %c0_62] : memref<1x256xf32, #tpu.memory_space<vmem>>, vector<1x256xf32>
    %134 = vector.broadcast %133 : vector<1x256xf32> to vector<16x256xf32>
    %135 = arith.addf %132, %134 : vector<16x256xf32>
    %136 = arith.addf %86, %135 : vector<16x256xf32>
    %c0_63 = arith.constant 0 : index
    %c0_64 = arith.constant 0 : index
    %137 = vector.load %arg17[%c0_63, %c0_64] : memref<1x256xf32, #tpu.memory_space<vmem>>, vector<1x256xf32>
    %c0_65 = arith.constant 0 : index
    %c0_66 = arith.constant 0 : index
    %138 = vector.load %arg18[%c0_65, %c0_66] : memref<1x256xf32, #tpu.memory_space<vmem>>, vector<1x256xf32>
    %cst_67 = arith.constant dense<0.000000e+00> : vector<16xf32>
    %139 = vector.multi_reduction <add>, %136, %cst_67 [1] : vector<16x256xf32> to vector<16xf32>
    %140 = vector.shape_cast %139 : vector<16xf32> to vector<16x1xf32>
    %cst_68 = arith.constant 2.560000e+02 : f32
    %141 = vector.broadcast %cst_68 : f32 to vector<16x1xf32>
    %142 = arith.divf %140, %141 : vector<16x1xf32>
    %143 = vector.broadcast %142 : vector<16x1xf32> to vector<16x256xf32>
    %144 = arith.subf %136, %143 : vector<16x256xf32>
    %145 = arith.mulf %144, %144 : vector<16x256xf32>
    %cst_69 = arith.constant dense<0.000000e+00> : vector<16xf32>
    %146 = vector.multi_reduction <add>, %145, %cst_69 [1] : vector<16x256xf32> to vector<16xf32>
    %147 = vector.shape_cast %146 : vector<16xf32> to vector<16x1xf32>
    %cst_70 = arith.constant 2.560000e+02 : f32
    %148 = vector.broadcast %cst_70 : f32 to vector<16x1xf32>
    %149 = arith.divf %147, %148 : vector<16x1xf32>
    %150 = vector.broadcast %142 : vector<16x1xf32> to vector<16x256xf32>
    %151 = arith.subf %136, %150 : vector<16x256xf32>
    %cst_71 = arith.constant 9.99999997E-7 : f32
    %152 = vector.broadcast %cst_71 : f32 to vector<16x1xf32>
    %153 = arith.addf %149, %152 : vector<16x1xf32>
    %154 = math.rsqrt %153 : vector<16x1xf32>
    %155 = vector.broadcast %154 : vector<16x1xf32> to vector<16x256xf32>
    %156 = arith.mulf %151, %155 : vector<16x256xf32>
    %157 = vector.broadcast %137 : vector<1x256xf32> to vector<16x256xf32>
    %158 = arith.mulf %156, %157 : vector<16x256xf32>
    %159 = vector.broadcast %138 : vector<1x256xf32> to vector<16x256xf32>
    %160 = arith.addf %158, %159 : vector<16x256xf32>
    %c0_72 = arith.constant 0 : index
    %c0_73 = arith.constant 0 : index
    %c0_74 = arith.constant 0 : index
    %161 = vector.load %arg19[%c0_72, %c0_73, %c0_74] : memref<1x16x256xf32, #tpu.memory_space<vmem>>, vector<1x16x256xf32>
    %162 = vector.shape_cast %161 : vector<1x16x256xf32> to vector<16x256xf32>
    %163 = vector.shape_cast %160 : vector<16x256xf32> to vector<1x16x256xf32>
    tpu.vector_store %arg19[%c0_72, %c0_73, %c0_74], %163 {strides = array<i32>} : memref<1x16x256xf32, #tpu.memory_space<vmem>>, vector<1x16x256xf32>,
    return
  }
  func.func @transform_0(%arg0: i32) -> (i32, i32, i32) {
    %c0_i32 = arith.constant 0 : i32
    %c0_i32_0 = arith.constant 0 : i32
    %c0_i32_1 = arith.constant 0 : i32
    return %arg0, %c0_i32, %c0_i32_0 : i32, i32, i32
  }
  func.func @transform_1(%arg0: i32) -> (i32, i32) {
    %c0_i32 = arith.constant 0 : i32
    %c0_i32_0 = arith.constant 0 : i32
    %c0_i32_1 = arith.constant 0 : i32
    return %c0_i32, %c0_i32_0 : i32, i32
  }
  func.func @transform_2(%arg0: i32) -> (i32, i32) {
    %c0_i32 = arith.constant 0 : i32
    %c0_i32_0 = arith.constant 0 : i32
    %c0_i32_1 = arith.constant 0 : i32
    return %c0_i32, %c0_i32_0 : i32, i32
  }
  func.func @transform_3(%arg0: i32) -> (i32, i32) {
    %c0_i32 = arith.constant 0 : i32
    %c0_i32_0 = arith.constant 0 : i32
    %c0_i32_1 = arith.constant 0 : i32
    return %c0_i32, %c0_i32_0 : i32, i32
  }
  func.func @transform_4(%arg0: i32) -> (i32, i32) {
    %c0_i32 = arith.constant 0 : i32
    %c0_i32_0 = arith.constant 0 : i32
    %c0_i32_1 = arith.constant 0 : i32
    return %c0_i32, %c0_i32_0 : i32, i32
  }
  func.func @transform_5(%arg0: i32) -> (i32, i32) {
    %c0_i32 = arith.constant 0 : i32
    %c0_i32_0 = arith.constant 0 : i32
    %c0_i32_1 = arith.constant 0 : i32
    return %c0_i32, %c0_i32_0 : i32, i32
  }
  func.func @transform_6(%arg0: i32) -> (i32, i32) {
    %c0_i32 = arith.constant 0 : i32
    %c0_i32_0 = arith.constant 0 : i32
    %c0_i32_1 = arith.constant 0 : i32
    return %c0_i32, %c0_i32_0 : i32, i32
  }
  func.func @transform_7(%arg0: i32) -> (i32, i32) {
    %c0_i32 = arith.constant 0 : i32
    %c0_i32_0 = arith.constant 0 : i32
    %c0_i32_1 = arith.constant 0 : i32
    return %c0_i32, %c0_i32_0 : i32, i32
  }
  func.func @transform_8(%arg0: i32) -> (i32, i32) {
    %c0_i32 = arith.constant 0 : i32
    %c0_i32_0 = arith.constant 0 : i32
    %c0_i32_1 = arith.constant 0 : i32
    return %c0_i32, %c0_i32_0 : i32, i32
  }
  func.func @transform_9(%arg0: i32) -> (i32, i32) {
    %c0_i32 = arith.constant 0 : i32
    %c0_i32_0 = arith.constant 0 : i32
    %c0_i32_1 = arith.constant 0 : i32
    return %c0_i32, %c0_i32_0 : i32, i32
  }
  func.func @transform_10(%arg0: i32) -> (i32, i32) {
    %c0_i32 = arith.constant 0 : i32
    %c0_i32_0 = arith.constant 0 : i32
    %c0_i32_1 = arith.constant 0 : i32
    return %c0_i32, %c0_i32_0 : i32, i32
  }
  func.func @transform_11(%arg0: i32) -> (i32, i32) {
    %c0_i32 = arith.constant 0 : i32
    %c0_i32_0 = arith.constant 0 : i32
    %c0_i32_1 = arith.constant 0 : i32
    return %c0_i32, %c0_i32_0 : i32, i32
  }
  func.func @transform_12(%arg0: i32) -> (i32, i32) {
    %c0_i32 = arith.constant 0 : i32
    %c0_i32_0 = arith.constant 0 : i32
    %c0_i32_1 = arith.constant 0 : i32
    return %c0_i32, %c0_i32_0 : i32, i32
  }
  func.func @transform_13(%arg0: i32) -> (i32, i32) {
    %c0_i32 = arith.constant 0 : i32
    %c0_i32_0 = arith.constant 0 : i32
    %c0_i32_1 = arith.constant 0 : i32
    return %c0_i32, %c0_i32_0 : i32, i32
  }
  func.func @transform_14(%arg0: i32) -> (i32, i32) {
    %c0_i32 = arith.constant 0 : i32
    %c0_i32_0 = arith.constant 0 : i32
    %c0_i32_1 = arith.constant 0 : i32
    return %c0_i32, %c0_i32_0 : i32, i32
  }
  func.func @transform_15(%arg0: i32) -> (i32, i32) {
    %c0_i32 = arith.constant 0 : i32
    %c0_i32_0 = arith.constant 0 : i32
    %c0_i32_1 = arith.constant 0 : i32
    return %c0_i32, %c0_i32_0 : i32, i32
  }
  func.func @transform_16(%arg0: i32) -> (i32, i32) {
    %c0_i32 = arith.constant 0 : i32
    %c0_i32_0 = arith.constant 0 : i32
    %c0_i32_1 = arith.constant 0 : i32
    return %c0_i32, %c0_i32_0 : i32, i32
  }
  func.func @transform_17(%arg0: i32) -> (i32, i32) {
    %c0_i32 = arith.constant 0 : i32
    %c0_i32_0 = arith.constant 0 : i32
    %c0_i32_1 = arith.constant 0 : i32
    return %c0_i32, %c0_i32_0 : i32, i32
  }
  func.func @transform_18(%arg0: i32) -> (i32, i32, i32) {
    %c0_i32 = arith.constant 0 : i32
    %c0_i32_0 = arith.constant 0 : i32
    %c0_i32_1 = arith.constant 0 : i32
    return %arg0, %c0_i32, %c0_i32_0 : i32, i32, i32
  }
}

module attributes {stable_mosaic.version = 11 : i64} {
  func.func @_decoder_kernel(%arg0: i32, %arg1: memref<1x16x256xf32, #tpu.memory_space<vmem>>, %arg2: memref<1x256xf32, #tpu.memory_space<vmem>>, %arg3: memref<1x256xf32, #tpu.memory_space<vmem>>, %arg4: memref<256x768xbf16, #tpu.memory_space<vmem>>, %arg5: memref<1x768xf32, #tpu.memory_space<vmem>>, %arg6: memref<256x256xbf16, #tpu.memory_space<vmem>>, %arg7: memref<1x256xf32, #tpu.memory_space<vmem>>, %arg8: memref<1x256xf32, #tpu.memory_space<vmem>>, %arg9: memref<1x256xf32, #tpu.memory_space<vmem>>, %arg10: memref<256x512xbf16, #tpu.memory_space<vmem>>, %arg11: memref<1x512xf32, #tpu.memory_space<vmem>>, %arg12: memref<512x256xbf16, #tpu.memory_space<vmem>>, %arg13: memref<1x256xf32, #tpu.memory_space<vmem>>, %arg14: memref<1x256xf32, #tpu.memory_space<vmem>>, %arg15: memref<1x256xf32, #tpu.memory_space<vmem>>, %arg16: memref<256x256xbf16, #tpu.memory_space<vmem>>, %arg17: memref<1x256xf32, #tpu.memory_space<vmem>>, %arg18: memref<1x16x256xf32, #tpu.memory_space<vmem>>, %arg19: memref<16x256xf32, #tpu.memory_space<vmem>>) attributes {dimension_semantics = [#tpu.dimension_semantics<parallel>], iteration_bounds = array<i64: 2>, scalar_prefetch = 0 : i64, scratch_operands = 1 : i64, tpu.core_type = #tpu.core_type<tc>, window_params = [{transform_indices = @transform_0, window_bounds = array<i64: 1, 16, 256>}, {pipeline_mode = #tpu.pipeline_mode<synchronous>, transform_indices = @transform_1, window_bounds = array<i64: 1, 256>}, {pipeline_mode = #tpu.pipeline_mode<synchronous>, transform_indices = @transform_2, window_bounds = array<i64: 1, 256>}, {pipeline_mode = #tpu.pipeline_mode<synchronous>, transform_indices = @transform_3, window_bounds = array<i64: 256, 768>}, {pipeline_mode = #tpu.pipeline_mode<synchronous>, transform_indices = @transform_4, window_bounds = array<i64: 1, 768>}, {pipeline_mode = #tpu.pipeline_mode<synchronous>, transform_indices = @transform_5, window_bounds = array<i64: 256, 256>}, {pipeline_mode = #tpu.pipeline_mode<synchronous>, transform_indices = @transform_6, window_bounds = array<i64: 1, 256>}, {pipeline_mode = #tpu.pipeline_mode<synchronous>, transform_indices = @transform_7, window_bounds = array<i64: 1, 256>}, {pipeline_mode = #tpu.pipeline_mode<synchronous>, transform_indices = @transform_8, window_bounds = array<i64: 1, 256>}, {pipeline_mode = #tpu.pipeline_mode<synchronous>, transform_indices = @transform_9, window_bounds = array<i64: 256, 512>}, {pipeline_mode = #tpu.pipeline_mode<synchronous>, transform_indices = @transform_10, window_bounds = array<i64: 1, 512>}, {pipeline_mode = #tpu.pipeline_mode<synchronous>, transform_indices = @transform_11, window_bounds = array<i64: 512, 256>}, {pipeline_mode = #tpu.pipeline_mode<synchronous>, transform_indices = @transform_12, window_bounds = array<i64: 1, 256>}, {pipeline_mode = #tpu.pipeline_mode<synchronous>, transform_indices = @transform_13, window_bounds = array<i64: 1, 256>}, {pipeline_mode = #tpu.pipeline_mode<synchronous>, transform_indices = @transform_14, window_bounds = array<i64: 1, 256>}, {pipeline_mode = #tpu.pipeline_mode<synchronous>, transform_indices = @transform_15, window_bounds = array<i64: 256, 256>}, {pipeline_mode = #tpu.pipeline_mode<synchronous>, transform_indices = @transform_16, window_bounds = array<i64: 1, 256>}, {transform_indices = @transform_17, window_bounds = array<i64: 1, 16, 256>}]} {
    %c0 = arith.constant 0 : index
    %c0_0 = arith.constant 0 : index
    %c0_1 = arith.constant 0 : index
    %0 = vector.load %arg1[%c0, %c0_0, %c0_1] : memref<1x16x256xf32, #tpu.memory_space<vmem>>, vector<1x16x256xf32>
    %1 = vector.shape_cast %0 : vector<1x16x256xf32> to vector<16x256xf32>
    %c0_2 = arith.constant 0 : index
    %c0_3 = arith.constant 0 : index
    %2 = vector.load %arg2[%c0_2, %c0_3] : memref<1x256xf32, #tpu.memory_space<vmem>>, vector<1x256xf32>
    %c0_4 = arith.constant 0 : index
    %c0_5 = arith.constant 0 : index
    %3 = vector.load %arg3[%c0_4, %c0_5] : memref<1x256xf32, #tpu.memory_space<vmem>>, vector<1x256xf32>
    %cst = arith.constant dense<0.000000e+00> : vector<16xf32>
    %4 = vector.multi_reduction <add>, %1, %cst [1] : vector<16x256xf32> to vector<16xf32>
    %5 = vector.shape_cast %4 : vector<16xf32> to vector<16x1xf32>
    %cst_6 = arith.constant 2.560000e+02 : f32
    %6 = vector.broadcast %cst_6 : f32 to vector<16x1xf32>
    %7 = arith.divf %5, %6 : vector<16x1xf32>
    %8 = vector.broadcast %7 : vector<16x1xf32> to vector<16x256xf32>
    %9 = arith.subf %1, %8 : vector<16x256xf32>
    %10 = arith.mulf %9, %9 : vector<16x256xf32>
    %cst_7 = arith.constant dense<0.000000e+00> : vector<16xf32>
    %11 = vector.multi_reduction <add>, %10, %cst_7 [1] : vector<16x256xf32> to vector<16xf32>
    %12 = vector.shape_cast %11 : vector<16xf32> to vector<16x1xf32>
    %cst_8 = arith.constant 2.560000e+02 : f32
    %13 = vector.broadcast %cst_8 : f32 to vector<16x1xf32>
    %14 = arith.divf %12, %13 : vector<16x1xf32>
    %15 = vector.broadcast %7 : vector<16x1xf32> to vector<16x256xf32>
    %16 = arith.subf %1, %15 : vector<16x256xf32>
    %cst_9 = arith.constant 9.99999997E-7 : f32
    %17 = vector.broadcast %cst_9 : f32 to vector<16x1xf32>
    %18 = arith.addf %14, %17 : vector<16x1xf32>
    %19 = math.rsqrt %18 : vector<16x1xf32>
    %20 = vector.broadcast %19 : vector<16x1xf32> to vector<16x256xf32>
    %21 = arith.mulf %16, %20 : vector<16x256xf32>
    %22 = vector.broadcast %2 : vector<1x256xf32> to vector<16x256xf32>
    %23 = arith.mulf %21, %22 : vector<16x256xf32>
    %24 = vector.broadcast %3 : vector<1x256xf32> to vector<16x256xf32>
    %25 = arith.addf %23, %24 : vector<16x256xf32>
    %26 = arith.truncf %25 : vector<16x256xf32> to vector<16x256xbf16>
    %c0_10 = arith.constant 0 : index
    %c0_11 = arith.constant 0 : index
    %27 = vector.load %arg4[%c0_10, %c0_11] : memref<256x768xbf16, #tpu.memory_space<vmem>>, vector<256x768xbf16>
    %cst_12 = arith.constant dense<0.000000e+00> : vector<16x768xf32>
    %28 = tpu.matmul %26, %27, %cst_12 {dimension_numbers = #tpu.dot_dimension_numbers<[1], [0], [0], [1], [0, 0, 1, 1], [], []>} : vector<16x256xbf16>, vector<256x768xbf16>, vector<16x768xf32> -> vector<16x768xf32>
    %c0_13 = arith.constant 0 : index
    %c0_14 = arith.constant 0 : index
    %29 = vector.load %arg5[%c0_13, %c0_14] : memref<1x768xf32, #tpu.memory_space<vmem>>, vector<1x768xf32>
    %30 = vector.broadcast %29 : vector<1x768xf32> to vector<16x768xf32>
    %31 = arith.addf %28, %30 : vector<16x768xf32>
    %32 = vector.extract_strided_slice %31 {offsets = [0, 0], sizes = [16, 128], strides = [1, 1]} : vector<16x768xf32> to vector<16x128xf32>
    %33 = arith.truncf %32 : vector<16x128xf32> to vector<16x128xbf16>
    %34 = vector.extract_strided_slice %31 {offsets = [0, 256], sizes = [16, 128], strides = [1, 1]} : vector<16x768xf32> to vector<16x128xf32>
    %35 = arith.truncf %34 : vector<16x128xf32> to vector<16x128xbf16>
    %36 = vector.extract_strided_slice %31 {offsets = [0, 512], sizes = [16, 128], strides = [1, 1]} : vector<16x768xf32> to vector<16x128xf32>
    %37 = arith.truncf %36 : vector<16x128xf32> to vector<16x128xbf16>
    %cst_15 = arith.constant dense<0.000000e+00> : vector<16x16xf32>
    %38 = tpu.matmul %33, %35, %cst_15 {dimension_numbers = #tpu.dot_dimension_numbers<[1], [1], [0], [0], [0, 0, 1, 0], [], []>} : vector<16x128xbf16>, vector<16x128xbf16>, vector<16x16xf32> -> vector<16x16xf32>
    %cst_16 = arith.constant dense<0xFF800000> : vector<16xf32>
    %39 = vector.multi_reduction <maximumf>, %38, %cst_16 [1] : vector<16x16xf32> to vector<16xf32>
    %40 = vector.shape_cast %39 : vector<16xf32> to vector<16x1xf32>
    %41 = vector.broadcast %40 : vector<16x1xf32> to vector<16x16xf32>
    %42 = arith.subf %38, %41 : vector<16x16xf32>
    %43 = math.exp %42 : vector<16x16xf32>
    %cst_17 = arith.constant dense<0.000000e+00> : vector<16xf32>
    %44 = vector.multi_reduction <add>, %43, %cst_17 [1] : vector<16x16xf32> to vector<16xf32>
    %45 = vector.shape_cast %44 : vector<16xf32> to vector<16x1xf32>
    %46 = tpu.reciprocal %45 {approx = true} : vector<16x1xf32> -> vector<16x1xf32>
    %47 = vector.broadcast %46 : vector<16x1xf32> to vector<16x16xf32>
    %48 = arith.mulf %43, %47 : vector<16x16xf32>
    %49 = arith.truncf %48 : vector<16x16xf32> to vector<16x16xbf16>
    %cst_18 = arith.constant dense<0.000000e+00> : vector<16x128xf32>
    %50 = tpu.matmul %49, %37, %cst_18 {dimension_numbers = #tpu.dot_dimension_numbers<[1], [0], [0], [1], [0, 0, 1, 1], [], []>} : vector<16x16xbf16>, vector<16x128xbf16>, vector<16x128xf32> -> vector<16x128xf32>
    %c0_19 = arith.constant 0 : index
    %c0_20 = arith.constant 0 : index
    %51 = vector.load %arg19[%c0_19, %c0_20] : memref<16x256xf32, #tpu.memory_space<vmem>>, vector<16x128xf32>
    tpu.vector_store %arg19[%c0_19, %c0_20], %50 {strides = array<i32>} : memref<16x256xf32, #tpu.memory_space<vmem>>, vector<16x128xf32>,
    %52 = vector.extract_strided_slice %31 {offsets = [0, 128], sizes = [16, 128], strides = [1, 1]} : vector<16x768xf32> to vector<16x128xf32>
    %53 = arith.truncf %52 : vector<16x128xf32> to vector<16x128xbf16>
    %54 = vector.extract_strided_slice %31 {offsets = [0, 384], sizes = [16, 128], strides = [1, 1]} : vector<16x768xf32> to vector<16x128xf32>
    %55 = arith.truncf %54 : vector<16x128xf32> to vector<16x128xbf16>
    %56 = vector.extract_strided_slice %31 {offsets = [0, 640], sizes = [16, 128], strides = [1, 1]} : vector<16x768xf32> to vector<16x128xf32>
    %57 = arith.truncf %56 : vector<16x128xf32> to vector<16x128xbf16>
    %cst_21 = arith.constant dense<0.000000e+00> : vector<16x16xf32>
    %58 = tpu.matmul %53, %55, %cst_21 {dimension_numbers = #tpu.dot_dimension_numbers<[1], [1], [0], [0], [0, 0, 1, 0], [], []>} : vector<16x128xbf16>, vector<16x128xbf16>, vector<16x16xf32> -> vector<16x16xf32>
    %cst_22 = arith.constant dense<0xFF800000> : vector<16xf32>
    %59 = vector.multi_reduction <maximumf>, %58, %cst_22 [1] : vector<16x16xf32> to vector<16xf32>
    %60 = vector.shape_cast %59 : vector<16xf32> to vector<16x1xf32>
    %61 = vector.broadcast %60 : vector<16x1xf32> to vector<16x16xf32>
    %62 = arith.subf %58, %61 : vector<16x16xf32>
    %63 = math.exp %62 : vector<16x16xf32>
    %cst_23 = arith.constant dense<0.000000e+00> : vector<16xf32>
    %64 = vector.multi_reduction <add>, %63, %cst_23 [1] : vector<16x16xf32> to vector<16xf32>
    %65 = vector.shape_cast %64 : vector<16xf32> to vector<16x1xf32>
    %66 = tpu.reciprocal %65 {approx = true} : vector<16x1xf32> -> vector<16x1xf32>
    %67 = vector.broadcast %66 : vector<16x1xf32> to vector<16x16xf32>
    %68 = arith.mulf %63, %67 : vector<16x16xf32>
    %69 = arith.truncf %68 : vector<16x16xf32> to vector<16x16xbf16>
    %cst_24 = arith.constant dense<0.000000e+00> : vector<16x128xf32>
    %70 = tpu.matmul %69, %57, %cst_24 {dimension_numbers = #tpu.dot_dimension_numbers<[1], [0], [0], [1], [0, 0, 1, 1], [], []>} : vector<16x16xbf16>, vector<16x128xbf16>, vector<16x128xf32> -> vector<16x128xf32>
    %c0_25 = arith.constant 0 : index
    %c128 = arith.constant 128 : index
    %71 = vector.load %arg19[%c0_25, %c128] : memref<16x256xf32, #tpu.memory_space<vmem>>, vector<16x128xf32>
    tpu.vector_store %arg19[%c0_25, %c128], %70 {strides = array<i32>} : memref<16x256xf32, #tpu.memory_space<vmem>>, vector<16x128xf32>,
    %c0_26 = arith.constant 0 : index
    %c0_27 = arith.constant 0 : index
    %72 = vector.load %arg19[%c0_26, %c0_27] : memref<16x256xf32, #tpu.memory_space<vmem>>, vector<16x256xf32>
    %73 = arith.truncf %72 : vector<16x256xf32> to vector<16x256xbf16>
    %c0_28 = arith.constant 0 : index
    %c0_29 = arith.constant 0 : index
    %74 = vector.load %arg6[%c0_28, %c0_29] : memref<256x256xbf16, #tpu.memory_space<vmem>>, vector<256x256xbf16>
    %cst_30 = arith.constant dense<0.000000e+00> : vector<16x256xf32>
    %75 = tpu.matmul %73, %74, %cst_30 {dimension_numbers = #tpu.dot_dimension_numbers<[1], [0], [0], [1], [0, 0, 1, 1], [], []>} : vector<16x256xbf16>, vector<256x256xbf16>, vector<16x256xf32> -> vector<16x256xf32>
    %76 = arith.addf %1, %75 : vector<16x256xf32>
    %c0_31 = arith.constant 0 : index
    %c0_32 = arith.constant 0 : index
    %77 = vector.load %arg7[%c0_31, %c0_32] : memref<1x256xf32, #tpu.memory_space<vmem>>, vector<1x256xf32>
    %78 = vector.broadcast %77 : vector<1x256xf32> to vector<16x256xf32>
    %79 = arith.addf %76, %78 : vector<16x256xf32>
    %c0_33 = arith.constant 0 : index
    %c0_34 = arith.constant 0 : index
    %80 = vector.load %arg8[%c0_33, %c0_34] : memref<1x256xf32, #tpu.memory_space<vmem>>, vector<1x256xf32>
    %c0_35 = arith.constant 0 : index
    %c0_36 = arith.constant 0 : index
    %81 = vector.load %arg9[%c0_35, %c0_36] : memref<1x256xf32, #tpu.memory_space<vmem>>, vector<1x256xf32>
    %cst_37 = arith.constant dense<0.000000e+00> : vector<16xf32>
    %82 = vector.multi_reduction <add>, %79, %cst_37 [1] : vector<16x256xf32> to vector<16xf32>
    %83 = vector.shape_cast %82 : vector<16xf32> to vector<16x1xf32>
    %cst_38 = arith.constant 2.560000e+02 : f32
    %84 = vector.broadcast %cst_38 : f32 to vector<16x1xf32>
    %85 = arith.divf %83, %84 : vector<16x1xf32>
    %86 = vector.broadcast %85 : vector<16x1xf32> to vector<16x256xf32>
    %87 = arith.subf %79, %86 : vector<16x256xf32>
    %88 = arith.mulf %87, %87 : vector<16x256xf32>
    %cst_39 = arith.constant dense<0.000000e+00> : vector<16xf32>
    %89 = vector.multi_reduction <add>, %88, %cst_39 [1] : vector<16x256xf32> to vector<16xf32>
    %90 = vector.shape_cast %89 : vector<16xf32> to vector<16x1xf32>
    %cst_40 = arith.constant 2.560000e+02 : f32
    %91 = vector.broadcast %cst_40 : f32 to vector<16x1xf32>
    %92 = arith.divf %90, %91 : vector<16x1xf32>
    %93 = vector.broadcast %85 : vector<16x1xf32> to vector<16x256xf32>
    %94 = arith.subf %79, %93 : vector<16x256xf32>
    %cst_41 = arith.constant 9.99999997E-7 : f32
    %95 = vector.broadcast %cst_41 : f32 to vector<16x1xf32>
    %96 = arith.addf %92, %95 : vector<16x1xf32>
    %97 = math.rsqrt %96 : vector<16x1xf32>
    %98 = vector.broadcast %97 : vector<16x1xf32> to vector<16x256xf32>
    %99 = arith.mulf %94, %98 : vector<16x256xf32>
    %100 = vector.broadcast %80 : vector<1x256xf32> to vector<16x256xf32>
    %101 = arith.mulf %99, %100 : vector<16x256xf32>
    %102 = vector.broadcast %81 : vector<1x256xf32> to vector<16x256xf32>
    %103 = arith.addf %101, %102 : vector<16x256xf32>
    %104 = arith.truncf %103 : vector<16x256xf32> to vector<16x256xbf16>
    %c0_42 = arith.constant 0 : index
    %c0_43 = arith.constant 0 : index
    %105 = vector.load %arg10[%c0_42, %c0_43] : memref<256x512xbf16, #tpu.memory_space<vmem>>, vector<256x512xbf16>
    %cst_44 = arith.constant dense<0.000000e+00> : vector<16x512xf32>
    %106 = tpu.matmul %104, %105, %cst_44 {dimension_numbers = #tpu.dot_dimension_numbers<[1], [0], [0], [1], [0, 0, 1, 1], [], []>} : vector<16x256xbf16>, vector<256x512xbf16>, vector<16x512xf32> -> vector<16x512xf32>
    %c0_45 = arith.constant 0 : index
    %c0_46 = arith.constant 0 : index
    %107 = vector.load %arg11[%c0_45, %c0_46] : memref<1x512xf32, #tpu.memory_space<vmem>>, vector<1x512xf32>
    %108 = vector.broadcast %107 : vector<1x512xf32> to vector<16x512xf32>
    %109 = arith.addf %106, %108 : vector<16x512xf32>
    %110 = arith.mulf %109, %109 : vector<16x512xf32>
    %111 = arith.mulf %109, %110 : vector<16x512xf32>
    %cst_47 = arith.constant 4.471500e-02 : f32
    %112 = vector.broadcast %cst_47 : f32 to vector<16x512xf32>
    %113 = arith.mulf %112, %111 : vector<16x512xf32>
    %114 = arith.addf %109, %113 : vector<16x512xf32>
    %cst_48 = arith.constant 0.797884583 : f32
    %115 = vector.broadcast %cst_48 : f32 to vector<16x512xf32>
    %116 = arith.mulf %115, %114 : vector<16x512xf32>
    %117 = math.tanh %116 : vector<16x512xf32>
    %cst_49 = arith.constant 1.000000e+00 : f32
    %118 = vector.broadcast %cst_49 : f32 to vector<16x512xf32>
    %119 = arith.addf %118, %117 : vector<16x512xf32>
    %cst_50 = arith.constant 5.000000e-01 : f32
    %120 = vector.broadcast %cst_50 : f32 to vector<16x512xf32>
    %121 = arith.mulf %120, %119 : vector<16x512xf32>
    %122 = arith.mulf %109, %121 : vector<16x512xf32>
    %123 = arith.truncf %122 : vector<16x512xf32> to vector<16x512xbf16>
    %c0_51 = arith.constant 0 : index
    %c0_52 = arith.constant 0 : index
    %124 = vector.load %arg12[%c0_51, %c0_52] : memref<512x256xbf16, #tpu.memory_space<vmem>>, vector<512x256xbf16>
    %cst_53 = arith.constant dense<0.000000e+00> : vector<16x256xf32>
    %125 = tpu.matmul %123, %124, %cst_53 {dimension_numbers = #tpu.dot_dimension_numbers<[1], [0], [0], [1], [0, 0, 1, 1], [], []>} : vector<16x512xbf16>, vector<512x256xbf16>, vector<16x256xf32> -> vector<16x256xf32>
    %c0_54 = arith.constant 0 : index
    %c0_55 = arith.constant 0 : index
    %126 = vector.load %arg13[%c0_54, %c0_55] : memref<1x256xf32, #tpu.memory_space<vmem>>, vector<1x256xf32>
    %127 = vector.broadcast %126 : vector<1x256xf32> to vector<16x256xf32>
    %128 = arith.addf %125, %127 : vector<16x256xf32>
    %129 = arith.addf %79, %128 : vector<16x256xf32>
    %c0_56 = arith.constant 0 : index
    %c0_57 = arith.constant 0 : index
    %130 = vector.load %arg14[%c0_56, %c0_57] : memref<1x256xf32, #tpu.memory_space<vmem>>, vector<1x256xf32>
    %c0_58 = arith.constant 0 : index
    %c0_59 = arith.constant 0 : index
    %131 = vector.load %arg15[%c0_58, %c0_59] : memref<1x256xf32, #tpu.memory_space<vmem>>, vector<1x256xf32>
    %cst_60 = arith.constant dense<0.000000e+00> : vector<16xf32>
    %132 = vector.multi_reduction <add>, %129, %cst_60 [1] : vector<16x256xf32> to vector<16xf32>
    %133 = vector.shape_cast %132 : vector<16xf32> to vector<16x1xf32>
    %cst_61 = arith.constant 2.560000e+02 : f32
    %134 = vector.broadcast %cst_61 : f32 to vector<16x1xf32>
    %135 = arith.divf %133, %134 : vector<16x1xf32>
    %136 = vector.broadcast %135 : vector<16x1xf32> to vector<16x256xf32>
    %137 = arith.subf %129, %136 : vector<16x256xf32>
    %138 = arith.mulf %137, %137 : vector<16x256xf32>
    %cst_62 = arith.constant dense<0.000000e+00> : vector<16xf32>
    %139 = vector.multi_reduction <add>, %138, %cst_62 [1] : vector<16x256xf32> to vector<16xf32>
    %140 = vector.shape_cast %139 : vector<16xf32> to vector<16x1xf32>
    %cst_63 = arith.constant 2.560000e+02 : f32
    %141 = vector.broadcast %cst_63 : f32 to vector<16x1xf32>
    %142 = arith.divf %140, %141 : vector<16x1xf32>
    %143 = vector.broadcast %135 : vector<16x1xf32> to vector<16x256xf32>
    %144 = arith.subf %129, %143 : vector<16x256xf32>
    %cst_64 = arith.constant 9.99999997E-7 : f32
    %145 = vector.broadcast %cst_64 : f32 to vector<16x1xf32>
    %146 = arith.addf %142, %145 : vector<16x1xf32>
    %147 = math.rsqrt %146 : vector<16x1xf32>
    %148 = vector.broadcast %147 : vector<16x1xf32> to vector<16x256xf32>
    %149 = arith.mulf %144, %148 : vector<16x256xf32>
    %150 = vector.broadcast %130 : vector<1x256xf32> to vector<16x256xf32>
    %151 = arith.mulf %149, %150 : vector<16x256xf32>
    %152 = vector.broadcast %131 : vector<1x256xf32> to vector<16x256xf32>
    %153 = arith.addf %151, %152 : vector<16x256xf32>
    %154 = arith.truncf %153 : vector<16x256xf32> to vector<16x256xbf16>
    %c0_65 = arith.constant 0 : index
    %c0_66 = arith.constant 0 : index
    %155 = vector.load %arg16[%c0_65, %c0_66] : memref<256x256xbf16, #tpu.memory_space<vmem>>, vector<256x256xbf16>
    %cst_67 = arith.constant dense<0.000000e+00> : vector<16x256xf32>
    %156 = tpu.matmul %154, %155, %cst_67 {dimension_numbers = #tpu.dot_dimension_numbers<[1], [0], [0], [1], [0, 0, 1, 1], [], []>} : vector<16x256xbf16>, vector<256x256xbf16>, vector<16x256xf32> -> vector<16x256xf32>
    %c0_68 = arith.constant 0 : index
    %c0_69 = arith.constant 0 : index
    %157 = vector.load %arg17[%c0_68, %c0_69] : memref<1x256xf32, #tpu.memory_space<vmem>>, vector<1x256xf32>
    %158 = vector.broadcast %157 : vector<1x256xf32> to vector<16x256xf32>
    %159 = arith.addf %156, %158 : vector<16x256xf32>
    %c0_70 = arith.constant 0 : index
    %c0_71 = arith.constant 0 : index
    %c0_72 = arith.constant 0 : index
    %160 = vector.load %arg18[%c0_70, %c0_71, %c0_72] : memref<1x16x256xf32, #tpu.memory_space<vmem>>, vector<1x16x256xf32>
    %161 = vector.shape_cast %160 : vector<1x16x256xf32> to vector<16x256xf32>
    %162 = vector.shape_cast %159 : vector<16x256xf32> to vector<1x16x256xf32>
    tpu.vector_store %arg18[%c0_70, %c0_71, %c0_72], %162 {strides = array<i32>} : memref<1x16x256xf32, #tpu.memory_space<vmem>>, vector<1x16x256xf32>,
    return
  }
  func.func @transform_0(%arg0: i32) -> (i32, i32, i32) {
    %c0_i32 = arith.constant 0 : i32
    %c0_i32_0 = arith.constant 0 : i32
    %c0_i32_1 = arith.constant 0 : i32
    return %arg0, %c0_i32, %c0_i32_0 : i32, i32, i32
  }
  func.func @transform_1(%arg0: i32) -> (i32, i32) {
    %c0_i32 = arith.constant 0 : i32
    %c0_i32_0 = arith.constant 0 : i32
    %c0_i32_1 = arith.constant 0 : i32
    return %c0_i32, %c0_i32_0 : i32, i32
  }
  func.func @transform_2(%arg0: i32) -> (i32, i32) {
    %c0_i32 = arith.constant 0 : i32
    %c0_i32_0 = arith.constant 0 : i32
    %c0_i32_1 = arith.constant 0 : i32
    return %c0_i32, %c0_i32_0 : i32, i32
  }
  func.func @transform_3(%arg0: i32) -> (i32, i32) {
    %c0_i32 = arith.constant 0 : i32
    %c0_i32_0 = arith.constant 0 : i32
    %c0_i32_1 = arith.constant 0 : i32
    return %c0_i32, %c0_i32_0 : i32, i32
  }
  func.func @transform_4(%arg0: i32) -> (i32, i32) {
    %c0_i32 = arith.constant 0 : i32
    %c0_i32_0 = arith.constant 0 : i32
    %c0_i32_1 = arith.constant 0 : i32
    return %c0_i32, %c0_i32_0 : i32, i32
  }
  func.func @transform_5(%arg0: i32) -> (i32, i32) {
    %c0_i32 = arith.constant 0 : i32
    %c0_i32_0 = arith.constant 0 : i32
    %c0_i32_1 = arith.constant 0 : i32
    return %c0_i32, %c0_i32_0 : i32, i32
  }
  func.func @transform_6(%arg0: i32) -> (i32, i32) {
    %c0_i32 = arith.constant 0 : i32
    %c0_i32_0 = arith.constant 0 : i32
    %c0_i32_1 = arith.constant 0 : i32
    return %c0_i32, %c0_i32_0 : i32, i32
  }
  func.func @transform_7(%arg0: i32) -> (i32, i32) {
    %c0_i32 = arith.constant 0 : i32
    %c0_i32_0 = arith.constant 0 : i32
    %c0_i32_1 = arith.constant 0 : i32
    return %c0_i32, %c0_i32_0 : i32, i32
  }
  func.func @transform_8(%arg0: i32) -> (i32, i32) {
    %c0_i32 = arith.constant 0 : i32
    %c0_i32_0 = arith.constant 0 : i32
    %c0_i32_1 = arith.constant 0 : i32
    return %c0_i32, %c0_i32_0 : i32, i32
  }
  func.func @transform_9(%arg0: i32) -> (i32, i32) {
    %c0_i32 = arith.constant 0 : i32
    %c0_i32_0 = arith.constant 0 : i32
    %c0_i32_1 = arith.constant 0 : i32
    return %c0_i32, %c0_i32_0 : i32, i32
  }
  func.func @transform_10(%arg0: i32) -> (i32, i32) {
    %c0_i32 = arith.constant 0 : i32
    %c0_i32_0 = arith.constant 0 : i32
    %c0_i32_1 = arith.constant 0 : i32
    return %c0_i32, %c0_i32_0 : i32, i32
  }
  func.func @transform_11(%arg0: i32) -> (i32, i32) {
    %c0_i32 = arith.constant 0 : i32
    %c0_i32_0 = arith.constant 0 : i32
    %c0_i32_1 = arith.constant 0 : i32
    return %c0_i32, %c0_i32_0 : i32, i32
  }
  func.func @transform_12(%arg0: i32) -> (i32, i32) {
    %c0_i32 = arith.constant 0 : i32
    %c0_i32_0 = arith.constant 0 : i32
    %c0_i32_1 = arith.constant 0 : i32
    return %c0_i32, %c0_i32_0 : i32, i32
  }
  func.func @transform_13(%arg0: i32) -> (i32, i32) {
    %c0_i32 = arith.constant 0 : i32
    %c0_i32_0 = arith.constant 0 : i32
    %c0_i32_1 = arith.constant 0 : i32
    return %c0_i32, %c0_i32_0 : i32, i32
  }
  func.func @transform_14(%arg0: i32) -> (i32, i32) {
    %c0_i32 = arith.constant 0 : i32
    %c0_i32_0 = arith.constant 0 : i32
    %c0_i32_1 = arith.constant 0 : i32
    return %c0_i32, %c0_i32_0 : i32, i32
  }
  func.func @transform_15(%arg0: i32) -> (i32, i32) {
    %c0_i32 = arith.constant 0 : i32
    %c0_i32_0 = arith.constant 0 : i32
    %c0_i32_1 = arith.constant 0 : i32
    return %c0_i32, %c0_i32_0 : i32, i32
  }
  func.func @transform_16(%arg0: i32) -> (i32, i32) {
    %c0_i32 = arith.constant 0 : i32
    %c0_i32_0 = arith.constant 0 : i32
    %c0_i32_1 = arith.constant 0 : i32
    return %c0_i32, %c0_i32_0 : i32, i32
  }
  func.func @transform_17(%arg0: i32) -> (i32, i32, i32) {
    %c0_i32 = arith.constant 0 : i32
    %c0_i32_0 = arith.constant 0 : i32
    %c0_i32_1 = arith.constant 0 : i32
    return %arg0, %c0_i32, %c0_i32_0 : i32, i32, i32
  }
}

</mosaic_0001>

<llo_original>
// kernel: autoencoder_forward.2
$region0: #{autoencoder_forward.2}
  #allocation0 [shape = 'u32[]', space=smem, size = 0x4, offset = 0x4, fixed_abs, tag = 'smem constant byte address 0x4 - core index']
  #allocation1 [shape = 'u32[72,128]{1,0:T(1,128)}', space=vmem, size = 0x9000, scoped, tag = 'internal scratch']
  #allocation2 [shape = 'f32[16,256]{1,0:T(8,128)}', space=vmem, size = 0x4000, scoped, tag = 'scratch operand']
  %s0 = inlined_call_operand.vmem [shape: bf16[2,16,256], index: 0, kind: input, shape index: {}]
  %s1 = inlined_call_operand.vmem [shape: f32[16,256], index: 1, kind: input, shape index: {}]
  %s2 = inlined_call_operand.hbm [shape: bf16[256,256], index: 2, kind: input, shape index: {}]
  %s3 = inlined_call_operand.vmem [shape: f32[1,256], index: 3, kind: input, shape index: {}]
  %s4 = inlined_call_operand.vmem [shape: f32[1,256], index: 4, kind: input, shape index: {}]
  %s5 = inlined_call_operand.vmem [shape: f32[1,256], index: 5, kind: input, shape index: {}]
  %s6 = inlined_call_operand.vmem [shape: bf16[256,768], index: 6, kind: input, shape index: {}]
  %s7 = inlined_call_operand.vmem [shape: f32[1,768], index: 7, kind: input, shape index: {}]
  %s8 = inlined_call_operand.hbm [shape: bf16[256,256], index: 8, kind: input, shape index: {}]
  %s9 = inlined_call_operand.hbm [shape: f32[1,256], index: 9, kind: input, shape index: {}]
  %s10 = inlined_call_operand.hbm [shape: f32[1,256], index: 10, kind: input, shape index: {}]
  %s11 = inlined_call_operand.hbm [shape: f32[1,256], index: 11, kind: input, shape index: {}]
  %s12 = inlined_call_operand.vmem [shape: bf16[256,512], index: 12, kind: input, shape index: {}]
  %s13 = inlined_call_operand.vmem [shape: f32[1,512], index: 13, kind: input, shape index: {}]
  %s14 = inlined_call_operand.vmem [shape: bf16[512,256], index: 14, kind: input, shape index: {}]
  %s15 = inlined_call_operand.hbm [shape: f32[1,256], index: 15, kind: input, shape index: {}]
  %s16 = inlined_call_operand.vmem [shape: f32[1,256], index: 16, kind: input, shape index: {}]
  %s17 = inlined_call_operand.vmem [shape: f32[1,256], index: 17, kind: input, shape index: {}]
  %s18 = inlined_call_operand.vmem [shape: f32[2,16,256], index: 18, kind: output, shape index: {}]
  %s19 = sld [smem:[#allocation0]]
  $region129: #{autoencoder_forward.2} parent=0
    _
  %s21 = ssub.s32 1, %s19
  %s22 = scalar_select 0, %s21, %s19
  $region1: #{autoencoder_forward.2} parent=0
    #allocation3 [shape = 'u8[131072]{0}', space=vmem, size = 0x20000, scoped, tag = 'input window, operand 2, single buffered']
    #allocation4 [shape = 's32[2]{0}', space=sflag, size = 0x8, scoped, tag = 'scoped memory for autoencoder_forward.2']
    #allocation5 [shape = 'u8[131072]{0}', space=vmem, size = 0x20000, scoped, tag = 'input window, operand 8, single buffered']
    #allocation6 [shape = 's32[1]{0}', space=sflag, size = 0x4, scoped, tag = 'scoped memory for autoencoder_forward.2']
    #allocation7 [shape = 'u8[1024]{0}', space=vmem, size = 0x400, scoped, tag = 'input window, operand 9, single buffered']
    #allocation8 [shape = 'u8[1024]{0}', space=vmem, size = 0x400, scoped, tag = 'input window, operand 10, single buffered']
    #allocation9 [shape = 's32[1]{0}', space=sflag, size = 0x4, scoped, tag = 'scoped memory for autoencoder_forward.2']
    #allocation10 [shape = 'u8[1024]{0}', space=vmem, size = 0x400, scoped, tag = 'input window, operand 11, single buffered']
    #allocation11 [shape = 'u8[1024]{0}', space=vmem, size = 0x400, scoped, tag = 'input window, operand 15, single buffered']
    #allocation12 [shape = 's32[1]{0}', space=sflag, size = 0x4, scoped, tag = 'scoped memory for autoencoder_forward.2']
    %23 = vsyncpa [#allocation4], 0
    %24 = vsyncpa [#allocation6], 0
    %25 = vsyncpa [#allocation9], 0
    %26 = vsyncpa [#allocation12], 0
    loop: start=0, step=1, limit=4
    $region2: #{autoencoder_forward.2} parent=1 // loop_pre_header
      _
    $region3: #{autoencoder_forward.2} parent=1 // loop_header
      %s28 = sphi 0, %s32
      %p29 = scmp.ge.s32.totalorder %s28, 4
      %s38 = sphi 0, %s40
      %s41 = sphi 0, %s38
      %s42 = sphi 0, %s41
      %s58 = sphi 0, %s42
      %s62 = sphi 0, %s62
      %s64 = sphi 0, %s62
      %s65 = sphi 0, %s64
      %s79 = sphi 0, %s65
      %s83 = sphi 0, %s83
      %s85 = sphi 0, %s83
      %s86 = sphi 0, %s85
      %s100 = sphi 0, %s86
      %s104 = sphi 0, %s104
      %s106 = sphi 0, %s104
      %s107 = sphi 0, %s106
      %s121 = sphi 0, %s107
      %s125 = sphi 0, %s125
      %s127 = sphi 0, %s125
      %s128 = sphi 0, %s127
      %s142 = sphi 0, %s128
      %s146 = sphi 0, %s146
      %s148 = sphi 0, %s146
      %s149 = sphi 0, %s148
      %s163 = sphi 0, %s149
      %s167 = sphi 0, %s167
      %s169 = sphi 0, %s167
      %s170 = sphi 0, %s169
      %s184 = sphi 0, %s170
      %s188 = sphi 0, %s188
      %s190 = sphi 0, %s188
      %s191 = sphi 0, %s190
      %s205 = sphi 0, %s191
      %s209 = sphi 0, %s209
      %s211 = sphi 0, %s209
      %s212 = sphi 0, %s211
      %s226 = sphi 0, %s212
      %s230 = sphi 0, %s230
      %s232 = sphi 0, %s230
      %s233 = sphi 0, %s232
      %s247 = sphi 0, %s233
      %s251 = sphi 0, %s251
      %s253 = sphi 0, %s251
      %s254 = sphi 0, %s253
      %s268 = sphi 0, %s254
      %s272 = sphi 0, %s272
      %s274 = sphi 0, %s272
      %s275 = sphi 0, %s274
      %s289 = sphi 0, %s275
      %s293 = sphi 0, %s293
      %s295 = sphi 0, %s293
      %s296 = sphi 0, %s295
      %s310 = sphi 0, %s296
      %s314 = sphi 0, %s314
      %s316 = sphi 0, %s314
      %s317 = sphi 0, %s316
      %s331 = sphi 0, %s317
      %s335 = sphi 0, %s335
      %s337 = sphi 0, %s335
      %s338 = sphi 0, %s337
      %s352 = sphi 0, %s338
      %s356 = sphi 0, %s356
      %s358 = sphi 0, %s356
      %s359 = sphi 0, %s358
      %s373 = sphi 0, %s359
      %s377 = sphi 0, %s377
      %s379 = sphi 0, %s377
      %s380 = sphi 0, %s379
      %s394 = sphi 0, %s380
      %s398 = sphi 0, %s398
      %s400 = sphi 0, %s398
      %s401 = sphi 0, %s400
      %s415 = sphi 0, %s401
      %s421 = sphi 0, %s423
      %s424 = sphi 0, %s421
      %s425 = sphi 0, %s424
      %s441 = sphi 0, %s425
    $region4: #{autoencoder_forward.2} parent=1 // loop_header_branch
      %31 = sbr.rel (%p29) target = $region8
    $region5: #{autoencoder_forward.2} parent=1 // loop_body
      %s33 = ssub.s32 %s28, 1
      %s34 = ssub.s32 %s28, 2
      %s35 = sadd.s32 %s28, 1
      %s36 = ssub.s32 %s28, %s35
      %p37 = scmp.eq.s32.totalorder %s36, 0
      %s39 = sadd.s32 %s38, 1
      %s40 = scalar_select %p37, %s38, %s39
      %p43 = pneg %p37
      %p44 = scmp.eq.s32.totalorder %s28, 1
      %p45 = por %p43, %p44
      %p46 = scmp.ne.s32.totalorder %s38, %s41
      %p47 = scmp.eq.s32.totalorder %s28, 0
      %p48 = por %p46, %p47
      %p49 = scmp.ne.s32.totalorder %s38, %s41
      %p50 = scmp.eq.s32.totalorder %s33, 1
      %p51 = por %p49, %p50
      %p52 = scmp.ne.s32.totalorder %s41, %s42
      %p53 = scmp.eq.s32.totalorder %s33, 0
      %p54 = por %p52, %p53
      %p55 = scmp.ne.s32.totalorder %s41, %s42
      %p56 = scmp.eq.s32.totalorder %s34, 1
      %p57 = por %p55, %p56
      %p59 = scmp.ne.s32.totalorder %s42, %s58
      %p60 = scmp.eq.s32.totalorder %s34, 0
      %p61 = por %p59, %p60
      %s63 = sadd.s32 %s62, 1
      %p66 = scmp.eq.s32.totalorder %s28, 1
      %p67 = scmp.ne.s32.totalorder %s62, %s64
      %p68 = scmp.eq.s32.totalorder %s28, 0
      %p69 = por %p67, %p68
      %p70 = scmp.ne.s32.totalorder %s62, %s64
      %p71 = scmp.eq.s32.totalorder %s33, 1
      %p72 = por %p70, %p71
      %p73 = scmp.ne.s32.totalorder %s64, %s65
      %p74 = scmp.eq.s32.totalorder %s33, 0
      %p75 = por %p73, %p74
      %p76 = scmp.ne.s32.totalorder %s64, %s65
      %p77 = scmp.eq.s32.totalorder %s34, 1
      %p78 = por %p76, %p77
      %p80 = scmp.ne.s32.totalorder %s65, %s79
      %p81 = scmp.eq.s32.totalorder %s34, 0
      %p82 = por %p80, %p81
      %s84 = sadd.s32 %s83, 1
      %p87 = scmp.eq.s32.totalorder %s28, 1
      %p88 = scmp.ne.s32.totalorder %s83, %s85
      %p89 = scmp.eq.s32.totalorder %s28, 0
      %p90 = por %p88, %p89
      %p91 = scmp.ne.s32.totalorder %s83, %s85
      %p92 = scmp.eq.s32.totalorder %s33, 1
      %p93 = por %p91, %p92
      %p94 = scmp.ne.s32.totalorder %s85, %s86
      %p95 = scmp.eq.s32.totalorder %s33, 0
      %p96 = por %p94, %p95
      %p97 = scmp.ne.s32.totalorder %s85, %s86
      %p98 = scmp.eq.s32.totalorder %s34, 1
      %p99 = por %p97, %p98
      %p101 = scmp.ne.s32.totalorder %s86, %s100
      %p102 = scmp.eq.s32.totalorder %s34, 0
      %p103 = por %p101, %p102
      %s105 = sadd.s32 %s104, 1
      %p108 = scmp.eq.s32.totalorder %s28, 1
      %p109 = scmp.ne.s32.totalorder %s104, %s106
      %p110 = scmp.eq.s32.totalorder %s28, 0
      %p111 = por %p109, %p110
      %p112 = scmp.ne.s32.totalorder %s104, %s106
      %p113 = scmp.eq.s32.totalorder %s33, 1
      %p114 = por %p112, %p113
      %p115 = scmp.ne.s32.totalorder %s106, %s107
      %p116 = scmp.eq.s32.totalorder %s33, 0
      %p117 = por %p115, %p116
      %p118 = scmp.ne.s32.totalorder %s106, %s107
      %p119 = scmp.eq.s32.totalorder %s34, 1
      %p120 = por %p118, %p119
      %p122 = scmp.ne.s32.totalorder %s107, %s121
      %p123 = scmp.eq.s32.totalorder %s34, 0
      %p124 = por %p122, %p123
      %s126 = sadd.s32 %s125, 1
      %p129 = scmp.eq.s32.totalorder %s28, 1
      %p130 = scmp.ne.s32.totalorder %s125, %s127
      %p131 = scmp.eq.s32.totalorder %s28, 0
      %p132 = por %p130, %p131
      %p133 = scmp.ne.s32.totalorder %s125, %s127
      %p134 = scmp.eq.s32.totalorder %s33, 1
      %p135 = por %p133, %p134
      %p136 = scmp.ne.s32.totalorder %s127, %s128
      %p137 = scmp.eq.s32.totalorder %s33, 0
      %p138 = por %p136, %p137
      %p139 = scmp.ne.s32.totalorder %s127, %s128
      %p140 = scmp.eq.s32.totalorder %s34, 1
      %p141 = por %p139, %p140
      %p143 = scmp.ne.s32.totalorder %s128, %s142
      %p144 = scmp.eq.s32.totalorder %s34, 0
      %p145 = por %p143, %p144
      %s147 = sadd.s32 %s146, 1
      %p150 = scmp.eq.s32.totalorder %s28, 1
      %p151 = scmp.ne.s32.totalorder %s146, %s148
      %p152 = scmp.eq.s32.totalorder %s28, 0
      %p153 = por %p151, %p152
      %p154 = scmp.ne.s32.totalorder %s146, %s148
      %p155 = scmp.eq.s32.totalorder %s33, 1
      %p156 = por %p154, %p155
      %p157 = scmp.ne.s32.totalorder %s148, %s149
      %p158 = scmp.eq.s32.totalorder %s33, 0
      %p159 = por %p157, %p158
      %p160 = scmp.ne.s32.totalorder %s148, %s149
      %p161 = scmp.eq.s32.totalorder %s34, 1
      %p162 = por %p160, %p161
      %p164 = scmp.ne.s32.totalorder %s149, %s163
      %p165 = scmp.eq.s32.totalorder %s34, 0
      %p166 = por %p164, %p165
      %s168 = sadd.s32 %s167, 1
      %p171 = scmp.eq.s32.totalorder %s28, 1
      %p172 = scmp.ne.s32.totalorder %s167, %s169
      %p173 = scmp.eq.s32.totalorder %s28, 0
      %p174 = por %p172, %p173
      %p175 = scmp.ne.s32.totalorder %s167, %s169
      %p176 = scmp.eq.s32.totalorder %s33, 1
      %p177 = por %p175, %p176
      %p178 = scmp.ne.s32.totalorder %s169, %s170
      %p179 = scmp.eq.s32.totalorder %s33, 0
      %p180 = por %p178, %p179
      %p181 = scmp.ne.s32.totalorder %s169, %s170
      %p182 = scmp.eq.s32.totalorder %s34, 1
      %p183 = por %p181, %p182
      %p185 = scmp.ne.s32.totalorder %s170, %s184
      %p186 = scmp.eq.s32.totalorder %s34, 0
      %p187 = por %p185, %p186
      %s189 = sadd.s32 %s188, 1
      %p192 = scmp.eq.s32.totalorder %s28, 1
      %p193 = scmp.ne.s32.totalorder %s188, %s190
      %p194 = scmp.eq.s32.totalorder %s28, 0
      %p195 = por %p193, %p194
      %p196 = scmp.ne.s32.totalorder %s188, %s190
      %p197 = scmp.eq.s32.totalorder %s33, 1
      %p198 = por %p196, %p197
      %p199 = scmp.ne.s32.totalorder %s190, %s191
      %p200 = scmp.eq.s32.totalorder %s33, 0
      %p201 = por %p199, %p200
      %p202 = scmp.ne.s32.totalorder %s190, %s191
      %p203 = scmp.eq.s32.totalorder %s34, 1
      %p204 = por %p202, %p203
      %p206 = scmp.ne.s32.totalorder %s191, %s205
      %p207 = scmp.eq.s32.totalorder %s34, 0
      %p208 = por %p206, %p207
      %s210 = sadd.s32 %s209, 1
      %p213 = scmp.eq.s32.totalorder %s28, 1
      %p214 = scmp.ne.s32.totalorder %s209, %s211
      %p215 = scmp.eq.s32.totalorder %s28, 0
      %p216 = por %p214, %p215
      %p217 = scmp.ne.s32.totalorder %s209, %s211
      %p218 = scmp.eq.s32.totalorder %s33, 1
      %p219 = por %p217, %p218
      %p220 = scmp.ne.s32.totalorder %s211, %s212
      %p221 = scmp.eq.s32.totalorder %s33, 0
      %p222 = por %p220, %p221
      %p223 = scmp.ne.s32.totalorder %s211, %s212
      %p224 = scmp.eq.s32.totalorder %s34, 1
      %p225 = por %p223, %p224
      %p227 = scmp.ne.s32.totalorder %s212, %s226
      %p228 = scmp.eq.s32.totalorder %s34, 0
      %p229 = por %p227, %p228
      %s231 = sadd.s32 %s230, 1
      %p234 = scmp.eq.s32.totalorder %s28, 1
      %p235 = scmp.ne.s32.totalorder %s230, %s232
      %p236 = scmp.eq.s32.totalorder %s28, 0
      %p237 = por %p235, %p236
      %p238 = scmp.ne.s32.totalorder %s230, %s232
      %p239 = scmp.eq.s32.totalorder %s33, 1
      %p240 = por %p238, %p239
      %p241 = scmp.ne.s32.totalorder %s232, %s233
      %p242 = scmp.eq.s32.totalorder %s33, 0
      %p243 = por %p241, %p242
      %p244 = scmp.ne.s32.totalorder %s232, %s233
      %p245 = scmp.eq.s32.totalorder %s34, 1
      %p246 = por %p244, %p245
      %p248 = scmp.ne.s32.totalorder %s233, %s247
      %p249 = scmp.eq.s32.totalorder %s34, 0
      %p250 = por %p248, %p249
      %s252 = sadd.s32 %s251, 1
      %p255 = scmp.eq.s32.totalorder %s28, 1
      %p256 = scmp.ne.s32.totalorder %s251, %s253
      %p257 = scmp.eq.s32.totalorder %s28, 0
      %p258 = por %p256, %p257
      %p259 = scmp.ne.s32.totalorder %s251, %s253
      %p260 = scmp.eq.s32.totalorder %s33, 1
      %p261 = por %p259, %p260
      %p262 = scmp.ne.s32.totalorder %s253, %s254
      %p263 = scmp.eq.s32.totalorder %s33, 0
      %p264 = por %p262, %p263
      %p265 = scmp.ne.s32.totalorder %s253, %s254
      %p266 = scmp.eq.s32.totalorder %s34, 1
      %p267 = por %p265, %p266
      %p269 = scmp.ne.s32.totalorder %s254, %s268
      %p270 = scmp.eq.s32.totalorder %s34, 0
      %p271 = por %p269, %p270
      %s273 = sadd.s32 %s272, 1
      %p276 = scmp.eq.s32.totalorder %s28, 1
      %p277 = scmp.ne.s32.totalorder %s272, %s274
      %p278 = scmp.eq.s32.totalorder %s28, 0
      %p279 = por %p277, %p278
      %p280 = scmp.ne.s32.totalorder %s272, %s274
      %p281 = scmp.eq.s32.totalorder %s33, 1
      %p282 = por %p280, %p281
      %p283 = scmp.ne.s32.totalorder %s274, %s275
      %p284 = scmp.eq.s32.totalorder %s33, 0
      %p285 = por %p283, %p284
      %p286 = scmp.ne.s32.totalorder %s274, %s275
      %p287 = scmp.eq.s32.totalorder %s34, 1
      %p288 = por %p286, %p287
      %p290 = scmp.ne.s32.totalorder %s275, %s289
      %p291 = scmp.eq.s32.totalorder %s34, 0
      %p292 = por %p290, %p291
      %s294 = sadd.s32 %s293, 1
      %p297 = scmp.eq.s32.totalorder %s28, 1
      %p298 = scmp.ne.s32.totalorder %s293, %s295
      %p299 = scmp.eq.s32.totalorder %s28, 0
      %p300 = por %p298, %p299
      %p301 = scmp.ne.s32.totalorder %s293, %s295
      %p302 = scmp.eq.s32.totalorder %s33, 1
      %p303 = por %p301, %p302
      %p304 = scmp.ne.s32.totalorder %s295, %s296
      %p305 = scmp.eq.s32.totalorder %s33, 0
      %p306 = por %p304, %p305
      %p307 = scmp.ne.s32.totalorder %s295, %s296
      %p308 = scmp.eq.s32.totalorder %s34, 1
      %p309 = por %p307, %p308
      %p311 = scmp.ne.s32.totalorder %s296, %s310
      %p312 = scmp.eq.s32.totalorder %s34, 0
      %p313 = por %p311, %p312
      %s315 = sadd.s32 %s314, 1
      %p318 = scmp.eq.s32.totalorder %s28, 1
      %p319 = scmp.ne.s32.totalorder %s314, %s316
      %p320 = scmp.eq.s32.totalorder %s28, 0
      %p321 = por %p319, %p320
      %p322 = scmp.ne.s32.totalorder %s314, %s316
      %p323 = scmp.eq.s32.totalorder %s33, 1
      %p324 = por %p322, %p323
      %p325 = scmp.ne.s32.totalorder %s316, %s317
      %p326 = scmp.eq.s32.totalorder %s33, 0
      %p327 = por %p325, %p326
      %p328 = scmp.ne.s32.totalorder %s316, %s317
      %p329 = scmp.eq.s32.totalorder %s34, 1
      %p330 = por %p328, %p329
      %p332 = scmp.ne.s32.totalorder %s317, %s331
      %p333 = scmp.eq.s32.totalorder %s34, 0
      %p334 = por %p332, %p333
      %s336 = sadd.s32 %s335, 1
      %p339 = scmp.eq.s32.totalorder %s28, 1
      %p340 = scmp.ne.s32.totalorder %s335, %s337
      %p341 = scmp.eq.s32.totalorder %s28, 0
      %p342 = por %p340, %p341
      %p343 = scmp.ne.s32.totalorder %s335, %s337
      %p344 = scmp.eq.s32.totalorder %s33, 1
      %p345 = por %p343, %p344
      %p346 = scmp.ne.s32.totalorder %s337, %s338
      %p347 = scmp.eq.s32.totalorder %s33, 0
      %p348 = por %p346, %p347
      %p349 = scmp.ne.s32.totalorder %s337, %s338
      %p350 = scmp.eq.s32.totalorder %s34, 1
      %p351 = por %p349, %p350
      %p353 = scmp.ne.s32.totalorder %s338, %s352
      %p354 = scmp.eq.s32.totalorder %s34, 0
      %p355 = por %p353, %p354
      %s357 = sadd.s32 %s356, 1
      %p360 = scmp.eq.s32.totalorder %s28, 1
      %p361 = scmp.ne.s32.totalorder %s356, %s358
      %p362 = scmp.eq.s32.totalorder %s28, 0
      %p363 = por %p361, %p362
      %p364 = scmp.ne.s32.totalorder %s356, %s358
      %p365 = scmp.eq.s32.totalorder %s33, 1
      %p366 = por %p364, %p365
      %p367 = scmp.ne.s32.totalorder %s358, %s359
      %p368 = scmp.eq.s32.totalorder %s33, 0
      %p369 = por %p367, %p368
      %p370 = scmp.ne.s32.totalorder %s358, %s359
      %p371 = scmp.eq.s32.totalorder %s34, 1
      %p372 = por %p370, %p371
      %p374 = scmp.ne.s32.totalorder %s359, %s373
      %p375 = scmp.eq.s32.totalorder %s34, 0
      %p376 = por %p374, %p375
      %s378 = sadd.s32 %s377, 1
      %p381 = scmp.eq.s32.totalorder %s28, 1
      %p382 = scmp.ne.s32.totalorder %s377, %s379
      %p383 = scmp.eq.s32.totalorder %s28, 0
      %p384 = por %p382, %p383
      %p385 = scmp.ne.s32.totalorder %s377, %s379
      %p386 = scmp.eq.s32.totalorder %s33, 1
      %p387 = por %p385, %p386
      %p388 = scmp.ne.s32.totalorder %s379, %s380
      %p389 = scmp.eq.s32.totalorder %s33, 0
      %p390 = por %p388, %p389
      %p391 = scmp.ne.s32.totalorder %s379, %s380
      %p392 = scmp.eq.s32.totalorder %s34, 1
      %p393 = por %p391, %p392
      %p395 = scmp.ne.s32.totalorder %s380, %s394
      %p396 = scmp.eq.s32.totalorder %s34, 0
      %p397 = por %p395, %p396
      %s399 = sadd.s32 %s398, 1
      %p402 = scmp.eq.s32.totalorder %s28, 1
      %p403 = scmp.ne.s32.totalorder %s398, %s400
      %p404 = scmp.eq.s32.totalorder %s28, 0
      %p405 = por %p403, %p404
      %p406 = scmp.ne.s32.totalorder %s398, %s400
      %p407 = scmp.eq.s32.totalorder %s33, 1
      %p408 = por %p406, %p407
      %p409 = scmp.ne.s32.totalorder %s400, %s401
      %p410 = scmp.eq.s32.totalorder %s33, 0
      %p411 = por %p409, %p410
      %p412 = scmp.ne.s32.totalorder %s400, %s401
      %p413 = scmp.eq.s32.totalorder %s34, 1
      %p414 = por %p412, %p413
      %p416 = scmp.ne.s32.totalorder %s401, %s415
      %p417 = scmp.eq.s32.totalorder %s34, 0
      %p418 = por %p416, %p417
      %s419 = ssub.s32 %s28, %s35
      %p420 = scmp.eq.s32.totalorder %s419, 0
      %s422 = sadd.s32 %s421, 1
      %s423 = scalar_select %p420, %s421, %s422
      %p426 = pneg %p420
      %p427 = scmp.eq.s32.totalorder %s28, 1
      %p428 = por %p426, %p427
      %p429 = scmp.ne.s32.totalorder %s421, %s424
      %p430 = scmp.eq.s32.totalorder %s28, 0
      %p431 = por %p429, %p430
      %p432 = scmp.ne.s32.totalorder %s421, %s424
      %p433 = scmp.eq.s32.totalorder %s33, 1
      %p434 = por %p432, %p433
      %p435 = scmp.ne.s32.totalorder %s424, %s425
      %p436 = scmp.eq.s32.totalorder %s33, 0
      %p437 = por %p435, %p436
      %p438 = scmp.ne.s32.totalorder %s424, %s425
      %p439 = scmp.eq.s32.totalorder %s34, 1
      %p440 = por %p438, %p439
      %p442 = scmp.ne.s32.totalorder %s425, %s441
      %p443 = scmp.eq.s32.totalorder %s34, 0
      %p444 = por %p442, %p443
      %p445 = scmp.le.s32.totalorder 1, %s28
      %p446 = scmp.lt.s32.totalorder %s28, 3
      %p447 = pnand %p445, %p446
      %p448 = pneg %p447
      // Predicated region
      $region9: #{autoencoder_forward.2} parent=5 // pred_check
        _
      $region10: #{autoencoder_forward.2} parent=5 // pred_check_branch
        %450 = sbr.rel (%p447) target = $region12
      $region11: #{autoencoder_forward.2} parent=5 // pred_region
        %s451 = ssub.s32 %s28, 1
        // Predicated region
        $region13: #{autoencoder_forward.2} parent=11 // pred_check
          %p452 = pneg %p75
        $region14: #{autoencoder_forward.2} parent=11 // pred_check_branch
          %454 = sbr.rel (%p452) target = $region16
        $region15: #{autoencoder_forward.2} parent=11 // pred_region
          _
        $region16: #{autoencoder_forward.2} parent=11 // pred_fallthru
          _
        // Predicated region
        $region17: #{autoencoder_forward.2} parent=11 // pred_check
          %p455 = pneg %p96
        $region18: #{autoencoder_forward.2} parent=11 // pred_check_branch
          %457 = sbr.rel (%p455) target = $region20
        $region19: #{autoencoder_forward.2} parent=11 // pred_region
          %459 = vsyncadd [#allocation4], 0
          %s460 = sshll.u32 %s2, 4
          %s461 = int_to_ptr.hbm [resolvable:$true] %s460
          %s462 = sshll.u32 [#allocation3], 4
          %s463 = int_to_ptr.vmem [resolvable:$true] %s462
          %468 = dma.hbm_to_vmem [thread:$0]  %s461, 4096, %s463, [#allocation4], 128, 128, 8
        $region20: #{autoencoder_forward.2} parent=11 // pred_fallthru
          _
        // Predicated region
        $region21: #{autoencoder_forward.2} parent=11 // pred_check
          %p469 = pneg %p117
        $region22: #{autoencoder_forward.2} parent=11 // pred_check_branch
          %471 = sbr.rel (%p469) target = $region24
        $region23: #{autoencoder_forward.2} parent=11 // pred_region
          _
        $region24: #{autoencoder_forward.2} parent=11 // pred_fallthru
          _
        // Predicated region
        $region25: #{autoencoder_forward.2} parent=11 // pred_check
          %p472 = pneg %p138
        $region26: #{autoencoder_forward.2} parent=11 // pred_check_branch
          %474 = sbr.rel (%p472) target = $region28
        $region27: #{autoencoder_forward.2} parent=11 // pred_region
          _
        $region28: #{autoencoder_forward.2} parent=11 // pred_fallthru
          _
        // Predicated region
        $region29: #{autoencoder_forward.2} parent=11 // pred_check
          %p475 = pneg %p159
        $region30: #{autoencoder_forward.2} parent=11 // pred_check_branch
          %477 = sbr.rel (%p475) target = $region32
        $region31: #{autoencoder_forward.2} parent=11 // pred_region
          _
        $region32: #{autoencoder_forward.2} parent=11 // pred_fallthru
          _
        // Predicated region
        $region33: #{autoencoder_forward.2} parent=11 // pred_check
          %p478 = pneg %p180
        $region34: #{autoencoder_forward.2} parent=11 // pred_check_branch
          %480 = sbr.rel (%p478) target = $region36
        $region35: #{autoencoder_forward.2} parent=11 // pred_region
          _
        $region36: #{autoencoder_forward.2} parent=11 // pred_fallthru
          _
        // Predicated region
        $region37: #{autoencoder_forward.2} parent=11 // pred_check
          %p481 = pneg %p201
        $region38: #{autoencoder_forward.2} parent=11 // pred_check_branch
          %483 = sbr.rel (%p481) target = $region40
        $region39: #{autoencoder_forward.2} parent=11 // pred_region
          _
        $region40: #{autoencoder_forward.2} parent=11 // pred_fallthru
          _
        // Predicated region
        $region41: #{autoencoder_forward.2} parent=11 // pred_check
          %p484 = pneg %p222
        $region42: #{autoencoder_forward.2} parent=11 // pred_check_branch
          %486 = sbr.rel (%p484) target = $region44
        $region43: #{autoencoder_forward.2} parent=11 // pred_region
          %488 = vsyncadd [#allocation6], 0
          %s489 = sshll.u32 %s8, 4
          %s490 = int_to_ptr.hbm [resolvable:$true] %s489
          %s491 = sshll.u32 [#allocation5], 4
          %s492 = int_to_ptr.vmem [resolvable:$true] %s491
          %497 = dma.hbm_to_vmem [thread:$0]  %s490, 4096, %s492, [#allocation6], 128, 128, 8
        $region44: #{autoencoder_forward.2} parent=11 // pred_fallthru
          _
        // Predicated region
        $region45: #{autoencoder_forward.2} parent=11 // pred_check
          %p498 = pneg %p243
        $region46: #{autoencoder_forward.2} parent=11 // pred_check_branch
          %500 = sbr.rel (%p498) target = $region48
        $region47: #{autoencoder_forward.2} parent=11 // pred_region
          %502 = vsyncadd [#allocation6], 0
          %s504 = sshll.u32 %s9, 4
          %s505 = int_to_ptr.hbm [resolvable:$true] %s504
          %s506 = sshll.u32 [#allocation7], 4
          %s507 = int_to_ptr.vmem [resolvable:$true] %s506
          %509 = dma.hbm_to_vmem [thread:$0]  %s505, 32, %s507, [#allocation6]
        $region48: #{autoencoder_forward.2} parent=11 // pred_fallthru
          _
        // Predicated region
        $region49: #{autoencoder_forward.2} parent=11 // pred_check
          %p510 = pneg %p264
        $region50: #{autoencoder_forward.2} parent=11 // pred_check_branch
          %512 = sbr.rel (%p510) target = $region52
        $region51: #{autoencoder_forward.2} parent=11 // pred_region
          %514 = vsyncadd [#allocation9], 0
          %s516 = sshll.u32 %s10, 4
          %s517 = int_to_ptr.hbm [resolvable:$true] %s516
          %s518 = sshll.u32 [#allocation8], 4
          %s519 = int_to_ptr.vmem [resolvable:$true] %s518
          %521 = dma.hbm_to_vmem [thread:$0]  %s517, 32, %s519, [#allocation9]
        $region52: #{autoencoder_forward.2} parent=11 // pred_fallthru
          _
        // Predicated region
        $region53: #{autoencoder_forward.2} parent=11 // pred_check
          %p522 = pneg %p285
        $region54: #{autoencoder_forward.2} parent=11 // pred_check_branch
          %524 = sbr.rel (%p522) target = $region56
        $region55: #{autoencoder_forward.2} parent=11 // pred_region
          %526 = vsyncadd [#allocation9], 0
          %s528 = sshll.u32 %s11, 4
          %s529 = int_to_ptr.hbm [resolvable:$true] %s528
          %s530 = sshll.u32 [#allocation10], 4
          %s531 = int_to_ptr.vmem [resolvable:$true] %s530
          %533 = dma.hbm_to_vmem [thread:$0]  %s529, 32, %s531, [#allocation9]
        $region56: #{autoencoder_forward.2} parent=11 // pred_fallthru
          _
        // Predicated region
        $region57: #{autoencoder_forward.2} parent=11 // pred_check
          %p534 = pneg %p306
        $region58: #{autoencoder_forward.2} parent=11 // pred_check_branch
          %536 = sbr.rel (%p534) target = $region60
        $region59: #{autoencoder_forward.2} parent=11 // pred_region
          _
        $region60: #{autoencoder_forward.2} parent=11 // pred_fallthru
          _
        // Predicated region
        $region61: #{autoencoder_forward.2} parent=11 // pred_check
          %p537 = pneg %p327
        $region62: #{autoencoder_forward.2} parent=11 // pred_check_branch
          %539 = sbr.rel (%p537) target = $region64
        $region63: #{autoencoder_forward.2} parent=11 // pred_region
          _
        $region64: #{autoencoder_forward.2} parent=11 // pred_fallthru
          _
        // Predicated region
        $region65: #{autoencoder_forward.2} parent=11 // pred_check
          %p540 = pneg %p348
        $region66: #{autoencoder_forward.2} parent=11 // pred_check_branch
          %542 = sbr.rel (%p540) target = $region68
        $region67: #{autoencoder_forward.2} parent=11 // pred_region
          _
        $region68: #{autoencoder_forward.2} parent=11 // pred_fallthru
          _
        // Predicated region
        $region69: #{autoencoder_forward.2} parent=11 // pred_check
          %p543 = pneg %p369
        $region70: #{autoencoder_forward.2} parent=11 // pred_check_branch
          %545 = sbr.rel (%p543) target = $region72
        $region71: #{autoencoder_forward.2} parent=11 // pred_region
          %547 = vsyncadd [#allocation12], 0
          %s549 = sshll.u32 %s15, 4
          %s550 = int_to_ptr.hbm [resolvable:$true] %s549
          %s551 = sshll.u32 [#allocation11], 4
          %s552 = int_to_ptr.vmem [resolvable:$true] %s551
          %554 = dma.hbm_to_vmem [thread:$0]  %s550, 32, %s552, [#allocation12]
        $region72: #{autoencoder_forward.2} parent=11 // pred_fallthru
          _
        // Predicated region
        $region73: #{autoencoder_forward.2} parent=11 // pred_check
          %p555 = pneg %p390
        $region74: #{autoencoder_forward.2} parent=11 // pred_check_branch
          %557 = sbr.rel (%p555) target = $region76
        $region75: #{autoencoder_forward.2} parent=11 // pred_region
          _
        $region76: #{autoencoder_forward.2} parent=11 // pred_fallthru
          _
        // Predicated region
        $region77: #{autoencoder_forward.2} parent=11 // pred_check
          %p558 = pneg %p411
        $region78: #{autoencoder_forward.2} parent=11 // pred_check_branch
          %560 = sbr.rel (%p558) target = $region80
        $region79: #{autoencoder_forward.2} parent=11 // pred_region
          _
        $region80: #{autoencoder_forward.2} parent=11 // pred_fallthru
          _
      $region12: #{autoencoder_forward.2} parent=5 // pred_fallthru
        _
      %p561 = scmp.lt.s32.totalorder %s28, 2
      // Predicated region
      $region81: #{autoencoder_forward.2} parent=5 // pred_check
        %p562 = pneg %p561
      $region82: #{autoencoder_forward.2} parent=5 // pred_check_branch
        %564 = sbr.rel (%p562) target = $region84
      $region83: #{autoencoder_forward.2} parent=5 // pred_region
        // Predicated region
        $region85: #{autoencoder_forward.2} parent=83 // pred_check
          %p565 = pneg %p48
        $region86: #{autoencoder_forward.2} parent=83 // pred_check_branch
          %567 = sbr.rel (%p565) target = $region88
        $region87: #{autoencoder_forward.2} parent=83 // pred_region
          %p568 = scmp.lt.s32.totalorder %s28, 1
          %s569 = scalar_select %p568, %s28, 1
          %s570 = smul.addr %s569, 4
          %s571 = smul.addr %s570, 4
          %s572 = scalar_lea.vmem %s0, %s571
        $region88: #{autoencoder_forward.2} parent=83 // pred_fallthru
          _
      $region84: #{autoencoder_forward.2} parent=5 // pred_fallthru
        _
      %p573 = scmp.le.s32.totalorder 1, %s28
      %p574 = scmp.lt.s32.totalorder %s28, 3
      %p575 = pnand %p573, %p574
      %p576 = pneg %p575
      // Predicated region
      $region89: #{autoencoder_forward.2} parent=5 // pred_check
        _
      $region90: #{autoencoder_forward.2} parent=5 // pred_check_branch
        %578 = sbr.rel (%p575) target = $region92
      $region91: #{autoencoder_forward.2} parent=5 // pred_region
        %s579 = ssub.s32 %s28, 1
        // Predicated region
        $region93: #{autoencoder_forward.2} parent=91 // pred_check
          %p580 = pneg %p96
        $region94: #{autoencoder_forward.2} parent=91 // pred_check_branch
          %582 = sbr.rel (%p580) target = $region96
        $region95: #{autoencoder_forward.2} parent=91 // pred_region
          %584 = dma.done [#allocation4], 4096
        $region96: #{autoencoder_forward.2} parent=91 // pred_fallthru
          _
        // Predicated region
        $region97: #{autoencoder_forward.2} parent=91 // pred_check
          %p585 = pneg %p222
        $region98: #{autoencoder_forward.2} parent=91 // pred_check_branch
          %587 = sbr.rel (%p585) target = $region100
        $region99: #{autoencoder_forward.2} parent=91 // pred_region
          %589 = dma.done [#allocation6], 4096
        $region100: #{autoencoder_forward.2} parent=91 // pred_fallthru
          _
        // Predicated region
        $region101: #{autoencoder_forward.2} parent=91 // pred_check
          %p590 = pneg %p243
        $region102: #{autoencoder_forward.2} parent=91 // pred_check_branch
          %592 = sbr.rel (%p590) target = $region104
        $region103: #{autoencoder_forward.2} parent=91 // pred_region
          %594 = dma.done [#allocation6], 32
        $region104: #{autoencoder_forward.2} parent=91 // pred_fallthru
          _
        // Predicated region
        $region105: #{autoencoder_forward.2} parent=91 // pred_check
          %p595 = pneg %p264
        $region106: #{autoencoder_forward.2} parent=91 // pred_check_branch
          %597 = sbr.rel (%p595) target = $region108
        $region107: #{autoencoder_forward.2} parent=91 // pred_region
          %599 = dma.done [#allocation9], 32
        $region108: #{autoencoder_forward.2} parent=91 // pred_fallthru
          _
        // Predicated region
        $region109: #{autoencoder_forward.2} parent=91 // pred_check
          %p600 = pneg %p285
        $region110: #{autoencoder_forward.2} parent=91 // pred_check_branch
          %602 = sbr.rel (%p600) target = $region112
        $region111: #{autoencoder_forward.2} parent=91 // pred_region
          %604 = dma.done [#allocation9], 32
        $region112: #{autoencoder_forward.2} parent=91 // pred_fallthru
          _
        // Predicated region
        $region113: #{autoencoder_forward.2} parent=91 // pred_check
          %p605 = pneg %p369
        $region114: #{autoencoder_forward.2} parent=91 // pred_check_branch
          %607 = sbr.rel (%p605) target = $region116
        $region115: #{autoencoder_forward.2} parent=91 // pred_region
          %609 = dma.done [#allocation12], 32
        $region116: #{autoencoder_forward.2} parent=91 // pred_fallthru
          _
        %p610 = scmp.lt.s32.totalorder %s33, 1
        %s611 = scalar_select %p610, %s33, 1
        %s612 = smul.addr %s611, 4
        %s613 = smul.addr %s612, 4
        %s614 = scalar_lea.vmem %s0, %s613
        %p615 = pneg %p54
        %p616 = pneg %p51
        %p617 = pneg %p75
        %p618 = pneg %p72
        %p619 = pneg %p96
        %p620 = pneg %p93
        %p621 = pneg %p117
        %p622 = pneg %p114
        %p623 = pneg %p138
        %p624 = pneg %p135
        %p625 = pneg %p159
        %p626 = pneg %p156
        %p627 = pneg %p180
        %p628 = pneg %p177
        %p629 = pneg %p201
        %p630 = pneg %p198
        %p631 = pneg %p222
        %p632 = pneg %p219
        %p633 = pneg %p243
        %p634 = pneg %p240
        %p635 = pneg %p264
        %p636 = pneg %p261
        %p637 = pneg %p285
        %p638 = pneg %p282
        %p639 = pneg %p306
        %p640 = pneg %p303
        %p641 = pneg %p327
        %p642 = pneg %p324
        %p643 = pneg %p348
        %p644 = pneg %p345
        %p645 = pneg %p369
        %p646 = pneg %p366
        %p647 = pneg %p390
        %p648 = pneg %p387
        %p649 = pneg %p411
        %p650 = pneg %p408
        %p651 = pneg %p437
        %p652 = pneg %p434
        %p653 = scmp.lt.s32.totalorder %s33, 1
        %s654 = scalar_select %p653, %s33, 1
        %s655 = smul.addr %s654, 4
        %s656 = smul.addr %s655, 8
        %s657 = scalar_lea.vmem %s18, %s656
        %p658 = scmp.lt.s32.totalorder %s33, 1
        %s659 = scalar_select %p658, %s33, 1
        %s660 = smul.addr %s659, 4
        %s661 = smul.addr %s660, 4
        %s662 = scalar_lea.vmem %s0, %s661
        %p663 = scmp.lt.s32.totalorder %s33, 1
        %s664 = scalar_select %p663, %s33, 1
        %s665 = smul.addr %s664, 4
        %s666 = smul.addr %s665, 8
        %s667 = scalar_lea.vmem %s18, %s666
        %v669 = vld [vmem:[%s662] sm:$0xff]
        %v670 = vld [vmem:[%s662 + $0x8] sm:$0xff]
        %v671 = vld [vmem:[#allocation3] sm:$0xff]
        %v672 = vld [vmem:[#allocation3 + $0x8] sm:$0xff]
        %v673 = vld [vmem:[#allocation3 + $0x10] sm:$0xff]
        %v674 = vld [vmem:[#allocation3 + $0x18] sm:$0xff]
        %v675 = vld [vmem:[#allocation3 + $0x20] sm:$0xff]
        %v676 = vld [vmem:[#allocation3 + $0x28] sm:$0xff]
        %v677 = vld [vmem:[#allocation3 + $0x30] sm:$0xff]
        %v678 = vld [vmem:[#allocation3 + $0x38] sm:$0xff]
        %v679 = vld [vmem:[#allocation3 + $0x40] sm:$0xff]
        %v680 = vld [vmem:[#allocation3 + $0x48] sm:$0xff]
        %v681 = vld [vmem:[#allocation3 + $0x50] sm:$0xff]
        %v682 = vld [vmem:[#allocation3 + $0x58] sm:$0xff]
        %v683 = vld [vmem:[#allocation3 + $0x60] sm:$0xff]
        %v684 = vld [vmem:[#allocation3 + $0x68] sm:$0xff]
        %v685 = vld [vmem:[#allocation3 + $0x70] sm:$0xff]
        %v686 = vld [vmem:[#allocation3 + $0x78] sm:$0xff]
        %v687 = vld [vmem:[#allocation3 + $0x80] sm:$0xff]
        %v688 = vld [vmem:[#allocation3 + $0x88] sm:$0xff]
        %v689 = vld [vmem:[#allocation3 + $0x90] sm:$0xff]
        %v690 = vld [vmem:[#allocation3 + $0x98] sm:$0xff]
        %v691 = vld [vmem:[#allocation3 + $0xa0] sm:$0xff]
        %v692 = vld [vmem:[#allocation3 + $0xa8] sm:$0xff]
        %v693 = vld [vmem:[#allocation3 + $0xb0] sm:$0xff]
        %v694 = vld [vmem:[#allocation3 + $0xb8] sm:$0xff]
        %v695 = vld [vmem:[#allocation3 + $0xc0] sm:$0xff]
        %v696 = vld [vmem:[#allocation3 + $0xc8] sm:$0xff]
        %v697 = vld [vmem:[#allocation3 + $0xd0] sm:$0xff]
        %v698 = vld [vmem:[#allocation3 + $0xd8] sm:$0xff]
        %v699 = vld [vmem:[#allocation3 + $0xe0] sm:$0xff]
        %v700 = vld [vmem:[#allocation3 + $0xe8] sm:$0xff]
        %v701 = vld [vmem:[#allocation3 + $0xf0] sm:$0xff]
        %v702 = vld [vmem:[#allocation3 + $0xf8] sm:$0xff]
        %v703 = vld [vmem:[%s3] sm:$0x3]
        %v705 = vperm.slane %v703, 0
        %v706 = vperm.slane %v703, 1
        %v711 = vunpack.c.l.b16 %v669
        %v712 = vunpack.c.h.b16 %v669
        %v713 = vunpack.c.l.b16 %v670
        %v714 = vunpack.c.h.b16 %v670
        %v715 = vpack.c.b16 %v713, %v711
        %v716 = vpack.c.b16 %v714, %v712
        %v751 = vunpack.c.l.b16 %v671
        %v752 = vunpack.c.h.b16 %v671
        %v753 = vunpack.c.l.b16 %v672
        %v754 = vunpack.c.h.b16 %v672
        %v755 = vunpack.c.l.b16 %v673
        %v756 = vunpack.c.h.b16 %v673
        %v757 = vunpack.c.l.b16 %v674
        %v758 = vunpack.c.h.b16 %v674
        %v759 = vunpack.c.l.b16 %v675
        %v760 = vunpack.c.h.b16 %v675
        %v761 = vunpack.c.l.b16 %v676
        %v762 = vunpack.c.h.b16 %v676
        %v763 = vunpack.c.l.b16 %v677
        %v764 = vunpack.c.h.b16 %v677
        %v765 = vunpack.c.l.b16 %v678
        %v766 = vunpack.c.h.b16 %v678
        %v767 = vunpack.c.l.b16 %v679
        %v768 = vunpack.c.h.b16 %v679
        %v769 = vunpack.c.l.b16 %v680
        %v770 = vunpack.c.h.b16 %v680
        %v771 = vunpack.c.l.b16 %v681
        %v772 = vunpack.c.h.b16 %v681
        %v773 = vunpack.c.l.b16 %v682
        %v774 = vunpack.c.h.b16 %v682
        %v775 = vunpack.c.l.b16 %v683
        %v776 = vunpack.c.h.b16 %v683
        %v777 = vunpack.c.l.b16 %v684
        %v778 = vunpack.c.h.b16 %v684
        %v779 = vunpack.c.l.b16 %v685
        %v780 = vunpack.c.h.b16 %v685
        %v781 = vunpack.c.l.b16 %v686
        %v782 = vunpack.c.h.b16 %v686
        %v783 = vunpack.c.l.b16 %v687
        %v784 = vunpack.c.h.b16 %v687
        %v785 = vunpack.c.l.b16 %v688
        %v786 = vunpack.c.h.b16 %v688
        %v787 = vunpack.c.l.b16 %v689
        %v788 = vunpack.c.h.b16 %v689
        %v789 = vunpack.c.l.b16 %v690
        %v790 = vunpack.c.h.b16 %v690
        %v791 = vunpack.c.l.b16 %v691
        %v792 = vunpack.c.h.b16 %v691
        %v793 = vunpack.c.l.b16 %v692
        %v794 = vunpack.c.h.b16 %v692
        %v795 = vunpack.c.l.b16 %v693
        %v796 = vunpack.c.h.b16 %v693
        %v797 = vunpack.c.l.b16 %v694
        %v798 = vunpack.c.h.b16 %v694
        %v799 = vunpack.c.l.b16 %v695
        %v800 = vunpack.c.h.b16 %v695
        %v801 = vunpack.c.l.b16 %v696
        %v802 = vunpack.c.h.b16 %v696
        %v803 = vunpack.c.l.b16 %v697
        %v804 = vunpack.c.h.b16 %v697
        %v805 = vunpack.c.l.b16 %v698
        %v806 = vunpack.c.h.b16 %v698
        %v807 = vunpack.c.l.b16 %v699
        %v808 = vunpack.c.h.b16 %v699
        %v809 = vunpack.c.l.b16 %v700
        %v810 = vunpack.c.h.b16 %v700
        %v811 = vunpack.c.l.b16 %v701
        %v812 = vunpack.c.h.b16 %v701
        %v813 = vunpack.c.l.b16 %v702
        %v814 = vunpack.c.h.b16 %v702
        %v815 = vpack.c.b16 %v753, %v751
        %v816 = vpack.c.b16 %v754, %v752
        %v817 = vpack.c.b16 %v757, %v755
        %v818 = vpack.c.b16 %v758, %v756
        %v819 = vpack.c.b16 %v761, %v759
        %v820 = vpack.c.b16 %v762, %v760
        %v821 = vpack.c.b16 %v765, %v763
        %v822 = vpack.c.b16 %v766, %v764
        %v823 = vpack.c.b16 %v769, %v767
        %v824 = vpack.c.b16 %v770, %v768
        %v825 = vpack.c.b16 %v773, %v771
        %v826 = vpack.c.b16 %v774, %v772
        %v827 = vpack.c.b16 %v777, %v775
        %v828 = vpack.c.b16 %v778, %v776
        %v829 = vpack.c.b16 %v781, %v779
        %v830 = vpack.c.b16 %v782, %v780
        %v831 = vpack.c.b16 %v785, %v783
        %v832 = vpack.c.b16 %v786, %v784
        %v833 = vpack.c.b16 %v789, %v787
        %v834 = vpack.c.b16 %v790, %v788
        %v835 = vpack.c.b16 %v793, %v791
        %v836 = vpack.c.b16 %v794, %v792
        %v837 = vpack.c.b16 %v797, %v795
        %v838 = vpack.c.b16 %v798, %v796
        %v839 = vpack.c.b16 %v801, %v799
        %v840 = vpack.c.b16 %v802, %v800
        %v841 = vpack.c.b16 %v805, %v803
        %v842 = vpack.c.b16 %v806, %v804
        %v843 = vpack.c.b16 %v809, %v807
        %v844 = vpack.c.b16 %v810, %v808
        %v845 = vpack.c.b16 %v813, %v811
        %v846 = vpack.c.b16 %v814, %v812
        %879 = vmatpush.bf16.msra.mxu0 %v829
        %880 = vmatpush.bf16.msra.mxu0 %v827
        %881 = vmatpush.bf16.msra.mxu0 %v825
        %882 = vmatpush.bf16.msra.mxu0 %v823
        %883 = vmatpush.bf16.msra.mxu0 %v821
        %884 = vmatpush.bf16.msra.mxu0 %v819
        %885 = vmatpush.bf16.msra.mxu0 %v817
        %886 = vmatpush.bf16.msra.mxu0 %v815
        %887 = vmatmul.bf16.gmra.mxu0 %v715
        %v888 = vpop.f32.mrf.mxu0
        %v889 = vadd.f32 %v705, %v888
        %v890 = vpop.f32.mrf.mxu0
        %v891 = vadd.f32 %v705, %v890
        %892 = vdwg.mxu0
        %893 = vmatpush.bf16.msra.mxu0 %v845
        %894 = vmatpush.bf16.msra.mxu0 %v843
        %895 = vmatpush.bf16.msra.mxu0 %v841
        %896 = vmatpush.bf16.msra.mxu0 %v839
        %897 = vmatpush.bf16.msra.mxu0 %v837
        %898 = vmatpush.bf16.msra.mxu0 %v835
        %899 = vmatpush.bf16.msra.mxu0 %v833
        %900 = vmatpush.bf16.msra.mxu0 %v831
        %901 = vmatmul.bf16.gmra.mxu0 %v716
        %v902 = vpop.f32.mrf.mxu0
        %v903 = vadd.f32 %v889, %v902
        %v904 = vpop.f32.mrf.mxu0
        %v905 = vadd.f32 %v891, %v904
        %906 = vdwg.mxu0
        %907 = vmatpush.bf16.msra.mxu0 %v830
        %908 = vmatpush.bf16.msra.mxu0 %v828
        %909 = vmatpush.bf16.msra.mxu0 %v826
        %910 = vmatpush.bf16.msra.mxu0 %v824
        %911 = vmatpush.bf16.msra.mxu0 %v822
        %912 = vmatpush.bf16.msra.mxu0 %v820
        %913 = vmatpush.bf16.msra.mxu0 %v818
        %914 = vmatpush.bf16.msra.mxu0 %v816
        %915 = vmatmul.bf16.gmra.mxu0 %v715
        %v916 = vpop.f32.mrf.mxu0
        %v917 = vadd.f32 %v706, %v916
        %v918 = vpop.f32.mrf.mxu0
        %v919 = vadd.f32 %v706, %v918
        %920 = vdwg.mxu0
        %921 = vmatpush.bf16.msra.mxu0 %v846
        %922 = vmatpush.bf16.msra.mxu0 %v844
        %923 = vmatpush.bf16.msra.mxu0 %v842
        %924 = vmatpush.bf16.msra.mxu0 %v840
        %925 = vmatpush.bf16.msra.mxu0 %v838
        %926 = vmatpush.bf16.msra.mxu0 %v836
        %927 = vmatpush.bf16.msra.mxu0 %v834
        %928 = vmatpush.bf16.msra.mxu0 %v832
        %929 = vmatmul.bf16.gmra.mxu0 %v716
        %v930 = vpop.f32.mrf.mxu0
        %v931 = vadd.f32 %v917, %v930
        %v932 = vpop.f32.mrf.mxu0
        %v933 = vadd.f32 %v919, %v932
        %934 = vdwg.mxu0
        %v935 = vld [vmem:[%s1] sm:$0xff]
        %v936 = vld [vmem:[%s1 + $0x8] sm:$0xff]
        %v937 = vld [vmem:[%s1 + $0x10] sm:$0xff]
        %v938 = vld [vmem:[%s1 + $0x18] sm:$0xff]
        %v939 = vadd.f32 %v903, %v935
        %v940 = vadd.f32 %v931, %v936
        %v941 = vadd.f32 %v905, %v937
        %v942 = vadd.f32 %v933, %v938
        %v943 = vld [vmem:[%s4] sm:$0x3]
        %v944 = vld [vmem:[%s5] sm:$0x3]
        %v945 = vadd.f32 %v939, %v940
        %946 = vadd.xlane.f32.xlu0 %v945
        %v947 = vpop.xlane.xlu0 %946
        %v948 = vadd.f32 %v941, %v942
        %949 = vadd.xlane.f32.xlu0 %v948
        %v950 = vpop.xlane.xlu0 %949
        %v951 = vrcp.pop 256.0
        %v952 = vmul.f32 256.0, %v951
        %v953 = vsub.f32 1.0, %v952
        %v954 = vmul.f32 %v951, %v953
        %v955 = vadd.f32 %v951, %v954
        %vm956 = vweird.f32 %v951
        %v957 = vsel %vm956, %v951, %v955
        %v958 = vmul.f32 %v947, %v957
        %v959 = vmul.f32 %v950, %v957
        %v960 = vsub.f32 %v939, %v958
        %v961 = vsub.f32 %v940, %v958
        %v962 = vsub.f32 %v941, %v959
        %v963 = vsub.f32 %v942, %v959
        %v964 = vmul.f32 %v960, %v960
        %v965 = vmul.f32 %v961, %v961
        %v966 = vmul.f32 %v962, %v962
        %v967 = vmul.f32 %v963, %v963
        %v968 = vadd.f32 %v964, %v965
        %969 = vadd.xlane.f32.xlu0 %v968
        %v970 = vpop.xlane.xlu0 %969
        %v971 = vadd.f32 %v966, %v967
        %972 = vadd.xlane.f32.xlu0 %v971
        %v973 = vpop.xlane.xlu0 %972
        %v974 = vmul.f32 %v970, %v957
        %v975 = vmul.f32 %v973, %v957
        %v976 = vadd.f32 %v974, 1e-06
        %v977 = vadd.f32 %v975, 1e-06
        %v978 = vrsqrt.pop %v976
        %v979 = vmul.f32 %v978, %v976
        %v980 = vmul.f32 %v979, %v978
        %v981 = vmul.f32 0.5, %v980
        %v982 = vsub.f32 1.5, %v981
        %v983 = vmul.f32 %v978, %v982
        %vm984 = vweird.f32 %v976
        %vm985 = vweird.f32 %v978
        %vm986 = vmor %vm984, %vm985
        %v987 = vsel %vm986, %v978, %v983
        %v988 = vrsqrt.pop %v977
        %v989 = vmul.f32 %v988, %v977
        %v990 = vmul.f32 %v989, %v988
        %v991 = vmul.f32 0.5, %v990
        %v992 = vsub.f32 1.5, %v991
        %v993 = vmul.f32 %v988, %v992
        %vm994 = vweird.f32 %v977
        %vm995 = vweird.f32 %v988
        %vm996 = vmor %vm994, %vm995
        %v997 = vsel %vm996, %v988, %v993
        %v998 = vmul.f32 %v960, %v987
        %v999 = vmul.f32 %v961, %v987
        %v1000 = vmul.f32 %v962, %v997
        %v1001 = vmul.f32 %v963, %v997
        %v1003 = vperm.slane %v943, 0
        %v1004 = vperm.slane %v943, 1
        %v1007 = vmul.f32 %v998, %v1003
        %v1008 = vmul.f32 %v999, %v1004
        %v1009 = vmul.f32 %v1000, %v1003
        %v1010 = vmul.f32 %v1001, %v1004
        %v1012 = vperm.slane %v944, 0
        %v1013 = vperm.slane %v944, 1
        %v1016 = vadd.f32 %v1007, %v1012
        %v1017 = vadd.f32 %v1008, %v1013
        %v1018 = vadd.f32 %v1009, %v1012
        %v1019 = vadd.f32 %v1010, %v1013
        %v1020 = vpack.c.bf16 %v1018, %v1016
        %v1021 = vpack.c.bf16 %v1019, %v1017
        %v1022 = vld [vmem:[%s6] sm:$0xff]
        %v1023 = vld [vmem:[%s6 + $0x8] sm:$0xff]
        %v1024 = vld [vmem:[%s6 + $0x10] sm:$0xff]
        %v1025 = vld [vmem:[%s6 + $0x18] sm:$0xff]
        %v1026 = vld [vmem:[%s6 + $0x20] sm:$0xff]
        %v1027 = vld [vmem:[%s6 + $0x28] sm:$0xff]
        %v1028 = vld [vmem:[%s6 + $0x30] sm:$0xff]
        %v1029 = vld [vmem:[%s6 + $0x38] sm:$0xff]
        %v1030 = vld [vmem:[%s6 + $0x40] sm:$0xff]
        %v1031 = vld [vmem:[%s6 + $0x48] sm:$0xff]
        %v1032 = vld [vmem:[%s6 + $0x50] sm:$0xff]
        %v1033 = vld [vmem:[%s6 + $0x58] sm:$0xff]
        %v1034 = vld [vmem:[%s6 + $0x60] sm:$0xff]
        %v1035 = vld [vmem:[%s6 + $0x68] sm:$0xff]
        %v1036 = vld [vmem:[%s6 + $0x70] sm:$0xff]
        %v1037 = vld [vmem:[%s6 + $0x78] sm:$0xff]
        %v1038 = vld [vmem:[%s6 + $0x80] sm:$0xff]
        %v1039 = vld [vmem:[%s6 + $0x88] sm:$0xff]
        %v1040 = vld [vmem:[%s6 + $0x90] sm:$0xff]
        %v1041 = vld [vmem:[%s6 + $0x98] sm:$0xff]
        %v1042 = vld [vmem:[%s6 + $0xa0] sm:$0xff]
        %v1043 = vld [vmem:[%s6 + $0xa8] sm:$0xff]
        %v1044 = vld [vmem:[%s6 + $0xb0] sm:$0xff]
        %v1045 = vld [vmem:[%s6 + $0xb8] sm:$0xff]
        %v1046 = vld [vmem:[%s6 + $0xc0] sm:$0xff]
        %v1047 = vld [vmem:[%s6 + $0xc8] sm:$0xff]
        %v1048 = vld [vmem:[%s6 + $0xd0] sm:$0xff]
        %v1049 = vld [vmem:[%s6 + $0xd8] sm:$0xff]
        %v1050 = vld [vmem:[%s6 + $0xe0] sm:$0xff]
        %v1051 = vld [vmem:[%s6 + $0xe8] sm:$0xff]
        %v1052 = vld [vmem:[%s6 + $0xf0] sm:$0xff]
        %v1053 = vld [vmem:[%s6 + $0xf8] sm:$0xff]
        %v1054 = vld [vmem:[%s6 + $0x100] sm:$0xff]
        %v1055 = vld [vmem:[%s6 + $0x108] sm:$0xff]
        %v1056 = vld [vmem:[%s6 + $0x110] sm:$0xff]
        %v1057 = vld [vmem:[%s6 + $0x118] sm:$0xff]
        %v1058 = vld [vmem:[%s6 + $0x120] sm:$0xff]
        %v1059 = vld [vmem:[%s6 + $0x128] sm:$0xff]
        %v1060 = vld [vmem:[%s6 + $0x130] sm:$0xff]
        %v1061 = vld [vmem:[%s6 + $0x138] sm:$0xff]
        %v1062 = vld [vmem:[%s6 + $0x140] sm:$0xff]
        %v1063 = vld [vmem:[%s6 + $0x148] sm:$0xff]
        %v1064 = vld [vmem:[%s6 + $0x150] sm:$0xff]
        %v1065 = vld [vmem:[%s6 + $0x158] sm:$0xff]
        %v1066 = vld [vmem:[%s6 + $0x160] sm:$0xff]
        %v1067 = vld [vmem:[%s6 + $0x168] sm:$0xff]
        %v1068 = vld [vmem:[%s6 + $0x170] sm:$0xff]
        %v1069 = vld [vmem:[%s6 + $0x178] sm:$0xff]
        %v1070 = vld [vmem:[%s6 + $0x180] sm:$0xff]
        %v1071 = vld [vmem:[%s6 + $0x188] sm:$0xff]
        %v1072 = vld [vmem:[%s6 + $0x190] sm:$0xff]
        %v1073 = vld [vmem:[%s6 + $0x198] sm:$0xff]
        %v1074 = vld [vmem:[%s6 + $0x1a0] sm:$0xff]
        %v1075 = vld [vmem:[%s6 + $0x1a8] sm:$0xff]
        %v1076 = vld [vmem:[%s6 + $0x1b0] sm:$0xff]
        %v1077 = vld [vmem:[%s6 + $0x1b8] sm:$0xff]
        %v1078 = vld [vmem:[%s6 + $0x1c0] sm:$0xff]
        %v1079 = vld [vmem:[%s6 + $0x1c8] sm:$0xff]
        %v1080 = vld [vmem:[%s6 + $0x1d0] sm:$0xff]
        %v1081 = vld [vmem:[%s6 + $0x1d8] sm:$0xff]
        %v1082 = vld [vmem:[%s6 + $0x1e0] sm:$0xff]
        %v1083 = vld [vmem:[%s6 + $0x1e8] sm:$0xff]
        %v1084 = vld [vmem:[%s6 + $0x1f0] sm:$0xff]
        %v1085 = vld [vmem:[%s6 + $0x1f8] sm:$0xff]
        %v1086 = vld [vmem:[%s6 + $0x200] sm:$0xff]
        %v1087 = vld [vmem:[%s6 + $0x208] sm:$0xff]
        %v1088 = vld [vmem:[%s6 + $0x210] sm:$0xff]
        %v1089 = vld [vmem:[%s6 + $0x218] sm:$0xff]
        %v1090 = vld [vmem:[%s6 + $0x220] sm:$0xff]
        %v1091 = vld [vmem:[%s6 + $0x228] sm:$0xff]
        %v1092 = vld [vmem:[%s6 + $0x230] sm:$0xff]
        %v1093 = vld [vmem:[%s6 + $0x238] sm:$0xff]
        %v1094 = vld [vmem:[%s6 + $0x240] sm:$0xff]
        %v1095 = vld [vmem:[%s6 + $0x248] sm:$0xff]
        %v1096 = vld [vmem:[%s6 + $0x250] sm:$0xff]
        %v1097 = vld [vmem:[%s6 + $0x258] sm:$0xff]
        %v1098 = vld [vmem:[%s6 + $0x260] sm:$0xff]
        %v1099 = vld [vmem:[%s6 + $0x268] sm:$0xff]
        %v1100 = vld [vmem:[%s6 + $0x270] sm:$0xff]
        %v1101 = vld [vmem:[%s6 + $0x278] sm:$0xff]
        %v1102 = vld [vmem:[%s6 + $0x280] sm:$0xff]
        %v1103 = vld [vmem:[%s6 + $0x288] sm:$0xff]
        %v1104 = vld [vmem:[%s6 + $0x290] sm:$0xff]
        %v1105 = vld [vmem:[%s6 + $0x298] sm:$0xff]
        %v1106 = vld [vmem:[%s6 + $0x2a0] sm:$0xff]
        %v1107 = vld [vmem:[%s6 + $0x2a8] sm:$0xff]
        %v1108 = vld [vmem:[%s6 + $0x2b0] sm:$0xff]
        %v1109 = vld [vmem:[%s6 + $0x2b8] sm:$0xff]
        %v1110 = vld [vmem:[%s6 + $0x2c0] sm:$0xff]
        %v1111 = vld [vmem:[%s6 + $0x2c8] sm:$0xff]
        %v1112 = vld [vmem:[%s6 + $0x2d0] sm:$0xff]
        %v1113 = vld [vmem:[%s6 + $0x2d8] sm:$0xff]
        %v1114 = vld [vmem:[%s6 + $0x2e0] sm:$0xff]
        %v1115 = vld [vmem:[%s6 + $0x2e8] sm:$0xff]
        %v1116 = vld [vmem:[%s6 + $0x2f0] sm:$0xff]
        %v1117 = vld [vmem:[%s6 + $0x2f8] sm:$0xff]
        %v1118 = vld [vmem:[%s7] sm:$0x3f]
        %v1120 = vperm.slane %v1118, 0
        %v1121 = vperm.slane %v1118, 1
        %v1122 = vperm.slane %v1118, 2
        %v1123 = vperm.slane %v1118, 3
        %v1124 = vperm.slane %v1118, 4
        %v1125 = vperm.slane %v1118, 5
        %v1228 = vunpack.c.l.b16 %v1022
        %v1229 = vunpack.c.h.b16 %v1022
        %v1230 = vunpack.c.l.b16 %v1023
        %v1231 = vunpack.c.h.b16 %v1023
        %v1232 = vunpack.c.l.b16 %v1024
        %v1233 = vunpack.c.h.b16 %v1024
        %v1234 = vunpack.c.l.b16 %v1025
        %v1235 = vunpack.c.h.b16 %v1025
        %v1236 = vunpack.c.l.b16 %v1026
        %v1237 = vunpack.c.h.b16 %v1026
        %v1238 = vunpack.c.l.b16 %v1027
        %v1239 = vunpack.c.h.b16 %v1027
        %v1240 = vunpack.c.l.b16 %v1028
        %v1241 = vunpack.c.h.b16 %v1028
        %v1242 = vunpack.c.l.b16 %v1029
        %v1243 = vunpack.c.h.b16 %v1029
        %v1244 = vunpack.c.l.b16 %v1030
        %v1245 = vunpack.c.h.b16 %v1030
        %v1246 = vunpack.c.l.b16 %v1031
        %v1247 = vunpack.c.h.b16 %v1031
        %v1248 = vunpack.c.l.b16 %v1032
        %v1249 = vunpack.c.h.b16 %v1032
        %v1250 = vunpack.c.l.b16 %v1033
        %v1251 = vunpack.c.h.b16 %v1033
        %v1252 = vunpack.c.l.b16 %v1034
        %v1253 = vunpack.c.h.b16 %v1034
        %v1254 = vunpack.c.l.b16 %v1035
        %v1255 = vunpack.c.h.b16 %v1035
        %v1256 = vunpack.c.l.b16 %v1036
        %v1257 = vunpack.c.h.b16 %v1036
        %v1258 = vunpack.c.l.b16 %v1037
        %v1259 = vunpack.c.h.b16 %v1037
        %v1260 = vunpack.c.l.b16 %v1038
        %v1261 = vunpack.c.h.b16 %v1038
        %v1262 = vunpack.c.l.b16 %v1039
        %v1263 = vunpack.c.h.b16 %v1039
        %v1264 = vunpack.c.l.b16 %v1040
        %v1265 = vunpack.c.h.b16 %v1040
        %v1266 = vunpack.c.l.b16 %v1041
        %v1267 = vunpack.c.h.b16 %v1041
        %v1268 = vunpack.c.l.b16 %v1042
        %v1269 = vunpack.c.h.b16 %v1042
        %v1270 = vunpack.c.l.b16 %v1043
        %v1271 = vunpack.c.h.b16 %v1043
        %v1272 = vunpack.c.l.b16 %v1044
        %v1273 = vunpack.c.h.b16 %v1044
        %v1274 = vunpack.c.l.b16 %v1045
        %v1275 = vunpack.c.h.b16 %v1045
        %v1276 = vunpack.c.l.b16 %v1046
        %v1277 = vunpack.c.h.b16 %v1046
        %v1278 = vunpack.c.l.b16 %v1047
        %v1279 = vunpack.c.h.b16 %v1047
        %v1280 = vunpack.c.l.b16 %v1048
        %v1281 = vunpack.c.h.b16 %v1048
        %v1282 = vunpack.c.l.b16 %v1049
        %v1283 = vunpack.c.h.b16 %v1049
        %v1284 = vunpack.c.l.b16 %v1050
        %v1285 = vunpack.c.h.b16 %v1050
        %v1286 = vunpack.c.l.b16 %v1051
        %v1287 = vunpack.c.h.b16 %v1051
        %v1288 = vunpack.c.l.b16 %v1052
        %v1289 = vunpack.c.h.b16 %v1052
        %v1290 = vunpack.c.l.b16 %v1053
        %v1291 = vunpack.c.h.b16 %v1053
        %v1292 = vunpack.c.l.b16 %v1054
        %v1293 = vunpack.c.h.b16 %v1054
        %v1294 = vunpack.c.l.b16 %v1055
        %v1295 = vunpack.c.h.b16 %v1055
        %v1296 = vunpack.c.l.b16 %v1056
        %v1297 = vunpack.c.h.b16 %v1056
        %v1298 = vunpack.c.l.b16 %v1057
        %v1299 = vunpack.c.h.b16 %v1057
        %v1300 = vunpack.c.l.b16 %v1058
        %v1301 = vunpack.c.h.b16 %v1058
        %v1302 = vunpack.c.l.b16 %v1059
        %v1303 = vunpack.c.h.b16 %v1059
        %v1304 = vunpack.c.l.b16 %v1060
        %v1305 = vunpack.c.h.b16 %v1060
        %v1306 = vunpack.c.l.b16 %v1061
        %v1307 = vunpack.c.h.b16 %v1061
        %v1308 = vunpack.c.l.b16 %v1062
        %v1309 = vunpack.c.h.b16 %v1062
        %v1310 = vunpack.c.l.b16 %v1063
        %v1311 = vunpack.c.h.b16 %v1063
        %v1312 = vunpack.c.l.b16 %v1064
        %v1313 = vunpack.c.h.b16 %v1064
        %v1314 = vunpack.c.l.b16 %v1065
        %v1315 = vunpack.c.h.b16 %v1065
        %v1316 = vunpack.c.l.b16 %v1066
        %v1317 = vunpack.c.h.b16 %v1066
        %v1318 = vunpack.c.l.b16 %v1067
        %v1319 = vunpack.c.h.b16 %v1067
        %v1320 = vunpack.c.l.b16 %v1068
        %v1321 = vunpack.c.h.b16 %v1068
        %v1322 = vunpack.c.l.b16 %v1069
        %v1323 = vunpack.c.h.b16 %v1069
        %v1324 = vunpack.c.l.b16 %v1070
        %v1325 = vunpack.c.h.b16 %v1070
        %v1326 = vunpack.c.l.b16 %v1071
        %v1327 = vunpack.c.h.b16 %v1071
        %v1328 = vunpack.c.l.b16 %v1072
        %v1329 = vunpack.c.h.b16 %v1072
        %v1330 = vunpack.c.l.b16 %v1073
        %v1331 = vunpack.c.h.b16 %v1073
        %v1332 = vunpack.c.l.b16 %v1074
        %v1333 = vunpack.c.h.b16 %v1074
        %v1334 = vunpack.c.l.b16 %v1075
        %v1335 = vunpack.c.h.b16 %v1075
        %v1336 = vunpack.c.l.b16 %v1076
        %v1337 = vunpack.c.h.b16 %v1076
        %v1338 = vunpack.c.l.b16 %v1077
        %v1339 = vunpack.c.h.b16 %v1077
        %v1340 = vunpack.c.l.b16 %v1078
        %v1341 = vunpack.c.h.b16 %v1078
        %v1342 = vunpack.c.l.b16 %v1079
        %v1343 = vunpack.c.h.b16 %v1079
        %v1344 = vunpack.c.l.b16 %v1080
        %v1345 = vunpack.c.h.b16 %v1080
        %v1346 = vunpack.c.l.b16 %v1081
        %v1347 = vunpack.c.h.b16 %v1081
        %v1348 = vunpack.c.l.b16 %v1082
        %v1349 = vunpack.c.h.b16 %v1082
        %v1350 = vunpack.c.l.b16 %v1083
        %v1351 = vunpack.c.h.b16 %v1083
        %v1352 = vunpack.c.l.b16 %v1084
        %v1353 = vunpack.c.h.b16 %v1084
        %v1354 = vunpack.c.l.b16 %v1085
        %v1355 = vunpack.c.h.b16 %v1085
        %v1356 = vunpack.c.l.b16 %v1086
        %v1357 = vunpack.c.h.b16 %v1086
        %v1358 = vunpack.c.l.b16 %v1087
        %v1359 = vunpack.c.h.b16 %v1087
        %v1360 = vunpack.c.l.b16 %v1088
        %v1361 = vunpack.c.h.b16 %v1088
        %v1362 = vunpack.c.l.b16 %v1089
        %v1363 = vunpack.c.h.b16 %v1089
        %v1364 = vunpack.c.l.b16 %v1090
        %v1365 = vunpack.c.h.b16 %v1090
        %v1366 = vunpack.c.l.b16 %v1091
        %v1367 = vunpack.c.h.b16 %v1091
        %v1368 = vunpack.c.l.b16 %v1092
        %v1369 = vunpack.c.h.b16 %v1092
        %v1370 = vunpack.c.l.b16 %v1093
        %v1371 = vunpack.c.h.b16 %v1093
        %v1372 = vunpack.c.l.b16 %v1094
        %v1373 = vunpack.c.h.b16 %v1094
        %v1374 = vunpack.c.l.b16 %v1095
        %v1375 = vunpack.c.h.b16 %v1095
        %v1376 = vunpack.c.l.b16 %v1096
        %v1377 = vunpack.c.h.b16 %v1096
        %v1378 = vunpack.c.l.b16 %v1097
        %v1379 = vunpack.c.h.b16 %v1097
        %v1380 = vunpack.c.l.b16 %v1098
        %v1381 = vunpack.c.h.b16 %v1098
        %v1382 = vunpack.c.l.b16 %v1099
        %v1383 = vunpack.c.h.b16 %v1099
        %v1384 = vunpack.c.l.b16 %v1100
        %v1385 = vunpack.c.h.b16 %v1100
        %v1386 = vunpack.c.l.b16 %v1101
        %v1387 = vunpack.c.h.b16 %v1101
        %v1388 = vunpack.c.l.b16 %v1102
        %v1389 = vunpack.c.h.b16 %v1102
        %v1390 = vunpack.c.l.b16 %v1103
        %v1391 = vunpack.c.h.b16 %v1103
        %v1392 = vunpack.c.l.b16 %v1104
        %v1393 = vunpack.c.h.b16 %v1104
        %v1394 = vunpack.c.l.b16 %v1105
        %v1395 = vunpack.c.h.b16 %v1105
        %v1396 = vunpack.c.l.b16 %v1106
        %v1397 = vunpack.c.h.b16 %v1106
        %v1398 = vunpack.c.l.b16 %v1107
        %v1399 = vunpack.c.h.b16 %v1107
        %v1400 = vunpack.c.l.b16 %v1108
        %v1401 = vunpack.c.h.b16 %v1108
        %v1402 = vunpack.c.l.b16 %v1109
        %v1403 = vunpack.c.h.b16 %v1109
        %v1404 = vunpack.c.l.b16 %v1110
        %v1405 = vunpack.c.h.b16 %v1110
        %v1406 = vunpack.c.l.b16 %v1111
        %v1407 = vunpack.c.h.b16 %v1111
        %v1408 = vunpack.c.l.b16 %v1112
        %v1409 = vunpack.c.h.b16 %v1112
        %v1410 = vunpack.c.l.b16 %v1113
        %v1411 = vunpack.c.h.b16 %v1113
        %v1412 = vunpack.c.l.b16 %v1114
        %v1413 = vunpack.c.h.b16 %v1114
        %v1414 = vunpack.c.l.b16 %v1115
        %v1415 = vunpack.c.h.b16 %v1115
        %v1416 = vunpack.c.l.b16 %v1116
        %v1417 = vunpack.c.h.b16 %v1116
        %v1418 = vunpack.c.l.b16 %v1117
        %v1419 = vunpack.c.h.b16 %v1117
        %v1420 = vpack.c.b16 %v1234, %v1228
        %v1421 = vpack.c.b16 %v1235, %v1229
        %v1422 = vpack.c.b16 %v1236, %v1230
        %v1423 = vpack.c.b16 %v1237, %v1231
        %v1424 = vpack.c.b16 %v1238, %v1232
        %v1425 = vpack.c.b16 %v1239, %v1233
        %v1426 = vpack.c.b16 %v1246, %v1240
        %v1427 = vpack.c.b16 %v1247, %v1241
        %v1428 = vpack.c.b16 %v1248, %v1242
        %v1429 = vpack.c.b16 %v1249, %v1243
        %v1430 = vpack.c.b16 %v1250, %v1244
        %v1431 = vpack.c.b16 %v1251, %v1245
        %v1432 = vpack.c.b16 %v1258, %v1252
        %v1433 = vpack.c.b16 %v1259, %v1253
        %v1434 = vpack.c.b16 %v1260, %v1254
        %v1435 = vpack.c.b16 %v1261, %v1255
        %v1436 = vpack.c.b16 %v1262, %v1256
        %v1437 = vpack.c.b16 %v1263, %v1257
        %v1438 = vpack.c.b16 %v1270, %v1264
        %v1439 = vpack.c.b16 %v1271, %v1265
        %v1440 = vpack.c.b16 %v1272, %v1266
        %v1441 = vpack.c.b16 %v1273, %v1267
        %v1442 = vpack.c.b16 %v1274, %v1268
        %v1443 = vpack.c.b16 %v1275, %v1269
        %v1444 = vpack.c.b16 %v1282, %v1276
        %v1445 = vpack.c.b16 %v1283, %v1277
        %v1446 = vpack.c.b16 %v1284, %v1278
        %v1447 = vpack.c.b16 %v1285, %v1279
        %v1448 = vpack.c.b16 %v1286, %v1280
        %v1449 = vpack.c.b16 %v1287, %v1281
        %v1450 = vpack.c.b16 %v1294, %v1288
        %v1451 = vpack.c.b16 %v1295, %v1289
        %v1452 = vpack.c.b16 %v1296, %v1290
        %v1453 = vpack.c.b16 %v1297, %v1291
        %v1454 = vpack.c.b16 %v1298, %v1292
        %v1455 = vpack.c.b16 %v1299, %v1293
        %v1456 = vpack.c.b16 %v1306, %v1300
        %v1457 = vpack.c.b16 %v1307, %v1301
        %v1458 = vpack.c.b16 %v1308, %v1302
        %v1459 = vpack.c.b16 %v1309, %v1303
        %v1460 = vpack.c.b16 %v1310, %v1304
        %v1461 = vpack.c.b16 %v1311, %v1305
        %v1462 = vpack.c.b16 %v1318, %v1312
        %v1463 = vpack.c.b16 %v1319, %v1313
        %v1464 = vpack.c.b16 %v1320, %v1314
        %v1465 = vpack.c.b16 %v1321, %v1315
        %v1466 = vpack.c.b16 %v1322, %v1316
        %v1467 = vpack.c.b16 %v1323, %v1317
        %v1468 = vpack.c.b16 %v1330, %v1324
        %v1469 = vpack.c.b16 %v1331, %v1325
        %v1470 = vpack.c.b16 %v1332, %v1326
        %v1471 = vpack.c.b16 %v1333, %v1327
        %v1472 = vpack.c.b16 %v1334, %v1328
        %v1473 = vpack.c.b16 %v1335, %v1329
        %v1474 = vpack.c.b16 %v1342, %v1336
        %v1475 = vpack.c.b16 %v1343, %v1337
        %v1476 = vpack.c.b16 %v1344, %v1338
        %v1477 = vpack.c.b16 %v1345, %v1339
        %v1478 = vpack.c.b16 %v1346, %v1340
        %v1479 = vpack.c.b16 %v1347, %v1341
        %v1480 = vpack.c.b16 %v1354, %v1348
        %v1481 = vpack.c.b16 %v1355, %v1349
        %v1482 = vpack.c.b16 %v1356, %v1350
        %v1483 = vpack.c.b16 %v1357, %v1351
        %v1484 = vpack.c.b16 %v1358, %v1352
        %v1485 = vpack.c.b16 %v1359, %v1353
        %v1486 = vpack.c.b16 %v1366, %v1360
        %v1487 = vpack.c.b16 %v1367, %v1361
        %v1488 = vpack.c.b16 %v1368, %v1362
        %v1489 = vpack.c.b16 %v1369, %v1363
        %v1490 = vpack.c.b16 %v1370, %v1364
        %v1491 = vpack.c.b16 %v1371, %v1365
        %v1492 = vpack.c.b16 %v1378, %v1372
        %v1493 = vpack.c.b16 %v1379, %v1373
        %v1494 = vpack.c.b16 %v1380, %v1374
        %v1495 = vpack.c.b16 %v1381, %v1375
        %v1496 = vpack.c.b16 %v1382, %v1376
        %v1497 = vpack.c.b16 %v1383, %v1377
        %v1498 = vpack.c.b16 %v1390, %v1384
        %v1499 = vpack.c.b16 %v1391, %v1385
        %v1500 = vpack.c.b16 %v1392, %v1386
        %v1501 = vpack.c.b16 %v1393, %v1387
        %v1502 = vpack.c.b16 %v1394, %v1388
        %v1503 = vpack.c.b16 %v1395, %v1389
        %v1504 = vpack.c.b16 %v1402, %v1396
        %v1505 = vpack.c.b16 %v1403, %v1397
        %v1506 = vpack.c.b16 %v1404, %v1398
        %v1507 = vpack.c.b16 %v1405, %v1399
        %v1508 = vpack.c.b16 %v1406, %v1400
        %v1509 = vpack.c.b16 %v1407, %v1401
        %v1510 = vpack.c.b16 %v1414, %v1408
        %v1511 = vpack.c.b16 %v1415, %v1409
        %v1512 = vpack.c.b16 %v1416, %v1410
        %v1513 = vpack.c.b16 %v1417, %v1411
        %v1514 = vpack.c.b16 %v1418, %v1412
        %v1515 = vpack.c.b16 %v1419, %v1413
        %1612 = vmatpush.bf16.msra.mxu0 %v1462
        %1613 = vmatpush.bf16.msra.mxu0 %v1456
        %1614 = vmatpush.bf16.msra.mxu0 %v1450
        %1615 = vmatpush.bf16.msra.mxu0 %v1444
        %1616 = vmatpush.bf16.msra.mxu0 %v1438
        %1617 = vmatpush.bf16.msra.mxu0 %v1432
        %1618 = vmatpush.bf16.msra.mxu0 %v1426
        %1619 = vmatpush.bf16.msra.mxu0 %v1420
        %1620 = vmatmul.bf16.gmra.mxu0 %v1020
        %v1621 = vpop.f32.mrf.mxu0
        %v1622 = vadd.f32 %v1120, %v1621
        %v1623 = vpop.f32.mrf.mxu0
        %v1624 = vadd.f32 %v1120, %v1623
        %1625 = vdwg.mxu0
        %1626 = vmatpush.bf16.msra.mxu0 %v1510
        %1627 = vmatpush.bf16.msra.mxu0 %v1504
        %1628 = vmatpush.bf16.msra.mxu0 %v1498
        %1629 = vmatpush.bf16.msra.mxu0 %v1492
        %1630 = vmatpush.bf16.msra.mxu0 %v1486
        %1631 = vmatpush.bf16.msra.mxu0 %v1480
        %1632 = vmatpush.bf16.msra.mxu0 %v1474
        %1633 = vmatpush.bf16.msra.mxu0 %v1468
        %1634 = vmatmul.bf16.gmra.mxu0 %v1021
        %v1635 = vpop.f32.mrf.mxu0
        %v1636 = vadd.f32 %v1622, %v1635
        %v1637 = vpop.f32.mrf.mxu0
        %v1638 = vadd.f32 %v1624, %v1637
        %1639 = vdwg.mxu0
        %1640 = vmatpush.bf16.msra.mxu0 %v1463
        %1641 = vmatpush.bf16.msra.mxu0 %v1457
        %1642 = vmatpush.bf16.msra.mxu0 %v1451
        %1643 = vmatpush.bf16.msra.mxu0 %v1445
        %1644 = vmatpush.bf16.msra.mxu0 %v1439
        %1645 = vmatpush.bf16.msra.mxu0 %v1433
        %1646 = vmatpush.bf16.msra.mxu0 %v1427
        %1647 = vmatpush.bf16.msra.mxu0 %v1421
        %1648 = vmatmul.bf16.gmra.mxu0 %v1020
        %v1649 = vpop.f32.mrf.mxu0
        %v1650 = vadd.f32 %v1121, %v1649
        %v1651 = vpop.f32.mrf.mxu0
        %v1652 = vadd.f32 %v1121, %v1651
        %1653 = vdwg.mxu0
        %1654 = vmatpush.bf16.msra.mxu0 %v1511
        %1655 = vmatpush.bf16.msra.mxu0 %v1505
        %1656 = vmatpush.bf16.msra.mxu0 %v1499
        %1657 = vmatpush.bf16.msra.mxu0 %v1493
        %1658 = vmatpush.bf16.msra.mxu0 %v1487
        %1659 = vmatpush.bf16.msra.mxu0 %v1481
        %1660 = vmatpush.bf16.msra.mxu0 %v1475
        %1661 = vmatpush.bf16.msra.mxu0 %v1469
        %1662 = vmatmul.bf16.gmra.mxu0 %v1021
        %v1663 = vpop.f32.mrf.mxu0
        %v1664 = vadd.f32 %v1650, %v1663
        %v1665 = vpop.f32.mrf.mxu0
        %v1666 = vadd.f32 %v1652, %v1665
        %1667 = vdwg.mxu0
        %1668 = vmatpush.bf16.msra.mxu0 %v1464
        %1669 = vmatpush.bf16.msra.mxu0 %v1458
        %1670 = vmatpush.bf16.msra.mxu0 %v1452
        %1671 = vmatpush.bf16.msra.mxu0 %v1446
        %1672 = vmatpush.bf16.msra.mxu0 %v1440
        %1673 = vmatpush.bf16.msra.mxu0 %v1434
        %1674 = vmatpush.bf16.msra.mxu0 %v1428
        %1675 = vmatpush.bf16.msra.mxu0 %v1422
        %1676 = vmatmul.bf16.gmra.mxu0 %v1020
        %v1677 = vpop.f32.mrf.mxu0
        %v1678 = vadd.f32 %v1122, %v1677
        %v1679 = vpop.f32.mrf.mxu0
        %v1680 = vadd.f32 %v1122, %v1679
        %1681 = vdwg.mxu0
        %1682 = vmatpush.bf16.msra.mxu0 %v1512
        %1683 = vmatpush.bf16.msra.mxu0 %v1506
        %1684 = vmatpush.bf16.msra.mxu0 %v1500
        %1685 = vmatpush.bf16.msra.mxu0 %v1494
        %1686 = vmatpush.bf16.msra.mxu0 %v1488
        %1687 = vmatpush.bf16.msra.mxu0 %v1482
        %1688 = vmatpush.bf16.msra.mxu0 %v1476
        %1689 = vmatpush.bf16.msra.mxu0 %v1470
        %1690 = vmatmul.bf16.gmra.mxu0 %v1021
        %v1691 = vpop.f32.mrf.mxu0
        %v1692 = vadd.f32 %v1678, %v1691
        %v1693 = vpop.f32.mrf.mxu0
        %v1694 = vadd.f32 %v1680, %v1693
        %1695 = vdwg.mxu0
        %1696 = vmatpush.bf16.msra.mxu0 %v1465
        %1697 = vmatpush.bf16.msra.mxu0 %v1459
        %1698 = vmatpush.bf16.msra.mxu0 %v1453
        %1699 = vmatpush.bf16.msra.mxu0 %v1447
        %1700 = vmatpush.bf16.msra.mxu0 %v1441
        %1701 = vmatpush.bf16.msra.mxu0 %v1435
        %1702 = vmatpush.bf16.msra.mxu0 %v1429
        %1703 = vmatpush.bf16.msra.mxu0 %v1423
        %1704 = vmatmul.bf16.gmra.mxu0 %v1020
        %v1705 = vpop.f32.mrf.mxu0
        %v1706 = vadd.f32 %v1123, %v1705
        %v1707 = vpop.f32.mrf.mxu0
        %v1708 = vadd.f32 %v1123, %v1707
        %1709 = vdwg.mxu0
        %1710 = vmatpush.bf16.msra.mxu0 %v1513
        %1711 = vmatpush.bf16.msra.mxu0 %v1507
        %1712 = vmatpush.bf16.msra.mxu0 %v1501
        %1713 = vmatpush.bf16.msra.mxu0 %v1495
        %1714 = vmatpush.bf16.msra.mxu0 %v1489
        %1715 = vmatpush.bf16.msra.mxu0 %v1483
        %1716 = vmatpush.bf16.msra.mxu0 %v1477
        %1717 = vmatpush.bf16.msra.mxu0 %v1471
        %1718 = vmatmul.bf16.gmra.mxu0 %v1021
        %v1719 = vpop.f32.mrf.mxu0
        %v1720 = vadd.f32 %v1706, %v1719
        %v1721 = vpop.f32.mrf.mxu0
        %v1722 = vadd.f32 %v1708, %v1721
        %1723 = vdwg.mxu0
        %1724 = vmatpush.bf16.msra.mxu0 %v1466
        %1725 = vmatpush.bf16.msra.mxu0 %v1460
        %1726 = vmatpush.bf16.msra.mxu0 %v1454
        %1727 = vmatpush.bf16.msra.mxu0 %v1448
        %1728 = vmatpush.bf16.msra.mxu0 %v1442
        %1729 = vmatpush.bf16.msra.mxu0 %v1436
        %1730 = vmatpush.bf16.msra.mxu0 %v1430
        %1731 = vmatpush.bf16.msra.mxu0 %v1424
        %1732 = vmatmul.bf16.gmra.mxu0 %v1020
        %v1733 = vpop.f32.mrf.mxu0
        %v1734 = vadd.f32 %v1124, %v1733
        %v1735 = vpop.f32.mrf.mxu0
        %v1736 = vadd.f32 %v1124, %v1735
        %1737 = vdwg.mxu0
        %1738 = vmatpush.bf16.msra.mxu0 %v1514
        %1739 = vmatpush.bf16.msra.mxu0 %v1508
        %1740 = vmatpush.bf16.msra.mxu0 %v1502
        %1741 = vmatpush.bf16.msra.mxu0 %v1496
        %1742 = vmatpush.bf16.msra.mxu0 %v1490
        %1743 = vmatpush.bf16.msra.mxu0 %v1484
        %1744 = vmatpush.bf16.msra.mxu0 %v1478
        %1745 = vmatpush.bf16.msra.mxu0 %v1472
        %1746 = vmatmul.bf16.gmra.mxu0 %v1021
        %v1747 = vpop.f32.mrf.mxu0
        %v1748 = vadd.f32 %v1734, %v1747
        %v1749 = vpop.f32.mrf.mxu0
        %v1750 = vadd.f32 %v1736, %v1749
        %1751 = vdwg.mxu0
        %1752 = vmatpush.bf16.msra.mxu0 %v1467
        %1753 = vmatpush.bf16.msra.mxu0 %v1461
        %1754 = vmatpush.bf16.msra.mxu0 %v1455
        %1755 = vmatpush.bf16.msra.mxu0 %v1449
        %1756 = vmatpush.bf16.msra.mxu0 %v1443
        %1757 = vmatpush.bf16.msra.mxu0 %v1437
        %1758 = vmatpush.bf16.msra.mxu0 %v1431
        %1759 = vmatpush.bf16.msra.mxu0 %v1425
        %1760 = vmatmul.bf16.gmra.mxu0 %v1020
        %v1761 = vpop.f32.mrf.mxu0
        %v1762 = vadd.f32 %v1125, %v1761
        %v1763 = vpop.f32.mrf.mxu0
        %v1764 = vadd.f32 %v1125, %v1763
        %1765 = vdwg.mxu0
        %1766 = vmatpush.bf16.msra.mxu0 %v1515
        %1767 = vmatpush.bf16.msra.mxu0 %v1509
        %1768 = vmatpush.bf16.msra.mxu0 %v1503
        %1769 = vmatpush.bf16.msra.mxu0 %v1497
        %1770 = vmatpush.bf16.msra.mxu0 %v1491
        %1771 = vmatpush.bf16.msra.mxu0 %v1485
        %1772 = vmatpush.bf16.msra.mxu0 %v1479
        %1773 = vmatpush.bf16.msra.mxu0 %v1473
        %1774 = vmatmul.bf16.gmra.mxu0 %v1021
        %v1775 = vpop.f32.mrf.mxu0
        %v1776 = vadd.f32 %v1762, %v1775
        %v1777 = vpop.f32.mrf.mxu0
        %v1778 = vadd.f32 %v1764, %v1777
        %1779 = vdwg.mxu0
        %v1780 = vpack.c.bf16 %v1638, %v1636
        %v1781 = vpack.c.bf16 %v1694, %v1692
        %v1782 = vpack.c.bf16 %v1750, %v1748
        %1783 = vmatpush.bf16.xpose.msra.mxu0 0
        %1784 = vmatpush.bf16.xpose.msra.mxu0 0
        %1785 = vmatpush.bf16.xpose.msra.mxu0 0
        %1786 = vmatpush.bf16.xpose.msra.mxu0 0
        %1787 = vmatpush.bf16.xpose.msra.mxu0 0
        %1788 = vmatpush.bf16.xpose.msra.mxu0 0
        %1789 = vmatpush.bf16.xpose.msra.mxu0 0
        %1790 = vmatpush.bf16.xpose.msra.mxu0 %v1781
        %1791 = vmatmul.bf16.gmra.mxu0 %v1780
        %v1792 = vpop.f32.mrf.mxu0
        %v1793 = vadd.f32 0.0, %v1792
        %v1794 = vpop.f32.mrf.mxu0
        %v1795 = vadd.f32 0.0, %v1794
        %1796 = vdwg.mxu0
        %vm1797 = vcmask 130048
        %v1798 = vsel %vm1797, %v1793, -inf
        %1799 = vmax.xlane.f32.xlu0 %v1798
        %v1800 = vpop.xlane.xlu0 %1799
        %v1801 = vsel %vm1797, %v1795, -inf
        %1802 = vmax.xlane.f32.xlu0 %v1801
        %v1803 = vpop.xlane.xlu0 %1802
        %v1804 = vsub.f32 %v1793, %v1800
        %v1805 = vsub.f32 %v1795, %v1803
        %v1806 = vmul.f32 %v1804, 1.442695
        %v1807 = vpow.pop %v1806
        %v1808 = vmul.f32 %v1805, 1.442695
        %v1809 = vpow.pop %v1808
        %v1810 = vsel %vm1797, %v1807, 0.0
        %1811 = vadd.xlane.f32.xlu0 %v1810
        %v1812 = vpop.xlane.xlu0 %1811
        %v1813 = vsel %vm1797, %v1809, 0.0
        %1814 = vadd.xlane.f32.xlu0 %v1813
        %v1815 = vpop.xlane.xlu0 %1814
        %v1816 = vrcp.pop %v1812
        %v1817 = vrcp.pop %v1815
        %v1818 = vmul.f32 %v1807, %v1816
        %v1819 = vmul.f32 %v1809, %v1817
        %v1820 = vpack.c.bf16 %v1819, %v1818
        %v1822 = vsel %vm1797, %v1820, 0
        %1824 = vmatpush.bf16.msra.mxu0 0
        %1825 = vmatpush.bf16.msra.mxu0 0
        %1826 = vmatpush.bf16.msra.mxu0 0
        %1827 = vmatpush.bf16.msra.mxu0 0
        %1828 = vmatpush.bf16.msra.mxu0 0
        %1829 = vmatpush.bf16.msra.mxu0 0
        %1830 = vmatpush.bf16.msra.mxu0 0
        %1831 = vmatpush.bf16.msra.mxu0 %v1782
        %1832 = vmatmul.bf16.gmra.mxu0 %v1822
        %v1833 = vpop.f32.mrf.mxu0
        %v1834 = vadd.f32 0.0, %v1833
        %v1835 = vpop.f32.mrf.mxu0
        %v1836 = vadd.f32 0.0, %v1835
        %1837 = vdwg.mxu0
        %1838 = vst [vmem:[#allocation2] sm:$0xff] %v1834
        %1839 = vst [vmem:[#allocation2 + $0x10] sm:$0xff] %v1836
        %v1840 = vpack.c.bf16 %v1666, %v1664
        %v1841 = vpack.c.bf16 %v1722, %v1720
        %v1842 = vpack.c.bf16 %v1778, %v1776
        %1843 = vmatpush.bf16.xpose.msra.mxu0 0
        %1844 = vmatpush.bf16.xpose.msra.mxu0 0
        %1845 = vmatpush.bf16.xpose.msra.mxu0 0
        %1846 = vmatpush.bf16.xpose.msra.mxu0 0
        %1847 = vmatpush.bf16.xpose.msra.mxu0 0
        %1848 = vmatpush.bf16.xpose.msra.mxu0 0
        %1849 = vmatpush.bf16.xpose.msra.mxu0 0
        %1850 = vmatpush.bf16.xpose.msra.mxu0 %v1841
        %1851 = vmatmul.bf16.gmra.mxu0 %v1840
        %v1852 = vpop.f32.mrf.mxu0
        %v1853 = vadd.f32 0.0, %v1852
        %v1854 = vpop.f32.mrf.mxu0
        %v1855 = vadd.f32 0.0, %v1854
        %1856 = vdwg.mxu0
        %v1857 = vsel %vm1797, %v1853, -inf
        %1858 = vmax.xlane.f32.xlu0 %v1857
        %v1859 = vpop.xlane.xlu0 %1858
        %v1860 = vsel %vm1797, %v1855, -inf
        %1861 = vmax.xlane.f32.xlu0 %v1860
        %v1862 = vpop.xlane.xlu0 %1861
        %v1863 = vsub.f32 %v1853, %v1859
        %v1864 = vsub.f32 %v1855, %v1862
        %v1865 = vmul.f32 %v1863, 1.442695
        %v1866 = vpow.pop %v1865
        %v1867 = vmul.f32 %v1864, 1.442695
        %v1868 = vpow.pop %v1867
        %v1869 = vsel %vm1797, %v1866, 0.0
        %1870 = vadd.xlane.f32.xlu0 %v1869
        %v1871 = vpop.xlane.xlu0 %1870
        %v1872 = vsel %vm1797, %v1868, 0.0
        %1873 = vadd.xlane.f32.xlu0 %v1872
        %v1874 = vpop.xlane.xlu0 %1873
        %v1875 = vrcp.pop %v1871
        %v1876 = vrcp.pop %v1874
        %v1877 = vmul.f32 %v1866, %v1875
        %v1878 = vmul.f32 %v1868, %v1876
        %v1879 = vpack.c.bf16 %v1878, %v1877
        %v1881 = vsel %vm1797, %v1879, 0
        %1883 = vmatpush.bf16.msra.mxu0 0
        %1884 = vmatpush.bf16.msra.mxu0 0
        %1885 = vmatpush.bf16.msra.mxu0 0
        %1886 = vmatpush.bf16.msra.mxu0 0
        %1887 = vmatpush.bf16.msra.mxu0 0
        %1888 = vmatpush.bf16.msra.mxu0 0
        %1889 = vmatpush.bf16.msra.mxu0 0
        %1890 = vmatpush.bf16.msra.mxu0 %v1842
        %1891 = vmatmul.bf16.gmra.mxu0 %v1881
        %v1892 = vpop.f32.mrf.mxu0
        %v1893 = vadd.f32 0.0, %v1892
        %v1894 = vpop.f32.mrf.mxu0
        %v1895 = vadd.f32 0.0, %v1894
        %1896 = vdwg.mxu0
        %1897 = vst [vmem:[#allocation2 + $0x8] sm:$0xff] %v1893
        %1898 = vst [vmem:[#allocation2 + $0x18] sm:$0xff] %v1895
        %v1899 = vld [vmem:[#allocation2] sm:$0xff]
        %v1900 = vld [vmem:[#allocation2 + $0x8] sm:$0xff]
        %v1901 = vld [vmem:[#allocation2 + $0x10] sm:$0xff]
        %v1902 = vld [vmem:[#allocation2 + $0x18] sm:$0xff]
        %v1903 = vpack.c.bf16 %v1901, %v1899
        %v1904 = vpack.c.bf16 %v1902, %v1900
        %v1905 = vld [vmem:[#allocation5] sm:$0xff]
        %v1906 = vld [vmem:[#allocation5 + $0x8] sm:$0xff]
        %v1907 = vld [vmem:[#allocation5 + $0x10] sm:$0xff]
        %v1908 = vld [vmem:[#allocation5 + $0x18] sm:$0xff]
        %v1909 = vld [vmem:[#allocation5 + $0x20] sm:$0xff]
        %v1910 = vld [vmem:[#allocation5 + $0x28] sm:$0xff]
        %v1911 = vld [vmem:[#allocation5 + $0x30] sm:$0xff]
        %v1912 = vld [vmem:[#allocation5 + $0x38] sm:$0xff]
        %v1913 = vld [vmem:[#allocation5 + $0x40] sm:$0xff]
        %v1914 = vld [vmem:[#allocation5 + $0x48] sm:$0xff]
        %v1915 = vld [vmem:[#allocation5 + $0x50] sm:$0xff]
        %v1916 = vld [vmem:[#allocation5 + $0x58] sm:$0xff]
        %v1917 = vld [vmem:[#allocation5 + $0x60] sm:$0xff]
        %v1918 = vld [vmem:[#allocation5 + $0x68] sm:$0xff]
        %v1919 = vld [vmem:[#allocation5 + $0x70] sm:$0xff]
        %v1920 = vld [vmem:[#allocation5 + $0x78] sm:$0xff]
        %v1921 = vld [vmem:[#allocation5 + $0x80] sm:$0xff]
        %v1922 = vld [vmem:[#allocation5 + $0x88] sm:$0xff]
        %v1923 = vld [vmem:[#allocation5 + $0x90] sm:$0xff]
        %v1924 = vld [vmem:[#allocation5 + $0x98] sm:$0xff]
        %v1925 = vld [vmem:[#allocation5 + $0xa0] sm:$0xff]
        %v1926 = vld [vmem:[#allocation5 + $0xa8] sm:$0xff]
        %v1927 = vld [vmem:[#allocation5 + $0xb0] sm:$0xff]
        %v1928 = vld [vmem:[#allocation5 + $0xb8] sm:$0xff]
        %v1929 = vld [vmem:[#allocation5 + $0xc0] sm:$0xff]
        %v1930 = vld [vmem:[#allocation5 + $0xc8] sm:$0xff]
        %v1931 = vld [vmem:[#allocation5 + $0xd0] sm:$0xff]
        %v1932 = vld [vmem:[#allocation5 + $0xd8] sm:$0xff]
        %v1933 = vld [vmem:[#allocation5 + $0xe0] sm:$0xff]
        %v1934 = vld [vmem:[#allocation5 + $0xe8] sm:$0xff]
        %v1935 = vld [vmem:[#allocation5 + $0xf0] sm:$0xff]
        %v1936 = vld [vmem:[#allocation5 + $0xf8] sm:$0xff]
        %v1969 = vunpack.c.l.b16 %v1905
        %v1970 = vunpack.c.h.b16 %v1905
        %v1971 = vunpack.c.l.b16 %v1906
        %v1972 = vunpack.c.h.b16 %v1906
        %v1973 = vunpack.c.l.b16 %v1907
        %v1974 = vunpack.c.h.b16 %v1907
        %v1975 = vunpack.c.l.b16 %v1908
        %v1976 = vunpack.c.h.b16 %v1908
        %v1977 = vunpack.c.l.b16 %v1909
        %v1978 = vunpack.c.h.b16 %v1909
        %v1979 = vunpack.c.l.b16 %v1910
        %v1980 = vunpack.c.h.b16 %v1910
        %v1981 = vunpack.c.l.b16 %v1911
        %v1982 = vunpack.c.h.b16 %v1911
        %v1983 = vunpack.c.l.b16 %v1912
        %v1984 = vunpack.c.h.b16 %v1912
        %v1985 = vunpack.c.l.b16 %v1913
        %v1986 = vunpack.c.h.b16 %v1913
        %v1987 = vunpack.c.l.b16 %v1914
        %v1988 = vunpack.c.h.b16 %v1914
        %v1989 = vunpack.c.l.b16 %v1915
        %v1990 = vunpack.c.h.b16 %v1915
        %v1991 = vunpack.c.l.b16 %v1916
        %v1992 = vunpack.c.h.b16 %v1916
        %v1993 = vunpack.c.l.b16 %v1917
        %v1994 = vunpack.c.h.b16 %v1917
        %v1995 = vunpack.c.l.b16 %v1918
        %v1996 = vunpack.c.h.b16 %v1918
        %v1997 = vunpack.c.l.b16 %v1919
        %v1998 = vunpack.c.h.b16 %v1919
        %v1999 = vunpack.c.l.b16 %v1920
        %v2000 = vunpack.c.h.b16 %v1920
        %v2001 = vunpack.c.l.b16 %v1921
        %v2002 = vunpack.c.h.b16 %v1921
        %v2003 = vunpack.c.l.b16 %v1922
        %v2004 = vunpack.c.h.b16 %v1922
        %v2005 = vunpack.c.l.b16 %v1923
        %v2006 = vunpack.c.h.b16 %v1923
        %v2007 = vunpack.c.l.b16 %v1924
        %v2008 = vunpack.c.h.b16 %v1924
        %v2009 = vunpack.c.l.b16 %v1925
        %v2010 = vunpack.c.h.b16 %v1925
        %v2011 = vunpack.c.l.b16 %v1926
        %v2012 = vunpack.c.h.b16 %v1926
        %v2013 = vunpack.c.l.b16 %v1927
        %v2014 = vunpack.c.h.b16 %v1927
        %v2015 = vunpack.c.l.b16 %v1928
        %v2016 = vunpack.c.h.b16 %v1928
        %v2017 = vunpack.c.l.b16 %v1929
        %v2018 = vunpack.c.h.b16 %v1929
        %v2019 = vunpack.c.l.b16 %v1930
        %v2020 = vunpack.c.h.b16 %v1930
        %v2021 = vunpack.c.l.b16 %v1931
        %v2022 = vunpack.c.h.b16 %v1931
        %v2023 = vunpack.c.l.b16 %v1932
        %v2024 = vunpack.c.h.b16 %v1932
        %v2025 = vunpack.c.l.b16 %v1933
        %v2026 = vunpack.c.h.b16 %v1933
        %v2027 = vunpack.c.l.b16 %v1934
        %v2028 = vunpack.c.h.b16 %v1934
        %v2029 = vunpack.c.l.b16 %v1935
        %v2030 = vunpack.c.h.b16 %v1935
        %v2031 = vunpack.c.l.b16 %v1936
        %v2032 = vunpack.c.h.b16 %v1936
        %v2033 = vpack.c.b16 %v1971, %v1969
        %v2034 = vpack.c.b16 %v1972, %v1970
        %v2035 = vpack.c.b16 %v1975, %v1973
        %v2036 = vpack.c.b16 %v1976, %v1974
        %v2037 = vpack.c.b16 %v1979, %v1977
        %v2038 = vpack.c.b16 %v1980, %v1978
        %v2039 = vpack.c.b16 %v1983, %v1981
        %v2040 = vpack.c.b16 %v1984, %v1982
        %v2041 = vpack.c.b16 %v1987, %v1985
        %v2042 = vpack.c.b16 %v1988, %v1986
        %v2043 = vpack.c.b16 %v1991, %v1989
        %v2044 = vpack.c.b16 %v1992, %v1990
        %v2045 = vpack.c.b16 %v1995, %v1993
        %v2046 = vpack.c.b16 %v1996, %v1994
        %v2047 = vpack.c.b16 %v1999, %v1997
        %v2048 = vpack.c.b16 %v2000, %v1998
        %v2049 = vpack.c.b16 %v2003, %v2001
        %v2050 = vpack.c.b16 %v2004, %v2002
        %v2051 = vpack.c.b16 %v2007, %v2005
        %v2052 = vpack.c.b16 %v2008, %v2006
        %v2053 = vpack.c.b16 %v2011, %v2009
        %v2054 = vpack.c.b16 %v2012, %v2010
        %v2055 = vpack.c.b16 %v2015, %v2013
        %v2056 = vpack.c.b16 %v2016, %v2014
        %v2057 = vpack.c.b16 %v2019, %v2017
        %v2058 = vpack.c.b16 %v2020, %v2018
        %v2059 = vpack.c.b16 %v2023, %v2021
        %v2060 = vpack.c.b16 %v2024, %v2022
        %v2061 = vpack.c.b16 %v2027, %v2025
        %v2062 = vpack.c.b16 %v2028, %v2026
        %v2063 = vpack.c.b16 %v2031, %v2029
        %v2064 = vpack.c.b16 %v2032, %v2030
        %2097 = vmatpush.bf16.msra.mxu0 %v2047
        %2098 = vmatpush.bf16.msra.mxu0 %v2045
        %2099 = vmatpush.bf16.msra.mxu0 %v2043
        %2100 = vmatpush.bf16.msra.mxu0 %v2041
        %2101 = vmatpush.bf16.msra.mxu0 %v2039
        %2102 = vmatpush.bf16.msra.mxu0 %v2037
        %2103 = vmatpush.bf16.msra.mxu0 %v2035
        %2104 = vmatpush.bf16.msra.mxu0 %v2033
        %2105 = vmatmul.bf16.gmra.mxu0 %v1903
        %v2106 = vpop.f32.mrf.mxu0
        %v2107 = vadd.f32 0.0, %v2106
        %v2108 = vpop.f32.mrf.mxu0
        %v2109 = vadd.f32 0.0, %v2108
        %2110 = vdwg.mxu0
        %2111 = vmatpush.bf16.msra.mxu0 %v2063
        %2112 = vmatpush.bf16.msra.mxu0 %v2061
        %2113 = vmatpush.bf16.msra.mxu0 %v2059
        %2114 = vmatpush.bf16.msra.mxu0 %v2057
        %2115 = vmatpush.bf16.msra.mxu0 %v2055
        %2116 = vmatpush.bf16.msra.mxu0 %v2053
        %2117 = vmatpush.bf16.msra.mxu0 %v2051
        %2118 = vmatpush.bf16.msra.mxu0 %v2049
        %2119 = vmatmul.bf16.gmra.mxu0 %v1904
        %v2120 = vpop.f32.mrf.mxu0
        %v2121 = vadd.f32 %v2107, %v2120
        %v2122 = vpop.f32.mrf.mxu0
        %v2123 = vadd.f32 %v2109, %v2122
        %2124 = vdwg.mxu0
        %2125 = vmatpush.bf16.msra.mxu0 %v2048
        %2126 = vmatpush.bf16.msra.mxu0 %v2046
        %2127 = vmatpush.bf16.msra.mxu0 %v2044
        %2128 = vmatpush.bf16.msra.mxu0 %v2042
        %2129 = vmatpush.bf16.msra.mxu0 %v2040
        %2130 = vmatpush.bf16.msra.mxu0 %v2038
        %2131 = vmatpush.bf16.msra.mxu0 %v2036
        %2132 = vmatpush.bf16.msra.mxu0 %v2034
        %2133 = vmatmul.bf16.gmra.mxu0 %v1903
        %v2134 = vpop.f32.mrf.mxu0
        %v2135 = vadd.f32 0.0, %v2134
        %v2136 = vpop.f32.mrf.mxu0
        %v2137 = vadd.f32 0.0, %v2136
        %2138 = vdwg.mxu0
        %2139 = vmatpush.bf16.msra.mxu0 %v2064
        %2140 = vmatpush.bf16.msra.mxu0 %v2062
        %2141 = vmatpush.bf16.msra.mxu0 %v2060
        %2142 = vmatpush.bf16.msra.mxu0 %v2058
        %2143 = vmatpush.bf16.msra.mxu0 %v2056
        %2144 = vmatpush.bf16.msra.mxu0 %v2054
        %2145 = vmatpush.bf16.msra.mxu0 %v2052
        %2146 = vmatpush.bf16.msra.mxu0 %v2050
        %2147 = vmatmul.bf16.gmra.mxu0 %v1904
        %v2148 = vpop.f32.mrf.mxu0
        %v2149 = vadd.f32 %v2135, %v2148
        %v2150 = vpop.f32.mrf.mxu0
        %v2151 = vadd.f32 %v2137, %v2150
        %2152 = vdwg.mxu0
        %v2153 = vadd.f32 %v939, %v2121
        %v2154 = vadd.f32 %v940, %v2149
        %v2155 = vadd.f32 %v941, %v2123
        %v2156 = vadd.f32 %v942, %v2151
        %v2157 = vld [vmem:[#allocation7] sm:$0x3]
        %v2159 = vperm.slane %v2157, 0
        %v2160 = vperm.slane %v2157, 1
        %v2163 = vadd.f32 %v2153, %v2159
        %v2164 = vadd.f32 %v2154, %v2160
        %v2165 = vadd.f32 %v2155, %v2159
        %v2166 = vadd.f32 %v2156, %v2160
        %v2167 = vld [vmem:[#allocation8] sm:$0x3]
        %v2168 = vld [vmem:[#allocation10] sm:$0x3]
        %v2169 = vadd.f32 %v2163, %v2164
        %2170 = vadd.xlane.f32.xlu0 %v2169
        %v2171 = vpop.xlane.xlu0 %2170
        %v2172 = vadd.f32 %v2165, %v2166
        %2173 = vadd.xlane.f32.xlu0 %v2172
        %v2174 = vpop.xlane.xlu0 %2173
        %v2175 = vmul.f32 %v2171, %v957
        %v2176 = vmul.f32 %v2174, %v957
        %v2177 = vsub.f32 %v2163, %v2175
        %v2178 = vsub.f32 %v2164, %v2175
        %v2179 = vsub.f32 %v2165, %v2176
        %v2180 = vsub.f32 %v2166, %v2176
        %v2181 = vmul.f32 %v2177, %v2177
        %v2182 = vmul.f32 %v2178, %v2178
        %v2183 = vmul.f32 %v2179, %v2179
        %v2184 = vmul.f32 %v2180, %v2180
        %v2185 = vadd.f32 %v2181, %v2182
        %2186 = vadd.xlane.f32.xlu0 %v2185
        %v2187 = vpop.xlane.xlu0 %2186
        %v2188 = vadd.f32 %v2183, %v2184
        %2189 = vadd.xlane.f32.xlu0 %v2188
        %v2190 = vpop.xlane.xlu0 %2189
        %v2191 = vmul.f32 %v2187, %v957
        %v2192 = vmul.f32 %v2190, %v957
        %v2193 = vadd.f32 %v2191, 1e-06
        %v2194 = vadd.f32 %v2192, 1e-06
        %v2195 = vrsqrt.pop %v2193
        %v2196 = vmul.f32 %v2195, %v2193
        %v2197 = vmul.f32 %v2196, %v2195
        %v2198 = vmul.f32 0.5, %v2197
        %v2199 = vsub.f32 1.5, %v2198
        %v2200 = vmul.f32 %v2195, %v2199
        %vm2201 = vweird.f32 %v2193
        %vm2202 = vweird.f32 %v2195
        %vm2203 = vmor %vm2201, %vm2202
        %v2204 = vsel %vm2203, %v2195, %v2200
        %v2205 = vrsqrt.pop %v2194
        %v2206 = vmul.f32 %v2205, %v2194
        %v2207 = vmul.f32 %v2206, %v2205
        %v2208 = vmul.f32 0.5, %v2207
        %v2209 = vsub.f32 1.5, %v2208
        %v2210 = vmul.f32 %v2205, %v2209
        %vm2211 = vweird.f32 %v2194
        %vm2212 = vweird.f32 %v2205
        %vm2213 = vmor %vm2211, %vm2212
        %v2214 = vsel %vm2213, %v2205, %v2210
        %v2215 = vmul.f32 %v2177, %v2204
        %v2216 = vmul.f32 %v2178, %v2204
        %v2217 = vmul.f32 %v2179, %v2214
        %v2218 = vmul.f32 %v2180, %v2214
        %v2220 = vperm.slane %v2167, 0
        %v2221 = vperm.slane %v2167, 1
        %v2224 = vmul.f32 %v2215, %v2220
        %v2225 = vmul.f32 %v2216, %v2221
        %v2226 = vmul.f32 %v2217, %v2220
        %v2227 = vmul.f32 %v2218, %v2221
        %v2229 = vperm.slane %v2168, 0
        %v2230 = vperm.slane %v2168, 1
        %v2233 = vadd.f32 %v2224, %v2229
        %v2234 = vadd.f32 %v2225, %v2230
        %v2235 = vadd.f32 %v2226, %v2229
        %v2236 = vadd.f32 %v2227, %v2230
        %v2237 = vpack.c.bf16 %v2235, %v2233
        %v2238 = vpack.c.bf16 %v2236, %v2234
        %v2239 = vld [vmem:[%s12] sm:$0xff]
        %v2240 = vld [vmem:[%s12 + $0x8] sm:$0xff]
        %v2241 = vld [vmem:[%s12 + $0x10] sm:$0xff]
        %v2242 = vld [vmem:[%s12 + $0x18] sm:$0xff]
        %v2243 = vld [vmem:[%s12 + $0x20] sm:$0xff]
        %v2244 = vld [vmem:[%s12 + $0x28] sm:$0xff]
        %v2245 = vld [vmem:[%s12 + $0x30] sm:$0xff]
        %v2246 = vld [vmem:[%s12 + $0x38] sm:$0xff]
        %v2247 = vld [vmem:[%s12 + $0x40] sm:$0xff]
        %v2248 = vld [vmem:[%s12 + $0x48] sm:$0xff]
        %v2249 = vld [vmem:[%s12 + $0x50] sm:$0xff]
        %v2250 = vld [vmem:[%s12 + $0x58] sm:$0xff]
        %v2251 = vld [vmem:[%s12 + $0x60] sm:$0xff]
        %v2252 = vld [vmem:[%s12 + $0x68] sm:$0xff]
        %v2253 = vld [vmem:[%s12 + $0x70] sm:$0xff]
        %v2254 = vld [vmem:[%s12 + $0x78] sm:$0xff]
        %v2255 = vld [vmem:[%s12 + $0x80] sm:$0xff]
        %v2256 = vld [vmem:[%s12 + $0x88] sm:$0xff]
        %v2257 = vld [vmem:[%s12 + $0x90] sm:$0xff]
        %v2258 = vld [vmem:[%s12 + $0x98] sm:$0xff]
        %v2259 = vld [vmem:[%s12 + $0xa0] sm:$0xff]
        %v2260 = vld [vmem:[%s12 + $0xa8] sm:$0xff]
        %v2261 = vld [vmem:[%s12 + $0xb0] sm:$0xff]
        %v2262 = vld [vmem:[%s12 + $0xb8] sm:$0xff]
        %v2263 = vld [vmem:[%s12 + $0xc0] sm:$0xff]
        %v2264 = vld [vmem:[%s12 + $0xc8] sm:$0xff]
        %v2265 = vld [vmem:[%s12 + $0xd0] sm:$0xff]
        %v2266 = vld [vmem:[%s12 + $0xd8] sm:$0xff]
        %v2267 = vld [vmem:[%s12 + $0xe0] sm:$0xff]
        %v2268 = vld [vmem:[%s12 + $0xe8] sm:$0xff]
        %v2269 = vld [vmem:[%s12 + $0xf0] sm:$0xff]
        %v2270 = vld [vmem:[%s12 + $0xf8] sm:$0xff]
        %v2271 = vld [vmem:[%s12 + $0x100] sm:$0xff]
        %v2272 = vld [vmem:[%s12 + $0x108] sm:$0xff]
        %v2273 = vld [vmem:[%s12 + $0x110] sm:$0xff]
        %v2274 = vld [vmem:[%s12 + $0x118] sm:$0xff]
        %v2275 = vld [vmem:[%s12 + $0x120] sm:$0xff]
        %v2276 = vld [vmem:[%s12 + $0x128] sm:$0xff]
        %v2277 = vld [vmem:[%s12 + $0x130] sm:$0xff]
        %v2278 = vld [vmem:[%s12 + $0x138] sm:$0xff]
        %v2279 = vld [vmem:[%s12 + $0x140] sm:$0xff]
        %v2280 = vld [vmem:[%s12 + $0x148] sm:$0xff]
        %v2281 = vld [vmem:[%s12 + $0x150] sm:$0xff]
        %v2282 = vld [vmem:[%s12 + $0x158] sm:$0xff]
        %v2283 = vld [vmem:[%s12 + $0x160] sm:$0xff]
        %v2284 = vld [vmem:[%s12 + $0x168] sm:$0xff]
        %v2285 = vld [vmem:[%s12 + $0x170] sm:$0xff]
        %v2286 = vld [vmem:[%s12 + $0x178] sm:$0xff]
        %v2287 = vld [vmem:[%s12 + $0x180] sm:$0xff]
        %v2288 = vld [vmem:[%s12 + $0x188] sm:$0xff]
        %v2289 = vld [vmem:[%s12 + $0x190] sm:$0xff]
        %v2290 = vld [vmem:[%s12 + $0x198] sm:$0xff]
        %v2291 = vld [vmem:[%s12 + $0x1a0] sm:$0xff]
        %v2292 = vld [vmem:[%s12 + $0x1a8] sm:$0xff]
        %v2293 = vld [vmem:[%s12 + $0x1b0] sm:$0xff]
        %v2294 = vld [vmem:[%s12 + $0x1b8] sm:$0xff]
        %v2295 = vld [vmem:[%s12 + $0x1c0] sm:$0xff]
        %v2296 = vld [vmem:[%s12 + $0x1c8] sm:$0xff]
        %v2297 = vld [vmem:[%s12 + $0x1d0] sm:$0xff]
        %v2298 = vld [vmem:[%s12 + $0x1d8] sm:$0xff]
        %v2299 = vld [vmem:[%s12 + $0x1e0] sm:$0xff]
        %v2300 = vld [vmem:[%s12 + $0x1e8] sm:$0xff]
        %v2301 = vld [vmem:[%s12 + $0x1f0] sm:$0xff]
        %v2302 = vld [vmem:[%s12 + $0x1f8] sm:$0xff]
        %v2303 = vld [vmem:[%s13] sm:$0xf]
        %v2305 = vperm.slane %v2303, 0
        %v2306 = vperm.slane %v2303, 1
        %v2307 = vperm.slane %v2303, 2
        %v2308 = vperm.slane %v2303, 3
        %v2377 = vunpack.c.l.b16 %v2239
        %v2378 = vunpack.c.h.b16 %v2239
        %v2379 = vunpack.c.l.b16 %v2240
        %v2380 = vunpack.c.h.b16 %v2240
        %v2381 = vunpack.c.l.b16 %v2241
        %v2382 = vunpack.c.h.b16 %v2241
        %v2383 = vunpack.c.l.b16 %v2242
        %v2384 = vunpack.c.h.b16 %v2242
        %v2385 = vunpack.c.l.b16 %v2243
        %v2386 = vunpack.c.h.b16 %v2243
        %v2387 = vunpack.c.l.b16 %v2244
        %v2388 = vunpack.c.h.b16 %v2244
        %v2389 = vunpack.c.l.b16 %v2245
        %v2390 = vunpack.c.h.b16 %v2245
        %v2391 = vunpack.c.l.b16 %v2246
        %v2392 = vunpack.c.h.b16 %v2246
        %v2393 = vunpack.c.l.b16 %v2247
        %v2394 = vunpack.c.h.b16 %v2247
        %v2395 = vunpack.c.l.b16 %v2248
        %v2396 = vunpack.c.h.b16 %v2248
        %v2397 = vunpack.c.l.b16 %v2249
        %v2398 = vunpack.c.h.b16 %v2249
        %v2399 = vunpack.c.l.b16 %v2250
        %v2400 = vunpack.c.h.b16 %v2250
        %v2401 = vunpack.c.l.b16 %v2251
        %v2402 = vunpack.c.h.b16 %v2251
        %v2403 = vunpack.c.l.b16 %v2252
        %v2404 = vunpack.c.h.b16 %v2252
        %v2405 = vunpack.c.l.b16 %v2253
        %v2406 = vunpack.c.h.b16 %v2253
        %v2407 = vunpack.c.l.b16 %v2254
        %v2408 = vunpack.c.h.b16 %v2254
        %v2409 = vunpack.c.l.b16 %v2255
        %v2410 = vunpack.c.h.b16 %v2255
        %v2411 = vunpack.c.l.b16 %v2256
        %v2412 = vunpack.c.h.b16 %v2256
        %v2413 = vunpack.c.l.b16 %v2257
        %v2414 = vunpack.c.h.b16 %v2257
        %v2415 = vunpack.c.l.b16 %v2258
        %v2416 = vunpack.c.h.b16 %v2258
        %v2417 = vunpack.c.l.b16 %v2259
        %v2418 = vunpack.c.h.b16 %v2259
        %v2419 = vunpack.c.l.b16 %v2260
        %v2420 = vunpack.c.h.b16 %v2260
        %v2421 = vunpack.c.l.b16 %v2261
        %v2422 = vunpack.c.h.b16 %v2261
        %v2423 = vunpack.c.l.b16 %v2262
        %v2424 = vunpack.c.h.b16 %v2262
        %v2425 = vunpack.c.l.b16 %v2263
        %v2426 = vunpack.c.h.b16 %v2263
        %v2427 = vunpack.c.l.b16 %v2264
        %v2428 = vunpack.c.h.b16 %v2264
        %v2429 = vunpack.c.l.b16 %v2265
        %v2430 = vunpack.c.h.b16 %v2265
        %v2431 = vunpack.c.l.b16 %v2266
        %v2432 = vunpack.c.h.b16 %v2266
        %v2433 = vunpack.c.l.b16 %v2267
        %v2434 = vunpack.c.h.b16 %v2267
        %v2435 = vunpack.c.l.b16 %v2268
        %v2436 = vunpack.c.h.b16 %v2268
        %v2437 = vunpack.c.l.b16 %v2269
        %v2438 = vunpack.c.h.b16 %v2269
        %v2439 = vunpack.c.l.b16 %v2270
        %v2440 = vunpack.c.h.b16 %v2270
        %v2441 = vunpack.c.l.b16 %v2271
        %v2442 = vunpack.c.h.b16 %v2271
        %v2443 = vunpack.c.l.b16 %v2272
        %v2444 = vunpack.c.h.b16 %v2272
        %v2445 = vunpack.c.l.b16 %v2273
        %v2446 = vunpack.c.h.b16 %v2273
        %v2447 = vunpack.c.l.b16 %v2274
        %v2448 = vunpack.c.h.b16 %v2274
        %v2449 = vunpack.c.l.b16 %v2275
        %v2450 = vunpack.c.h.b16 %v2275
        %v2451 = vunpack.c.l.b16 %v2276
        %v2452 = vunpack.c.h.b16 %v2276
        %v2453 = vunpack.c.l.b16 %v2277
        %v2454 = vunpack.c.h.b16 %v2277
        %v2455 = vunpack.c.l.b16 %v2278
        %v2456 = vunpack.c.h.b16 %v2278
        %v2457 = vunpack.c.l.b16 %v2279
        %v2458 = vunpack.c.h.b16 %v2279
        %v2459 = vunpack.c.l.b16 %v2280
        %v2460 = vunpack.c.h.b16 %v2280
        %v2461 = vunpack.c.l.b16 %v2281
        %v2462 = vunpack.c.h.b16 %v2281
        %v2463 = vunpack.c.l.b16 %v2282
        %v2464 = vunpack.c.h.b16 %v2282
        %v2465 = vunpack.c.l.b16 %v2283
        %v2466 = vunpack.c.h.b16 %v2283
        %v2467 = vunpack.c.l.b16 %v2284
        %v2468 = vunpack.c.h.b16 %v2284
        %v2469 = vunpack.c.l.b16 %v2285
        %v2470 = vunpack.c.h.b16 %v2285
        %v2471 = vunpack.c.l.b16 %v2286
        %v2472 = vunpack.c.h.b16 %v2286
        %v2473 = vunpack.c.l.b16 %v2287
        %v2474 = vunpack.c.h.b16 %v2287
        %v2475 = vunpack.c.l.b16 %v2288
        %v2476 = vunpack.c.h.b16 %v2288
        %v2477 = vunpack.c.l.b16 %v2289
        %v2478 = vunpack.c.h.b16 %v2289
        %v2479 = vunpack.c.l.b16 %v2290
        %v2480 = vunpack.c.h.b16 %v2290
        %v2481 = vunpack.c.l.b16 %v2291
        %v2482 = vunpack.c.h.b16 %v2291
        %v2483 = vunpack.c.l.b16 %v2292
        %v2484 = vunpack.c.h.b16 %v2292
        %v2485 = vunpack.c.l.b16 %v2293
        %v2486 = vunpack.c.h.b16 %v2293
        %v2487 = vunpack.c.l.b16 %v2294
        %v2488 = vunpack.c.h.b16 %v2294
        %v2489 = vunpack.c.l.b16 %v2295
        %v2490 = vunpack.c.h.b16 %v2295
        %v2491 = vunpack.c.l.b16 %v2296
        %v2492 = vunpack.c.h.b16 %v2296
        %v2493 = vunpack.c.l.b16 %v2297
        %v2494 = vunpack.c.h.b16 %v2297
        %v2495 = vunpack.c.l.b16 %v2298
        %v2496 = vunpack.c.h.b16 %v2298
        %v2497 = vunpack.c.l.b16 %v2299
        %v2498 = vunpack.c.h.b16 %v2299
        %v2499 = vunpack.c.l.b16 %v2300
        %v2500 = vunpack.c.h.b16 %v2300
        %v2501 = vunpack.c.l.b16 %v2301
        %v2502 = vunpack.c.h.b16 %v2301
        %v2503 = vunpack.c.l.b16 %v2302
        %v2504 = vunpack.c.h.b16 %v2302
        %v2505 = vpack.c.b16 %v2381, %v2377
        %v2506 = vpack.c.b16 %v2382, %v2378
        %v2507 = vpack.c.b16 %v2383, %v2379
        %v2508 = vpack.c.b16 %v2384, %v2380
        %v2509 = vpack.c.b16 %v2389, %v2385
        %v2510 = vpack.c.b16 %v2390, %v2386
        %v2511 = vpack.c.b16 %v2391, %v2387
        %v2512 = vpack.c.b16 %v2392, %v2388
        %v2513 = vpack.c.b16 %v2397, %v2393
        %v2514 = vpack.c.b16 %v2398, %v2394
        %v2515 = vpack.c.b16 %v2399, %v2395
        %v2516 = vpack.c.b16 %v2400, %v2396
        %v2517 = vpack.c.b16 %v2405, %v2401
        %v2518 = vpack.c.b16 %v2406, %v2402
        %v2519 = vpack.c.b16 %v2407, %v2403
        %v2520 = vpack.c.b16 %v2408, %v2404
        %v2521 = vpack.c.b16 %v2413, %v2409
        %v2522 = vpack.c.b16 %v2414, %v2410
        %v2523 = vpack.c.b16 %v2415, %v2411
        %v2524 = vpack.c.b16 %v2416, %v2412
        %v2525 = vpack.c.b16 %v2421, %v2417
        %v2526 = vpack.c.b16 %v2422, %v2418
        %v2527 = vpack.c.b16 %v2423, %v2419
        %v2528 = vpack.c.b16 %v2424, %v2420
        %v2529 = vpack.c.b16 %v2429, %v2425
        %v2530 = vpack.c.b16 %v2430, %v2426
        %v2531 = vpack.c.b16 %v2431, %v2427
        %v2532 = vpack.c.b16 %v2432, %v2428
        %v2533 = vpack.c.b16 %v2437, %v2433
        %v2534 = vpack.c.b16 %v2438, %v2434
        %v2535 = vpack.c.b16 %v2439, %v2435
        %v2536 = vpack.c.b16 %v2440, %v2436
        %v2537 = vpack.c.b16 %v2445, %v2441
        %v2538 = vpack.c.b16 %v2446, %v2442
        %v2539 = vpack.c.b16 %v2447, %v2443
        %v2540 = vpack.c.b16 %v2448, %v2444
        %v2541 = vpack.c.b16 %v2453, %v2449
        %v2542 = vpack.c.b16 %v2454, %v2450
        %v2543 = vpack.c.b16 %v2455, %v2451
        %v2544 = vpack.c.b16 %v2456, %v2452
        %v2545 = vpack.c.b16 %v2461, %v2457
        %v2546 = vpack.c.b16 %v2462, %v2458
        %v2547 = vpack.c.b16 %v2463, %v2459
        %v2548 = vpack.c.b16 %v2464, %v2460
        %v2549 = vpack.c.b16 %v2469, %v2465
        %v2550 = vpack.c.b16 %v2470, %v2466
        %v2551 = vpack.c.b16 %v2471, %v2467
        %v2552 = vpack.c.b16 %v2472, %v2468
        %v2553 = vpack.c.b16 %v2477, %v2473
        %v2554 = vpack.c.b16 %v2478, %v2474
        %v2555 = vpack.c.b16 %v2479, %v2475
        %v2556 = vpack.c.b16 %v2480, %v2476
        %v2557 = vpack.c.b16 %v2485, %v2481
        %v2558 = vpack.c.b16 %v2486, %v2482
        %v2559 = vpack.c.b16 %v2487, %v2483
        %v2560 = vpack.c.b16 %v2488, %v2484
        %v2561 = vpack.c.b16 %v2493, %v2489
        %v2562 = vpack.c.b16 %v2494, %v2490
        %v2563 = vpack.c.b16 %v2495, %v2491
        %v2564 = vpack.c.b16 %v2496, %v2492
        %v2565 = vpack.c.b16 %v2501, %v2497
        %v2566 = vpack.c.b16 %v2502, %v2498
        %v2567 = vpack.c.b16 %v2503, %v2499
        %v2568 = vpack.c.b16 %v2504, %v2500
        %2633 = vmatpush.bf16.msra.mxu0 %v2533
        %2634 = vmatpush.bf16.msra.mxu0 %v2529
        %2635 = vmatpush.bf16.msra.mxu0 %v2525
        %2636 = vmatpush.bf16.msra.mxu0 %v2521
        %2637 = vmatpush.bf16.msra.mxu0 %v2517
        %2638 = vmatpush.bf16.msra.mxu0 %v2513
        %2639 = vmatpush.bf16.msra.mxu0 %v2509
        %2640 = vmatpush.bf16.msra.mxu0 %v2505
        %2641 = vmatmul.bf16.gmra.mxu0 %v2237
        %v2642 = vpop.f32.mrf.mxu0
        %v2643 = vadd.f32 %v2305, %v2642
        %v2644 = vpop.f32.mrf.mxu0
        %v2645 = vadd.f32 %v2305, %v2644
        %2646 = vdwg.mxu0
        %2647 = vmatpush.bf16.msra.mxu0 %v2565
        %2648 = vmatpush.bf16.msra.mxu0 %v2561
        %2649 = vmatpush.bf16.msra.mxu0 %v2557
        %2650 = vmatpush.bf16.msra.mxu0 %v2553
        %2651 = vmatpush.bf16.msra.mxu0 %v2549
        %2652 = vmatpush.bf16.msra.mxu0 %v2545
        %2653 = vmatpush.bf16.msra.mxu0 %v2541
        %2654 = vmatpush.bf16.msra.mxu0 %v2537
        %2655 = vmatmul.bf16.gmra.mxu0 %v2238
        %v2656 = vpop.f32.mrf.mxu0
        %v2657 = vadd.f32 %v2643, %v2656
        %v2658 = vpop.f32.mrf.mxu0
        %v2659 = vadd.f32 %v2645, %v2658
        %2660 = vdwg.mxu0
        %2661 = vmatpush.bf16.msra.mxu0 %v2534
        %2662 = vmatpush.bf16.msra.mxu0 %v2530
        %2663 = vmatpush.bf16.msra.mxu0 %v2526
        %2664 = vmatpush.bf16.msra.mxu0 %v2522
        %2665 = vmatpush.bf16.msra.mxu0 %v2518
        %2666 = vmatpush.bf16.msra.mxu0 %v2514
        %2667 = vmatpush.bf16.msra.mxu0 %v2510
        %2668 = vmatpush.bf16.msra.mxu0 %v2506
        %2669 = vmatmul.bf16.gmra.mxu0 %v2237
        %v2670 = vpop.f32.mrf.mxu0
        %v2671 = vadd.f32 %v2306, %v2670
        %v2672 = vpop.f32.mrf.mxu0
        %v2673 = vadd.f32 %v2306, %v2672
        %2674 = vdwg.mxu0
        %2675 = vmatpush.bf16.msra.mxu0 %v2566
        %2676 = vmatpush.bf16.msra.mxu0 %v2562
        %2677 = vmatpush.bf16.msra.mxu0 %v2558
        %2678 = vmatpush.bf16.msra.mxu0 %v2554
        %2679 = vmatpush.bf16.msra.mxu0 %v2550
        %2680 = vmatpush.bf16.msra.mxu0 %v2546
        %2681 = vmatpush.bf16.msra.mxu0 %v2542
        %2682 = vmatpush.bf16.msra.mxu0 %v2538
        %2683 = vmatmul.bf16.gmra.mxu0 %v2238
        %v2684 = vpop.f32.mrf.mxu0
        %v2685 = vadd.f32 %v2671, %v2684
        %v2686 = vpop.f32.mrf.mxu0
        %v2687 = vadd.f32 %v2673, %v2686
        %2688 = vdwg.mxu0
        %2689 = vmatpush.bf16.msra.mxu0 %v2535
        %2690 = vmatpush.bf16.msra.mxu0 %v2531
        %2691 = vmatpush.bf16.msra.mxu0 %v2527
        %2692 = vmatpush.bf16.msra.mxu0 %v2523
        %2693 = vmatpush.bf16.msra.mxu0 %v2519
        %2694 = vmatpush.bf16.msra.mxu0 %v2515
        %2695 = vmatpush.bf16.msra.mxu0 %v2511
        %2696 = vmatpush.bf16.msra.mxu0 %v2507
        %2697 = vmatmul.bf16.gmra.mxu0 %v2237
        %v2698 = vpop.f32.mrf.mxu0
        %v2699 = vadd.f32 %v2307, %v2698
        %v2700 = vpop.f32.mrf.mxu0
        %v2701 = vadd.f32 %v2307, %v2700
        %2702 = vdwg.mxu0
        %2703 = vmatpush.bf16.msra.mxu0 %v2567
        %2704 = vmatpush.bf16.msra.mxu0 %v2563
        %2705 = vmatpush.bf16.msra.mxu0 %v2559
        %2706 = vmatpush.bf16.msra.mxu0 %v2555
        %2707 = vmatpush.bf16.msra.mxu0 %v2551
        %2708 = vmatpush.bf16.msra.mxu0 %v2547
        %2709 = vmatpush.bf16.msra.mxu0 %v2543
        %2710 = vmatpush.bf16.msra.mxu0 %v2539
        %2711 = vmatmul.bf16.gmra.mxu0 %v2238
        %v2712 = vpop.f32.mrf.mxu0
        %v2713 = vadd.f32 %v2699, %v2712
        %v2714 = vpop.f32.mrf.mxu0
        %v2715 = vadd.f32 %v2701, %v2714
        %2716 = vdwg.mxu0
        %2717 = vmatpush.bf16.msra.mxu0 %v2536
        %2718 = vmatpush.bf16.msra.mxu0 %v2532
        %2719 = vmatpush.bf16.msra.mxu0 %v2528
        %2720 = vmatpush.bf16.msra.mxu0 %v2524
        %2721 = vmatpush.bf16.msra.mxu0 %v2520
        %2722 = vmatpush.bf16.msra.mxu0 %v2516
        %2723 = vmatpush.bf16.msra.mxu0 %v2512
        %2724 = vmatpush.bf16.msra.mxu0 %v2508
        %2725 = vmatmul.bf16.gmra.mxu0 %v2237
        %v2726 = vpop.f32.mrf.mxu0
        %v2727 = vadd.f32 %v2308, %v2726
        %v2728 = vpop.f32.mrf.mxu0
        %v2729 = vadd.f32 %v2308, %v2728
        %2730 = vdwg.mxu0
        %2731 = vmatpush.bf16.msra.mxu0 %v2568
        %2732 = vmatpush.bf16.msra.mxu0 %v2564
        %2733 = vmatpush.bf16.msra.mxu0 %v2560
        %2734 = vmatpush.bf16.msra.mxu0 %v2556
        %2735 = vmatpush.bf16.msra.mxu0 %v2552
        %2736 = vmatpush.bf16.msra.mxu0 %v2548
        %2737 = vmatpush.bf16.msra.mxu0 %v2544
        %2738 = vmatpush.bf16.msra.mxu0 %v2540
        %2739 = vmatmul.bf16.gmra.mxu0 %v2238
        %v2740 = vpop.f32.mrf.mxu0
        %v2741 = vadd.f32 %v2727, %v2740
        %v2742 = vpop.f32.mrf.mxu0
        %v2743 = vadd.f32 %v2729, %v2742
        %2744 = vdwg.mxu0
        %v2745 = vmul.f32 %v2657, %v2657
        %v2746 = vmul.f32 %v2685, %v2685
        %v2747 = vmul.f32 %v2713, %v2713
        %v2748 = vmul.f32 %v2741, %v2741
        %v2749 = vmul.f32 %v2659, %v2659
        %v2750 = vmul.f32 %v2687, %v2687
        %v2751 = vmul.f32 %v2715, %v2715
        %v2752 = vmul.f32 %v2743, %v2743
        %v2753 = vmul.f32 %v2657, %v2745
        %v2754 = vmul.f32 %v2685, %v2746
        %v2755 = vmul.f32 %v2713, %v2747
        %v2756 = vmul.f32 %v2741, %v2748
        %v2757 = vmul.f32 %v2659, %v2749
        %v2758 = vmul.f32 %v2687, %v2750
        %v2759 = vmul.f32 %v2715, %v2751
        %v2760 = vmul.f32 %v2743, %v2752
        %v2761 = vmul.f32 %v2753, 0.044715
        %v2762 = vmul.f32 %v2754, 0.044715
        %v2763 = vmul.f32 %v2755, 0.044715
        %v2764 = vmul.f32 %v2756, 0.044715
        %v2765 = vmul.f32 %v2757, 0.044715
        %v2766 = vmul.f32 %v2758, 0.044715
        %v2767 = vmul.f32 %v2759, 0.044715
        %v2768 = vmul.f32 %v2760, 0.044715
        %v2769 = vadd.f32 %v2657, %v2761
        %v2770 = vadd.f32 %v2685, %v2762
        %v2771 = vadd.f32 %v2713, %v2763
        %v2772 = vadd.f32 %v2741, %v2764
        %v2773 = vadd.f32 %v2659, %v2765
        %v2774 = vadd.f32 %v2687, %v2766
        %v2775 = vadd.f32 %v2715, %v2767
        %v2776 = vadd.f32 %v2743, %v2768
        %v2777 = vmul.f32 %v2769, 0.7978846
        %v2778 = vmul.f32 %v2770, 0.7978846
        %v2779 = vmul.f32 %v2771, 0.7978846
        %v2780 = vmul.f32 %v2772, 0.7978846
        %v2781 = vmul.f32 %v2773, 0.7978846
        %v2782 = vmul.f32 %v2774, 0.7978846
        %v2783 = vmul.f32 %v2775, 0.7978846
        %v2784 = vmul.f32 %v2776, 0.7978846
        %v2785 = vtanh.pop %v2777
        %v2786 = vtanh.pop %v2778
        %v2787 = vtanh.pop %v2779
        %v2788 = vtanh.pop %v2780
        %v2789 = vtanh.pop %v2781
        %v2790 = vtanh.pop %v2782
        %v2791 = vtanh.pop %v2783
        %v2792 = vtanh.pop %v2784
        %v2793 = vadd.f32 %v2785, 1.0
        %v2794 = vadd.f32 %v2786, 1.0
        %v2795 = vadd.f32 %v2787, 1.0
        %v2796 = vadd.f32 %v2788, 1.0
        %v2797 = vadd.f32 %v2789, 1.0
        %v2798 = vadd.f32 %v2790, 1.0
        %v2799 = vadd.f32 %v2791, 1.0
        %v2800 = vadd.f32 %v2792, 1.0
        %v2801 = vmul.f32 %v2793, 0.5
        %v2802 = vmul.f32 %v2794, 0.5
        %v2803 = vmul.f32 %v2795, 0.5
        %v2804 = vmul.f32 %v2796, 0.5
        %v2805 = vmul.f32 %v2797, 0.5
        %v2806 = vmul.f32 %v2798, 0.5
        %v2807 = vmul.f32 %v2799, 0.5
        %v2808 = vmul.f32 %v2800, 0.5
        %v2809 = vmul.f32 %v2657, %v2801
        %v2810 = vmul.f32 %v2685, %v2802
        %v2811 = vmul.f32 %v2713, %v2803
        %v2812 = vmul.f32 %v2741, %v2804
        %v2813 = vmul.f32 %v2659, %v2805
        %v2814 = vmul.f32 %v2687, %v2806
        %v2815 = vmul.f32 %v2715, %v2807
        %v2816 = vmul.f32 %v2743, %v2808
        %v2817 = vpack.c.bf16 %v2813, %v2809
        %v2818 = vpack.c.bf16 %v2814, %v2810
        %v2819 = vpack.c.bf16 %v2815, %v2811
        %v2820 = vpack.c.bf16 %v2816, %v2812
        %v2821 = vld [vmem:[%s14] sm:$0xff]
        %v2822 = vld [vmem:[%s14 + $0x8] sm:$0xff]
        %v2823 = vld [vmem:[%s14 + $0x10] sm:$0xff]
        %v2824 = vld [vmem:[%s14 + $0x18] sm:$0xff]
        %v2825 = vld [vmem:[%s14 + $0x20] sm:$0xff]
        %v2826 = vld [vmem:[%s14 + $0x28] sm:$0xff]
        %v2827 = vld [vmem:[%s14 + $0x30] sm:$0xff]
        %v2828 = vld [vmem:[%s14 + $0x38] sm:$0xff]
        %v2829 = vld [vmem:[%s14 + $0x40] sm:$0xff]
        %v2830 = vld [vmem:[%s14 + $0x48] sm:$0xff]
        %v2831 = vld [vmem:[%s14 + $0x50] sm:$0xff]
        %v2832 = vld [vmem:[%s14 + $0x58] sm:$0xff]
        %v2833 = vld [vmem:[%s14 + $0x60] sm:$0xff]
        %v2834 = vld [vmem:[%s14 + $0x68] sm:$0xff]
        %v2835 = vld [vmem:[%s14 + $0x70] sm:$0xff]
        %v2836 = vld [vmem:[%s14 + $0x78] sm:$0xff]
        %v2837 = vld [vmem:[%s14 + $0x80] sm:$0xff]
        %v2838 = vld [vmem:[%s14 + $0x88] sm:$0xff]
        %v2839 = vld [vmem:[%s14 + $0x90] sm:$0xff]
        %v2840 = vld [vmem:[%s14 + $0x98] sm:$0xff]
        %v2841 = vld [vmem:[%s14 + $0xa0] sm:$0xff]
        %v2842 = vld [vmem:[%s14 + $0xa8] sm:$0xff]
        %v2843 = vld [vmem:[%s14 + $0xb0] sm:$0xff]
        %v2844 = vld [vmem:[%s14 + $0xb8] sm:$0xff]
        %v2845 = vld [vmem:[%s14 + $0xc0] sm:$0xff]
        %v2846 = vld [vmem:[%s14 + $0xc8] sm:$0xff]
        %v2847 = vld [vmem:[%s14 + $0xd0] sm:$0xff]
        %v2848 = vld [vmem:[%s14 + $0xd8] sm:$0xff]
        %v2849 = vld [vmem:[%s14 + $0xe0] sm:$0xff]
        %v2850 = vld [vmem:[%s14 + $0xe8] sm:$0xff]
        %v2851 = vld [vmem:[%s14 + $0xf0] sm:$0xff]
        %v2852 = vld [vmem:[%s14 + $0xf8] sm:$0xff]
        %v2853 = vld [vmem:[%s14 + $0x100] sm:$0xff]
        %v2854 = vld [vmem:[%s14 + $0x108] sm:$0xff]
        %v2855 = vld [vmem:[%s14 + $0x110] sm:$0xff]
        %v2856 = vld [vmem:[%s14 + $0x118] sm:$0xff]
        %v2857 = vld [vmem:[%s14 + $0x120] sm:$0xff]
        %v2858 = vld [vmem:[%s14 + $0x128] sm:$0xff]
        %v2859 = vld [vmem:[%s14 + $0x130] sm:$0xff]
        %v2860 = vld [vmem:[%s14 + $0x138] sm:$0xff]
        %v2861 = vld [vmem:[%s14 + $0x140] sm:$0xff]
        %v2862 = vld [vmem:[%s14 + $0x148] sm:$0xff]
        %v2863 = vld [vmem:[%s14 + $0x150] sm:$0xff]
        %v2864 = vld [vmem:[%s14 + $0x158] sm:$0xff]
        %v2865 = vld [vmem:[%s14 + $0x160] sm:$0xff]
        %v2866 = vld [vmem:[%s14 + $0x168] sm:$0xff]
        %v2867 = vld [vmem:[%s14 + $0x170] sm:$0xff]
        %v2868 = vld [vmem:[%s14 + $0x178] sm:$0xff]
        %v2869 = vld [vmem:[%s14 + $0x180] sm:$0xff]
        %v2870 = vld [vmem:[%s14 + $0x188] sm:$0xff]
        %v2871 = vld [vmem:[%s14 + $0x190] sm:$0xff]
        %v2872 = vld [vmem:[%s14 + $0x198] sm:$0xff]
        %v2873 = vld [vmem:[%s14 + $0x1a0] sm:$0xff]
        %v2874 = vld [vmem:[%s14 + $0x1a8] sm:$0xff]
        %v2875 = vld [vmem:[%s14 + $0x1b0] sm:$0xff]
        %v2876 = vld [vmem:[%s14 + $0x1b8] sm:$0xff]
        %v2877 = vld [vmem:[%s14 + $0x1c0] sm:$0xff]
        %v2878 = vld [vmem:[%s14 + $0x1c8] sm:$0xff]
        %v2879 = vld [vmem:[%s14 + $0x1d0] sm:$0xff]
        %v2880 = vld [vmem:[%s14 + $0x1d8] sm:$0xff]
        %v2881 = vld [vmem:[%s14 + $0x1e0] sm:$0xff]
        %v2882 = vld [vmem:[%s14 + $0x1e8] sm:$0xff]
        %v2883 = vld [vmem:[%s14 + $0x1f0] sm:$0xff]
        %v2884 = vld [vmem:[%s14 + $0x1f8] sm:$0xff]
        %v2885 = vld [vmem:[#allocation11] sm:$0x3]
        %v2887 = vperm.slane %v2885, 0
        %v2888 = vperm.slane %v2885, 1
        %v2955 = vunpack.c.l.b16 %v2821
        %v2956 = vunpack.c.h.b16 %v2821
        %v2957 = vunpack.c.l.b16 %v2822
        %v2958 = vunpack.c.h.b16 %v2822
        %v2959 = vunpack.c.l.b16 %v2823
        %v2960 = vunpack.c.h.b16 %v2823
        %v2961 = vunpack.c.l.b16 %v2824
        %v2962 = vunpack.c.h.b16 %v2824
        %v2963 = vunpack.c.l.b16 %v2825
        %v2964 = vunpack.c.h.b16 %v2825
        %v2965 = vunpack.c.l.b16 %v2826
        %v2966 = vunpack.c.h.b16 %v2826
        %v2967 = vunpack.c.l.b16 %v2827
        %v2968 = vunpack.c.h.b16 %v2827
        %v2969 = vunpack.c.l.b16 %v2828
        %v2970 = vunpack.c.h.b16 %v2828
        %v2971 = vunpack.c.l.b16 %v2829
        %v2972 = vunpack.c.h.b16 %v2829
        %v2973 = vunpack.c.l.b16 %v2830
        %v2974 = vunpack.c.h.b16 %v2830
        %v2975 = vunpack.c.l.b16 %v2831
        %v2976 = vunpack.c.h.b16 %v2831
        %v2977 = vunpack.c.l.b16 %v2832
        %v2978 = vunpack.c.h.b16 %v2832
        %v2979 = vunpack.c.l.b16 %v2833
        %v2980 = vunpack.c.h.b16 %v2833
        %v2981 = vunpack.c.l.b16 %v2834
        %v2982 = vunpack.c.h.b16 %v2834
        %v2983 = vunpack.c.l.b16 %v2835
        %v2984 = vunpack.c.h.b16 %v2835
        %v2985 = vunpack.c.l.b16 %v2836
        %v2986 = vunpack.c.h.b16 %v2836
        %v2987 = vunpack.c.l.b16 %v2837
        %v2988 = vunpack.c.h.b16 %v2837
        %v2989 = vunpack.c.l.b16 %v2838
        %v2990 = vunpack.c.h.b16 %v2838
        %v2991 = vunpack.c.l.b16 %v2839
        %v2992 = vunpack.c.h.b16 %v2839
        %v2993 = vunpack.c.l.b16 %v2840
        %v2994 = vunpack.c.h.b16 %v2840
        %v2995 = vunpack.c.l.b16 %v2841
        %v2996 = vunpack.c.h.b16 %v2841
        %v2997 = vunpack.c.l.b16 %v2842
        %v2998 = vunpack.c.h.b16 %v2842
        %v2999 = vunpack.c.l.b16 %v2843
        %v3000 = vunpack.c.h.b16 %v2843
        %v3001 = vunpack.c.l.b16 %v2844
        %v3002 = vunpack.c.h.b16 %v2844
        %v3003 = vunpack.c.l.b16 %v2845
        %v3004 = vunpack.c.h.b16 %v2845
        %v3005 = vunpack.c.l.b16 %v2846
        %v3006 = vunpack.c.h.b16 %v2846
        %v3007 = vunpack.c.l.b16 %v2847
        %v3008 = vunpack.c.h.b16 %v2847
        %v3009 = vunpack.c.l.b16 %v2848
        %v3010 = vunpack.c.h.b16 %v2848
        %v3011 = vunpack.c.l.b16 %v2849
        %v3012 = vunpack.c.h.b16 %v2849
        %v3013 = vunpack.c.l.b16 %v2850
        %v3014 = vunpack.c.h.b16 %v2850
        %v3015 = vunpack.c.l.b16 %v2851
        %v3016 = vunpack.c.h.b16 %v2851
        %v3017 = vunpack.c.l.b16 %v2852
        %v3018 = vunpack.c.h.b16 %v2852
        %v3019 = vunpack.c.l.b16 %v2853
        %v3020 = vunpack.c.h.b16 %v2853
        %v3021 = vunpack.c.l.b16 %v2854
        %v3022 = vunpack.c.h.b16 %v2854
        %v3023 = vunpack.c.l.b16 %v2855
        %v3024 = vunpack.c.h.b16 %v2855
        %v3025 = vunpack.c.l.b16 %v2856
        %v3026 = vunpack.c.h.b16 %v2856
        %v3027 = vunpack.c.l.b16 %v2857
        %v3028 = vunpack.c.h.b16 %v2857
        %v3029 = vunpack.c.l.b16 %v2858
        %v3030 = vunpack.c.h.b16 %v2858
        %v3031 = vunpack.c.l.b16 %v2859
        %v3032 = vunpack.c.h.b16 %v2859
        %v3033 = vunpack.c.l.b16 %v2860
        %v3034 = vunpack.c.h.b16 %v2860
        %v3035 = vunpack.c.l.b16 %v2861
        %v3036 = vunpack.c.h.b16 %v2861
        %v3037 = vunpack.c.l.b16 %v2862
        %v3038 = vunpack.c.h.b16 %v2862
        %v3039 = vunpack.c.l.b16 %v2863
        %v3040 = vunpack.c.h.b16 %v2863
        %v3041 = vunpack.c.l.b16 %v2864
        %v3042 = vunpack.c.h.b16 %v2864
        %v3043 = vunpack.c.l.b16 %v2865
        %v3044 = vunpack.c.h.b16 %v2865
        %v3045 = vunpack.c.l.b16 %v2866
        %v3046 = vunpack.c.h.b16 %v2866
        %v3047 = vunpack.c.l.b16 %v2867
        %v3048 = vunpack.c.h.b16 %v2867
        %v3049 = vunpack.c.l.b16 %v2868
        %v3050 = vunpack.c.h.b16 %v2868
        %v3051 = vunpack.c.l.b16 %v2869
        %v3052 = vunpack.c.h.b16 %v2869
        %v3053 = vunpack.c.l.b16 %v2870
        %v3054 = vunpack.c.h.b16 %v2870
        %v3055 = vunpack.c.l.b16 %v2871
        %v3056 = vunpack.c.h.b16 %v2871
        %v3057 = vunpack.c.l.b16 %v2872
        %v3058 = vunpack.c.h.b16 %v2872
        %v3059 = vunpack.c.l.b16 %v2873
        %v3060 = vunpack.c.h.b16 %v2873
        %v3061 = vunpack.c.l.b16 %v2874
        %v3062 = vunpack.c.h.b16 %v2874
        %v3063 = vunpack.c.l.b16 %v2875
        %v3064 = vunpack.c.h.b16 %v2875
        %v3065 = vunpack.c.l.b16 %v2876
        %v3066 = vunpack.c.h.b16 %v2876
        %v3067 = vunpack.c.l.b16 %v2877
        %v3068 = vunpack.c.h.b16 %v2877
        %v3069 = vunpack.c.l.b16 %v2878
        %v3070 = vunpack.c.h.b16 %v2878
        %v3071 = vunpack.c.l.b16 %v2879
        %v3072 = vunpack.c.h.b16 %v2879
        %v3073 = vunpack.c.l.b16 %v2880
        %v3074 = vunpack.c.h.b16 %v2880
        %v3075 = vunpack.c.l.b16 %v2881
        %v3076 = vunpack.c.h.b16 %v2881
        %v3077 = vunpack.c.l.b16 %v2882
        %v3078 = vunpack.c.h.b16 %v2882
        %v3079 = vunpack.c.l.b16 %v2883
        %v3080 = vunpack.c.h.b16 %v2883
        %v3081 = vunpack.c.l.b16 %v2884
        %v3082 = vunpack.c.h.b16 %v2884
        %v3083 = vpack.c.b16 %v2957, %v2955
        %v3084 = vpack.c.b16 %v2958, %v2956
        %v3085 = vpack.c.b16 %v2961, %v2959
        %v3086 = vpack.c.b16 %v2962, %v2960
        %v3087 = vpack.c.b16 %v2965, %v2963
        %v3088 = vpack.c.b16 %v2966, %v2964
        %v3089 = vpack.c.b16 %v2969, %v2967
        %v3090 = vpack.c.b16 %v2970, %v2968
        %v3091 = vpack.c.b16 %v2973, %v2971
        %v3092 = vpack.c.b16 %v2974, %v2972
        %v3093 = vpack.c.b16 %v2977, %v2975
        %v3094 = vpack.c.b16 %v2978, %v2976
        %v3095 = vpack.c.b16 %v2981, %v2979
        %v3096 = vpack.c.b16 %v2982, %v2980
        %v3097 = vpack.c.b16 %v2985, %v2983
        %v3098 = vpack.c.b16 %v2986, %v2984
        %v3099 = vpack.c.b16 %v2989, %v2987
        %v3100 = vpack.c.b16 %v2990, %v2988
        %v3101 = vpack.c.b16 %v2993, %v2991
        %v3102 = vpack.c.b16 %v2994, %v2992
        %v3103 = vpack.c.b16 %v2997, %v2995
        %v3104 = vpack.c.b16 %v2998, %v2996
        %v3105 = vpack.c.b16 %v3001, %v2999
        %v3106 = vpack.c.b16 %v3002, %v3000
        %v3107 = vpack.c.b16 %v3005, %v3003
        %v3108 = vpack.c.b16 %v3006, %v3004
        %v3109 = vpack.c.b16 %v3009, %v3007
        %v3110 = vpack.c.b16 %v3010, %v3008
        %v3111 = vpack.c.b16 %v3013, %v3011
        %v3112 = vpack.c.b16 %v3014, %v3012
        %v3113 = vpack.c.b16 %v3017, %v3015
        %v3114 = vpack.c.b16 %v3018, %v3016
        %v3115 = vpack.c.b16 %v3021, %v3019
        %v3116 = vpack.c.b16 %v3022, %v3020
        %v3117 = vpack.c.b16 %v3025, %v3023
        %v3118 = vpack.c.b16 %v3026, %v3024
        %v3119 = vpack.c.b16 %v3029, %v3027
        %v3120 = vpack.c.b16 %v3030, %v3028
        %v3121 = vpack.c.b16 %v3033, %v3031
        %v3122 = vpack.c.b16 %v3034, %v3032
        %v3123 = vpack.c.b16 %v3037, %v3035
        %v3124 = vpack.c.b16 %v3038, %v3036
        %v3125 = vpack.c.b16 %v3041, %v3039
        %v3126 = vpack.c.b16 %v3042, %v3040
        %v3127 = vpack.c.b16 %v3045, %v3043
        %v3128 = vpack.c.b16 %v3046, %v3044
        %v3129 = vpack.c.b16 %v3049, %v3047
        %v3130 = vpack.c.b16 %v3050, %v3048
        %v3131 = vpack.c.b16 %v3053, %v3051
        %v3132 = vpack.c.b16 %v3054, %v3052
        %v3133 = vpack.c.b16 %v3057, %v3055
        %v3134 = vpack.c.b16 %v3058, %v3056
        %v3135 = vpack.c.b16 %v3061, %v3059
        %v3136 = vpack.c.b16 %v3062, %v3060
        %v3137 = vpack.c.b16 %v3065, %v3063
        %v3138 = vpack.c.b16 %v3066, %v3064
        %v3139 = vpack.c.b16 %v3069, %v3067
        %v3140 = vpack.c.b16 %v3070, %v3068
        %v3141 = vpack.c.b16 %v3073, %v3071
        %v3142 = vpack.c.b16 %v3074, %v3072
        %v3143 = vpack.c.b16 %v3077, %v3075
        %v3144 = vpack.c.b16 %v3078, %v3076
        %v3145 = vpack.c.b16 %v3081, %v3079
        %v3146 = vpack.c.b16 %v3082, %v3080
        %3211 = vmatpush.bf16.msra.mxu0 %v3097
        %3212 = vmatpush.bf16.msra.mxu0 %v3095
        %3213 = vmatpush.bf16.msra.mxu0 %v3093
        %3214 = vmatpush.bf16.msra.mxu0 %v3091
        %3215 = vmatpush.bf16.msra.mxu0 %v3089
        %3216 = vmatpush.bf16.msra.mxu0 %v3087
        %3217 = vmatpush.bf16.msra.mxu0 %v3085
        %3218 = vmatpush.bf16.msra.mxu0 %v3083
        %3219 = vmatmul.bf16.gmra.mxu0 %v2817
        %v3220 = vpop.f32.mrf.mxu0
        %v3221 = vadd.f32 %v2887, %v3220
        %v3222 = vpop.f32.mrf.mxu0
        %v3223 = vadd.f32 %v2887, %v3222
        %3224 = vdwg.mxu0
        %3225 = vmatpush.bf16.msra.mxu0 %v3113
        %3226 = vmatpush.bf16.msra.mxu0 %v3111
        %3227 = vmatpush.bf16.msra.mxu0 %v3109
        %3228 = vmatpush.bf16.msra.mxu0 %v3107
        %3229 = vmatpush.bf16.msra.mxu0 %v3105
        %3230 = vmatpush.bf16.msra.mxu0 %v3103
        %3231 = vmatpush.bf16.msra.mxu0 %v3101
        %3232 = vmatpush.bf16.msra.mxu0 %v3099
        %3233 = vmatmul.bf16.gmra.mxu0 %v2818
        %v3234 = vpop.f32.mrf.mxu0
        %v3235 = vadd.f32 %v3221, %v3234
        %v3236 = vpop.f32.mrf.mxu0
        %v3237 = vadd.f32 %v3223, %v3236
        %3238 = vdwg.mxu0
        %3239 = vmatpush.bf16.msra.mxu0 %v3129
        %3240 = vmatpush.bf16.msra.mxu0 %v3127
        %3241 = vmatpush.bf16.msra.mxu0 %v3125
        %3242 = vmatpush.bf16.msra.mxu0 %v3123
        %3243 = vmatpush.bf16.msra.mxu0 %v3121
        %3244 = vmatpush.bf16.msra.mxu0 %v3119
        %3245 = vmatpush.bf16.msra.mxu0 %v3117
        %3246 = vmatpush.bf16.msra.mxu0 %v3115
        %3247 = vmatmul.bf16.gmra.mxu0 %v2819
        %v3248 = vpop.f32.mrf.mxu0
        %v3249 = vadd.f32 %v3235, %v3248
        %v3250 = vpop.f32.mrf.mxu0
        %v3251 = vadd.f32 %v3237, %v3250
        %3252 = vdwg.mxu0
        %3253 = vmatpush.bf16.msra.mxu0 %v3145
        %3254 = vmatpush.bf16.msra.mxu0 %v3143
        %3255 = vmatpush.bf16.msra.mxu0 %v3141
        %3256 = vmatpush.bf16.msra.mxu0 %v3139
        %3257 = vmatpush.bf16.msra.mxu0 %v3137
        %3258 = vmatpush.bf16.msra.mxu0 %v3135
        %3259 = vmatpush.bf16.msra.mxu0 %v3133
        %3260 = vmatpush.bf16.msra.mxu0 %v3131
        %3261 = vmatmul.bf16.gmra.mxu0 %v2820
        %v3262 = vpop.f32.mrf.mxu0
        %v3263 = vadd.f32 %v3249, %v3262
        %v3264 = vpop.f32.mrf.mxu0
        %v3265 = vadd.f32 %v3251, %v3264
        %3266 = vdwg.mxu0
        %3267 = vmatpush.bf16.msra.mxu0 %v3098
        %3268 = vmatpush.bf16.msra.mxu0 %v3096
        %3269 = vmatpush.bf16.msra.mxu0 %v3094
        %3270 = vmatpush.bf16.msra.mxu0 %v3092
        %3271 = vmatpush.bf16.msra.mxu0 %v3090
        %3272 = vmatpush.bf16.msra.mxu0 %v3088
        %3273 = vmatpush.bf16.msra.mxu0 %v3086
        %3274 = vmatpush.bf16.msra.mxu0 %v3084
        %3275 = vmatmul.bf16.gmra.mxu0 %v2817
        %v3276 = vpop.f32.mrf.mxu0
        %v3277 = vadd.f32 %v2888, %v3276
        %v3278 = vpop.f32.mrf.mxu0
        %v3279 = vadd.f32 %v2888, %v3278
        %3280 = vdwg.mxu0
        %3281 = vmatpush.bf16.msra.mxu0 %v3114
        %3282 = vmatpush.bf16.msra.mxu0 %v3112
        %3283 = vmatpush.bf16.msra.mxu0 %v3110
        %3284 = vmatpush.bf16.msra.mxu0 %v3108
        %3285 = vmatpush.bf16.msra.mxu0 %v3106
        %3286 = vmatpush.bf16.msra.mxu0 %v3104
        %3287 = vmatpush.bf16.msra.mxu0 %v3102
        %3288 = vmatpush.bf16.msra.mxu0 %v3100
        %3289 = vmatmul.bf16.gmra.mxu0 %v2818
        %v3290 = vpop.f32.mrf.mxu0
        %v3291 = vadd.f32 %v3277, %v3290
        %v3292 = vpop.f32.mrf.mxu0
        %v3293 = vadd.f32 %v3279, %v3292
        %3294 = vdwg.mxu0
        %3295 = vmatpush.bf16.msra.mxu0 %v3130
        %3296 = vmatpush.bf16.msra.mxu0 %v3128
        %3297 = vmatpush.bf16.msra.mxu0 %v3126
        %3298 = vmatpush.bf16.msra.mxu0 %v3124
        %3299 = vmatpush.bf16.msra.mxu0 %v3122
        %3300 = vmatpush.bf16.msra.mxu0 %v3120
        %3301 = vmatpush.bf16.msra.mxu0 %v3118
        %3302 = vmatpush.bf16.msra.mxu0 %v3116
        %3303 = vmatmul.bf16.gmra.mxu0 %v2819
        %v3304 = vpop.f32.mrf.mxu0
        %v3305 = vadd.f32 %v3291, %v3304
        %v3306 = vpop.f32.mrf.mxu0
        %v3307 = vadd.f32 %v3293, %v3306
        %3308 = vdwg.mxu0
        %3309 = vmatpush.bf16.msra.mxu0 %v3146
        %3310 = vmatpush.bf16.msra.mxu0 %v3144
        %3311 = vmatpush.bf16.msra.mxu0 %v3142
        %3312 = vmatpush.bf16.msra.mxu0 %v3140
        %3313 = vmatpush.bf16.msra.mxu0 %v3138
        %3314 = vmatpush.bf16.msra.mxu0 %v3136
        %3315 = vmatpush.bf16.msra.mxu0 %v3134
        %3316 = vmatpush.bf16.msra.mxu0 %v3132
        %3317 = vmatmul.bf16.gmra.mxu0 %v2820
        %v3318 = vpop.f32.mrf.mxu0
        %v3319 = vadd.f32 %v3305, %v3318
        %v3320 = vpop.f32.mrf.mxu0
        %v3321 = vadd.f32 %v3307, %v3320
        %3322 = vdwg.mxu0
        %v3323 = vadd.f32 %v2163, %v3263
        %v3324 = vadd.f32 %v2164, %v3319
        %v3325 = vadd.f32 %v2165, %v3265
        %v3326 = vadd.f32 %v2166, %v3321
        %v3327 = vld [vmem:[%s16] sm:$0x3]
        %v3328 = vld [vmem:[%s17] sm:$0x3]
        %v3329 = vadd.f32 %v3323, %v3324
        %3330 = vadd.xlane.f32.xlu0 %v3329
        %v3331 = vpop.xlane.xlu0 %3330
        %v3332 = vadd.f32 %v3325, %v3326
        %3333 = vadd.xlane.f32.xlu0 %v3332
        %v3334 = vpop.xlane.xlu0 %3333
        %v3335 = vmul.f32 %v3331, %v957
        %v3336 = vmul.f32 %v3334, %v957
        %v3337 = vsub.f32 %v3323, %v3335
        %v3338 = vsub.f32 %v3324, %v3335
        %v3339 = vsub.f32 %v3325, %v3336
        %v3340 = vsub.f32 %v3326, %v3336
        %v3341 = vmul.f32 %v3337, %v3337
        %v3342 = vmul.f32 %v3338, %v3338
        %v3343 = vmul.f32 %v3339, %v3339
        %v3344 = vmul.f32 %v3340, %v3340
        %v3345 = vadd.f32 %v3341, %v3342
        %3346 = vadd.xlane.f32.xlu0 %v3345
        %v3347 = vpop.xlane.xlu0 %3346
        %v3348 = vadd.f32 %v3343, %v3344
        %3349 = vadd.xlane.f32.xlu0 %v3348
        %v3350 = vpop.xlane.xlu0 %3349
        %v3351 = vmul.f32 %v3347, %v957
        %v3352 = vmul.f32 %v3350, %v957
        %v3353 = vadd.f32 %v3351, 1e-06
        %v3354 = vadd.f32 %v3352, 1e-06
        %v3355 = vrsqrt.pop %v3353
        %v3356 = vmul.f32 %v3355, %v3353
        %v3357 = vmul.f32 %v3356, %v3355
        %v3358 = vmul.f32 0.5, %v3357
        %v3359 = vsub.f32 1.5, %v3358
        %v3360 = vmul.f32 %v3355, %v3359
        %vm3361 = vweird.f32 %v3353
        %vm3362 = vweird.f32 %v3355
        %vm3363 = vmor %vm3361, %vm3362
        %v3364 = vsel %vm3363, %v3355, %v3360
        %v3365 = vrsqrt.pop %v3354
        %v3366 = vmul.f32 %v3365, %v3354
        %v3367 = vmul.f32 %v3366, %v3365
        %v3368 = vmul.f32 0.5, %v3367
        %v3369 = vsub.f32 1.5, %v3368
        %v3370 = vmul.f32 %v3365, %v3369
        %vm3371 = vweird.f32 %v3354
        %vm3372 = vweird.f32 %v3365
        %vm3373 = vmor %vm3371, %vm3372
        %v3374 = vsel %vm3373, %v3365, %v3370
        %v3375 = vmul.f32 %v3337, %v3364
        %v3376 = vmul.f32 %v3338, %v3364
        %v3377 = vmul.f32 %v3339, %v3374
        %v3378 = vmul.f32 %v3340, %v3374
        %v3380 = vperm.slane %v3327, 0
        %v3381 = vperm.slane %v3327, 1
        %v3384 = vmul.f32 %v3375, %v3380
        %v3385 = vmul.f32 %v3376, %v3381
        %v3386 = vmul.f32 %v3377, %v3380
        %v3387 = vmul.f32 %v3378, %v3381
        %v3389 = vperm.slane %v3328, 0
        %v3390 = vperm.slane %v3328, 1
        %v3393 = vadd.f32 %v3384, %v3389
        %v3394 = vadd.f32 %v3385, %v3390
        %v3395 = vadd.f32 %v3386, %v3389
        %v3396 = vadd.f32 %v3387, %v3390
        %3397 = vst [vmem:[%s667] sm:$0xff] %v3393
        %3398 = vst [vmem:[%s667 + $0x8] sm:$0xff] %v3394
        %3399 = vst [vmem:[%s667 + $0x10] sm:$0xff] %v3395
        %3400 = vst [vmem:[%s667 + $0x18] sm:$0xff] %v3396
        %p3401 = scmp.lt.s32.totalorder %s33, 1
        %s3402 = scalar_select %p3401, %s33, 1
        %s3403 = smul.addr %s3402, 4
        %s3404 = smul.addr %s3403, 8
        %s3405 = scalar_lea.vmem %s18, %s3404
        // Predicated region
        $region117: #{autoencoder_forward.2} parent=91 // pred_check
          %p3406 = pneg %p434
        $region118: #{autoencoder_forward.2} parent=91 // pred_check_branch
          %3408 = sbr.rel (%p3406) target = $region120
        $region119: #{autoencoder_forward.2} parent=91 // pred_region
          _
        $region120: #{autoencoder_forward.2} parent=91 // pred_fallthru
          _
      $region92: #{autoencoder_forward.2} parent=5 // pred_fallthru
        _
      %p3409 = scmp.le.s32.totalorder 2, %s28
      // Predicated region
      $region121: #{autoencoder_forward.2} parent=5 // pred_check
        %p3410 = pneg %p3409
      $region122: #{autoencoder_forward.2} parent=5 // pred_check_branch
        %3412 = sbr.rel (%p3410) target = $region124
      $region123: #{autoencoder_forward.2} parent=5 // pred_region
        %s3413 = ssub.s32 %s28, 2
        // Predicated region
        $region125: #{autoencoder_forward.2} parent=123 // pred_check
          %p3414 = pneg %p440
        $region126: #{autoencoder_forward.2} parent=123 // pred_check_branch
          %3416 = sbr.rel (%p3414) target = $region128
        $region127: #{autoencoder_forward.2} parent=123 // pred_region
          %p3417 = scmp.lt.s32.totalorder %s34, 1
          %s3418 = scalar_select %p3417, %s34, 1
          %s3419 = smul.addr %s3418, 4
          %s3420 = smul.addr %s3419, 8
          %s3421 = scalar_lea.vmem %s18, %s3420
        $region128: #{autoencoder_forward.2} parent=123 // pred_fallthru
          _
      $region124: #{autoencoder_forward.2} parent=5 // pred_fallthru
        _
    $region6: #{autoencoder_forward.2} parent=1 // loop_footer
      %s32 = sadd.s32 1, %s28
    $region7: #{autoencoder_forward.2} parent=1 // loop_footer_branch
      %27 = sbr.rel target = $region3
    $region8: #{autoencoder_forward.2} parent=1 // loop_exit
      _
    %3422 = vsyncpa [#allocation4], 1
    %s3423 = scalar_lea.sflag [#allocation4], 1
    %3424 = vsyncpa %s3423, 1
    %3425 = vsyncpa [#allocation6], 1
    %3426 = vsyncpa [#allocation9], 1
    %3427 = vsyncpa [#allocation12], 1

// kernel: autoencoder_forward.3
$region0: #{autoencoder_forward.3}
  #allocation0 [shape = 'u32[]', space=smem, size = 0x4, offset = 0x4, fixed_abs, tag = 'smem constant byte address 0x4 - core index']
  #allocation1 [shape = 'u32[72,128]{1,0:T(1,128)}', space=vmem, size = 0x9000, scoped, tag = 'internal scratch']
  #allocation2 [shape = 'f32[16,256]{1,0:T(8,128)}', space=vmem, size = 0x4000, scoped, tag = 'scratch operand']
  %s0 = inlined_call_operand.vmem [shape: f32[2,16,256], index: 0, kind: input, shape index: {}]
  %s1 = inlined_call_operand.hbm [shape: f32[1,256], index: 1, kind: input, shape index: {}]
  %s2 = inlined_call_operand.hbm [shape: f32[1,256], index: 2, kind: input, shape index: {}]
  %s3 = inlined_call_operand.vmem [shape: bf16[256,768], index: 3, kind: input, shape index: {}]
  %s4 = inlined_call_operand.vmem [shape: f32[1,768], index: 4, kind: input, shape index: {}]
  %s5 = inlined_call_operand.hbm [shape: bf16[256,256], index: 5, kind: input, shape index: {}]
  %s6 = inlined_call_operand.hbm [shape: f32[1,256], index: 6, kind: input, shape index: {}]
  %s7 = inlined_call_operand.hbm [shape: f32[1,256], index: 7, kind: input, shape index: {}]
  %s8 = inlined_call_operand.hbm [shape: f32[1,256], index: 8, kind: input, shape index: {}]
  %s9 = inlined_call_operand.vmem [shape: bf16[256,512], index: 9, kind: input, shape index: {}]
  %s10 = inlined_call_operand.vmem [shape: f32[1,512], index: 10, kind: input, shape index: {}]
  %s11 = inlined_call_operand.vmem [shape: bf16[512,256], index: 11, kind: input, shape index: {}]
  %s12 = inlined_call_operand.hbm [shape: f32[1,256], index: 12, kind: input, shape index: {}]
  %s13 = inlined_call_operand.hbm [shape: f32[1,256], index: 13, kind: input, shape index: {}]
  %s14 = inlined_call_operand.hbm [shape: f32[1,256], index: 14, kind: input, shape index: {}]
  %s15 = inlined_call_operand.hbm [shape: bf16[256,256], index: 15, kind: input, shape index: {}]
  %s16 = inlined_call_operand.hbm [shape: f32[1,256], index: 16, kind: input, shape index: {}]
  %s17 = inlined_call_operand.vmem [shape: f32[2,16,256], index: 17, kind: output, shape index: {}]
  %s18 = sld [smem:[#allocation0]]
  $region145: #{autoencoder_forward.3} parent=0
    _
  %s20 = ssub.s32 1, %s18
  %s21 = scalar_select 0, %s20, %s18
  $region1: #{autoencoder_forward.3} parent=0
    #allocation3 [shape = 'u8[1024]{0}', space=vmem, size = 0x400, scoped, tag = 'input window, operand 1, single buffered']
    #allocation4 [shape = 's32[2]{0}', space=sflag, size = 0x8, scoped, tag = 'scoped memory for autoencoder_forward.3']
    #allocation5 [shape = 'u8[1024]{0}', space=vmem, size = 0x400, scoped, tag = 'input window, operand 2, single buffered']
    #allocation6 [shape = 's32[1]{0}', space=sflag, size = 0x4, scoped, tag = 'scoped memory for autoencoder_forward.3']
    #allocation7 [shape = 'u8[131072]{0}', space=vmem, size = 0x20000, scoped, tag = 'input window, operand 5, single buffered']
    #allocation8 [shape = 'u8[1024]{0}', space=vmem, size = 0x400, scoped, tag = 'input window, operand 6, single buffered']
    #allocation9 [shape = 's32[1]{0}', space=sflag, size = 0x4, scoped, tag = 'scoped memory for autoencoder_forward.3']
    #allocation10 [shape = 'u8[1024]{0}', space=vmem, size = 0x400, scoped, tag = 'input window, operand 7, single buffered']
    #allocation11 [shape = 'u8[1024]{0}', space=vmem, size = 0x400, scoped, tag = 'input window, operand 8, single buffered']
    #allocation12 [shape = 's32[1]{0}', space=sflag, size = 0x4, scoped, tag = 'scoped memory for autoencoder_forward.3']
    #allocation13 [shape = 'u8[1024]{0}', space=vmem, size = 0x400, scoped, tag = 'input window, operand 12, single buffered']
    #allocation14 [shape = 'u8[1024]{0}', space=vmem, size = 0x400, scoped, tag = 'input window, operand 13, single buffered']
    #allocation15 [shape = 's32[1]{0}', space=sflag, size = 0x4, scoped, tag = 'scoped memory for autoencoder_forward.3']
    #allocation16 [shape = 'u8[1024]{0}', space=vmem, size = 0x400, scoped, tag = 'input window, operand 14, single buffered']
    #allocation17 [shape = 'u8[131072]{0}', space=vmem, size = 0x20000, scoped, tag = 'input window, operand 15, single buffered']
    #allocation18 [shape = 's32[1]{0}', space=sflag, size = 0x4, scoped, tag = 'scoped memory for autoencoder_forward.3']
    #allocation19 [shape = 'u8[1024]{0}', space=vmem, size = 0x400, scoped, tag = 'input window, operand 16, single buffered']
    %22 = vsyncpa [#allocation4], 0
    %23 = vsyncpa [#allocation6], 0
    %24 = vsyncpa [#allocation9], 0
    %25 = vsyncpa [#allocation12], 0
    %26 = vsyncpa [#allocation15], 0
    %27 = vsyncpa [#allocation18], 0
    loop: start=0, step=1, limit=4
    $region2: #{autoencoder_forward.3} parent=1 // loop_pre_header
      _
    $region3: #{autoencoder_forward.3} parent=1 // loop_header
      %s29 = sphi 0, %s33
      %p30 = scmp.ge.s32.totalorder %s29, 4
      %s39 = sphi 0, %s41
      %s42 = sphi 0, %s39
      %s43 = sphi 0, %s42
      %s59 = sphi 0, %s43
      %s63 = sphi 0, %s63
      %s65 = sphi 0, %s63
      %s66 = sphi 0, %s65
      %s80 = sphi 0, %s66
      %s84 = sphi 0, %s84
      %s86 = sphi 0, %s84
      %s87 = sphi 0, %s86
      %s101 = sphi 0, %s87
      %s105 = sphi 0, %s105
      %s107 = sphi 0, %s105
      %s108 = sphi 0, %s107
      %s122 = sphi 0, %s108
      %s126 = sphi 0, %s126
      %s128 = sphi 0, %s126
      %s129 = sphi 0, %s128
      %s143 = sphi 0, %s129
      %s147 = sphi 0, %s147
      %s149 = sphi 0, %s147
      %s150 = sphi 0, %s149
      %s164 = sphi 0, %s150
      %s168 = sphi 0, %s168
      %s170 = sphi 0, %s168
      %s171 = sphi 0, %s170
      %s185 = sphi 0, %s171
      %s189 = sphi 0, %s189
      %s191 = sphi 0, %s189
      %s192 = sphi 0, %s191
      %s206 = sphi 0, %s192
      %s210 = sphi 0, %s210
      %s212 = sphi 0, %s210
      %s213 = sphi 0, %s212
      %s227 = sphi 0, %s213
      %s231 = sphi 0, %s231
      %s233 = sphi 0, %s231
      %s234 = sphi 0, %s233
      %s248 = sphi 0, %s234
      %s252 = sphi 0, %s252
      %s254 = sphi 0, %s252
      %s255 = sphi 0, %s254
      %s269 = sphi 0, %s255
      %s273 = sphi 0, %s273
      %s275 = sphi 0, %s273
      %s276 = sphi 0, %s275
      %s290 = sphi 0, %s276
      %s294 = sphi 0, %s294
      %s296 = sphi 0, %s294
      %s297 = sphi 0, %s296
      %s311 = sphi 0, %s297
      %s315 = sphi 0, %s315
      %s317 = sphi 0, %s315
      %s318 = sphi 0, %s317
      %s332 = sphi 0, %s318
      %s336 = sphi 0, %s336
      %s338 = sphi 0, %s336
      %s339 = sphi 0, %s338
      %s353 = sphi 0, %s339
      %s357 = sphi 0, %s357
      %s359 = sphi 0, %s357
      %s360 = sphi 0, %s359
      %s374 = sphi 0, %s360
      %s378 = sphi 0, %s378
      %s380 = sphi 0, %s378
      %s381 = sphi 0, %s380
      %s395 = sphi 0, %s381
      %s401 = sphi 0, %s403
      %s404 = sphi 0, %s401
      %s405 = sphi 0, %s404
      %s421 = sphi 0, %s405
    $region4: #{autoencoder_forward.3} parent=1 // loop_header_branch
      %32 = sbr.rel (%p30) target = $region8
    $region5: #{autoencoder_forward.3} parent=1 // loop_body
      %s34 = ssub.s32 %s29, 1
      %s35 = ssub.s32 %s29, 2
      %s36 = sadd.s32 %s29, 1
      %s37 = ssub.s32 %s29, %s36
      %p38 = scmp.eq.s32.totalorder %s37, 0
      %s40 = sadd.s32 %s39, 1
      %s41 = scalar_select %p38, %s39, %s40
      %p44 = pneg %p38
      %p45 = scmp.eq.s32.totalorder %s29, 1
      %p46 = por %p44, %p45
      %p47 = scmp.ne.s32.totalorder %s39, %s42
      %p48 = scmp.eq.s32.totalorder %s29, 0
      %p49 = por %p47, %p48
      %p50 = scmp.ne.s32.totalorder %s39, %s42
      %p51 = scmp.eq.s32.totalorder %s34, 1
      %p52 = por %p50, %p51
      %p53 = scmp.ne.s32.totalorder %s42, %s43
      %p54 = scmp.eq.s32.totalorder %s34, 0
      %p55 = por %p53, %p54
      %p56 = scmp.ne.s32.totalorder %s42, %s43
      %p57 = scmp.eq.s32.totalorder %s35, 1
      %p58 = por %p56, %p57
      %p60 = scmp.ne.s32.totalorder %s43, %s59
      %p61 = scmp.eq.s32.totalorder %s35, 0
      %p62 = por %p60, %p61
      %s64 = sadd.s32 %s63, 1
      %p67 = scmp.eq.s32.totalorder %s29, 1
      %p68 = scmp.ne.s32.totalorder %s63, %s65
      %p69 = scmp.eq.s32.totalorder %s29, 0
      %p70 = por %p68, %p69
      %p71 = scmp.ne.s32.totalorder %s63, %s65
      %p72 = scmp.eq.s32.totalorder %s34, 1
      %p73 = por %p71, %p72
      %p74 = scmp.ne.s32.totalorder %s65, %s66
      %p75 = scmp.eq.s32.totalorder %s34, 0
      %p76 = por %p74, %p75
      %p77 = scmp.ne.s32.totalorder %s65, %s66
      %p78 = scmp.eq.s32.totalorder %s35, 1
      %p79 = por %p77, %p78
      %p81 = scmp.ne.s32.totalorder %s66, %s80
      %p82 = scmp.eq.s32.totalorder %s35, 0
      %p83 = por %p81, %p82
      %s85 = sadd.s32 %s84, 1
      %p88 = scmp.eq.s32.totalorder %s29, 1
      %p89 = scmp.ne.s32.totalorder %s84, %s86
      %p90 = scmp.eq.s32.totalorder %s29, 0
      %p91 = por %p89, %p90
      %p92 = scmp.ne.s32.totalorder %s84, %s86
      %p93 = scmp.eq.s32.totalorder %s34, 1
      %p94 = por %p92, %p93
      %p95 = scmp.ne.s32.totalorder %s86, %s87
      %p96 = scmp.eq.s32.totalorder %s34, 0
      %p97 = por %p95, %p96
      %p98 = scmp.ne.s32.totalorder %s86, %s87
      %p99 = scmp.eq.s32.totalorder %s35, 1
      %p100 = por %p98, %p99
      %p102 = scmp.ne.s32.totalorder %s87, %s101
      %p103 = scmp.eq.s32.totalorder %s35, 0
      %p104 = por %p102, %p103
      %s106 = sadd.s32 %s105, 1
      %p109 = scmp.eq.s32.totalorder %s29, 1
      %p110 = scmp.ne.s32.totalorder %s105, %s107
      %p111 = scmp.eq.s32.totalorder %s29, 0
      %p112 = por %p110, %p111
      %p113 = scmp.ne.s32.totalorder %s105, %s107
      %p114 = scmp.eq.s32.totalorder %s34, 1
      %p115 = por %p113, %p114
      %p116 = scmp.ne.s32.totalorder %s107, %s108
      %p117 = scmp.eq.s32.totalorder %s34, 0
      %p118 = por %p116, %p117
      %p119 = scmp.ne.s32.totalorder %s107, %s108
      %p120 = scmp.eq.s32.totalorder %s35, 1
      %p121 = por %p119, %p120
      %p123 = scmp.ne.s32.totalorder %s108, %s122
      %p124 = scmp.eq.s32.totalorder %s35, 0
      %p125 = por %p123, %p124
      %s127 = sadd.s32 %s126, 1
      %p130 = scmp.eq.s32.totalorder %s29, 1
      %p131 = scmp.ne.s32.totalorder %s126, %s128
      %p132 = scmp.eq.s32.totalorder %s29, 0
      %p133 = por %p131, %p132
      %p134 = scmp.ne.s32.totalorder %s126, %s128
      %p135 = scmp.eq.s32.totalorder %s34, 1
      %p136 = por %p134, %p135
      %p137 = scmp.ne.s32.totalorder %s128, %s129
      %p138 = scmp.eq.s32.totalorder %s34, 0
      %p139 = por %p137, %p138
      %p140 = scmp.ne.s32.totalorder %s128, %s129
      %p141 = scmp.eq.s32.totalorder %s35, 1
      %p142 = por %p140, %p141
      %p144 = scmp.ne.s32.totalorder %s129, %s143
      %p145 = scmp.eq.s32.totalorder %s35, 0
      %p146 = por %p144, %p145
      %s148 = sadd.s32 %s147, 1
      %p151 = scmp.eq.s32.totalorder %s29, 1
      %p152 = scmp.ne.s32.totalorder %s147, %s149
      %p153 = scmp.eq.s32.totalorder %s29, 0
      %p154 = por %p152, %p153
      %p155 = scmp.ne.s32.totalorder %s147, %s149
      %p156 = scmp.eq.s32.totalorder %s34, 1
      %p157 = por %p155, %p156
      %p158 = scmp.ne.s32.totalorder %s149, %s150
      %p159 = scmp.eq.s32.totalorder %s34, 0
      %p160 = por %p158, %p159
      %p161 = scmp.ne.s32.totalorder %s149, %s150
      %p162 = scmp.eq.s32.totalorder %s35, 1
      %p163 = por %p161, %p162
      %p165 = scmp.ne.s32.totalorder %s150, %s164
      %p166 = scmp.eq.s32.totalorder %s35, 0
      %p167 = por %p165, %p166
      %s169 = sadd.s32 %s168, 1
      %p172 = scmp.eq.s32.totalorder %s29, 1
      %p173 = scmp.ne.s32.totalorder %s168, %s170
      %p174 = scmp.eq.s32.totalorder %s29, 0
      %p175 = por %p173, %p174
      %p176 = scmp.ne.s32.totalorder %s168, %s170
      %p177 = scmp.eq.s32.totalorder %s34, 1
      %p178 = por %p176, %p177
      %p179 = scmp.ne.s32.totalorder %s170, %s171
      %p180 = scmp.eq.s32.totalorder %s34, 0
      %p181 = por %p179, %p180
      %p182 = scmp.ne.s32.totalorder %s170, %s171
      %p183 = scmp.eq.s32.totalorder %s35, 1
      %p184 = por %p182, %p183
      %p186 = scmp.ne.s32.totalorder %s171, %s185
      %p187 = scmp.eq.s32.totalorder %s35, 0
      %p188 = por %p186, %p187
      %s190 = sadd.s32 %s189, 1
      %p193 = scmp.eq.s32.totalorder %s29, 1
      %p194 = scmp.ne.s32.totalorder %s189, %s191
      %p195 = scmp.eq.s32.totalorder %s29, 0
      %p196 = por %p194, %p195
      %p197 = scmp.ne.s32.totalorder %s189, %s191
      %p198 = scmp.eq.s32.totalorder %s34, 1
      %p199 = por %p197, %p198
      %p200 = scmp.ne.s32.totalorder %s191, %s192
      %p201 = scmp.eq.s32.totalorder %s34, 0
      %p202 = por %p200, %p201
      %p203 = scmp.ne.s32.totalorder %s191, %s192
      %p204 = scmp.eq.s32.totalorder %s35, 1
      %p205 = por %p203, %p204
      %p207 = scmp.ne.s32.totalorder %s192, %s206
      %p208 = scmp.eq.s32.totalorder %s35, 0
      %p209 = por %p207, %p208
      %s211 = sadd.s32 %s210, 1
      %p214 = scmp.eq.s32.totalorder %s29, 1
      %p215 = scmp.ne.s32.totalorder %s210, %s212
      %p216 = scmp.eq.s32.totalorder %s29, 0
      %p217 = por %p215, %p216
      %p218 = scmp.ne.s32.totalorder %s210, %s212
      %p219 = scmp.eq.s32.totalorder %s34, 1
      %p220 = por %p218, %p219
      %p221 = scmp.ne.s32.totalorder %s212, %s213
      %p222 = scmp.eq.s32.totalorder %s34, 0
      %p223 = por %p221, %p222
      %p224 = scmp.ne.s32.totalorder %s212, %s213
      %p225 = scmp.eq.s32.totalorder %s35, 1
      %p226 = por %p224, %p225
      %p228 = scmp.ne.s32.totalorder %s213, %s227
      %p229 = scmp.eq.s32.totalorder %s35, 0
      %p230 = por %p228, %p229
      %s232 = sadd.s32 %s231, 1
      %p235 = scmp.eq.s32.totalorder %s29, 1
      %p236 = scmp.ne.s32.totalorder %s231, %s233
      %p237 = scmp.eq.s32.totalorder %s29, 0
      %p238 = por %p236, %p237
      %p239 = scmp.ne.s32.totalorder %s231, %s233
      %p240 = scmp.eq.s32.totalorder %s34, 1
      %p241 = por %p239, %p240
      %p242 = scmp.ne.s32.totalorder %s233, %s234
      %p243 = scmp.eq.s32.totalorder %s34, 0
      %p244 = por %p242, %p243
      %p245 = scmp.ne.s32.totalorder %s233, %s234
      %p246 = scmp.eq.s32.totalorder %s35, 1
      %p247 = por %p245, %p246
      %p249 = scmp.ne.s32.totalorder %s234, %s248
      %p250 = scmp.eq.s32.totalorder %s35, 0
      %p251 = por %p249, %p250
      %s253 = sadd.s32 %s252, 1
      %p256 = scmp.eq.s32.totalorder %s29, 1
      %p257 = scmp.ne.s32.totalorder %s252, %s254
      %p258 = scmp.eq.s32.totalorder %s29, 0
      %p259 = por %p257, %p258
      %p260 = scmp.ne.s32.totalorder %s252, %s254
      %p261 = scmp.eq.s32.totalorder %s34, 1
      %p262 = por %p260, %p261
      %p263 = scmp.ne.s32.totalorder %s254, %s255
      %p264 = scmp.eq.s32.totalorder %s34, 0
      %p265 = por %p263, %p264
      %p266 = scmp.ne.s32.totalorder %s254, %s255
      %p267 = scmp.eq.s32.totalorder %s35, 1
      %p268 = por %p266, %p267
      %p270 = scmp.ne.s32.totalorder %s255, %s269
      %p271 = scmp.eq.s32.totalorder %s35, 0
      %p272 = por %p270, %p271
      %s274 = sadd.s32 %s273, 1
      %p277 = scmp.eq.s32.totalorder %s29, 1
      %p278 = scmp.ne.s32.totalorder %s273, %s275
      %p279 = scmp.eq.s32.totalorder %s29, 0
      %p280 = por %p278, %p279
      %p281 = scmp.ne.s32.totalorder %s273, %s275
      %p282 = scmp.eq.s32.totalorder %s34, 1
      %p283 = por %p281, %p282
      %p284 = scmp.ne.s32.totalorder %s275, %s276
      %p285 = scmp.eq.s32.totalorder %s34, 0
      %p286 = por %p284, %p285
      %p287 = scmp.ne.s32.totalorder %s275, %s276
      %p288 = scmp.eq.s32.totalorder %s35, 1
      %p289 = por %p287, %p288
      %p291 = scmp.ne.s32.totalorder %s276, %s290
      %p292 = scmp.eq.s32.totalorder %s35, 0
      %p293 = por %p291, %p292
      %s295 = sadd.s32 %s294, 1
      %p298 = scmp.eq.s32.totalorder %s29, 1
      %p299 = scmp.ne.s32.totalorder %s294, %s296
      %p300 = scmp.eq.s32.totalorder %s29, 0
      %p301 = por %p299, %p300
      %p302 = scmp.ne.s32.totalorder %s294, %s296
      %p303 = scmp.eq.s32.totalorder %s34, 1
      %p304 = por %p302, %p303
      %p305 = scmp.ne.s32.totalorder %s296, %s297
      %p306 = scmp.eq.s32.totalorder %s34, 0
      %p307 = por %p305, %p306
      %p308 = scmp.ne.s32.totalorder %s296, %s297
      %p309 = scmp.eq.s32.totalorder %s35, 1
      %p310 = por %p308, %p309
      %p312 = scmp.ne.s32.totalorder %s297, %s311
      %p313 = scmp.eq.s32.totalorder %s35, 0
      %p314 = por %p312, %p313
      %s316 = sadd.s32 %s315, 1
      %p319 = scmp.eq.s32.totalorder %s29, 1
      %p320 = scmp.ne.s32.totalorder %s315, %s317
      %p321 = scmp.eq.s32.totalorder %s29, 0
      %p322 = por %p320, %p321
      %p323 = scmp.ne.s32.totalorder %s315, %s317
      %p324 = scmp.eq.s32.totalorder %s34, 1
      %p325 = por %p323, %p324
      %p326 = scmp.ne.s32.totalorder %s317, %s318
      %p327 = scmp.eq.s32.totalorder %s34, 0
      %p328 = por %p326, %p327
      %p329 = scmp.ne.s32.totalorder %s317, %s318
      %p330 = scmp.eq.s32.totalorder %s35, 1
      %p331 = por %p329, %p330
      %p333 = scmp.ne.s32.totalorder %s318, %s332
      %p334 = scmp.eq.s32.totalorder %s35, 0
      %p335 = por %p333, %p334
      %s337 = sadd.s32 %s336, 1
      %p340 = scmp.eq.s32.totalorder %s29, 1
      %p341 = scmp.ne.s32.totalorder %s336, %s338
      %p342 = scmp.eq.s32.totalorder %s29, 0
      %p343 = por %p341, %p342
      %p344 = scmp.ne.s32.totalorder %s336, %s338
      %p345 = scmp.eq.s32.totalorder %s34, 1
      %p346 = por %p344, %p345
      %p347 = scmp.ne.s32.totalorder %s338, %s339
      %p348 = scmp.eq.s32.totalorder %s34, 0
      %p349 = por %p347, %p348
      %p350 = scmp.ne.s32.totalorder %s338, %s339
      %p351 = scmp.eq.s32.totalorder %s35, 1
      %p352 = por %p350, %p351
      %p354 = scmp.ne.s32.totalorder %s339, %s353
      %p355 = scmp.eq.s32.totalorder %s35, 0
      %p356 = por %p354, %p355
      %s358 = sadd.s32 %s357, 1
      %p361 = scmp.eq.s32.totalorder %s29, 1
      %p362 = scmp.ne.s32.totalorder %s357, %s359
      %p363 = scmp.eq.s32.totalorder %s29, 0
      %p364 = por %p362, %p363
      %p365 = scmp.ne.s32.totalorder %s357, %s359
      %p366 = scmp.eq.s32.totalorder %s34, 1
      %p367 = por %p365, %p366
      %p368 = scmp.ne.s32.totalorder %s359, %s360
      %p369 = scmp.eq.s32.totalorder %s34, 0
      %p370 = por %p368, %p369
      %p371 = scmp.ne.s32.totalorder %s359, %s360
      %p372 = scmp.eq.s32.totalorder %s35, 1
      %p373 = por %p371, %p372
      %p375 = scmp.ne.s32.totalorder %s360, %s374
      %p376 = scmp.eq.s32.totalorder %s35, 0
      %p377 = por %p375, %p376
      %s379 = sadd.s32 %s378, 1
      %p382 = scmp.eq.s32.totalorder %s29, 1
      %p383 = scmp.ne.s32.totalorder %s378, %s380
      %p384 = scmp.eq.s32.totalorder %s29, 0
      %p385 = por %p383, %p384
      %p386 = scmp.ne.s32.totalorder %s378, %s380
      %p387 = scmp.eq.s32.totalorder %s34, 1
      %p388 = por %p386, %p387
      %p389 = scmp.ne.s32.totalorder %s380, %s381
      %p390 = scmp.eq.s32.totalorder %s34, 0
      %p391 = por %p389, %p390
      %p392 = scmp.ne.s32.totalorder %s380, %s381
      %p393 = scmp.eq.s32.totalorder %s35, 1
      %p394 = por %p392, %p393
      %p396 = scmp.ne.s32.totalorder %s381, %s395
      %p397 = scmp.eq.s32.totalorder %s35, 0
      %p398 = por %p396, %p397
      %s399 = ssub.s32 %s29, %s36
      %p400 = scmp.eq.s32.totalorder %s399, 0
      %s402 = sadd.s32 %s401, 1
      %s403 = scalar_select %p400, %s401, %s402
      %p406 = pneg %p400
      %p407 = scmp.eq.s32.totalorder %s29, 1
      %p408 = por %p406, %p407
      %p409 = scmp.ne.s32.totalorder %s401, %s404
      %p410 = scmp.eq.s32.totalorder %s29, 0
      %p411 = por %p409, %p410
      %p412 = scmp.ne.s32.totalorder %s401, %s404
      %p413 = scmp.eq.s32.totalorder %s34, 1
      %p414 = por %p412, %p413
      %p415 = scmp.ne.s32.totalorder %s404, %s405
      %p416 = scmp.eq.s32.totalorder %s34, 0
      %p417 = por %p415, %p416
      %p418 = scmp.ne.s32.totalorder %s404, %s405
      %p419 = scmp.eq.s32.totalorder %s35, 1
      %p420 = por %p418, %p419
      %p422 = scmp.ne.s32.totalorder %s405, %s421
      %p423 = scmp.eq.s32.totalorder %s35, 0
      %p424 = por %p422, %p423
      %p425 = scmp.le.s32.totalorder 1, %s29
      %p426 = scmp.lt.s32.totalorder %s29, 3
      %p427 = pnand %p425, %p426
      %p428 = pneg %p427
      // Predicated region
      $region9: #{autoencoder_forward.3} parent=5 // pred_check
        _
      $region10: #{autoencoder_forward.3} parent=5 // pred_check_branch
        %430 = sbr.rel (%p427) target = $region12
      $region11: #{autoencoder_forward.3} parent=5 // pred_region
        %s431 = ssub.s32 %s29, 1
        // Predicated region
        $region13: #{autoencoder_forward.3} parent=11 // pred_check
          %p432 = pneg %p76
        $region14: #{autoencoder_forward.3} parent=11 // pred_check_branch
          %434 = sbr.rel (%p432) target = $region16
        $region15: #{autoencoder_forward.3} parent=11 // pred_region
          %436 = vsyncadd [#allocation4], 0
          %s438 = sshll.u32 %s1, 4
          %s439 = int_to_ptr.hbm [resolvable:$true] %s438
          %s440 = sshll.u32 [#allocation3], 4
          %s441 = int_to_ptr.vmem [resolvable:$true] %s440
          %443 = dma.hbm_to_vmem [thread:$0]  %s439, 32, %s441, [#allocation4]
        $region16: #{autoencoder_forward.3} parent=11 // pred_fallthru
          _
        // Predicated region
        $region17: #{autoencoder_forward.3} parent=11 // pred_check
          %p444 = pneg %p97
        $region18: #{autoencoder_forward.3} parent=11 // pred_check_branch
          %446 = sbr.rel (%p444) target = $region20
        $region19: #{autoencoder_forward.3} parent=11 // pred_region
          %448 = vsyncadd [#allocation6], 0
          %s450 = sshll.u32 %s2, 4
          %s451 = int_to_ptr.hbm [resolvable:$true] %s450
          %s452 = sshll.u32 [#allocation5], 4
          %s453 = int_to_ptr.vmem [resolvable:$true] %s452
          %455 = dma.hbm_to_vmem [thread:$0]  %s451, 32, %s453, [#allocation6]
        $region20: #{autoencoder_forward.3} parent=11 // pred_fallthru
          _
        // Predicated region
        $region21: #{autoencoder_forward.3} parent=11 // pred_check
          %p456 = pneg %p118
        $region22: #{autoencoder_forward.3} parent=11 // pred_check_branch
          %458 = sbr.rel (%p456) target = $region24
        $region23: #{autoencoder_forward.3} parent=11 // pred_region
          _
        $region24: #{autoencoder_forward.3} parent=11 // pred_fallthru
          _
        // Predicated region
        $region25: #{autoencoder_forward.3} parent=11 // pred_check
          %p459 = pneg %p139
        $region26: #{autoencoder_forward.3} parent=11 // pred_check_branch
          %461 = sbr.rel (%p459) target = $region28
        $region27: #{autoencoder_forward.3} parent=11 // pred_region
          _
        $region28: #{autoencoder_forward.3} parent=11 // pred_fallthru
          _
        // Predicated region
        $region29: #{autoencoder_forward.3} parent=11 // pred_check
          %p462 = pneg %p160
        $region30: #{autoencoder_forward.3} parent=11 // pred_check_branch
          %464 = sbr.rel (%p462) target = $region32
        $region31: #{autoencoder_forward.3} parent=11 // pred_region
          %466 = vsyncadd [#allocation6], 0
          %s467 = sshll.u32 %s5, 4
          %s468 = int_to_ptr.hbm [resolvable:$true] %s467
          %s469 = sshll.u32 [#allocation7], 4
          %s470 = int_to_ptr.vmem [resolvable:$true] %s469
          %475 = dma.hbm_to_vmem [thread:$0]  %s468, 4096, %s470, [#allocation6], 128, 128, 8
        $region32: #{autoencoder_forward.3} parent=11 // pred_fallthru
          _
        // Predicated region
        $region33: #{autoencoder_forward.3} parent=11 // pred_check
          %p476 = pneg %p181
        $region34: #{autoencoder_forward.3} parent=11 // pred_check_branch
          %478 = sbr.rel (%p476) target = $region36
        $region35: #{autoencoder_forward.3} parent=11 // pred_region
          %480 = vsyncadd [#allocation9], 0
          %s482 = sshll.u32 %s6, 4
          %s483 = int_to_ptr.hbm [resolvable:$true] %s482
          %s484 = sshll.u32 [#allocation8], 4
          %s485 = int_to_ptr.vmem [resolvable:$true] %s484
          %487 = dma.hbm_to_vmem [thread:$0]  %s483, 32, %s485, [#allocation9]
        $region36: #{autoencoder_forward.3} parent=11 // pred_fallthru
          _
        // Predicated region
        $region37: #{autoencoder_forward.3} parent=11 // pred_check
          %p488 = pneg %p202
        $region38: #{autoencoder_forward.3} parent=11 // pred_check_branch
          %490 = sbr.rel (%p488) target = $region40
        $region39: #{autoencoder_forward.3} parent=11 // pred_region
          %492 = vsyncadd [#allocation9], 0
          %s494 = sshll.u32 %s7, 4
          %s495 = int_to_ptr.hbm [resolvable:$true] %s494
          %s496 = sshll.u32 [#allocation10], 4
          %s497 = int_to_ptr.vmem [resolvable:$true] %s496
          %499 = dma.hbm_to_vmem [thread:$0]  %s495, 32, %s497, [#allocation9]
        $region40: #{autoencoder_forward.3} parent=11 // pred_fallthru
          _
        // Predicated region
        $region41: #{autoencoder_forward.3} parent=11 // pred_check
          %p500 = pneg %p223
        $region42: #{autoencoder_forward.3} parent=11 // pred_check_branch
          %502 = sbr.rel (%p500) target = $region44
        $region43: #{autoencoder_forward.3} parent=11 // pred_region
          %504 = vsyncadd [#allocation12], 0
          %s506 = sshll.u32 %s8, 4
          %s507 = int_to_ptr.hbm [resolvable:$true] %s506
          %s508 = sshll.u32 [#allocation11], 4
          %s509 = int_to_ptr.vmem [resolvable:$true] %s508
          %511 = dma.hbm_to_vmem [thread:$0]  %s507, 32, %s509, [#allocation12]
        $region44: #{autoencoder_forward.3} parent=11 // pred_fallthru
          _
        // Predicated region
        $region45: #{autoencoder_forward.3} parent=11 // pred_check
          %p512 = pneg %p244
        $region46: #{autoencoder_forward.3} parent=11 // pred_check_branch
          %514 = sbr.rel (%p512) target = $region48
        $region47: #{autoencoder_forward.3} parent=11 // pred_region
          _
        $region48: #{autoencoder_forward.3} parent=11 // pred_fallthru
          _
        // Predicated region
        $region49: #{autoencoder_forward.3} parent=11 // pred_check
          %p515 = pneg %p265
        $region50: #{autoencoder_forward.3} parent=11 // pred_check_branch
          %517 = sbr.rel (%p515) target = $region52
        $region51: #{autoencoder_forward.3} parent=11 // pred_region
          _
        $region52: #{autoencoder_forward.3} parent=11 // pred_fallthru
          _
        // Predicated region
        $region53: #{autoencoder_forward.3} parent=11 // pred_check
          %p518 = pneg %p286
        $region54: #{autoencoder_forward.3} parent=11 // pred_check_branch
          %520 = sbr.rel (%p518) target = $region56
        $region55: #{autoencoder_forward.3} parent=11 // pred_region
          _
        $region56: #{autoencoder_forward.3} parent=11 // pred_fallthru
          _
        // Predicated region
        $region57: #{autoencoder_forward.3} parent=11 // pred_check
          %p521 = pneg %p307
        $region58: #{autoencoder_forward.3} parent=11 // pred_check_branch
          %523 = sbr.rel (%p521) target = $region60
        $region59: #{autoencoder_forward.3} parent=11 // pred_region
          %525 = vsyncadd [#allocation12], 0
          %s527 = sshll.u32 %s12, 4
          %s528 = int_to_ptr.hbm [resolvable:$true] %s527
          %s529 = sshll.u32 [#allocation13], 4
          %s530 = int_to_ptr.vmem [resolvable:$true] %s529
          %532 = dma.hbm_to_vmem [thread:$0]  %s528, 32, %s530, [#allocation12]
        $region60: #{autoencoder_forward.3} parent=11 // pred_fallthru
          _
        // Predicated region
        $region61: #{autoencoder_forward.3} parent=11 // pred_check
          %p533 = pneg %p328
        $region62: #{autoencoder_forward.3} parent=11 // pred_check_branch
          %535 = sbr.rel (%p533) target = $region64
        $region63: #{autoencoder_forward.3} parent=11 // pred_region
          %537 = vsyncadd [#allocation15], 0
          %s539 = sshll.u32 %s13, 4
          %s540 = int_to_ptr.hbm [resolvable:$true] %s539
          %s541 = sshll.u32 [#allocation14], 4
          %s542 = int_to_ptr.vmem [resolvable:$true] %s541
          %544 = dma.hbm_to_vmem [thread:$0]  %s540, 32, %s542, [#allocation15]
        $region64: #{autoencoder_forward.3} parent=11 // pred_fallthru
          _
        // Predicated region
        $region65: #{autoencoder_forward.3} parent=11 // pred_check
          %p545 = pneg %p349
        $region66: #{autoencoder_forward.3} parent=11 // pred_check_branch
          %547 = sbr.rel (%p545) target = $region68
        $region67: #{autoencoder_forward.3} parent=11 // pred_region
          %549 = vsyncadd [#allocation15], 0
          %s551 = sshll.u32 %s14, 4
          %s552 = int_to_ptr.hbm [resolvable:$true] %s551
          %s553 = sshll.u32 [#allocation16], 4
          %s554 = int_to_ptr.vmem [resolvable:$true] %s553
          %556 = dma.hbm_to_vmem [thread:$0]  %s552, 32, %s554, [#allocation15]
        $region68: #{autoencoder_forward.3} parent=11 // pred_fallthru
          _
        // Predicated region
        $region69: #{autoencoder_forward.3} parent=11 // pred_check
          %p557 = pneg %p370
        $region70: #{autoencoder_forward.3} parent=11 // pred_check_branch
          %559 = sbr.rel (%p557) target = $region72
        $region71: #{autoencoder_forward.3} parent=11 // pred_region
          %561 = vsyncadd [#allocation18], 0
          %s562 = sshll.u32 %s15, 4
          %s563 = int_to_ptr.hbm [resolvable:$true] %s562
          %s564 = sshll.u32 [#allocation17], 4
          %s565 = int_to_ptr.vmem [resolvable:$true] %s564
          %570 = dma.hbm_to_vmem [thread:$0]  %s563, 4096, %s565, [#allocation18], 128, 128, 8
        $region72: #{autoencoder_forward.3} parent=11 // pred_fallthru
          _
        // Predicated region
        $region73: #{autoencoder_forward.3} parent=11 // pred_check
          %p571 = pneg %p391
        $region74: #{autoencoder_forward.3} parent=11 // pred_check_branch
          %573 = sbr.rel (%p571) target = $region76
        $region75: #{autoencoder_forward.3} parent=11 // pred_region
          %575 = vsyncadd [#allocation18], 0
          %s577 = sshll.u32 %s16, 4
          %s578 = int_to_ptr.hbm [resolvable:$true] %s577
          %s579 = sshll.u32 [#allocation19], 4
          %s580 = int_to_ptr.vmem [resolvable:$true] %s579
          %582 = dma.hbm_to_vmem [thread:$0]  %s578, 32, %s580, [#allocation18]
        $region76: #{autoencoder_forward.3} parent=11 // pred_fallthru
          _
      $region12: #{autoencoder_forward.3} parent=5 // pred_fallthru
        _
      %p583 = scmp.lt.s32.totalorder %s29, 2
      // Predicated region
      $region77: #{autoencoder_forward.3} parent=5 // pred_check
        %p584 = pneg %p583
      $region78: #{autoencoder_forward.3} parent=5 // pred_check_branch
        %586 = sbr.rel (%p584) target = $region80
      $region79: #{autoencoder_forward.3} parent=5 // pred_region
        // Predicated region
        $region81: #{autoencoder_forward.3} parent=79 // pred_check
          %p587 = pneg %p49
        $region82: #{autoencoder_forward.3} parent=79 // pred_check_branch
          %589 = sbr.rel (%p587) target = $region84
        $region83: #{autoencoder_forward.3} parent=79 // pred_region
          %p590 = scmp.lt.s32.totalorder %s29, 1
          %s591 = scalar_select %p590, %s29, 1
          %s592 = smul.addr %s591, 4
          %s593 = smul.addr %s592, 8
          %s594 = scalar_lea.vmem %s0, %s593
        $region84: #{autoencoder_forward.3} parent=79 // pred_fallthru
          _
      $region80: #{autoencoder_forward.3} parent=5 // pred_fallthru
        _
      %p595 = scmp.le.s32.totalorder 1, %s29
      %p596 = scmp.lt.s32.totalorder %s29, 3
      %p597 = pnand %p595, %p596
      %p598 = pneg %p597
      // Predicated region
      $region85: #{autoencoder_forward.3} parent=5 // pred_check
        _
      $region86: #{autoencoder_forward.3} parent=5 // pred_check_branch
        %600 = sbr.rel (%p597) target = $region88
      $region87: #{autoencoder_forward.3} parent=5 // pred_region
        %s601 = ssub.s32 %s29, 1
        // Predicated region
        $region89: #{autoencoder_forward.3} parent=87 // pred_check
          %p602 = pneg %p76
        $region90: #{autoencoder_forward.3} parent=87 // pred_check_branch
          %604 = sbr.rel (%p602) target = $region92
        $region91: #{autoencoder_forward.3} parent=87 // pred_region
          %606 = dma.done [#allocation4], 32
        $region92: #{autoencoder_forward.3} parent=87 // pred_fallthru
          _
        // Predicated region
        $region93: #{autoencoder_forward.3} parent=87 // pred_check
          %p607 = pneg %p97
        $region94: #{autoencoder_forward.3} parent=87 // pred_check_branch
          %609 = sbr.rel (%p607) target = $region96
        $region95: #{autoencoder_forward.3} parent=87 // pred_region
          %611 = dma.done [#allocation6], 32
        $region96: #{autoencoder_forward.3} parent=87 // pred_fallthru
          _
        // Predicated region
        $region97: #{autoencoder_forward.3} parent=87 // pred_check
          %p612 = pneg %p160
        $region98: #{autoencoder_forward.3} parent=87 // pred_check_branch
          %614 = sbr.rel (%p612) target = $region100
        $region99: #{autoencoder_forward.3} parent=87 // pred_region
          %616 = dma.done [#allocation6], 4096
        $region100: #{autoencoder_forward.3} parent=87 // pred_fallthru
          _
        // Predicated region
        $region101: #{autoencoder_forward.3} parent=87 // pred_check
          %p617 = pneg %p181
        $region102: #{autoencoder_forward.3} parent=87 // pred_check_branch
          %619 = sbr.rel (%p617) target = $region104
        $region103: #{autoencoder_forward.3} parent=87 // pred_region
          %621 = dma.done [#allocation9], 32
        $region104: #{autoencoder_forward.3} parent=87 // pred_fallthru
          _
        // Predicated region
        $region105: #{autoencoder_forward.3} parent=87 // pred_check
          %p622 = pneg %p202
        $region106: #{autoencoder_forward.3} parent=87 // pred_check_branch
          %624 = sbr.rel (%p622) target = $region108
        $region107: #{autoencoder_forward.3} parent=87 // pred_region
          %626 = dma.done [#allocation9], 32
        $region108: #{autoencoder_forward.3} parent=87 // pred_fallthru
          _
        // Predicated region
        $region109: #{autoencoder_forward.3} parent=87 // pred_check
          %p627 = pneg %p223
        $region110: #{autoencoder_forward.3} parent=87 // pred_check_branch
          %629 = sbr.rel (%p627) target = $region112
        $region111: #{autoencoder_forward.3} parent=87 // pred_region
          %631 = dma.done [#allocation12], 32
        $region112: #{autoencoder_forward.3} parent=87 // pred_fallthru
          _
        // Predicated region
        $region113: #{autoencoder_forward.3} parent=87 // pred_check
          %p632 = pneg %p307
        $region114: #{autoencoder_forward.3} parent=87 // pred_check_branch
          %634 = sbr.rel (%p632) target = $region116
        $region115: #{autoencoder_forward.3} parent=87 // pred_region
          %636 = dma.done [#allocation12], 32
        $region116: #{autoencoder_forward.3} parent=87 // pred_fallthru
          _
        // Predicated region
        $region117: #{autoencoder_forward.3} parent=87 // pred_check
          %p637 = pneg %p328
        $region118: #{autoencoder_forward.3} parent=87 // pred_check_branch
          %639 = sbr.rel (%p637) target = $region120
        $region119: #{autoencoder_forward.3} parent=87 // pred_region
          %641 = dma.done [#allocation15], 32
        $region120: #{autoencoder_forward.3} parent=87 // pred_fallthru
          _
        // Predicated region
        $region121: #{autoencoder_forward.3} parent=87 // pred_check
          %p642 = pneg %p349
        $region122: #{autoencoder_forward.3} parent=87 // pred_check_branch
          %644 = sbr.rel (%p642) target = $region124
        $region123: #{autoencoder_forward.3} parent=87 // pred_region
          %646 = dma.done [#allocation15], 32
        $region124: #{autoencoder_forward.3} parent=87 // pred_fallthru
          _
        // Predicated region
        $region125: #{autoencoder_forward.3} parent=87 // pred_check
          %p647 = pneg %p370
        $region126: #{autoencoder_forward.3} parent=87 // pred_check_branch
          %649 = sbr.rel (%p647) target = $region128
        $region127: #{autoencoder_forward.3} parent=87 // pred_region
          %651 = dma.done [#allocation18], 4096
        $region128: #{autoencoder_forward.3} parent=87 // pred_fallthru
          _
        // Predicated region
        $region129: #{autoencoder_forward.3} parent=87 // pred_check
          %p652 = pneg %p391
        $region130: #{autoencoder_forward.3} parent=87 // pred_check_branch
          %654 = sbr.rel (%p652) target = $region132
        $region131: #{autoencoder_forward.3} parent=87 // pred_region
          %656 = dma.done [#allocation18], 32
        $region132: #{autoencoder_forward.3} parent=87 // pred_fallthru
          _
        %p657 = scmp.lt.s32.totalorder %s34, 1
        %s658 = scalar_select %p657, %s34, 1
        %s659 = smul.addr %s658, 4
        %s660 = smul.addr %s659, 8
        %s661 = scalar_lea.vmem %s0, %s660
        %p662 = pneg %p55
        %p663 = pneg %p52
        %p664 = pneg %p76
        %p665 = pneg %p73
        %p666 = pneg %p97
        %p667 = pneg %p94
        %p668 = pneg %p118
        %p669 = pneg %p115
        %p670 = pneg %p139
        %p671 = pneg %p136
        %p672 = pneg %p160
        %p673 = pneg %p157
        %p674 = pneg %p181
        %p675 = pneg %p178
        %p676 = pneg %p202
        %p677 = pneg %p199
        %p678 = pneg %p223
        %p679 = pneg %p220
        %p680 = pneg %p244
        %p681 = pneg %p241
        %p682 = pneg %p265
        %p683 = pneg %p262
        %p684 = pneg %p286
        %p685 = pneg %p283
        %p686 = pneg %p307
        %p687 = pneg %p304
        %p688 = pneg %p328
        %p689 = pneg %p325
        %p690 = pneg %p349
        %p691 = pneg %p346
        %p692 = pneg %p370
        %p693 = pneg %p367
        %p694 = pneg %p391
        %p695 = pneg %p388
        %p696 = pneg %p417
        %p697 = pneg %p414
        %p698 = scmp.lt.s32.totalorder %s34, 1
        %s699 = scalar_select %p698, %s34, 1
        %s700 = smul.addr %s699, 4
        %s701 = smul.addr %s700, 8
        %s702 = scalar_lea.vmem %s17, %s701
        %p703 = scmp.lt.s32.totalorder %s34, 1
        %s704 = scalar_select %p703, %s34, 1
        %s705 = smul.addr %s704, 4
        %s706 = smul.addr %s705, 8
        %s707 = scalar_lea.vmem %s0, %s706
        %p708 = scmp.lt.s32.totalorder %s34, 1
        %s709 = scalar_select %p708, %s34, 1
        %s710 = smul.addr %s709, 4
        %s711 = smul.addr %s710, 8
        %s712 = scalar_lea.vmem %s17, %s711
        %v714 = vld [vmem:[%s707] sm:$0xff]
        %v715 = vld [vmem:[%s707 + $0x8] sm:$0xff]
        %v716 = vld [vmem:[%s707 + $0x10] sm:$0xff]
        %v717 = vld [vmem:[%s707 + $0x18] sm:$0xff]
        %v718 = vld [vmem:[#allocation3] sm:$0x3]
        %v719 = vld [vmem:[#allocation5] sm:$0x3]
        %v720 = vadd.f32 %v714, %v715
        %721 = vadd.xlane.f32.xlu0 %v720
        %v722 = vpop.xlane.xlu0 %721
        %v723 = vadd.f32 %v716, %v717
        %724 = vadd.xlane.f32.xlu0 %v723
        %v725 = vpop.xlane.xlu0 %724
        %v726 = vrcp.pop 256.0
        %v727 = vmul.f32 256.0, %v726
        %v728 = vsub.f32 1.0, %v727
        %v729 = vmul.f32 %v726, %v728
        %v730 = vadd.f32 %v726, %v729
        %vm731 = vweird.f32 %v726
        %v732 = vsel %vm731, %v726, %v730
        %v733 = vmul.f32 %v722, %v732
        %v734 = vmul.f32 %v725, %v732
        %v735 = vsub.f32 %v714, %v733
        %v736 = vsub.f32 %v715, %v733
        %v737 = vsub.f32 %v716, %v734
        %v738 = vsub.f32 %v717, %v734
        %v739 = vmul.f32 %v735, %v735
        %v740 = vmul.f32 %v736, %v736
        %v741 = vmul.f32 %v737, %v737
        %v742 = vmul.f32 %v738, %v738
        %v743 = vadd.f32 %v739, %v740
        %744 = vadd.xlane.f32.xlu0 %v743
        %v745 = vpop.xlane.xlu0 %744
        %v746 = vadd.f32 %v741, %v742
        %747 = vadd.xlane.f32.xlu0 %v746
        %v748 = vpop.xlane.xlu0 %747
        %v749 = vmul.f32 %v745, %v732
        %v750 = vmul.f32 %v748, %v732
        %v751 = vadd.f32 %v749, 1e-06
        %v752 = vadd.f32 %v750, 1e-06
        %v753 = vrsqrt.pop %v751
        %v754 = vmul.f32 %v753, %v751
        %v755 = vmul.f32 %v754, %v753
        %v756 = vmul.f32 0.5, %v755
        %v757 = vsub.f32 1.5, %v756
        %v758 = vmul.f32 %v753, %v757
        %vm759 = vweird.f32 %v751
        %vm760 = vweird.f32 %v753
        %vm761 = vmor %vm759, %vm760
        %v762 = vsel %vm761, %v753, %v758
        %v763 = vrsqrt.pop %v752
        %v764 = vmul.f32 %v763, %v752
        %v765 = vmul.f32 %v764, %v763
        %v766 = vmul.f32 0.5, %v765
        %v767 = vsub.f32 1.5, %v766
        %v768 = vmul.f32 %v763, %v767
        %vm769 = vweird.f32 %v752
        %vm770 = vweird.f32 %v763
        %vm771 = vmor %vm769, %vm770
        %v772 = vsel %vm771, %v763, %v768
        %v773 = vmul.f32 %v735, %v762
        %v774 = vmul.f32 %v736, %v762
        %v775 = vmul.f32 %v737, %v772
        %v776 = vmul.f32 %v738, %v772
        %v778 = vperm.slane %v718, 0
        %v779 = vperm.slane %v718, 1
        %v782 = vmul.f32 %v773, %v778
        %v783 = vmul.f32 %v774, %v779
        %v784 = vmul.f32 %v775, %v778
        %v785 = vmul.f32 %v776, %v779
        %v787 = vperm.slane %v719, 0
        %v788 = vperm.slane %v719, 1
        %v791 = vadd.f32 %v782, %v787
        %v792 = vadd.f32 %v783, %v788
        %v793 = vadd.f32 %v784, %v787
        %v794 = vadd.f32 %v785, %v788
        %v795 = vpack.c.bf16 %v793, %v791
        %v796 = vpack.c.bf16 %v794, %v792
        %v797 = vld [vmem:[%s3] sm:$0xff]
        %v798 = vld [vmem:[%s3 + $0x8] sm:$0xff]
        %v799 = vld [vmem:[%s3 + $0x10] sm:$0xff]
        %v800 = vld [vmem:[%s3 + $0x18] sm:$0xff]
        %v801 = vld [vmem:[%s3 + $0x20] sm:$0xff]
        %v802 = vld [vmem:[%s3 + $0x28] sm:$0xff]
        %v803 = vld [vmem:[%s3 + $0x30] sm:$0xff]
        %v804 = vld [vmem:[%s3 + $0x38] sm:$0xff]
        %v805 = vld [vmem:[%s3 + $0x40] sm:$0xff]
        %v806 = vld [vmem:[%s3 + $0x48] sm:$0xff]
        %v807 = vld [vmem:[%s3 + $0x50] sm:$0xff]
        %v808 = vld [vmem:[%s3 + $0x58] sm:$0xff]
        %v809 = vld [vmem:[%s3 + $0x60] sm:$0xff]
        %v810 = vld [vmem:[%s3 + $0x68] sm:$0xff]
        %v811 = vld [vmem:[%s3 + $0x70] sm:$0xff]
        %v812 = vld [vmem:[%s3 + $0x78] sm:$0xff]
        %v813 = vld [vmem:[%s3 + $0x80] sm:$0xff]
        %v814 = vld [vmem:[%s3 + $0x88] sm:$0xff]
        %v815 = vld [vmem:[%s3 + $0x90] sm:$0xff]
        %v816 = vld [vmem:[%s3 + $0x98] sm:$0xff]
        %v817 = vld [vmem:[%s3 + $0xa0] sm:$0xff]
        %v818 = vld [vmem:[%s3 + $0xa8] sm:$0xff]
        %v819 = vld [vmem:[%s3 + $0xb0] sm:$0xff]
        %v820 = vld [vmem:[%s3 + $0xb8] sm:$0xff]
        %v821 = vld [vmem:[%s3 + $0xc0] sm:$0xff]
        %v822 = vld [vmem:[%s3 + $0xc8] sm:$0xff]
        %v823 = vld [vmem:[%s3 + $0xd0] sm:$0xff]
        %v824 = vld [vmem:[%s3 + $0xd8] sm:$0xff]
        %v825 = vld [vmem:[%s3 + $0xe0] sm:$0xff]
        %v826 = vld [vmem:[%s3 + $0xe8] sm:$0xff]
        %v827 = vld [vmem:[%s3 + $0xf0] sm:$0xff]
        %v828 = vld [vmem:[%s3 + $0xf8] sm:$0xff]
        %v829 = vld [vmem:[%s3 + $0x100] sm:$0xff]
        %v830 = vld [vmem:[%s3 + $0x108] sm:$0xff]
        %v831 = vld [vmem:[%s3 + $0x110] sm:$0xff]
        %v832 = vld [vmem:[%s3 + $0x118] sm:$0xff]
        %v833 = vld [vmem:[%s3 + $0x120] sm:$0xff]
        %v834 = vld [vmem:[%s3 + $0x128] sm:$0xff]
        %v835 = vld [vmem:[%s3 + $0x130] sm:$0xff]
        %v836 = vld [vmem:[%s3 + $0x138] sm:$0xff]
        %v837 = vld [vmem:[%s3 + $0x140] sm:$0xff]
        %v838 = vld [vmem:[%s3 + $0x148] sm:$0xff]
        %v839 = vld [vmem:[%s3 + $0x150] sm:$0xff]
        %v840 = vld [vmem:[%s3 + $0x158] sm:$0xff]
        %v841 = vld [vmem:[%s3 + $0x160] sm:$0xff]
        %v842 = vld [vmem:[%s3 + $0x168] sm:$0xff]
        %v843 = vld [vmem:[%s3 + $0x170] sm:$0xff]
        %v844 = vld [vmem:[%s3 + $0x178] sm:$0xff]
        %v845 = vld [vmem:[%s3 + $0x180] sm:$0xff]
        %v846 = vld [vmem:[%s3 + $0x188] sm:$0xff]
        %v847 = vld [vmem:[%s3 + $0x190] sm:$0xff]
        %v848 = vld [vmem:[%s3 + $0x198] sm:$0xff]
        %v849 = vld [vmem:[%s3 + $0x1a0] sm:$0xff]
        %v850 = vld [vmem:[%s3 + $0x1a8] sm:$0xff]
        %v851 = vld [vmem:[%s3 + $0x1b0] sm:$0xff]
        %v852 = vld [vmem:[%s3 + $0x1b8] sm:$0xff]
        %v853 = vld [vmem:[%s3 + $0x1c0] sm:$0xff]
        %v854 = vld [vmem:[%s3 + $0x1c8] sm:$0xff]
        %v855 = vld [vmem:[%s3 + $0x1d0] sm:$0xff]
        %v856 = vld [vmem:[%s3 + $0x1d8] sm:$0xff]
        %v857 = vld [vmem:[%s3 + $0x1e0] sm:$0xff]
        %v858 = vld [vmem:[%s3 + $0x1e8] sm:$0xff]
        %v859 = vld [vmem:[%s3 + $0x1f0] sm:$0xff]
        %v860 = vld [vmem:[%s3 + $0x1f8] sm:$0xff]
        %v861 = vld [vmem:[%s3 + $0x200] sm:$0xff]
        %v862 = vld [vmem:[%s3 + $0x208] sm:$0xff]
        %v863 = vld [vmem:[%s3 + $0x210] sm:$0xff]
        %v864 = vld [vmem:[%s3 + $0x218] sm:$0xff]
        %v865 = vld [vmem:[%s3 + $0x220] sm:$0xff]
        %v866 = vld [vmem:[%s3 + $0x228] sm:$0xff]
        %v867 = vld [vmem:[%s3 + $0x230] sm:$0xff]
        %v868 = vld [vmem:[%s3 + $0x238] sm:$0xff]
        %v869 = vld [vmem:[%s3 + $0x240] sm:$0xff]
        %v870 = vld [vmem:[%s3 + $0x248] sm:$0xff]
        %v871 = vld [vmem:[%s3 + $0x250] sm:$0xff]
        %v872 = vld [vmem:[%s3 + $0x258] sm:$0xff]
        %v873 = vld [vmem:[%s3 + $0x260] sm:$0xff]
        %v874 = vld [vmem:[%s3 + $0x268] sm:$0xff]
        %v875 = vld [vmem:[%s3 + $0x270] sm:$0xff]
        %v876 = vld [vmem:[%s3 + $0x278] sm:$0xff]
        %v877 = vld [vmem:[%s3 + $0x280] sm:$0xff]
        %v878 = vld [vmem:[%s3 + $0x288] sm:$0xff]
        %v879 = vld [vmem:[%s3 + $0x290] sm:$0xff]
        %v880 = vld [vmem:[%s3 + $0x298] sm:$0xff]
        %v881 = vld [vmem:[%s3 + $0x2a0] sm:$0xff]
        %v882 = vld [vmem:[%s3 + $0x2a8] sm:$0xff]
        %v883 = vld [vmem:[%s3 + $0x2b0] sm:$0xff]
        %v884 = vld [vmem:[%s3 + $0x2b8] sm:$0xff]
        %v885 = vld [vmem:[%s3 + $0x2c0] sm:$0xff]
        %v886 = vld [vmem:[%s3 + $0x2c8] sm:$0xff]
        %v887 = vld [vmem:[%s3 + $0x2d0] sm:$0xff]
        %v888 = vld [vmem:[%s3 + $0x2d8] sm:$0xff]
        %v889 = vld [vmem:[%s3 + $0x2e0] sm:$0xff]
        %v890 = vld [vmem:[%s3 + $0x2e8] sm:$0xff]
        %v891 = vld [vmem:[%s3 + $0x2f0] sm:$0xff]
        %v892 = vld [vmem:[%s3 + $0x2f8] sm:$0xff]
        %v893 = vld [vmem:[%s4] sm:$0x3f]
        %v895 = vperm.slane %v893, 0
        %v896 = vperm.slane %v893, 1
        %v897 = vperm.slane %v893, 2
        %v898 = vperm.slane %v893, 3
        %v899 = vperm.slane %v893, 4
        %v900 = vperm.slane %v893, 5
        %v1003 = vunpack.c.l.b16 %v797
        %v1004 = vunpack.c.h.b16 %v797
        %v1005 = vunpack.c.l.b16 %v798
        %v1006 = vunpack.c.h.b16 %v798
        %v1007 = vunpack.c.l.b16 %v799
        %v1008 = vunpack.c.h.b16 %v799
        %v1009 = vunpack.c.l.b16 %v800
        %v1010 = vunpack.c.h.b16 %v800
        %v1011 = vunpack.c.l.b16 %v801
        %v1012 = vunpack.c.h.b16 %v801
        %v1013 = vunpack.c.l.b16 %v802
        %v1014 = vunpack.c.h.b16 %v802
        %v1015 = vunpack.c.l.b16 %v803
        %v1016 = vunpack.c.h.b16 %v803
        %v1017 = vunpack.c.l.b16 %v804
        %v1018 = vunpack.c.h.b16 %v804
        %v1019 = vunpack.c.l.b16 %v805
        %v1020 = vunpack.c.h.b16 %v805
        %v1021 = vunpack.c.l.b16 %v806
        %v1022 = vunpack.c.h.b16 %v806
        %v1023 = vunpack.c.l.b16 %v807
        %v1024 = vunpack.c.h.b16 %v807
        %v1025 = vunpack.c.l.b16 %v808
        %v1026 = vunpack.c.h.b16 %v808
        %v1027 = vunpack.c.l.b16 %v809
        %v1028 = vunpack.c.h.b16 %v809
        %v1029 = vunpack.c.l.b16 %v810
        %v1030 = vunpack.c.h.b16 %v810
        %v1031 = vunpack.c.l.b16 %v811
        %v1032 = vunpack.c.h.b16 %v811
        %v1033 = vunpack.c.l.b16 %v812
        %v1034 = vunpack.c.h.b16 %v812
        %v1035 = vunpack.c.l.b16 %v813
        %v1036 = vunpack.c.h.b16 %v813
        %v1037 = vunpack.c.l.b16 %v814
        %v1038 = vunpack.c.h.b16 %v814
        %v1039 = vunpack.c.l.b16 %v815
        %v1040 = vunpack.c.h.b16 %v815
        %v1041 = vunpack.c.l.b16 %v816
        %v1042 = vunpack.c.h.b16 %v816
        %v1043 = vunpack.c.l.b16 %v817
        %v1044 = vunpack.c.h.b16 %v817
        %v1045 = vunpack.c.l.b16 %v818
        %v1046 = vunpack.c.h.b16 %v818
        %v1047 = vunpack.c.l.b16 %v819
        %v1048 = vunpack.c.h.b16 %v819
        %v1049 = vunpack.c.l.b16 %v820
        %v1050 = vunpack.c.h.b16 %v820
        %v1051 = vunpack.c.l.b16 %v821
        %v1052 = vunpack.c.h.b16 %v821
        %v1053 = vunpack.c.l.b16 %v822
        %v1054 = vunpack.c.h.b16 %v822
        %v1055 = vunpack.c.l.b16 %v823
        %v1056 = vunpack.c.h.b16 %v823
        %v1057 = vunpack.c.l.b16 %v824
        %v1058 = vunpack.c.h.b16 %v824
        %v1059 = vunpack.c.l.b16 %v825
        %v1060 = vunpack.c.h.b16 %v825
        %v1061 = vunpack.c.l.b16 %v826
        %v1062 = vunpack.c.h.b16 %v826
        %v1063 = vunpack.c.l.b16 %v827
        %v1064 = vunpack.c.h.b16 %v827
        %v1065 = vunpack.c.l.b16 %v828
        %v1066 = vunpack.c.h.b16 %v828
        %v1067 = vunpack.c.l.b16 %v829
        %v1068 = vunpack.c.h.b16 %v829
        %v1069 = vunpack.c.l.b16 %v830
        %v1070 = vunpack.c.h.b16 %v830
        %v1071 = vunpack.c.l.b16 %v831
        %v1072 = vunpack.c.h.b16 %v831
        %v1073 = vunpack.c.l.b16 %v832
        %v1074 = vunpack.c.h.b16 %v832
        %v1075 = vunpack.c.l.b16 %v833
        %v1076 = vunpack.c.h.b16 %v833
        %v1077 = vunpack.c.l.b16 %v834
        %v1078 = vunpack.c.h.b16 %v834
        %v1079 = vunpack.c.l.b16 %v835
        %v1080 = vunpack.c.h.b16 %v835
        %v1081 = vunpack.c.l.b16 %v836
        %v1082 = vunpack.c.h.b16 %v836
        %v1083 = vunpack.c.l.b16 %v837
        %v1084 = vunpack.c.h.b16 %v837
        %v1085 = vunpack.c.l.b16 %v838
        %v1086 = vunpack.c.h.b16 %v838
        %v1087 = vunpack.c.l.b16 %v839
        %v1088 = vunpack.c.h.b16 %v839
        %v1089 = vunpack.c.l.b16 %v840
        %v1090 = vunpack.c.h.b16 %v840
        %v1091 = vunpack.c.l.b16 %v841
        %v1092 = vunpack.c.h.b16 %v841
        %v1093 = vunpack.c.l.b16 %v842
        %v1094 = vunpack.c.h.b16 %v842
        %v1095 = vunpack.c.l.b16 %v843
        %v1096 = vunpack.c.h.b16 %v843
        %v1097 = vunpack.c.l.b16 %v844
        %v1098 = vunpack.c.h.b16 %v844
        %v1099 = vunpack.c.l.b16 %v845
        %v1100 = vunpack.c.h.b16 %v845
        %v1101 = vunpack.c.l.b16 %v846
        %v1102 = vunpack.c.h.b16 %v846
        %v1103 = vunpack.c.l.b16 %v847
        %v1104 = vunpack.c.h.b16 %v847
        %v1105 = vunpack.c.l.b16 %v848
        %v1106 = vunpack.c.h.b16 %v848
        %v1107 = vunpack.c.l.b16 %v849
        %v1108 = vunpack.c.h.b16 %v849
        %v1109 = vunpack.c.l.b16 %v850
        %v1110 = vunpack.c.h.b16 %v850
        %v1111 = vunpack.c.l.b16 %v851
        %v1112 = vunpack.c.h.b16 %v851
        %v1113 = vunpack.c.l.b16 %v852
        %v1114 = vunpack.c.h.b16 %v852
        %v1115 = vunpack.c.l.b16 %v853
        %v1116 = vunpack.c.h.b16 %v853
        %v1117 = vunpack.c.l.b16 %v854
        %v1118 = vunpack.c.h.b16 %v854
        %v1119 = vunpack.c.l.b16 %v855
        %v1120 = vunpack.c.h.b16 %v855
        %v1121 = vunpack.c.l.b16 %v856
        %v1122 = vunpack.c.h.b16 %v856
        %v1123 = vunpack.c.l.b16 %v857
        %v1124 = vunpack.c.h.b16 %v857
        %v1125 = vunpack.c.l.b16 %v858
        %v1126 = vunpack.c.h.b16 %v858
        %v1127 = vunpack.c.l.b16 %v859
        %v1128 = vunpack.c.h.b16 %v859
        %v1129 = vunpack.c.l.b16 %v860
        %v1130 = vunpack.c.h.b16 %v860
        %v1131 = vunpack.c.l.b16 %v861
        %v1132 = vunpack.c.h.b16 %v861
        %v1133 = vunpack.c.l.b16 %v862
        %v1134 = vunpack.c.h.b16 %v862
        %v1135 = vunpack.c.l.b16 %v863
        %v1136 = vunpack.c.h.b16 %v863
        %v1137 = vunpack.c.l.b16 %v864
        %v1138 = vunpack.c.h.b16 %v864
        %v1139 = vunpack.c.l.b16 %v865
        %v1140 = vunpack.c.h.b16 %v865
        %v1141 = vunpack.c.l.b16 %v866
        %v1142 = vunpack.c.h.b16 %v866
        %v1143 = vunpack.c.l.b16 %v867
        %v1144 = vunpack.c.h.b16 %v867
        %v1145 = vunpack.c.l.b16 %v868
        %v1146 = vunpack.c.h.b16 %v868
        %v1147 = vunpack.c.l.b16 %v869
        %v1148 = vunpack.c.h.b16 %v869
        %v1149 = vunpack.c.l.b16 %v870
        %v1150 = vunpack.c.h.b16 %v870
        %v1151 = vunpack.c.l.b16 %v871
        %v1152 = vunpack.c.h.b16 %v871
        %v1153 = vunpack.c.l.b16 %v872
        %v1154 = vunpack.c.h.b16 %v872
        %v1155 = vunpack.c.l.b16 %v873
        %v1156 = vunpack.c.h.b16 %v873
        %v1157 = vunpack.c.l.b16 %v874
        %v1158 = vunpack.c.h.b16 %v874
        %v1159 = vunpack.c.l.b16 %v875
        %v1160 = vunpack.c.h.b16 %v875
        %v1161 = vunpack.c.l.b16 %v876
        %v1162 = vunpack.c.h.b16 %v876
        %v1163 = vunpack.c.l.b16 %v877
        %v1164 = vunpack.c.h.b16 %v877
        %v1165 = vunpack.c.l.b16 %v878
        %v1166 = vunpack.c.h.b16 %v878
        %v1167 = vunpack.c.l.b16 %v879
        %v1168 = vunpack.c.h.b16 %v879
        %v1169 = vunpack.c.l.b16 %v880
        %v1170 = vunpack.c.h.b16 %v880
        %v1171 = vunpack.c.l.b16 %v881
        %v1172 = vunpack.c.h.b16 %v881
        %v1173 = vunpack.c.l.b16 %v882
        %v1174 = vunpack.c.h.b16 %v882
        %v1175 = vunpack.c.l.b16 %v883
        %v1176 = vunpack.c.h.b16 %v883
        %v1177 = vunpack.c.l.b16 %v884
        %v1178 = vunpack.c.h.b16 %v884
        %v1179 = vunpack.c.l.b16 %v885
        %v1180 = vunpack.c.h.b16 %v885
        %v1181 = vunpack.c.l.b16 %v886
        %v1182 = vunpack.c.h.b16 %v886
        %v1183 = vunpack.c.l.b16 %v887
        %v1184 = vunpack.c.h.b16 %v887
        %v1185 = vunpack.c.l.b16 %v888
        %v1186 = vunpack.c.h.b16 %v888
        %v1187 = vunpack.c.l.b16 %v889
        %v1188 = vunpack.c.h.b16 %v889
        %v1189 = vunpack.c.l.b16 %v890
        %v1190 = vunpack.c.h.b16 %v890
        %v1191 = vunpack.c.l.b16 %v891
        %v1192 = vunpack.c.h.b16 %v891
        %v1193 = vunpack.c.l.b16 %v892
        %v1194 = vunpack.c.h.b16 %v892
        %v1195 = vpack.c.b16 %v1009, %v1003
        %v1196 = vpack.c.b16 %v1010, %v1004
        %v1197 = vpack.c.b16 %v1011, %v1005
        %v1198 = vpack.c.b16 %v1012, %v1006
        %v1199 = vpack.c.b16 %v1013, %v1007
        %v1200 = vpack.c.b16 %v1014, %v1008
        %v1201 = vpack.c.b16 %v1021, %v1015
        %v1202 = vpack.c.b16 %v1022, %v1016
        %v1203 = vpack.c.b16 %v1023, %v1017
        %v1204 = vpack.c.b16 %v1024, %v1018
        %v1205 = vpack.c.b16 %v1025, %v1019
        %v1206 = vpack.c.b16 %v1026, %v1020
        %v1207 = vpack.c.b16 %v1033, %v1027
        %v1208 = vpack.c.b16 %v1034, %v1028
        %v1209 = vpack.c.b16 %v1035, %v1029
        %v1210 = vpack.c.b16 %v1036, %v1030
        %v1211 = vpack.c.b16 %v1037, %v1031
        %v1212 = vpack.c.b16 %v1038, %v1032
        %v1213 = vpack.c.b16 %v1045, %v1039
        %v1214 = vpack.c.b16 %v1046, %v1040
        %v1215 = vpack.c.b16 %v1047, %v1041
        %v1216 = vpack.c.b16 %v1048, %v1042
        %v1217 = vpack.c.b16 %v1049, %v1043
        %v1218 = vpack.c.b16 %v1050, %v1044
        %v1219 = vpack.c.b16 %v1057, %v1051
        %v1220 = vpack.c.b16 %v1058, %v1052
        %v1221 = vpack.c.b16 %v1059, %v1053
        %v1222 = vpack.c.b16 %v1060, %v1054
        %v1223 = vpack.c.b16 %v1061, %v1055
        %v1224 = vpack.c.b16 %v1062, %v1056
        %v1225 = vpack.c.b16 %v1069, %v1063
        %v1226 = vpack.c.b16 %v1070, %v1064
        %v1227 = vpack.c.b16 %v1071, %v1065
        %v1228 = vpack.c.b16 %v1072, %v1066
        %v1229 = vpack.c.b16 %v1073, %v1067
        %v1230 = vpack.c.b16 %v1074, %v1068
        %v1231 = vpack.c.b16 %v1081, %v1075
        %v1232 = vpack.c.b16 %v1082, %v1076
        %v1233 = vpack.c.b16 %v1083, %v1077
        %v1234 = vpack.c.b16 %v1084, %v1078
        %v1235 = vpack.c.b16 %v1085, %v1079
        %v1236 = vpack.c.b16 %v1086, %v1080
        %v1237 = vpack.c.b16 %v1093, %v1087
        %v1238 = vpack.c.b16 %v1094, %v1088
        %v1239 = vpack.c.b16 %v1095, %v1089
        %v1240 = vpack.c.b16 %v1096, %v1090
        %v1241 = vpack.c.b16 %v1097, %v1091
        %v1242 = vpack.c.b16 %v1098, %v1092
        %v1243 = vpack.c.b16 %v1105, %v1099
        %v1244 = vpack.c.b16 %v1106, %v1100
        %v1245 = vpack.c.b16 %v1107, %v1101
        %v1246 = vpack.c.b16 %v1108, %v1102
        %v1247 = vpack.c.b16 %v1109, %v1103
        %v1248 = vpack.c.b16 %v1110, %v1104
        %v1249 = vpack.c.b16 %v1117, %v1111
        %v1250 = vpack.c.b16 %v1118, %v1112
        %v1251 = vpack.c.b16 %v1119, %v1113
        %v1252 = vpack.c.b16 %v1120, %v1114
        %v1253 = vpack.c.b16 %v1121, %v1115
        %v1254 = vpack.c.b16 %v1122, %v1116
        %v1255 = vpack.c.b16 %v1129, %v1123
        %v1256 = vpack.c.b16 %v1130, %v1124
        %v1257 = vpack.c.b16 %v1131, %v1125
        %v1258 = vpack.c.b16 %v1132, %v1126
        %v1259 = vpack.c.b16 %v1133, %v1127
        %v1260 = vpack.c.b16 %v1134, %v1128
        %v1261 = vpack.c.b16 %v1141, %v1135
        %v1262 = vpack.c.b16 %v1142, %v1136
        %v1263 = vpack.c.b16 %v1143, %v1137
        %v1264 = vpack.c.b16 %v1144, %v1138
        %v1265 = vpack.c.b16 %v1145, %v1139
        %v1266 = vpack.c.b16 %v1146, %v1140
        %v1267 = vpack.c.b16 %v1153, %v1147
        %v1268 = vpack.c.b16 %v1154, %v1148
        %v1269 = vpack.c.b16 %v1155, %v1149
        %v1270 = vpack.c.b16 %v1156, %v1150
        %v1271 = vpack.c.b16 %v1157, %v1151
        %v1272 = vpack.c.b16 %v1158, %v1152
        %v1273 = vpack.c.b16 %v1165, %v1159
        %v1274 = vpack.c.b16 %v1166, %v1160
        %v1275 = vpack.c.b16 %v1167, %v1161
        %v1276 = vpack.c.b16 %v1168, %v1162
        %v1277 = vpack.c.b16 %v1169, %v1163
        %v1278 = vpack.c.b16 %v1170, %v1164
        %v1279 = vpack.c.b16 %v1177, %v1171
        %v1280 = vpack.c.b16 %v1178, %v1172
        %v1281 = vpack.c.b16 %v1179, %v1173
        %v1282 = vpack.c.b16 %v1180, %v1174
        %v1283 = vpack.c.b16 %v1181, %v1175
        %v1284 = vpack.c.b16 %v1182, %v1176
        %v1285 = vpack.c.b16 %v1189, %v1183
        %v1286 = vpack.c.b16 %v1190, %v1184
        %v1287 = vpack.c.b16 %v1191, %v1185
        %v1288 = vpack.c.b16 %v1192, %v1186
        %v1289 = vpack.c.b16 %v1193, %v1187
        %v1290 = vpack.c.b16 %v1194, %v1188
        %1387 = vmatpush.bf16.msra.mxu0 %v1237
        %1388 = vmatpush.bf16.msra.mxu0 %v1231
        %1389 = vmatpush.bf16.msra.mxu0 %v1225
        %1390 = vmatpush.bf16.msra.mxu0 %v1219
        %1391 = vmatpush.bf16.msra.mxu0 %v1213
        %1392 = vmatpush.bf16.msra.mxu0 %v1207
        %1393 = vmatpush.bf16.msra.mxu0 %v1201
        %1394 = vmatpush.bf16.msra.mxu0 %v1195
        %1395 = vmatmul.bf16.gmra.mxu0 %v795
        %v1396 = vpop.f32.mrf.mxu0
        %v1397 = vadd.f32 %v895, %v1396
        %v1398 = vpop.f32.mrf.mxu0
        %v1399 = vadd.f32 %v895, %v1398
        %1400 = vdwg.mxu0
        %1401 = vmatpush.bf16.msra.mxu0 %v1285
        %1402 = vmatpush.bf16.msra.mxu0 %v1279
        %1403 = vmatpush.bf16.msra.mxu0 %v1273
        %1404 = vmatpush.bf16.msra.mxu0 %v1267
        %1405 = vmatpush.bf16.msra.mxu0 %v1261
        %1406 = vmatpush.bf16.msra.mxu0 %v1255
        %1407 = vmatpush.bf16.msra.mxu0 %v1249
        %1408 = vmatpush.bf16.msra.mxu0 %v1243
        %1409 = vmatmul.bf16.gmra.mxu0 %v796
        %v1410 = vpop.f32.mrf.mxu0
        %v1411 = vadd.f32 %v1397, %v1410
        %v1412 = vpop.f32.mrf.mxu0
        %v1413 = vadd.f32 %v1399, %v1412
        %1414 = vdwg.mxu0
        %1415 = vmatpush.bf16.msra.mxu0 %v1238
        %1416 = vmatpush.bf16.msra.mxu0 %v1232
        %1417 = vmatpush.bf16.msra.mxu0 %v1226
        %1418 = vmatpush.bf16.msra.mxu0 %v1220
        %1419 = vmatpush.bf16.msra.mxu0 %v1214
        %1420 = vmatpush.bf16.msra.mxu0 %v1208
        %1421 = vmatpush.bf16.msra.mxu0 %v1202
        %1422 = vmatpush.bf16.msra.mxu0 %v1196
        %1423 = vmatmul.bf16.gmra.mxu0 %v795
        %v1424 = vpop.f32.mrf.mxu0
        %v1425 = vadd.f32 %v896, %v1424
        %v1426 = vpop.f32.mrf.mxu0
        %v1427 = vadd.f32 %v896, %v1426
        %1428 = vdwg.mxu0
        %1429 = vmatpush.bf16.msra.mxu0 %v1286
        %1430 = vmatpush.bf16.msra.mxu0 %v1280
        %1431 = vmatpush.bf16.msra.mxu0 %v1274
        %1432 = vmatpush.bf16.msra.mxu0 %v1268
        %1433 = vmatpush.bf16.msra.mxu0 %v1262
        %1434 = vmatpush.bf16.msra.mxu0 %v1256
        %1435 = vmatpush.bf16.msra.mxu0 %v1250
        %1436 = vmatpush.bf16.msra.mxu0 %v1244
        %1437 = vmatmul.bf16.gmra.mxu0 %v796
        %v1438 = vpop.f32.mrf.mxu0
        %v1439 = vadd.f32 %v1425, %v1438
        %v1440 = vpop.f32.mrf.mxu0
        %v1441 = vadd.f32 %v1427, %v1440
        %1442 = vdwg.mxu0
        %1443 = vmatpush.bf16.msra.mxu0 %v1239
        %1444 = vmatpush.bf16.msra.mxu0 %v1233
        %1445 = vmatpush.bf16.msra.mxu0 %v1227
        %1446 = vmatpush.bf16.msra.mxu0 %v1221
        %1447 = vmatpush.bf16.msra.mxu0 %v1215
        %1448 = vmatpush.bf16.msra.mxu0 %v1209
        %1449 = vmatpush.bf16.msra.mxu0 %v1203
        %1450 = vmatpush.bf16.msra.mxu0 %v1197
        %1451 = vmatmul.bf16.gmra.mxu0 %v795
        %v1452 = vpop.f32.mrf.mxu0
        %v1453 = vadd.f32 %v897, %v1452
        %v1454 = vpop.f32.mrf.mxu0
        %v1455 = vadd.f32 %v897, %v1454
        %1456 = vdwg.mxu0
        %1457 = vmatpush.bf16.msra.mxu0 %v1287
        %1458 = vmatpush.bf16.msra.mxu0 %v1281
        %1459 = vmatpush.bf16.msra.mxu0 %v1275
        %1460 = vmatpush.bf16.msra.mxu0 %v1269
        %1461 = vmatpush.bf16.msra.mxu0 %v1263
        %1462 = vmatpush.bf16.msra.mxu0 %v1257
        %1463 = vmatpush.bf16.msra.mxu0 %v1251
        %1464 = vmatpush.bf16.msra.mxu0 %v1245
        %1465 = vmatmul.bf16.gmra.mxu0 %v796
        %v1466 = vpop.f32.mrf.mxu0
        %v1467 = vadd.f32 %v1453, %v1466
        %v1468 = vpop.f32.mrf.mxu0
        %v1469 = vadd.f32 %v1455, %v1468
        %1470 = vdwg.mxu0
        %1471 = vmatpush.bf16.msra.mxu0 %v1240
        %1472 = vmatpush.bf16.msra.mxu0 %v1234
        %1473 = vmatpush.bf16.msra.mxu0 %v1228
        %1474 = vmatpush.bf16.msra.mxu0 %v1222
        %1475 = vmatpush.bf16.msra.mxu0 %v1216
        %1476 = vmatpush.bf16.msra.mxu0 %v1210
        %1477 = vmatpush.bf16.msra.mxu0 %v1204
        %1478 = vmatpush.bf16.msra.mxu0 %v1198
        %1479 = vmatmul.bf16.gmra.mxu0 %v795
        %v1480 = vpop.f32.mrf.mxu0
        %v1481 = vadd.f32 %v898, %v1480
        %v1482 = vpop.f32.mrf.mxu0
        %v1483 = vadd.f32 %v898, %v1482
        %1484 = vdwg.mxu0
        %1485 = vmatpush.bf16.msra.mxu0 %v1288
        %1486 = vmatpush.bf16.msra.mxu0 %v1282
        %1487 = vmatpush.bf16.msra.mxu0 %v1276
        %1488 = vmatpush.bf16.msra.mxu0 %v1270
        %1489 = vmatpush.bf16.msra.mxu0 %v1264
        %1490 = vmatpush.bf16.msra.mxu0 %v1258
        %1491 = vmatpush.bf16.msra.mxu0 %v1252
        %1492 = vmatpush.bf16.msra.mxu0 %v1246
        %1493 = vmatmul.bf16.gmra.mxu0 %v796
        %v1494 = vpop.f32.mrf.mxu0
        %v1495 = vadd.f32 %v1481, %v1494
        %v1496 = vpop.f32.mrf.mxu0
        %v1497 = vadd.f32 %v1483, %v1496
        %1498 = vdwg.mxu0
        %1499 = vmatpush.bf16.msra.mxu0 %v1241
        %1500 = vmatpush.bf16.msra.mxu0 %v1235
        %1501 = vmatpush.bf16.msra.mxu0 %v1229
        %1502 = vmatpush.bf16.msra.mxu0 %v1223
        %1503 = vmatpush.bf16.msra.mxu0 %v1217
        %1504 = vmatpush.bf16.msra.mxu0 %v1211
        %1505 = vmatpush.bf16.msra.mxu0 %v1205
        %1506 = vmatpush.bf16.msra.mxu0 %v1199
        %1507 = vmatmul.bf16.gmra.mxu0 %v795
        %v1508 = vpop.f32.mrf.mxu0
        %v1509 = vadd.f32 %v899, %v1508
        %v1510 = vpop.f32.mrf.mxu0
        %v1511 = vadd.f32 %v899, %v1510
        %1512 = vdwg.mxu0
        %1513 = vmatpush.bf16.msra.mxu0 %v1289
        %1514 = vmatpush.bf16.msra.mxu0 %v1283
        %1515 = vmatpush.bf16.msra.mxu0 %v1277
        %1516 = vmatpush.bf16.msra.mxu0 %v1271
        %1517 = vmatpush.bf16.msra.mxu0 %v1265
        %1518 = vmatpush.bf16.msra.mxu0 %v1259
        %1519 = vmatpush.bf16.msra.mxu0 %v1253
        %1520 = vmatpush.bf16.msra.mxu0 %v1247
        %1521 = vmatmul.bf16.gmra.mxu0 %v796
        %v1522 = vpop.f32.mrf.mxu0
        %v1523 = vadd.f32 %v1509, %v1522
        %v1524 = vpop.f32.mrf.mxu0
        %v1525 = vadd.f32 %v1511, %v1524
        %1526 = vdwg.mxu0
        %1527 = vmatpush.bf16.msra.mxu0 %v1242
        %1528 = vmatpush.bf16.msra.mxu0 %v1236
        %1529 = vmatpush.bf16.msra.mxu0 %v1230
        %1530 = vmatpush.bf16.msra.mxu0 %v1224
        %1531 = vmatpush.bf16.msra.mxu0 %v1218
        %1532 = vmatpush.bf16.msra.mxu0 %v1212
        %1533 = vmatpush.bf16.msra.mxu0 %v1206
        %1534 = vmatpush.bf16.msra.mxu0 %v1200
        %1535 = vmatmul.bf16.gmra.mxu0 %v795
        %v1536 = vpop.f32.mrf.mxu0
        %v1537 = vadd.f32 %v900, %v1536
        %v1538 = vpop.f32.mrf.mxu0
        %v1539 = vadd.f32 %v900, %v1538
        %1540 = vdwg.mxu0
        %1541 = vmatpush.bf16.msra.mxu0 %v1290
        %1542 = vmatpush.bf16.msra.mxu0 %v1284
        %1543 = vmatpush.bf16.msra.mxu0 %v1278
        %1544 = vmatpush.bf16.msra.mxu0 %v1272
        %1545 = vmatpush.bf16.msra.mxu0 %v1266
        %1546 = vmatpush.bf16.msra.mxu0 %v1260
        %1547 = vmatpush.bf16.msra.mxu0 %v1254
        %1548 = vmatpush.bf16.msra.mxu0 %v1248
        %1549 = vmatmul.bf16.gmra.mxu0 %v796
        %v1550 = vpop.f32.mrf.mxu0
        %v1551 = vadd.f32 %v1537, %v1550
        %v1552 = vpop.f32.mrf.mxu0
        %v1553 = vadd.f32 %v1539, %v1552
        %1554 = vdwg.mxu0
        %v1555 = vpack.c.bf16 %v1413, %v1411
        %v1556 = vpack.c.bf16 %v1469, %v1467
        %v1557 = vpack.c.bf16 %v1525, %v1523
        %1558 = vmatpush.bf16.xpose.msra.mxu0 0
        %1559 = vmatpush.bf16.xpose.msra.mxu0 0
        %1560 = vmatpush.bf16.xpose.msra.mxu0 0
        %1561 = vmatpush.bf16.xpose.msra.mxu0 0
        %1562 = vmatpush.bf16.xpose.msra.mxu0 0
        %1563 = vmatpush.bf16.xpose.msra.mxu0 0
        %1564 = vmatpush.bf16.xpose.msra.mxu0 0
        %1565 = vmatpush.bf16.xpose.msra.mxu0 %v1556
        %1566 = vmatmul.bf16.gmra.mxu0 %v1555
        %v1567 = vpop.f32.mrf.mxu0
        %v1568 = vadd.f32 0.0, %v1567
        %v1569 = vpop.f32.mrf.mxu0
        %v1570 = vadd.f32 0.0, %v1569
        %1571 = vdwg.mxu0
        %vm1572 = vcmask 130048
        %v1573 = vsel %vm1572, %v1568, -inf
        %1574 = vmax.xlane.f32.xlu0 %v1573
        %v1575 = vpop.xlane.xlu0 %1574
        %v1576 = vsel %vm1572, %v1570, -inf
        %1577 = vmax.xlane.f32.xlu0 %v1576
        %v1578 = vpop.xlane.xlu0 %1577
        %v1579 = vsub.f32 %v1568, %v1575
        %v1580 = vsub.f32 %v1570, %v1578
        %v1581 = vmul.f32 %v1579, 1.442695
        %v1582 = vpow.pop %v1581
        %v1583 = vmul.f32 %v1580, 1.442695
        %v1584 = vpow.pop %v1583
        %v1585 = vsel %vm1572, %v1582, 0.0
        %1586 = vadd.xlane.f32.xlu0 %v1585
        %v1587 = vpop.xlane.xlu0 %1586
        %v1588 = vsel %vm1572, %v1584, 0.0
        %1589 = vadd.xlane.f32.xlu0 %v1588
        %v1590 = vpop.xlane.xlu0 %1589
        %v1591 = vrcp.pop %v1587
        %v1592 = vrcp.pop %v1590
        %v1593 = vmul.f32 %v1582, %v1591
        %v1594 = vmul.f32 %v1584, %v1592
        %v1595 = vpack.c.bf16 %v1594, %v1593
        %v1597 = vsel %vm1572, %v1595, 0
        %1599 = vmatpush.bf16.msra.mxu0 0
        %1600 = vmatpush.bf16.msra.mxu0 0
        %1601 = vmatpush.bf16.msra.mxu0 0
        %1602 = vmatpush.bf16.msra.mxu0 0
        %1603 = vmatpush.bf16.msra.mxu0 0
        %1604 = vmatpush.bf16.msra.mxu0 0
        %1605 = vmatpush.bf16.msra.mxu0 0
        %1606 = vmatpush.bf16.msra.mxu0 %v1557
        %1607 = vmatmul.bf16.gmra.mxu0 %v1597
        %v1608 = vpop.f32.mrf.mxu0
        %v1609 = vadd.f32 0.0, %v1608
        %v1610 = vpop.f32.mrf.mxu0
        %v1611 = vadd.f32 0.0, %v1610
        %1612 = vdwg.mxu0
        %1613 = vst [vmem:[#allocation2] sm:$0xff] %v1609
        %1614 = vst [vmem:[#allocation2 + $0x10] sm:$0xff] %v1611
        %v1615 = vpack.c.bf16 %v1441, %v1439
        %v1616 = vpack.c.bf16 %v1497, %v1495
        %v1617 = vpack.c.bf16 %v1553, %v1551
        %1618 = vmatpush.bf16.xpose.msra.mxu0 0
        %1619 = vmatpush.bf16.xpose.msra.mxu0 0
        %1620 = vmatpush.bf16.xpose.msra.mxu0 0
        %1621 = vmatpush.bf16.xpose.msra.mxu0 0
        %1622 = vmatpush.bf16.xpose.msra.mxu0 0
        %1623 = vmatpush.bf16.xpose.msra.mxu0 0
        %1624 = vmatpush.bf16.xpose.msra.mxu0 0
        %1625 = vmatpush.bf16.xpose.msra.mxu0 %v1616
        %1626 = vmatmul.bf16.gmra.mxu0 %v1615
        %v1627 = vpop.f32.mrf.mxu0
        %v1628 = vadd.f32 0.0, %v1627
        %v1629 = vpop.f32.mrf.mxu0
        %v1630 = vadd.f32 0.0, %v1629
        %1631 = vdwg.mxu0
        %v1632 = vsel %vm1572, %v1628, -inf
        %1633 = vmax.xlane.f32.xlu0 %v1632
        %v1634 = vpop.xlane.xlu0 %1633
        %v1635 = vsel %vm1572, %v1630, -inf
        %1636 = vmax.xlane.f32.xlu0 %v1635
        %v1637 = vpop.xlane.xlu0 %1636
        %v1638 = vsub.f32 %v1628, %v1634
        %v1639 = vsub.f32 %v1630, %v1637
        %v1640 = vmul.f32 %v1638, 1.442695
        %v1641 = vpow.pop %v1640
        %v1642 = vmul.f32 %v1639, 1.442695
        %v1643 = vpow.pop %v1642
        %v1644 = vsel %vm1572, %v1641, 0.0
        %1645 = vadd.xlane.f32.xlu0 %v1644
        %v1646 = vpop.xlane.xlu0 %1645
        %v1647 = vsel %vm1572, %v1643, 0.0
        %1648 = vadd.xlane.f32.xlu0 %v1647
        %v1649 = vpop.xlane.xlu0 %1648
        %v1650 = vrcp.pop %v1646
        %v1651 = vrcp.pop %v1649
        %v1652 = vmul.f32 %v1641, %v1650
        %v1653 = vmul.f32 %v1643, %v1651
        %v1654 = vpack.c.bf16 %v1653, %v1652
        %v1656 = vsel %vm1572, %v1654, 0
        %1658 = vmatpush.bf16.msra.mxu0 0
        %1659 = vmatpush.bf16.msra.mxu0 0
        %1660 = vmatpush.bf16.msra.mxu0 0
        %1661 = vmatpush.bf16.msra.mxu0 0
        %1662 = vmatpush.bf16.msra.mxu0 0
        %1663 = vmatpush.bf16.msra.mxu0 0
        %1664 = vmatpush.bf16.msra.mxu0 0
        %1665 = vmatpush.bf16.msra.mxu0 %v1617
        %1666 = vmatmul.bf16.gmra.mxu0 %v1656
        %v1667 = vpop.f32.mrf.mxu0
        %v1668 = vadd.f32 0.0, %v1667
        %v1669 = vpop.f32.mrf.mxu0
        %v1670 = vadd.f32 0.0, %v1669
        %1671 = vdwg.mxu0
        %1672 = vst [vmem:[#allocation2 + $0x8] sm:$0xff] %v1668
        %1673 = vst [vmem:[#allocation2 + $0x18] sm:$0xff] %v1670
        %v1674 = vld [vmem:[#allocation2] sm:$0xff]
        %v1675 = vld [vmem:[#allocation2 + $0x8] sm:$0xff]
        %v1676 = vld [vmem:[#allocation2 + $0x10] sm:$0xff]
        %v1677 = vld [vmem:[#allocation2 + $0x18] sm:$0xff]
        %v1678 = vpack.c.bf16 %v1676, %v1674
        %v1679 = vpack.c.bf16 %v1677, %v1675
        %v1680 = vld [vmem:[#allocation7] sm:$0xff]
        %v1681 = vld [vmem:[#allocation7 + $0x8] sm:$0xff]
        %v1682 = vld [vmem:[#allocation7 + $0x10] sm:$0xff]
        %v1683 = vld [vmem:[#allocation7 + $0x18] sm:$0xff]
        %v1684 = vld [vmem:[#allocation7 + $0x20] sm:$0xff]
        %v1685 = vld [vmem:[#allocation7 + $0x28] sm:$0xff]
        %v1686 = vld [vmem:[#allocation7 + $0x30] sm:$0xff]
        %v1687 = vld [vmem:[#allocation7 + $0x38] sm:$0xff]
        %v1688 = vld [vmem:[#allocation7 + $0x40] sm:$0xff]
        %v1689 = vld [vmem:[#allocation7 + $0x48] sm:$0xff]
        %v1690 = vld [vmem:[#allocation7 + $0x50] sm:$0xff]
        %v1691 = vld [vmem:[#allocation7 + $0x58] sm:$0xff]
        %v1692 = vld [vmem:[#allocation7 + $0x60] sm:$0xff]
        %v1693 = vld [vmem:[#allocation7 + $0x68] sm:$0xff]
        %v1694 = vld [vmem:[#allocation7 + $0x70] sm:$0xff]
        %v1695 = vld [vmem:[#allocation7 + $0x78] sm:$0xff]
        %v1696 = vld [vmem:[#allocation7 + $0x80] sm:$0xff]
        %v1697 = vld [vmem:[#allocation7 + $0x88] sm:$0xff]
        %v1698 = vld [vmem:[#allocation7 + $0x90] sm:$0xff]
        %v1699 = vld [vmem:[#allocation7 + $0x98] sm:$0xff]
        %v1700 = vld [vmem:[#allocation7 + $0xa0] sm:$0xff]
        %v1701 = vld [vmem:[#allocation7 + $0xa8] sm:$0xff]
        %v1702 = vld [vmem:[#allocation7 + $0xb0] sm:$0xff]
        %v1703 = vld [vmem:[#allocation7 + $0xb8] sm:$0xff]
        %v1704 = vld [vmem:[#allocation7 + $0xc0] sm:$0xff]
        %v1705 = vld [vmem:[#allocation7 + $0xc8] sm:$0xff]
        %v1706 = vld [vmem:[#allocation7 + $0xd0] sm:$0xff]
        %v1707 = vld [vmem:[#allocation7 + $0xd8] sm:$0xff]
        %v1708 = vld [vmem:[#allocation7 + $0xe0] sm:$0xff]
        %v1709 = vld [vmem:[#allocation7 + $0xe8] sm:$0xff]
        %v1710 = vld [vmem:[#allocation7 + $0xf0] sm:$0xff]
        %v1711 = vld [vmem:[#allocation7 + $0xf8] sm:$0xff]
        %v1744 = vunpack.c.l.b16 %v1680
        %v1745 = vunpack.c.h.b16 %v1680
        %v1746 = vunpack.c.l.b16 %v1681
        %v1747 = vunpack.c.h.b16 %v1681
        %v1748 = vunpack.c.l.b16 %v1682
        %v1749 = vunpack.c.h.b16 %v1682
        %v1750 = vunpack.c.l.b16 %v1683
        %v1751 = vunpack.c.h.b16 %v1683
        %v1752 = vunpack.c.l.b16 %v1684
        %v1753 = vunpack.c.h.b16 %v1684
        %v1754 = vunpack.c.l.b16 %v1685
        %v1755 = vunpack.c.h.b16 %v1685
        %v1756 = vunpack.c.l.b16 %v1686
        %v1757 = vunpack.c.h.b16 %v1686
        %v1758 = vunpack.c.l.b16 %v1687
        %v1759 = vunpack.c.h.b16 %v1687
        %v1760 = vunpack.c.l.b16 %v1688
        %v1761 = vunpack.c.h.b16 %v1688
        %v1762 = vunpack.c.l.b16 %v1689
        %v1763 = vunpack.c.h.b16 %v1689
        %v1764 = vunpack.c.l.b16 %v1690
        %v1765 = vunpack.c.h.b16 %v1690
        %v1766 = vunpack.c.l.b16 %v1691
        %v1767 = vunpack.c.h.b16 %v1691
        %v1768 = vunpack.c.l.b16 %v1692
        %v1769 = vunpack.c.h.b16 %v1692
        %v1770 = vunpack.c.l.b16 %v1693
        %v1771 = vunpack.c.h.b16 %v1693
        %v1772 = vunpack.c.l.b16 %v1694
        %v1773 = vunpack.c.h.b16 %v1694
        %v1774 = vunpack.c.l.b16 %v1695
        %v1775 = vunpack.c.h.b16 %v1695
        %v1776 = vunpack.c.l.b16 %v1696
        %v1777 = vunpack.c.h.b16 %v1696
        %v1778 = vunpack.c.l.b16 %v1697
        %v1779 = vunpack.c.h.b16 %v1697
        %v1780 = vunpack.c.l.b16 %v1698
        %v1781 = vunpack.c.h.b16 %v1698
        %v1782 = vunpack.c.l.b16 %v1699
        %v1783 = vunpack.c.h.b16 %v1699
        %v1784 = vunpack.c.l.b16 %v1700
        %v1785 = vunpack.c.h.b16 %v1700
        %v1786 = vunpack.c.l.b16 %v1701
        %v1787 = vunpack.c.h.b16 %v1701
        %v1788 = vunpack.c.l.b16 %v1702
        %v1789 = vunpack.c.h.b16 %v1702
        %v1790 = vunpack.c.l.b16 %v1703
        %v1791 = vunpack.c.h.b16 %v1703
        %v1792 = vunpack.c.l.b16 %v1704
        %v1793 = vunpack.c.h.b16 %v1704
        %v1794 = vunpack.c.l.b16 %v1705
        %v1795 = vunpack.c.h.b16 %v1705
        %v1796 = vunpack.c.l.b16 %v1706
        %v1797 = vunpack.c.h.b16 %v1706
        %v1798 = vunpack.c.l.b16 %v1707
        %v1799 = vunpack.c.h.b16 %v1707
        %v1800 = vunpack.c.l.b16 %v1708
        %v1801 = vunpack.c.h.b16 %v1708
        %v1802 = vunpack.c.l.b16 %v1709
        %v1803 = vunpack.c.h.b16 %v1709
        %v1804 = vunpack.c.l.b16 %v1710
        %v1805 = vunpack.c.h.b16 %v1710
        %v1806 = vunpack.c.l.b16 %v1711
        %v1807 = vunpack.c.h.b16 %v1711
        %v1808 = vpack.c.b16 %v1746, %v1744
        %v1809 = vpack.c.b16 %v1747, %v1745
        %v1810 = vpack.c.b16 %v1750, %v1748
        %v1811 = vpack.c.b16 %v1751, %v1749
        %v1812 = vpack.c.b16 %v1754, %v1752
        %v1813 = vpack.c.b16 %v1755, %v1753
        %v1814 = vpack.c.b16 %v1758, %v1756
        %v1815 = vpack.c.b16 %v1759, %v1757
        %v1816 = vpack.c.b16 %v1762, %v1760
        %v1817 = vpack.c.b16 %v1763, %v1761
        %v1818 = vpack.c.b16 %v1766, %v1764
        %v1819 = vpack.c.b16 %v1767, %v1765
        %v1820 = vpack.c.b16 %v1770, %v1768
        %v1821 = vpack.c.b16 %v1771, %v1769
        %v1822 = vpack.c.b16 %v1774, %v1772
        %v1823 = vpack.c.b16 %v1775, %v1773
        %v1824 = vpack.c.b16 %v1778, %v1776
        %v1825 = vpack.c.b16 %v1779, %v1777
        %v1826 = vpack.c.b16 %v1782, %v1780
        %v1827 = vpack.c.b16 %v1783, %v1781
        %v1828 = vpack.c.b16 %v1786, %v1784
        %v1829 = vpack.c.b16 %v1787, %v1785
        %v1830 = vpack.c.b16 %v1790, %v1788
        %v1831 = vpack.c.b16 %v1791, %v1789
        %v1832 = vpack.c.b16 %v1794, %v1792
        %v1833 = vpack.c.b16 %v1795, %v1793
        %v1834 = vpack.c.b16 %v1798, %v1796
        %v1835 = vpack.c.b16 %v1799, %v1797
        %v1836 = vpack.c.b16 %v1802, %v1800
        %v1837 = vpack.c.b16 %v1803, %v1801
        %v1838 = vpack.c.b16 %v1806, %v1804
        %v1839 = vpack.c.b16 %v1807, %v1805
        %1872 = vmatpush.bf16.msra.mxu0 %v1822
        %1873 = vmatpush.bf16.msra.mxu0 %v1820
        %1874 = vmatpush.bf16.msra.mxu0 %v1818
        %1875 = vmatpush.bf16.msra.mxu0 %v1816
        %1876 = vmatpush.bf16.msra.mxu0 %v1814
        %1877 = vmatpush.bf16.msra.mxu0 %v1812
        %1878 = vmatpush.bf16.msra.mxu0 %v1810
        %1879 = vmatpush.bf16.msra.mxu0 %v1808
        %1880 = vmatmul.bf16.gmra.mxu0 %v1678
        %v1881 = vpop.f32.mrf.mxu0
        %v1882 = vadd.f32 0.0, %v1881
        %v1883 = vpop.f32.mrf.mxu0
        %v1884 = vadd.f32 0.0, %v1883
        %1885 = vdwg.mxu0
        %1886 = vmatpush.bf16.msra.mxu0 %v1838
        %1887 = vmatpush.bf16.msra.mxu0 %v1836
        %1888 = vmatpush.bf16.msra.mxu0 %v1834
        %1889 = vmatpush.bf16.msra.mxu0 %v1832
        %1890 = vmatpush.bf16.msra.mxu0 %v1830
        %1891 = vmatpush.bf16.msra.mxu0 %v1828
        %1892 = vmatpush.bf16.msra.mxu0 %v1826
        %1893 = vmatpush.bf16.msra.mxu0 %v1824
        %1894 = vmatmul.bf16.gmra.mxu0 %v1679
        %v1895 = vpop.f32.mrf.mxu0
        %v1896 = vadd.f32 %v1882, %v1895
        %v1897 = vpop.f32.mrf.mxu0
        %v1898 = vadd.f32 %v1884, %v1897
        %1899 = vdwg.mxu0
        %1900 = vmatpush.bf16.msra.mxu0 %v1823
        %1901 = vmatpush.bf16.msra.mxu0 %v1821
        %1902 = vmatpush.bf16.msra.mxu0 %v1819
        %1903 = vmatpush.bf16.msra.mxu0 %v1817
        %1904 = vmatpush.bf16.msra.mxu0 %v1815
        %1905 = vmatpush.bf16.msra.mxu0 %v1813
        %1906 = vmatpush.bf16.msra.mxu0 %v1811
        %1907 = vmatpush.bf16.msra.mxu0 %v1809
        %1908 = vmatmul.bf16.gmra.mxu0 %v1678
        %v1909 = vpop.f32.mrf.mxu0
        %v1910 = vadd.f32 0.0, %v1909
        %v1911 = vpop.f32.mrf.mxu0
        %v1912 = vadd.f32 0.0, %v1911
        %1913 = vdwg.mxu0
        %1914 = vmatpush.bf16.msra.mxu0 %v1839
        %1915 = vmatpush.bf16.msra.mxu0 %v1837
        %1916 = vmatpush.bf16.msra.mxu0 %v1835
        %1917 = vmatpush.bf16.msra.mxu0 %v1833
        %1918 = vmatpush.bf16.msra.mxu0 %v1831
        %1919 = vmatpush.bf16.msra.mxu0 %v1829
        %1920 = vmatpush.bf16.msra.mxu0 %v1827
        %1921 = vmatpush.bf16.msra.mxu0 %v1825
        %1922 = vmatmul.bf16.gmra.mxu0 %v1679
        %v1923 = vpop.f32.mrf.mxu0
        %v1924 = vadd.f32 %v1910, %v1923
        %v1925 = vpop.f32.mrf.mxu0
        %v1926 = vadd.f32 %v1912, %v1925
        %1927 = vdwg.mxu0
        %v1928 = vadd.f32 %v714, %v1896
        %v1929 = vadd.f32 %v715, %v1924
        %v1930 = vadd.f32 %v716, %v1898
        %v1931 = vadd.f32 %v717, %v1926
        %v1932 = vld [vmem:[#allocation8] sm:$0x3]
        %v1934 = vperm.slane %v1932, 0
        %v1935 = vperm.slane %v1932, 1
        %v1938 = vadd.f32 %v1928, %v1934
        %v1939 = vadd.f32 %v1929, %v1935
        %v1940 = vadd.f32 %v1930, %v1934
        %v1941 = vadd.f32 %v1931, %v1935
        %v1942 = vld [vmem:[#allocation10] sm:$0x3]
        %v1943 = vld [vmem:[#allocation11] sm:$0x3]
        %v1944 = vadd.f32 %v1938, %v1939
        %1945 = vadd.xlane.f32.xlu0 %v1944
        %v1946 = vpop.xlane.xlu0 %1945
        %v1947 = vadd.f32 %v1940, %v1941
        %1948 = vadd.xlane.f32.xlu0 %v1947
        %v1949 = vpop.xlane.xlu0 %1948
        %v1950 = vmul.f32 %v1946, %v732
        %v1951 = vmul.f32 %v1949, %v732
        %v1952 = vsub.f32 %v1938, %v1950
        %v1953 = vsub.f32 %v1939, %v1950
        %v1954 = vsub.f32 %v1940, %v1951
        %v1955 = vsub.f32 %v1941, %v1951
        %v1956 = vmul.f32 %v1952, %v1952
        %v1957 = vmul.f32 %v1953, %v1953
        %v1958 = vmul.f32 %v1954, %v1954
        %v1959 = vmul.f32 %v1955, %v1955
        %v1960 = vadd.f32 %v1956, %v1957
        %1961 = vadd.xlane.f32.xlu0 %v1960
        %v1962 = vpop.xlane.xlu0 %1961
        %v1963 = vadd.f32 %v1958, %v1959
        %1964 = vadd.xlane.f32.xlu0 %v1963
        %v1965 = vpop.xlane.xlu0 %1964
        %v1966 = vmul.f32 %v1962, %v732
        %v1967 = vmul.f32 %v1965, %v732
        %v1968 = vadd.f32 %v1966, 1e-06
        %v1969 = vadd.f32 %v1967, 1e-06
        %v1970 = vrsqrt.pop %v1968
        %v1971 = vmul.f32 %v1970, %v1968
        %v1972 = vmul.f32 %v1971, %v1970
        %v1973 = vmul.f32 0.5, %v1972
        %v1974 = vsub.f32 1.5, %v1973
        %v1975 = vmul.f32 %v1970, %v1974
        %vm1976 = vweird.f32 %v1968
        %vm1977 = vweird.f32 %v1970
        %vm1978 = vmor %vm1976, %vm1977
        %v1979 = vsel %vm1978, %v1970, %v1975
        %v1980 = vrsqrt.pop %v1969
        %v1981 = vmul.f32 %v1980, %v1969
        %v1982 = vmul.f32 %v1981, %v1980
        %v1983 = vmul.f32 0.5, %v1982
        %v1984 = vsub.f32 1.5, %v1983
        %v1985 = vmul.f32 %v1980, %v1984
        %vm1986 = vweird.f32 %v1969
        %vm1987 = vweird.f32 %v1980
        %vm1988 = vmor %vm1986, %vm1987
        %v1989 = vsel %vm1988, %v1980, %v1985
        %v1990 = vmul.f32 %v1952, %v1979
        %v1991 = vmul.f32 %v1953, %v1979
        %v1992 = vmul.f32 %v1954, %v1989
        %v1993 = vmul.f32 %v1955, %v1989
        %v1995 = vperm.slane %v1942, 0
        %v1996 = vperm.slane %v1942, 1
        %v1999 = vmul.f32 %v1990, %v1995
        %v2000 = vmul.f32 %v1991, %v1996
        %v2001 = vmul.f32 %v1992, %v1995
        %v2002 = vmul.f32 %v1993, %v1996
        %v2004 = vperm.slane %v1943, 0
        %v2005 = vperm.slane %v1943, 1
        %v2008 = vadd.f32 %v1999, %v2004
        %v2009 = vadd.f32 %v2000, %v2005
        %v2010 = vadd.f32 %v2001, %v2004
        %v2011 = vadd.f32 %v2002, %v2005
        %v2012 = vpack.c.bf16 %v2010, %v2008
        %v2013 = vpack.c.bf16 %v2011, %v2009
        %v2014 = vld [vmem:[%s9] sm:$0xff]
        %v2015 = vld [vmem:[%s9 + $0x8] sm:$0xff]
        %v2016 = vld [vmem:[%s9 + $0x10] sm:$0xff]
        %v2017 = vld [vmem:[%s9 + $0x18] sm:$0xff]
        %v2018 = vld [vmem:[%s9 + $0x20] sm:$0xff]
        %v2019 = vld [vmem:[%s9 + $0x28] sm:$0xff]
        %v2020 = vld [vmem:[%s9 + $0x30] sm:$0xff]
        %v2021 = vld [vmem:[%s9 + $0x38] sm:$0xff]
        %v2022 = vld [vmem:[%s9 + $0x40] sm:$0xff]
        %v2023 = vld [vmem:[%s9 + $0x48] sm:$0xff]
        %v2024 = vld [vmem:[%s9 + $0x50] sm:$0xff]
        %v2025 = vld [vmem:[%s9 + $0x58] sm:$0xff]
        %v2026 = vld [vmem:[%s9 + $0x60] sm:$0xff]
        %v2027 = vld [vmem:[%s9 + $0x68] sm:$0xff]
        %v2028 = vld [vmem:[%s9 + $0x70] sm:$0xff]
        %v2029 = vld [vmem:[%s9 + $0x78] sm:$0xff]
        %v2030 = vld [vmem:[%s9 + $0x80] sm:$0xff]
        %v2031 = vld [vmem:[%s9 + $0x88] sm:$0xff]
        %v2032 = vld [vmem:[%s9 + $0x90] sm:$0xff]
        %v2033 = vld [vmem:[%s9 + $0x98] sm:$0xff]
        %v2034 = vld [vmem:[%s9 + $0xa0] sm:$0xff]
        %v2035 = vld [vmem:[%s9 + $0xa8] sm:$0xff]
        %v2036 = vld [vmem:[%s9 + $0xb0] sm:$0xff]
        %v2037 = vld [vmem:[%s9 + $0xb8] sm:$0xff]
        %v2038 = vld [vmem:[%s9 + $0xc0] sm:$0xff]
        %v2039 = vld [vmem:[%s9 + $0xc8] sm:$0xff]
        %v2040 = vld [vmem:[%s9 + $0xd0] sm:$0xff]
        %v2041 = vld [vmem:[%s9 + $0xd8] sm:$0xff]
        %v2042 = vld [vmem:[%s9 + $0xe0] sm:$0xff]
        %v2043 = vld [vmem:[%s9 + $0xe8] sm:$0xff]
        %v2044 = vld [vmem:[%s9 + $0xf0] sm:$0xff]
        %v2045 = vld [vmem:[%s9 + $0xf8] sm:$0xff]
        %v2046 = vld [vmem:[%s9 + $0x100] sm:$0xff]
        %v2047 = vld [vmem:[%s9 + $0x108] sm:$0xff]
        %v2048 = vld [vmem:[%s9 + $0x110] sm:$0xff]
        %v2049 = vld [vmem:[%s9 + $0x118] sm:$0xff]
        %v2050 = vld [vmem:[%s9 + $0x120] sm:$0xff]
        %v2051 = vld [vmem:[%s9 + $0x128] sm:$0xff]
        %v2052 = vld [vmem:[%s9 + $0x130] sm:$0xff]
        %v2053 = vld [vmem:[%s9 + $0x138] sm:$0xff]
        %v2054 = vld [vmem:[%s9 + $0x140] sm:$0xff]
        %v2055 = vld [vmem:[%s9 + $0x148] sm:$0xff]
        %v2056 = vld [vmem:[%s9 + $0x150] sm:$0xff]
        %v2057 = vld [vmem:[%s9 + $0x158] sm:$0xff]
        %v2058 = vld [vmem:[%s9 + $0x160] sm:$0xff]
        %v2059 = vld [vmem:[%s9 + $0x168] sm:$0xff]
        %v2060 = vld [vmem:[%s9 + $0x170] sm:$0xff]
        %v2061 = vld [vmem:[%s9 + $0x178] sm:$0xff]
        %v2062 = vld [vmem:[%s9 + $0x180] sm:$0xff]
        %v2063 = vld [vmem:[%s9 + $0x188] sm:$0xff]
        %v2064 = vld [vmem:[%s9 + $0x190] sm:$0xff]
        %v2065 = vld [vmem:[%s9 + $0x198] sm:$0xff]
        %v2066 = vld [vmem:[%s9 + $0x1a0] sm:$0xff]
        %v2067 = vld [vmem:[%s9 + $0x1a8] sm:$0xff]
        %v2068 = vld [vmem:[%s9 + $0x1b0] sm:$0xff]
        %v2069 = vld [vmem:[%s9 + $0x1b8] sm:$0xff]
        %v2070 = vld [vmem:[%s9 + $0x1c0] sm:$0xff]
        %v2071 = vld [vmem:[%s9 + $0x1c8] sm:$0xff]
        %v2072 = vld [vmem:[%s9 + $0x1d0] sm:$0xff]
        %v2073 = vld [vmem:[%s9 + $0x1d8] sm:$0xff]
        %v2074 = vld [vmem:[%s9 + $0x1e0] sm:$0xff]
        %v2075 = vld [vmem:[%s9 + $0x1e8] sm:$0xff]
        %v2076 = vld [vmem:[%s9 + $0x1f0] sm:$0xff]
        %v2077 = vld [vmem:[%s9 + $0x1f8] sm:$0xff]
        %v2078 = vld [vmem:[%s10] sm:$0xf]
        %v2080 = vperm.slane %v2078, 0
        %v2081 = vperm.slane %v2078, 1
        %v2082 = vperm.slane %v2078, 2
        %v2083 = vperm.slane %v2078, 3
        %v2152 = vunpack.c.l.b16 %v2014
        %v2153 = vunpack.c.h.b16 %v2014
        %v2154 = vunpack.c.l.b16 %v2015
        %v2155 = vunpack.c.h.b16 %v2015
        %v2156 = vunpack.c.l.b16 %v2016
        %v2157 = vunpack.c.h.b16 %v2016
        %v2158 = vunpack.c.l.b16 %v2017
        %v2159 = vunpack.c.h.b16 %v2017
        %v2160 = vunpack.c.l.b16 %v2018
        %v2161 = vunpack.c.h.b16 %v2018
        %v2162 = vunpack.c.l.b16 %v2019
        %v2163 = vunpack.c.h.b16 %v2019
        %v2164 = vunpack.c.l.b16 %v2020
        %v2165 = vunpack.c.h.b16 %v2020
        %v2166 = vunpack.c.l.b16 %v2021
        %v2167 = vunpack.c.h.b16 %v2021
        %v2168 = vunpack.c.l.b16 %v2022
        %v2169 = vunpack.c.h.b16 %v2022
        %v2170 = vunpack.c.l.b16 %v2023
        %v2171 = vunpack.c.h.b16 %v2023
        %v2172 = vunpack.c.l.b16 %v2024
        %v2173 = vunpack.c.h.b16 %v2024
        %v2174 = vunpack.c.l.b16 %v2025
        %v2175 = vunpack.c.h.b16 %v2025
        %v2176 = vunpack.c.l.b16 %v2026
        %v2177 = vunpack.c.h.b16 %v2026
        %v2178 = vunpack.c.l.b16 %v2027
        %v2179 = vunpack.c.h.b16 %v2027
        %v2180 = vunpack.c.l.b16 %v2028
        %v2181 = vunpack.c.h.b16 %v2028
        %v2182 = vunpack.c.l.b16 %v2029
        %v2183 = vunpack.c.h.b16 %v2029
        %v2184 = vunpack.c.l.b16 %v2030
        %v2185 = vunpack.c.h.b16 %v2030
        %v2186 = vunpack.c.l.b16 %v2031
        %v2187 = vunpack.c.h.b16 %v2031
        %v2188 = vunpack.c.l.b16 %v2032
        %v2189 = vunpack.c.h.b16 %v2032
        %v2190 = vunpack.c.l.b16 %v2033
        %v2191 = vunpack.c.h.b16 %v2033
        %v2192 = vunpack.c.l.b16 %v2034
        %v2193 = vunpack.c.h.b16 %v2034
        %v2194 = vunpack.c.l.b16 %v2035
        %v2195 = vunpack.c.h.b16 %v2035
        %v2196 = vunpack.c.l.b16 %v2036
        %v2197 = vunpack.c.h.b16 %v2036
        %v2198 = vunpack.c.l.b16 %v2037
        %v2199 = vunpack.c.h.b16 %v2037
        %v2200 = vunpack.c.l.b16 %v2038
        %v2201 = vunpack.c.h.b16 %v2038
        %v2202 = vunpack.c.l.b16 %v2039
        %v2203 = vunpack.c.h.b16 %v2039
        %v2204 = vunpack.c.l.b16 %v2040
        %v2205 = vunpack.c.h.b16 %v2040
        %v2206 = vunpack.c.l.b16 %v2041
        %v2207 = vunpack.c.h.b16 %v2041
        %v2208 = vunpack.c.l.b16 %v2042
        %v2209 = vunpack.c.h.b16 %v2042
        %v2210 = vunpack.c.l.b16 %v2043
        %v2211 = vunpack.c.h.b16 %v2043
        %v2212 = vunpack.c.l.b16 %v2044
        %v2213 = vunpack.c.h.b16 %v2044
        %v2214 = vunpack.c.l.b16 %v2045
        %v2215 = vunpack.c.h.b16 %v2045
        %v2216 = vunpack.c.l.b16 %v2046
        %v2217 = vunpack.c.h.b16 %v2046
        %v2218 = vunpack.c.l.b16 %v2047
        %v2219 = vunpack.c.h.b16 %v2047
        %v2220 = vunpack.c.l.b16 %v2048
        %v2221 = vunpack.c.h.b16 %v2048
        %v2222 = vunpack.c.l.b16 %v2049
        %v2223 = vunpack.c.h.b16 %v2049
        %v2224 = vunpack.c.l.b16 %v2050
        %v2225 = vunpack.c.h.b16 %v2050
        %v2226 = vunpack.c.l.b16 %v2051
        %v2227 = vunpack.c.h.b16 %v2051
        %v2228 = vunpack.c.l.b16 %v2052
        %v2229 = vunpack.c.h.b16 %v2052
        %v2230 = vunpack.c.l.b16 %v2053
        %v2231 = vunpack.c.h.b16 %v2053
        %v2232 = vunpack.c.l.b16 %v2054
        %v2233 = vunpack.c.h.b16 %v2054
        %v2234 = vunpack.c.l.b16 %v2055
        %v2235 = vunpack.c.h.b16 %v2055
        %v2236 = vunpack.c.l.b16 %v2056
        %v2237 = vunpack.c.h.b16 %v2056
        %v2238 = vunpack.c.l.b16 %v2057
        %v2239 = vunpack.c.h.b16 %v2057
        %v2240 = vunpack.c.l.b16 %v2058
        %v2241 = vunpack.c.h.b16 %v2058
        %v2242 = vunpack.c.l.b16 %v2059
        %v2243 = vunpack.c.h.b16 %v2059
        %v2244 = vunpack.c.l.b16 %v2060
        %v2245 = vunpack.c.h.b16 %v2060
        %v2246 = vunpack.c.l.b16 %v2061
        %v2247 = vunpack.c.h.b16 %v2061
        %v2248 = vunpack.c.l.b16 %v2062
        %v2249 = vunpack.c.h.b16 %v2062
        %v2250 = vunpack.c.l.b16 %v2063
        %v2251 = vunpack.c.h.b16 %v2063
        %v2252 = vunpack.c.l.b16 %v2064
        %v2253 = vunpack.c.h.b16 %v2064
        %v2254 = vunpack.c.l.b16 %v2065
        %v2255 = vunpack.c.h.b16 %v2065
        %v2256 = vunpack.c.l.b16 %v2066
        %v2257 = vunpack.c.h.b16 %v2066
        %v2258 = vunpack.c.l.b16 %v2067
        %v2259 = vunpack.c.h.b16 %v2067
        %v2260 = vunpack.c.l.b16 %v2068
        %v2261 = vunpack.c.h.b16 %v2068
        %v2262 = vunpack.c.l.b16 %v2069
        %v2263 = vunpack.c.h.b16 %v2069
        %v2264 = vunpack.c.l.b16 %v2070
        %v2265 = vunpack.c.h.b16 %v2070
        %v2266 = vunpack.c.l.b16 %v2071
        %v2267 = vunpack.c.h.b16 %v2071
        %v2268 = vunpack.c.l.b16 %v2072
        %v2269 = vunpack.c.h.b16 %v2072
        %v2270 = vunpack.c.l.b16 %v2073
        %v2271 = vunpack.c.h.b16 %v2073
        %v2272 = vunpack.c.l.b16 %v2074
        %v2273 = vunpack.c.h.b16 %v2074
        %v2274 = vunpack.c.l.b16 %v2075
        %v2275 = vunpack.c.h.b16 %v2075
        %v2276 = vunpack.c.l.b16 %v2076
        %v2277 = vunpack.c.h.b16 %v2076
        %v2278 = vunpack.c.l.b16 %v2077
        %v2279 = vunpack.c.h.b16 %v2077
        %v2280 = vpack.c.b16 %v2156, %v2152
        %v2281 = vpack.c.b16 %v2157, %v2153
        %v2282 = vpack.c.b16 %v2158, %v2154
        %v2283 = vpack.c.b16 %v2159, %v2155
        %v2284 = vpack.c.b16 %v2164, %v2160
        %v2285 = vpack.c.b16 %v2165, %v2161
        %v2286 = vpack.c.b16 %v2166, %v2162
        %v2287 = vpack.c.b16 %v2167, %v2163
        %v2288 = vpack.c.b16 %v2172, %v2168
        %v2289 = vpack.c.b16 %v2173, %v2169
        %v2290 = vpack.c.b16 %v2174, %v2170
        %v2291 = vpack.c.b16 %v2175, %v2171
        %v2292 = vpack.c.b16 %v2180, %v2176
        %v2293 = vpack.c.b16 %v2181, %v2177
        %v2294 = vpack.c.b16 %v2182, %v2178
        %v2295 = vpack.c.b16 %v2183, %v2179
        %v2296 = vpack.c.b16 %v2188, %v2184
        %v2297 = vpack.c.b16 %v2189, %v2185
        %v2298 = vpack.c.b16 %v2190, %v2186
        %v2299 = vpack.c.b16 %v2191, %v2187
        %v2300 = vpack.c.b16 %v2196, %v2192
        %v2301 = vpack.c.b16 %v2197, %v2193
        %v2302 = vpack.c.b16 %v2198, %v2194
        %v2303 = vpack.c.b16 %v2199, %v2195
        %v2304 = vpack.c.b16 %v2204, %v2200
        %v2305 = vpack.c.b16 %v2205, %v2201
        %v2306 = vpack.c.b16 %v2206, %v2202
        %v2307 = vpack.c.b16 %v2207, %v2203
        %v2308 = vpack.c.b16 %v2212, %v2208
        %v2309 = vpack.c.b16 %v2213, %v2209
        %v2310 = vpack.c.b16 %v2214, %v2210
        %v2311 = vpack.c.b16 %v2215, %v2211
        %v2312 = vpack.c.b16 %v2220, %v2216
        %v2313 = vpack.c.b16 %v2221, %v2217
        %v2314 = vpack.c.b16 %v2222, %v2218
        %v2315 = vpack.c.b16 %v2223, %v2219
        %v2316 = vpack.c.b16 %v2228, %v2224
        %v2317 = vpack.c.b16 %v2229, %v2225
        %v2318 = vpack.c.b16 %v2230, %v2226
        %v2319 = vpack.c.b16 %v2231, %v2227
        %v2320 = vpack.c.b16 %v2236, %v2232
        %v2321 = vpack.c.b16 %v2237, %v2233
        %v2322 = vpack.c.b16 %v2238, %v2234
        %v2323 = vpack.c.b16 %v2239, %v2235
        %v2324 = vpack.c.b16 %v2244, %v2240
        %v2325 = vpack.c.b16 %v2245, %v2241
        %v2326 = vpack.c.b16 %v2246, %v2242
        %v2327 = vpack.c.b16 %v2247, %v2243
        %v2328 = vpack.c.b16 %v2252, %v2248
        %v2329 = vpack.c.b16 %v2253, %v2249
        %v2330 = vpack.c.b16 %v2254, %v2250
        %v2331 = vpack.c.b16 %v2255, %v2251
        %v2332 = vpack.c.b16 %v2260, %v2256
        %v2333 = vpack.c.b16 %v2261, %v2257
        %v2334 = vpack.c.b16 %v2262, %v2258
        %v2335 = vpack.c.b16 %v2263, %v2259
        %v2336 = vpack.c.b16 %v2268, %v2264
        %v2337 = vpack.c.b16 %v2269, %v2265
        %v2338 = vpack.c.b16 %v2270, %v2266
        %v2339 = vpack.c.b16 %v2271, %v2267
        %v2340 = vpack.c.b16 %v2276, %v2272
        %v2341 = vpack.c.b16 %v2277, %v2273
        %v2342 = vpack.c.b16 %v2278, %v2274
        %v2343 = vpack.c.b16 %v2279, %v2275
        %2408 = vmatpush.bf16.msra.mxu0 %v2308
        %2409 = vmatpush.bf16.msra.mxu0 %v2304
        %2410 = vmatpush.bf16.msra.mxu0 %v2300
        %2411 = vmatpush.bf16.msra.mxu0 %v2296
        %2412 = vmatpush.bf16.msra.mxu0 %v2292
        %2413 = vmatpush.bf16.msra.mxu0 %v2288
        %2414 = vmatpush.bf16.msra.mxu0 %v2284
        %2415 = vmatpush.bf16.msra.mxu0 %v2280
        %2416 = vmatmul.bf16.gmra.mxu0 %v2012
        %v2417 = vpop.f32.mrf.mxu0
        %v2418 = vadd.f32 %v2080, %v2417
        %v2419 = vpop.f32.mrf.mxu0
        %v2420 = vadd.f32 %v2080, %v2419
        %2421 = vdwg.mxu0
        %2422 = vmatpush.bf16.msra.mxu0 %v2340
        %2423 = vmatpush.bf16.msra.mxu0 %v2336
        %2424 = vmatpush.bf16.msra.mxu0 %v2332
        %2425 = vmatpush.bf16.msra.mxu0 %v2328
        %2426 = vmatpush.bf16.msra.mxu0 %v2324
        %2427 = vmatpush.bf16.msra.mxu0 %v2320
        %2428 = vmatpush.bf16.msra.mxu0 %v2316
        %2429 = vmatpush.bf16.msra.mxu0 %v2312
        %2430 = vmatmul.bf16.gmra.mxu0 %v2013
        %v2431 = vpop.f32.mrf.mxu0
        %v2432 = vadd.f32 %v2418, %v2431
        %v2433 = vpop.f32.mrf.mxu0
        %v2434 = vadd.f32 %v2420, %v2433
        %2435 = vdwg.mxu0
        %2436 = vmatpush.bf16.msra.mxu0 %v2309
        %2437 = vmatpush.bf16.msra.mxu0 %v2305
        %2438 = vmatpush.bf16.msra.mxu0 %v2301
        %2439 = vmatpush.bf16.msra.mxu0 %v2297
        %2440 = vmatpush.bf16.msra.mxu0 %v2293
        %2441 = vmatpush.bf16.msra.mxu0 %v2289
        %2442 = vmatpush.bf16.msra.mxu0 %v2285
        %2443 = vmatpush.bf16.msra.mxu0 %v2281
        %2444 = vmatmul.bf16.gmra.mxu0 %v2012
        %v2445 = vpop.f32.mrf.mxu0
        %v2446 = vadd.f32 %v2081, %v2445
        %v2447 = vpop.f32.mrf.mxu0
        %v2448 = vadd.f32 %v2081, %v2447
        %2449 = vdwg.mxu0
        %2450 = vmatpush.bf16.msra.mxu0 %v2341
        %2451 = vmatpush.bf16.msra.mxu0 %v2337
        %2452 = vmatpush.bf16.msra.mxu0 %v2333
        %2453 = vmatpush.bf16.msra.mxu0 %v2329
        %2454 = vmatpush.bf16.msra.mxu0 %v2325
        %2455 = vmatpush.bf16.msra.mxu0 %v2321
        %2456 = vmatpush.bf16.msra.mxu0 %v2317
        %2457 = vmatpush.bf16.msra.mxu0 %v2313
        %2458 = vmatmul.bf16.gmra.mxu0 %v2013
        %v2459 = vpop.f32.mrf.mxu0
        %v2460 = vadd.f32 %v2446, %v2459
        %v2461 = vpop.f32.mrf.mxu0
        %v2462 = vadd.f32 %v2448, %v2461
        %2463 = vdwg.mxu0
        %2464 = vmatpush.bf16.msra.mxu0 %v2310
        %2465 = vmatpush.bf16.msra.mxu0 %v2306
        %2466 = vmatpush.bf16.msra.mxu0 %v2302
        %2467 = vmatpush.bf16.msra.mxu0 %v2298
        %2468 = vmatpush.bf16.msra.mxu0 %v2294
        %2469 = vmatpush.bf16.msra.mxu0 %v2290
        %2470 = vmatpush.bf16.msra.mxu0 %v2286
        %2471 = vmatpush.bf16.msra.mxu0 %v2282
        %2472 = vmatmul.bf16.gmra.mxu0 %v2012
        %v2473 = vpop.f32.mrf.mxu0
        %v2474 = vadd.f32 %v2082, %v2473
        %v2475 = vpop.f32.mrf.mxu0
        %v2476 = vadd.f32 %v2082, %v2475
        %2477 = vdwg.mxu0
        %2478 = vmatpush.bf16.msra.mxu0 %v2342
        %2479 = vmatpush.bf16.msra.mxu0 %v2338
        %2480 = vmatpush.bf16.msra.mxu0 %v2334
        %2481 = vmatpush.bf16.msra.mxu0 %v2330
        %2482 = vmatpush.bf16.msra.mxu0 %v2326
        %2483 = vmatpush.bf16.msra.mxu0 %v2322
        %2484 = vmatpush.bf16.msra.mxu0 %v2318
        %2485 = vmatpush.bf16.msra.mxu0 %v2314
        %2486 = vmatmul.bf16.gmra.mxu0 %v2013
        %v2487 = vpop.f32.mrf.mxu0
        %v2488 = vadd.f32 %v2474, %v2487
        %v2489 = vpop.f32.mrf.mxu0
        %v2490 = vadd.f32 %v2476, %v2489
        %2491 = vdwg.mxu0
        %2492 = vmatpush.bf16.msra.mxu0 %v2311
        %2493 = vmatpush.bf16.msra.mxu0 %v2307
        %2494 = vmatpush.bf16.msra.mxu0 %v2303
        %2495 = vmatpush.bf16.msra.mxu0 %v2299
        %2496 = vmatpush.bf16.msra.mxu0 %v2295
        %2497 = vmatpush.bf16.msra.mxu0 %v2291
        %2498 = vmatpush.bf16.msra.mxu0 %v2287
        %2499 = vmatpush.bf16.msra.mxu0 %v2283
        %2500 = vmatmul.bf16.gmra.mxu0 %v2012
        %v2501 = vpop.f32.mrf.mxu0
        %v2502 = vadd.f32 %v2083, %v2501
        %v2503 = vpop.f32.mrf.mxu0
        %v2504 = vadd.f32 %v2083, %v2503
        %2505 = vdwg.mxu0
        %2506 = vmatpush.bf16.msra.mxu0 %v2343
        %2507 = vmatpush.bf16.msra.mxu0 %v2339
        %2508 = vmatpush.bf16.msra.mxu0 %v2335
        %2509 = vmatpush.bf16.msra.mxu0 %v2331
        %2510 = vmatpush.bf16.msra.mxu0 %v2327
        %2511 = vmatpush.bf16.msra.mxu0 %v2323
        %2512 = vmatpush.bf16.msra.mxu0 %v2319
        %2513 = vmatpush.bf16.msra.mxu0 %v2315
        %2514 = vmatmul.bf16.gmra.mxu0 %v2013
        %v2515 = vpop.f32.mrf.mxu0
        %v2516 = vadd.f32 %v2502, %v2515
        %v2517 = vpop.f32.mrf.mxu0
        %v2518 = vadd.f32 %v2504, %v2517
        %2519 = vdwg.mxu0
        %v2520 = vmul.f32 %v2432, %v2432
        %v2521 = vmul.f32 %v2460, %v2460
        %v2522 = vmul.f32 %v2488, %v2488
        %v2523 = vmul.f32 %v2516, %v2516
        %v2524 = vmul.f32 %v2434, %v2434
        %v2525 = vmul.f32 %v2462, %v2462
        %v2526 = vmul.f32 %v2490, %v2490
        %v2527 = vmul.f32 %v2518, %v2518
        %v2528 = vmul.f32 %v2432, %v2520
        %v2529 = vmul.f32 %v2460, %v2521
        %v2530 = vmul.f32 %v2488, %v2522
        %v2531 = vmul.f32 %v2516, %v2523
        %v2532 = vmul.f32 %v2434, %v2524
        %v2533 = vmul.f32 %v2462, %v2525
        %v2534 = vmul.f32 %v2490, %v2526
        %v2535 = vmul.f32 %v2518, %v2527
        %v2536 = vmul.f32 %v2528, 0.044715
        %v2537 = vmul.f32 %v2529, 0.044715
        %v2538 = vmul.f32 %v2530, 0.044715
        %v2539 = vmul.f32 %v2531, 0.044715
        %v2540 = vmul.f32 %v2532, 0.044715
        %v2541 = vmul.f32 %v2533, 0.044715
        %v2542 = vmul.f32 %v2534, 0.044715
        %v2543 = vmul.f32 %v2535, 0.044715
        %v2544 = vadd.f32 %v2432, %v2536
        %v2545 = vadd.f32 %v2460, %v2537
        %v2546 = vadd.f32 %v2488, %v2538
        %v2547 = vadd.f32 %v2516, %v2539
        %v2548 = vadd.f32 %v2434, %v2540
        %v2549 = vadd.f32 %v2462, %v2541
        %v2550 = vadd.f32 %v2490, %v2542
        %v2551 = vadd.f32 %v2518, %v2543
        %v2552 = vmul.f32 %v2544, 0.7978846
        %v2553 = vmul.f32 %v2545, 0.7978846
        %v2554 = vmul.f32 %v2546, 0.7978846
        %v2555 = vmul.f32 %v2547, 0.7978846
        %v2556 = vmul.f32 %v2548, 0.7978846
        %v2557 = vmul.f32 %v2549, 0.7978846
        %v2558 = vmul.f32 %v2550, 0.7978846
        %v2559 = vmul.f32 %v2551, 0.7978846
        %v2560 = vtanh.pop %v2552
        %v2561 = vtanh.pop %v2553
        %v2562 = vtanh.pop %v2554
        %v2563 = vtanh.pop %v2555
        %v2564 = vtanh.pop %v2556
        %v2565 = vtanh.pop %v2557
        %v2566 = vtanh.pop %v2558
        %v2567 = vtanh.pop %v2559
        %v2568 = vadd.f32 %v2560, 1.0
        %v2569 = vadd.f32 %v2561, 1.0
        %v2570 = vadd.f32 %v2562, 1.0
        %v2571 = vadd.f32 %v2563, 1.0
        %v2572 = vadd.f32 %v2564, 1.0
        %v2573 = vadd.f32 %v2565, 1.0
        %v2574 = vadd.f32 %v2566, 1.0
        %v2575 = vadd.f32 %v2567, 1.0
        %v2576 = vmul.f32 %v2568, 0.5
        %v2577 = vmul.f32 %v2569, 0.5
        %v2578 = vmul.f32 %v2570, 0.5
        %v2579 = vmul.f32 %v2571, 0.5
        %v2580 = vmul.f32 %v2572, 0.5
        %v2581 = vmul.f32 %v2573, 0.5
        %v2582 = vmul.f32 %v2574, 0.5
        %v2583 = vmul.f32 %v2575, 0.5
        %v2584 = vmul.f32 %v2432, %v2576
        %v2585 = vmul.f32 %v2460, %v2577
        %v2586 = vmul.f32 %v2488, %v2578
        %v2587 = vmul.f32 %v2516, %v2579
        %v2588 = vmul.f32 %v2434, %v2580
        %v2589 = vmul.f32 %v2462, %v2581
        %v2590 = vmul.f32 %v2490, %v2582
        %v2591 = vmul.f32 %v2518, %v2583
        %v2592 = vpack.c.bf16 %v2588, %v2584
        %v2593 = vpack.c.bf16 %v2589, %v2585
        %v2594 = vpack.c.bf16 %v2590, %v2586
        %v2595 = vpack.c.bf16 %v2591, %v2587
        %v2596 = vld [vmem:[%s11] sm:$0xff]
        %v2597 = vld [vmem:[%s11 + $0x8] sm:$0xff]
        %v2598 = vld [vmem:[%s11 + $0x10] sm:$0xff]
        %v2599 = vld [vmem:[%s11 + $0x18] sm:$0xff]
        %v2600 = vld [vmem:[%s11 + $0x20] sm:$0xff]
        %v2601 = vld [vmem:[%s11 + $0x28] sm:$0xff]
        %v2602 = vld [vmem:[%s11 + $0x30] sm:$0xff]
        %v2603 = vld [vmem:[%s11 + $0x38] sm:$0xff]
        %v2604 = vld [vmem:[%s11 + $0x40] sm:$0xff]
        %v2605 = vld [vmem:[%s11 + $0x48] sm:$0xff]
        %v2606 = vld [vmem:[%s11 + $0x50] sm:$0xff]
        %v2607 = vld [vmem:[%s11 + $0x58] sm:$0xff]
        %v2608 = vld [vmem:[%s11 + $0x60] sm:$0xff]
        %v2609 = vld [vmem:[%s11 + $0x68] sm:$0xff]
        %v2610 = vld [vmem:[%s11 + $0x70] sm:$0xff]
        %v2611 = vld [vmem:[%s11 + $0x78] sm:$0xff]
        %v2612 = vld [vmem:[%s11 + $0x80] sm:$0xff]
        %v2613 = vld [vmem:[%s11 + $0x88] sm:$0xff]
        %v2614 = vld [vmem:[%s11 + $0x90] sm:$0xff]
        %v2615 = vld [vmem:[%s11 + $0x98] sm:$0xff]
        %v2616 = vld [vmem:[%s11 + $0xa0] sm:$0xff]
        %v2617 = vld [vmem:[%s11 + $0xa8] sm:$0xff]
        %v2618 = vld [vmem:[%s11 + $0xb0] sm:$0xff]
        %v2619 = vld [vmem:[%s11 + $0xb8] sm:$0xff]
        %v2620 = vld [vmem:[%s11 + $0xc0] sm:$0xff]
        %v2621 = vld [vmem:[%s11 + $0xc8] sm:$0xff]
        %v2622 = vld [vmem:[%s11 + $0xd0] sm:$0xff]
        %v2623 = vld [vmem:[%s11 + $0xd8] sm:$0xff]
        %v2624 = vld [vmem:[%s11 + $0xe0] sm:$0xff]
        %v2625 = vld [vmem:[%s11 + $0xe8] sm:$0xff]
        %v2626 = vld [vmem:[%s11 + $0xf0] sm:$0xff]
        %v2627 = vld [vmem:[%s11 + $0xf8] sm:$0xff]
        %v2628 = vld [vmem:[%s11 + $0x100] sm:$0xff]
        %v2629 = vld [vmem:[%s11 + $0x108] sm:$0xff]
        %v2630 = vld [vmem:[%s11 + $0x110] sm:$0xff]
        %v2631 = vld [vmem:[%s11 + $0x118] sm:$0xff]
        %v2632 = vld [vmem:[%s11 + $0x120] sm:$0xff]
        %v2633 = vld [vmem:[%s11 + $0x128] sm:$0xff]
        %v2634 = vld [vmem:[%s11 + $0x130] sm:$0xff]
        %v2635 = vld [vmem:[%s11 + $0x138] sm:$0xff]
        %v2636 = vld [vmem:[%s11 + $0x140] sm:$0xff]
        %v2637 = vld [vmem:[%s11 + $0x148] sm:$0xff]
        %v2638 = vld [vmem:[%s11 + $0x150] sm:$0xff]
        %v2639 = vld [vmem:[%s11 + $0x158] sm:$0xff]
        %v2640 = vld [vmem:[%s11 + $0x160] sm:$0xff]
        %v2641 = vld [vmem:[%s11 + $0x168] sm:$0xff]
        %v2642 = vld [vmem:[%s11 + $0x170] sm:$0xff]
        %v2643 = vld [vmem:[%s11 + $0x178] sm:$0xff]
        %v2644 = vld [vmem:[%s11 + $0x180] sm:$0xff]
        %v2645 = vld [vmem:[%s11 + $0x188] sm:$0xff]
        %v2646 = vld [vmem:[%s11 + $0x190] sm:$0xff]
        %v2647 = vld [vmem:[%s11 + $0x198] sm:$0xff]
        %v2648 = vld [vmem:[%s11 + $0x1a0] sm:$0xff]
        %v2649 = vld [vmem:[%s11 + $0x1a8] sm:$0xff]
        %v2650 = vld [vmem:[%s11 + $0x1b0] sm:$0xff]
        %v2651 = vld [vmem:[%s11 + $0x1b8] sm:$0xff]
        %v2652 = vld [vmem:[%s11 + $0x1c0] sm:$0xff]
        %v2653 = vld [vmem:[%s11 + $0x1c8] sm:$0xff]
        %v2654 = vld [vmem:[%s11 + $0x1d0] sm:$0xff]
        %v2655 = vld [vmem:[%s11 + $0x1d8] sm:$0xff]
        %v2656 = vld [vmem:[%s11 + $0x1e0] sm:$0xff]
        %v2657 = vld [vmem:[%s11 + $0x1e8] sm:$0xff]
        %v2658 = vld [vmem:[%s11 + $0x1f0] sm:$0xff]
        %v2659 = vld [vmem:[%s11 + $0x1f8] sm:$0xff]
        %v2660 = vld [vmem:[#allocation13] sm:$0x3]
        %v2662 = vperm.slane %v2660, 0
        %v2663 = vperm.slane %v2660, 1
        %v2730 = vunpack.c.l.b16 %v2596
        %v2731 = vunpack.c.h.b16 %v2596
        %v2732 = vunpack.c.l.b16 %v2597
        %v2733 = vunpack.c.h.b16 %v2597
        %v2734 = vunpack.c.l.b16 %v2598
        %v2735 = vunpack.c.h.b16 %v2598
        %v2736 = vunpack.c.l.b16 %v2599
        %v2737 = vunpack.c.h.b16 %v2599
        %v2738 = vunpack.c.l.b16 %v2600
        %v2739 = vunpack.c.h.b16 %v2600
        %v2740 = vunpack.c.l.b16 %v2601
        %v2741 = vunpack.c.h.b16 %v2601
        %v2742 = vunpack.c.l.b16 %v2602
        %v2743 = vunpack.c.h.b16 %v2602
        %v2744 = vunpack.c.l.b16 %v2603
        %v2745 = vunpack.c.h.b16 %v2603
        %v2746 = vunpack.c.l.b16 %v2604
        %v2747 = vunpack.c.h.b16 %v2604
        %v2748 = vunpack.c.l.b16 %v2605
        %v2749 = vunpack.c.h.b16 %v2605
        %v2750 = vunpack.c.l.b16 %v2606
        %v2751 = vunpack.c.h.b16 %v2606
        %v2752 = vunpack.c.l.b16 %v2607
        %v2753 = vunpack.c.h.b16 %v2607
        %v2754 = vunpack.c.l.b16 %v2608
        %v2755 = vunpack.c.h.b16 %v2608
        %v2756 = vunpack.c.l.b16 %v2609
        %v2757 = vunpack.c.h.b16 %v2609
        %v2758 = vunpack.c.l.b16 %v2610
        %v2759 = vunpack.c.h.b16 %v2610
        %v2760 = vunpack.c.l.b16 %v2611
        %v2761 = vunpack.c.h.b16 %v2611
        %v2762 = vunpack.c.l.b16 %v2612
        %v2763 = vunpack.c.h.b16 %v2612
        %v2764 = vunpack.c.l.b16 %v2613
        %v2765 = vunpack.c.h.b16 %v2613
        %v2766 = vunpack.c.l.b16 %v2614
        %v2767 = vunpack.c.h.b16 %v2614
        %v2768 = vunpack.c.l.b16 %v2615
        %v2769 = vunpack.c.h.b16 %v2615
        %v2770 = vunpack.c.l.b16 %v2616
        %v2771 = vunpack.c.h.b16 %v2616
        %v2772 = vunpack.c.l.b16 %v2617
        %v2773 = vunpack.c.h.b16 %v2617
        %v2774 = vunpack.c.l.b16 %v2618
        %v2775 = vunpack.c.h.b16 %v2618
        %v2776 = vunpack.c.l.b16 %v2619
        %v2777 = vunpack.c.h.b16 %v2619
        %v2778 = vunpack.c.l.b16 %v2620
        %v2779 = vunpack.c.h.b16 %v2620
        %v2780 = vunpack.c.l.b16 %v2621
        %v2781 = vunpack.c.h.b16 %v2621
        %v2782 = vunpack.c.l.b16 %v2622
        %v2783 = vunpack.c.h.b16 %v2622
        %v2784 = vunpack.c.l.b16 %v2623
        %v2785 = vunpack.c.h.b16 %v2623
        %v2786 = vunpack.c.l.b16 %v2624
        %v2787 = vunpack.c.h.b16 %v2624
        %v2788 = vunpack.c.l.b16 %v2625
        %v2789 = vunpack.c.h.b16 %v2625
        %v2790 = vunpack.c.l.b16 %v2626
        %v2791 = vunpack.c.h.b16 %v2626
        %v2792 = vunpack.c.l.b16 %v2627
        %v2793 = vunpack.c.h.b16 %v2627
        %v2794 = vunpack.c.l.b16 %v2628
        %v2795 = vunpack.c.h.b16 %v2628
        %v2796 = vunpack.c.l.b16 %v2629
        %v2797 = vunpack.c.h.b16 %v2629
        %v2798 = vunpack.c.l.b16 %v2630
        %v2799 = vunpack.c.h.b16 %v2630
        %v2800 = vunpack.c.l.b16 %v2631
        %v2801 = vunpack.c.h.b16 %v2631
        %v2802 = vunpack.c.l.b16 %v2632
        %v2803 = vunpack.c.h.b16 %v2632
        %v2804 = vunpack.c.l.b16 %v2633
        %v2805 = vunpack.c.h.b16 %v2633
        %v2806 = vunpack.c.l.b16 %v2634
        %v2807 = vunpack.c.h.b16 %v2634
        %v2808 = vunpack.c.l.b16 %v2635
        %v2809 = vunpack.c.h.b16 %v2635
        %v2810 = vunpack.c.l.b16 %v2636
        %v2811 = vunpack.c.h.b16 %v2636
        %v2812 = vunpack.c.l.b16 %v2637
        %v2813 = vunpack.c.h.b16 %v2637
        %v2814 = vunpack.c.l.b16 %v2638
        %v2815 = vunpack.c.h.b16 %v2638
        %v2816 = vunpack.c.l.b16 %v2639
        %v2817 = vunpack.c.h.b16 %v2639
        %v2818 = vunpack.c.l.b16 %v2640
        %v2819 = vunpack.c.h.b16 %v2640
        %v2820 = vunpack.c.l.b16 %v2641
        %v2821 = vunpack.c.h.b16 %v2641
        %v2822 = vunpack.c.l.b16 %v2642
        %v2823 = vunpack.c.h.b16 %v2642
        %v2824 = vunpack.c.l.b16 %v2643
        %v2825 = vunpack.c.h.b16 %v2643
        %v2826 = vunpack.c.l.b16 %v2644
        %v2827 = vunpack.c.h.b16 %v2644
        %v2828 = vunpack.c.l.b16 %v2645
        %v2829 = vunpack.c.h.b16 %v2645
        %v2830 = vunpack.c.l.b16 %v2646
        %v2831 = vunpack.c.h.b16 %v2646
        %v2832 = vunpack.c.l.b16 %v2647
        %v2833 = vunpack.c.h.b16 %v2647
        %v2834 = vunpack.c.l.b16 %v2648
        %v2835 = vunpack.c.h.b16 %v2648
        %v2836 = vunpack.c.l.b16 %v2649
        %v2837 = vunpack.c.h.b16 %v2649
        %v2838 = vunpack.c.l.b16 %v2650
        %v2839 = vunpack.c.h.b16 %v2650
        %v2840 = vunpack.c.l.b16 %v2651
        %v2841 = vunpack.c.h.b16 %v2651
        %v2842 = vunpack.c.l.b16 %v2652
        %v2843 = vunpack.c.h.b16 %v2652
        %v2844 = vunpack.c.l.b16 %v2653
        %v2845 = vunpack.c.h.b16 %v2653
        %v2846 = vunpack.c.l.b16 %v2654
        %v2847 = vunpack.c.h.b16 %v2654
        %v2848 = vunpack.c.l.b16 %v2655
        %v2849 = vunpack.c.h.b16 %v2655
        %v2850 = vunpack.c.l.b16 %v2656
        %v2851 = vunpack.c.h.b16 %v2656
        %v2852 = vunpack.c.l.b16 %v2657
        %v2853 = vunpack.c.h.b16 %v2657
        %v2854 = vunpack.c.l.b16 %v2658
        %v2855 = vunpack.c.h.b16 %v2658
        %v2856 = vunpack.c.l.b16 %v2659
        %v2857 = vunpack.c.h.b16 %v2659
        %v2858 = vpack.c.b16 %v2732, %v2730
        %v2859 = vpack.c.b16 %v2733, %v2731
        %v2860 = vpack.c.b16 %v2736, %v2734
        %v2861 = vpack.c.b16 %v2737, %v2735
        %v2862 = vpack.c.b16 %v2740, %v2738
        %v2863 = vpack.c.b16 %v2741, %v2739
        %v2864 = vpack.c.b16 %v2744, %v2742
        %v2865 = vpack.c.b16 %v2745, %v2743
        %v2866 = vpack.c.b16 %v2748, %v2746
        %v2867 = vpack.c.b16 %v2749, %v2747
        %v2868 = vpack.c.b16 %v2752, %v2750
        %v2869 = vpack.c.b16 %v2753, %v2751
        %v2870 = vpack.c.b16 %v2756, %v2754
        %v2871 = vpack.c.b16 %v2757, %v2755
        %v2872 = vpack.c.b16 %v2760, %v2758
        %v2873 = vpack.c.b16 %v2761, %v2759
        %v2874 = vpack.c.b16 %v2764, %v2762
        %v2875 = vpack.c.b16 %v2765, %v2763
        %v2876 = vpack.c.b16 %v2768, %v2766
        %v2877 = vpack.c.b16 %v2769, %v2767
        %v2878 = vpack.c.b16 %v2772, %v2770
        %v2879 = vpack.c.b16 %v2773, %v2771
        %v2880 = vpack.c.b16 %v2776, %v2774
        %v2881 = vpack.c.b16 %v2777, %v2775
        %v2882 = vpack.c.b16 %v2780, %v2778
        %v2883 = vpack.c.b16 %v2781, %v2779
        %v2884 = vpack.c.b16 %v2784, %v2782
        %v2885 = vpack.c.b16 %v2785, %v2783
        %v2886 = vpack.c.b16 %v2788, %v2786
        %v2887 = vpack.c.b16 %v2789, %v2787
        %v2888 = vpack.c.b16 %v2792, %v2790
        %v2889 = vpack.c.b16 %v2793, %v2791
        %v2890 = vpack.c.b16 %v2796, %v2794
        %v2891 = vpack.c.b16 %v2797, %v2795
        %v2892 = vpack.c.b16 %v2800, %v2798
        %v2893 = vpack.c.b16 %v2801, %v2799
        %v2894 = vpack.c.b16 %v2804, %v2802
        %v2895 = vpack.c.b16 %v2805, %v2803
        %v2896 = vpack.c.b16 %v2808, %v2806
        %v2897 = vpack.c.b16 %v2809, %v2807
        %v2898 = vpack.c.b16 %v2812, %v2810
        %v2899 = vpack.c.b16 %v2813, %v2811
        %v2900 = vpack.c.b16 %v2816, %v2814
        %v2901 = vpack.c.b16 %v2817, %v2815
        %v2902 = vpack.c.b16 %v2820, %v2818
        %v2903 = vpack.c.b16 %v2821, %v2819
        %v2904 = vpack.c.b16 %v2824, %v2822
        %v2905 = vpack.c.b16 %v2825, %v2823
        %v2906 = vpack.c.b16 %v2828, %v2826
        %v2907 = vpack.c.b16 %v2829, %v2827
        %v2908 = vpack.c.b16 %v2832, %v2830
        %v2909 = vpack.c.b16 %v2833, %v2831
        %v2910 = vpack.c.b16 %v2836, %v2834
        %v2911 = vpack.c.b16 %v2837, %v2835
        %v2912 = vpack.c.b16 %v2840, %v2838
        %v2913 = vpack.c.b16 %v2841, %v2839
        %v2914 = vpack.c.b16 %v2844, %v2842
        %v2915 = vpack.c.b16 %v2845, %v2843
        %v2916 = vpack.c.b16 %v2848, %v2846
        %v2917 = vpack.c.b16 %v2849, %v2847
        %v2918 = vpack.c.b16 %v2852, %v2850
        %v2919 = vpack.c.b16 %v2853, %v2851
        %v2920 = vpack.c.b16 %v2856, %v2854
        %v2921 = vpack.c.b16 %v2857, %v2855
        %2986 = vmatpush.bf16.msra.mxu0 %v2872
        %2987 = vmatpush.bf16.msra.mxu0 %v2870
        %2988 = vmatpush.bf16.msra.mxu0 %v2868
        %2989 = vmatpush.bf16.msra.mxu0 %v2866
        %2990 = vmatpush.bf16.msra.mxu0 %v2864
        %2991 = vmatpush.bf16.msra.mxu0 %v2862
        %2992 = vmatpush.bf16.msra.mxu0 %v2860
        %2993 = vmatpush.bf16.msra.mxu0 %v2858
        %2994 = vmatmul.bf16.gmra.mxu0 %v2592
        %v2995 = vpop.f32.mrf.mxu0
        %v2996 = vadd.f32 %v2662, %v2995
        %v2997 = vpop.f32.mrf.mxu0
        %v2998 = vadd.f32 %v2662, %v2997
        %2999 = vdwg.mxu0
        %3000 = vmatpush.bf16.msra.mxu0 %v2888
        %3001 = vmatpush.bf16.msra.mxu0 %v2886
        %3002 = vmatpush.bf16.msra.mxu0 %v2884
        %3003 = vmatpush.bf16.msra.mxu0 %v2882
        %3004 = vmatpush.bf16.msra.mxu0 %v2880
        %3005 = vmatpush.bf16.msra.mxu0 %v2878
        %3006 = vmatpush.bf16.msra.mxu0 %v2876
        %3007 = vmatpush.bf16.msra.mxu0 %v2874
        %3008 = vmatmul.bf16.gmra.mxu0 %v2593
        %v3009 = vpop.f32.mrf.mxu0
        %v3010 = vadd.f32 %v2996, %v3009
        %v3011 = vpop.f32.mrf.mxu0
        %v3012 = vadd.f32 %v2998, %v3011
        %3013 = vdwg.mxu0
        %3014 = vmatpush.bf16.msra.mxu0 %v2904
        %3015 = vmatpush.bf16.msra.mxu0 %v2902
        %3016 = vmatpush.bf16.msra.mxu0 %v2900
        %3017 = vmatpush.bf16.msra.mxu0 %v2898
        %3018 = vmatpush.bf16.msra.mxu0 %v2896
        %3019 = vmatpush.bf16.msra.mxu0 %v2894
        %3020 = vmatpush.bf16.msra.mxu0 %v2892
        %3021 = vmatpush.bf16.msra.mxu0 %v2890
        %3022 = vmatmul.bf16.gmra.mxu0 %v2594
        %v3023 = vpop.f32.mrf.mxu0
        %v3024 = vadd.f32 %v3010, %v3023
        %v3025 = vpop.f32.mrf.mxu0
        %v3026 = vadd.f32 %v3012, %v3025
        %3027 = vdwg.mxu0
        %3028 = vmatpush.bf16.msra.mxu0 %v2920
        %3029 = vmatpush.bf16.msra.mxu0 %v2918
        %3030 = vmatpush.bf16.msra.mxu0 %v2916
        %3031 = vmatpush.bf16.msra.mxu0 %v2914
        %3032 = vmatpush.bf16.msra.mxu0 %v2912
        %3033 = vmatpush.bf16.msra.mxu0 %v2910
        %3034 = vmatpush.bf16.msra.mxu0 %v2908
        %3035 = vmatpush.bf16.msra.mxu0 %v2906
        %3036 = vmatmul.bf16.gmra.mxu0 %v2595
        %v3037 = vpop.f32.mrf.mxu0
        %v3038 = vadd.f32 %v3024, %v3037
        %v3039 = vpop.f32.mrf.mxu0
        %v3040 = vadd.f32 %v3026, %v3039
        %3041 = vdwg.mxu0
        %3042 = vmatpush.bf16.msra.mxu0 %v2873
        %3043 = vmatpush.bf16.msra.mxu0 %v2871
        %3044 = vmatpush.bf16.msra.mxu0 %v2869
        %3045 = vmatpush.bf16.msra.mxu0 %v2867
        %3046 = vmatpush.bf16.msra.mxu0 %v2865
        %3047 = vmatpush.bf16.msra.mxu0 %v2863
        %3048 = vmatpush.bf16.msra.mxu0 %v2861
        %3049 = vmatpush.bf16.msra.mxu0 %v2859
        %3050 = vmatmul.bf16.gmra.mxu0 %v2592
        %v3051 = vpop.f32.mrf.mxu0
        %v3052 = vadd.f32 %v2663, %v3051
        %v3053 = vpop.f32.mrf.mxu0
        %v3054 = vadd.f32 %v2663, %v3053
        %3055 = vdwg.mxu0
        %3056 = vmatpush.bf16.msra.mxu0 %v2889
        %3057 = vmatpush.bf16.msra.mxu0 %v2887
        %3058 = vmatpush.bf16.msra.mxu0 %v2885
        %3059 = vmatpush.bf16.msra.mxu0 %v2883
        %3060 = vmatpush.bf16.msra.mxu0 %v2881
        %3061 = vmatpush.bf16.msra.mxu0 %v2879
        %3062 = vmatpush.bf16.msra.mxu0 %v2877
        %3063 = vmatpush.bf16.msra.mxu0 %v2875
        %3064 = vmatmul.bf16.gmra.mxu0 %v2593
        %v3065 = vpop.f32.mrf.mxu0
        %v3066 = vadd.f32 %v3052, %v3065
        %v3067 = vpop.f32.mrf.mxu0
        %v3068 = vadd.f32 %v3054, %v3067
        %3069 = vdwg.mxu0
        %3070 = vmatpush.bf16.msra.mxu0 %v2905
        %3071 = vmatpush.bf16.msra.mxu0 %v2903
        %3072 = vmatpush.bf16.msra.mxu0 %v2901
        %3073 = vmatpush.bf16.msra.mxu0 %v2899
        %3074 = vmatpush.bf16.msra.mxu0 %v2897
        %3075 = vmatpush.bf16.msra.mxu0 %v2895
        %3076 = vmatpush.bf16.msra.mxu0 %v2893
        %3077 = vmatpush.bf16.msra.mxu0 %v2891
        %3078 = vmatmul.bf16.gmra.mxu0 %v2594
        %v3079 = vpop.f32.mrf.mxu0
        %v3080 = vadd.f32 %v3066, %v3079
        %v3081 = vpop.f32.mrf.mxu0
        %v3082 = vadd.f32 %v3068, %v3081
        %3083 = vdwg.mxu0
        %3084 = vmatpush.bf16.msra.mxu0 %v2921
        %3085 = vmatpush.bf16.msra.mxu0 %v2919
        %3086 = vmatpush.bf16.msra.mxu0 %v2917
        %3087 = vmatpush.bf16.msra.mxu0 %v2915
        %3088 = vmatpush.bf16.msra.mxu0 %v2913
        %3089 = vmatpush.bf16.msra.mxu0 %v2911
        %3090 = vmatpush.bf16.msra.mxu0 %v2909
        %3091 = vmatpush.bf16.msra.mxu0 %v2907
        %3092 = vmatmul.bf16.gmra.mxu0 %v2595
        %v3093 = vpop.f32.mrf.mxu0
        %v3094 = vadd.f32 %v3080, %v3093
        %v3095 = vpop.f32.mrf.mxu0
        %v3096 = vadd.f32 %v3082, %v3095
        %3097 = vdwg.mxu0
        %v3098 = vadd.f32 %v1938, %v3038
        %v3099 = vadd.f32 %v1939, %v3094
        %v3100 = vadd.f32 %v1940, %v3040
        %v3101 = vadd.f32 %v1941, %v3096
        %v3102 = vld [vmem:[#allocation14] sm:$0x3]
        %v3103 = vld [vmem:[#allocation16] sm:$0x3]
        %v3104 = vadd.f32 %v3098, %v3099
        %3105 = vadd.xlane.f32.xlu0 %v3104
        %v3106 = vpop.xlane.xlu0 %3105
        %v3107 = vadd.f32 %v3100, %v3101
        %3108 = vadd.xlane.f32.xlu0 %v3107
        %v3109 = vpop.xlane.xlu0 %3108
        %v3110 = vmul.f32 %v3106, %v732
        %v3111 = vmul.f32 %v3109, %v732
        %v3112 = vsub.f32 %v3098, %v3110
        %v3113 = vsub.f32 %v3099, %v3110
        %v3114 = vsub.f32 %v3100, %v3111
        %v3115 = vsub.f32 %v3101, %v3111
        %v3116 = vmul.f32 %v3112, %v3112
        %v3117 = vmul.f32 %v3113, %v3113
        %v3118 = vmul.f32 %v3114, %v3114
        %v3119 = vmul.f32 %v3115, %v3115
        %v3120 = vadd.f32 %v3116, %v3117
        %3121 = vadd.xlane.f32.xlu0 %v3120
        %v3122 = vpop.xlane.xlu0 %3121
        %v3123 = vadd.f32 %v3118, %v3119
        %3124 = vadd.xlane.f32.xlu0 %v3123
        %v3125 = vpop.xlane.xlu0 %3124
        %v3126 = vmul.f32 %v3122, %v732
        %v3127 = vmul.f32 %v3125, %v732
        %v3128 = vadd.f32 %v3126, 1e-06
        %v3129 = vadd.f32 %v3127, 1e-06
        %v3130 = vrsqrt.pop %v3128
        %v3131 = vmul.f32 %v3130, %v3128
        %v3132 = vmul.f32 %v3131, %v3130
        %v3133 = vmul.f32 0.5, %v3132
        %v3134 = vsub.f32 1.5, %v3133
        %v3135 = vmul.f32 %v3130, %v3134
        %vm3136 = vweird.f32 %v3128
        %vm3137 = vweird.f32 %v3130
        %vm3138 = vmor %vm3136, %vm3137
        %v3139 = vsel %vm3138, %v3130, %v3135
        %v3140 = vrsqrt.pop %v3129
        %v3141 = vmul.f32 %v3140, %v3129
        %v3142 = vmul.f32 %v3141, %v3140
        %v3143 = vmul.f32 0.5, %v3142
        %v3144 = vsub.f32 1.5, %v3143
        %v3145 = vmul.f32 %v3140, %v3144
        %vm3146 = vweird.f32 %v3129
        %vm3147 = vweird.f32 %v3140
        %vm3148 = vmor %vm3146, %vm3147
        %v3149 = vsel %vm3148, %v3140, %v3145
        %v3150 = vmul.f32 %v3112, %v3139
        %v3151 = vmul.f32 %v3113, %v3139
        %v3152 = vmul.f32 %v3114, %v3149
        %v3153 = vmul.f32 %v3115, %v3149
        %v3155 = vperm.slane %v3102, 0
        %v3156 = vperm.slane %v3102, 1
        %v3159 = vmul.f32 %v3150, %v3155
        %v3160 = vmul.f32 %v3151, %v3156
        %v3161 = vmul.f32 %v3152, %v3155
        %v3162 = vmul.f32 %v3153, %v3156
        %v3164 = vperm.slane %v3103, 0
        %v3165 = vperm.slane %v3103, 1
        %v3168 = vadd.f32 %v3159, %v3164
        %v3169 = vadd.f32 %v3160, %v3165
        %v3170 = vadd.f32 %v3161, %v3164
        %v3171 = vadd.f32 %v3162, %v3165
        %v3172 = vpack.c.bf16 %v3170, %v3168
        %v3173 = vpack.c.bf16 %v3171, %v3169
        %v3174 = vld [vmem:[#allocation17] sm:$0xff]
        %v3175 = vld [vmem:[#allocation17 + $0x8] sm:$0xff]
        %v3176 = vld [vmem:[#allocation17 + $0x10] sm:$0xff]
        %v3177 = vld [vmem:[#allocation17 + $0x18] sm:$0xff]
        %v3178 = vld [vmem:[#allocation17 + $0x20] sm:$0xff]
        %v3179 = vld [vmem:[#allocation17 + $0x28] sm:$0xff]
        %v3180 = vld [vmem:[#allocation17 + $0x30] sm:$0xff]
        %v3181 = vld [vmem:[#allocation17 + $0x38] sm:$0xff]
        %v3182 = vld [vmem:[#allocation17 + $0x40] sm:$0xff]
        %v3183 = vld [vmem:[#allocation17 + $0x48] sm:$0xff]
        %v3184 = vld [vmem:[#allocation17 + $0x50] sm:$0xff]
        %v3185 = vld [vmem:[#allocation17 + $0x58] sm:$0xff]
        %v3186 = vld [vmem:[#allocation17 + $0x60] sm:$0xff]
        %v3187 = vld [vmem:[#allocation17 + $0x68] sm:$0xff]
        %v3188 = vld [vmem:[#allocation17 + $0x70] sm:$0xff]
        %v3189 = vld [vmem:[#allocation17 + $0x78] sm:$0xff]
        %v3190 = vld [vmem:[#allocation17 + $0x80] sm:$0xff]
        %v3191 = vld [vmem:[#allocation17 + $0x88] sm:$0xff]
        %v3192 = vld [vmem:[#allocation17 + $0x90] sm:$0xff]
        %v3193 = vld [vmem:[#allocation17 + $0x98] sm:$0xff]
        %v3194 = vld [vmem:[#allocation17 + $0xa0] sm:$0xff]
        %v3195 = vld [vmem:[#allocation17 + $0xa8] sm:$0xff]
        %v3196 = vld [vmem:[#allocation17 + $0xb0] sm:$0xff]
        %v3197 = vld [vmem:[#allocation17 + $0xb8] sm:$0xff]
        %v3198 = vld [vmem:[#allocation17 + $0xc0] sm:$0xff]
        %v3199 = vld [vmem:[#allocation17 + $0xc8] sm:$0xff]
        %v3200 = vld [vmem:[#allocation17 + $0xd0] sm:$0xff]
        %v3201 = vld [vmem:[#allocation17 + $0xd8] sm:$0xff]
        %v3202 = vld [vmem:[#allocation17 + $0xe0] sm:$0xff]
        %v3203 = vld [vmem:[#allocation17 + $0xe8] sm:$0xff]
        %v3204 = vld [vmem:[#allocation17 + $0xf0] sm:$0xff]
        %v3205 = vld [vmem:[#allocation17 + $0xf8] sm:$0xff]
        %v3206 = vld [vmem:[#allocation19] sm:$0x3]
        %v3208 = vperm.slane %v3206, 0
        %v3209 = vperm.slane %v3206, 1
        %v3244 = vunpack.c.l.b16 %v3174
        %v3245 = vunpack.c.h.b16 %v3174
        %v3246 = vunpack.c.l.b16 %v3175
        %v3247 = vunpack.c.h.b16 %v3175
        %v3248 = vunpack.c.l.b16 %v3176
        %v3249 = vunpack.c.h.b16 %v3176
        %v3250 = vunpack.c.l.b16 %v3177
        %v3251 = vunpack.c.h.b16 %v3177
        %v3252 = vunpack.c.l.b16 %v3178
        %v3253 = vunpack.c.h.b16 %v3178
        %v3254 = vunpack.c.l.b16 %v3179
        %v3255 = vunpack.c.h.b16 %v3179
        %v3256 = vunpack.c.l.b16 %v3180
        %v3257 = vunpack.c.h.b16 %v3180
        %v3258 = vunpack.c.l.b16 %v3181
        %v3259 = vunpack.c.h.b16 %v3181
        %v3260 = vunpack.c.l.b16 %v3182
        %v3261 = vunpack.c.h.b16 %v3182
        %v3262 = vunpack.c.l.b16 %v3183
        %v3263 = vunpack.c.h.b16 %v3183
        %v3264 = vunpack.c.l.b16 %v3184
        %v3265 = vunpack.c.h.b16 %v3184
        %v3266 = vunpack.c.l.b16 %v3185
        %v3267 = vunpack.c.h.b16 %v3185
        %v3268 = vunpack.c.l.b16 %v3186
        %v3269 = vunpack.c.h.b16 %v3186
        %v3270 = vunpack.c.l.b16 %v3187
        %v3271 = vunpack.c.h.b16 %v3187
        %v3272 = vunpack.c.l.b16 %v3188
        %v3273 = vunpack.c.h.b16 %v3188
        %v3274 = vunpack.c.l.b16 %v3189
        %v3275 = vunpack.c.h.b16 %v3189
        %v3276 = vunpack.c.l.b16 %v3190
        %v3277 = vunpack.c.h.b16 %v3190
        %v3278 = vunpack.c.l.b16 %v3191
        %v3279 = vunpack.c.h.b16 %v3191
        %v3280 = vunpack.c.l.b16 %v3192
        %v3281 = vunpack.c.h.b16 %v3192
        %v3282 = vunpack.c.l.b16 %v3193
        %v3283 = vunpack.c.h.b16 %v3193
        %v3284 = vunpack.c.l.b16 %v3194
        %v3285 = vunpack.c.h.b16 %v3194
        %v3286 = vunpack.c.l.b16 %v3195
        %v3287 = vunpack.c.h.b16 %v3195
        %v3288 = vunpack.c.l.b16 %v3196
        %v3289 = vunpack.c.h.b16 %v3196
        %v3290 = vunpack.c.l.b16 %v3197
        %v3291 = vunpack.c.h.b16 %v3197
        %v3292 = vunpack.c.l.b16 %v3198
        %v3293 = vunpack.c.h.b16 %v3198
        %v3294 = vunpack.c.l.b16 %v3199
        %v3295 = vunpack.c.h.b16 %v3199
        %v3296 = vunpack.c.l.b16 %v3200
        %v3297 = vunpack.c.h.b16 %v3200
        %v3298 = vunpack.c.l.b16 %v3201
        %v3299 = vunpack.c.h.b16 %v3201
        %v3300 = vunpack.c.l.b16 %v3202
        %v3301 = vunpack.c.h.b16 %v3202
        %v3302 = vunpack.c.l.b16 %v3203
        %v3303 = vunpack.c.h.b16 %v3203
        %v3304 = vunpack.c.l.b16 %v3204
        %v3305 = vunpack.c.h.b16 %v3204
        %v3306 = vunpack.c.l.b16 %v3205
        %v3307 = vunpack.c.h.b16 %v3205
        %v3308 = vpack.c.b16 %v3246, %v3244
        %v3309 = vpack.c.b16 %v3247, %v3245
        %v3310 = vpack.c.b16 %v3250, %v3248
        %v3311 = vpack.c.b16 %v3251, %v3249
        %v3312 = vpack.c.b16 %v3254, %v3252
        %v3313 = vpack.c.b16 %v3255, %v3253
        %v3314 = vpack.c.b16 %v3258, %v3256
        %v3315 = vpack.c.b16 %v3259, %v3257
        %v3316 = vpack.c.b16 %v3262, %v3260
        %v3317 = vpack.c.b16 %v3263, %v3261
        %v3318 = vpack.c.b16 %v3266, %v3264
        %v3319 = vpack.c.b16 %v3267, %v3265
        %v3320 = vpack.c.b16 %v3270, %v3268
        %v3321 = vpack.c.b16 %v3271, %v3269
        %v3322 = vpack.c.b16 %v3274, %v3272
        %v3323 = vpack.c.b16 %v3275, %v3273
        %v3324 = vpack.c.b16 %v3278, %v3276
        %v3325 = vpack.c.b16 %v3279, %v3277
        %v3326 = vpack.c.b16 %v3282, %v3280
        %v3327 = vpack.c.b16 %v3283, %v3281
        %v3328 = vpack.c.b16 %v3286, %v3284
        %v3329 = vpack.c.b16 %v3287, %v3285
        %v3330 = vpack.c.b16 %v3290, %v3288
        %v3331 = vpack.c.b16 %v3291, %v3289
        %v3332 = vpack.c.b16 %v3294, %v3292
        %v3333 = vpack.c.b16 %v3295, %v3293
        %v3334 = vpack.c.b16 %v3298, %v3296
        %v3335 = vpack.c.b16 %v3299, %v3297
        %v3336 = vpack.c.b16 %v3302, %v3300
        %v3337 = vpack.c.b16 %v3303, %v3301
        %v3338 = vpack.c.b16 %v3306, %v3304
        %v3339 = vpack.c.b16 %v3307, %v3305
        %3372 = vmatpush.bf16.msra.mxu0 %v3322
        %3373 = vmatpush.bf16.msra.mxu0 %v3320
        %3374 = vmatpush.bf16.msra.mxu0 %v3318
        %3375 = vmatpush.bf16.msra.mxu0 %v3316
        %3376 = vmatpush.bf16.msra.mxu0 %v3314
        %3377 = vmatpush.bf16.msra.mxu0 %v3312
        %3378 = vmatpush.bf16.msra.mxu0 %v3310
        %3379 = vmatpush.bf16.msra.mxu0 %v3308
        %3380 = vmatmul.bf16.gmra.mxu0 %v3172
        %v3381 = vpop.f32.mrf.mxu0
        %v3382 = vadd.f32 %v3208, %v3381
        %v3383 = vpop.f32.mrf.mxu0
        %v3384 = vadd.f32 %v3208, %v3383
        %3385 = vdwg.mxu0
        %3386 = vmatpush.bf16.msra.mxu0 %v3338
        %3387 = vmatpush.bf16.msra.mxu0 %v3336
        %3388 = vmatpush.bf16.msra.mxu0 %v3334
        %3389 = vmatpush.bf16.msra.mxu0 %v3332
        %3390 = vmatpush.bf16.msra.mxu0 %v3330
        %3391 = vmatpush.bf16.msra.mxu0 %v3328
        %3392 = vmatpush.bf16.msra.mxu0 %v3326
        %3393 = vmatpush.bf16.msra.mxu0 %v3324
        %3394 = vmatmul.bf16.gmra.mxu0 %v3173
        %v3395 = vpop.f32.mrf.mxu0
        %v3396 = vadd.f32 %v3382, %v3395
        %v3397 = vpop.f32.mrf.mxu0
        %v3398 = vadd.f32 %v3384, %v3397
        %3399 = vdwg.mxu0
        %3400 = vmatpush.bf16.msra.mxu0 %v3323
        %3401 = vmatpush.bf16.msra.mxu0 %v3321
        %3402 = vmatpush.bf16.msra.mxu0 %v3319
        %3403 = vmatpush.bf16.msra.mxu0 %v3317
        %3404 = vmatpush.bf16.msra.mxu0 %v3315
        %3405 = vmatpush.bf16.msra.mxu0 %v3313
        %3406 = vmatpush.bf16.msra.mxu0 %v3311
        %3407 = vmatpush.bf16.msra.mxu0 %v3309
        %3408 = vmatmul.bf16.gmra.mxu0 %v3172
        %v3409 = vpop.f32.mrf.mxu0
        %v3410 = vadd.f32 %v3209, %v3409
        %v3411 = vpop.f32.mrf.mxu0
        %v3412 = vadd.f32 %v3209, %v3411
        %3413 = vdwg.mxu0
        %3414 = vmatpush.bf16.msra.mxu0 %v3339
        %3415 = vmatpush.bf16.msra.mxu0 %v3337
        %3416 = vmatpush.bf16.msra.mxu0 %v3335
        %3417 = vmatpush.bf16.msra.mxu0 %v3333
        %3418 = vmatpush.bf16.msra.mxu0 %v3331
        %3419 = vmatpush.bf16.msra.mxu0 %v3329
        %3420 = vmatpush.bf16.msra.mxu0 %v3327
        %3421 = vmatpush.bf16.msra.mxu0 %v3325
        %3422 = vmatmul.bf16.gmra.mxu0 %v3173
        %v3423 = vpop.f32.mrf.mxu0
        %v3424 = vadd.f32 %v3410, %v3423
        %v3425 = vpop.f32.mrf.mxu0
        %v3426 = vadd.f32 %v3412, %v3425
        %3427 = vdwg.mxu0
        %3428 = vst [vmem:[%s712] sm:$0xff] %v3396
        %3429 = vst [vmem:[%s712 + $0x8] sm:$0xff] %v3424
        %3430 = vst [vmem:[%s712 + $0x10] sm:$0xff] %v3398
        %3431 = vst [vmem:[%s712 + $0x18] sm:$0xff] %v3426
        %p3432 = scmp.lt.s32.totalorder %s34, 1
        %s3433 = scalar_select %p3432, %s34, 1
        %s3434 = smul.addr %s3433, 4
        %s3435 = smul.addr %s3434, 8
        %s3436 = scalar_lea.vmem %s17, %s3435
        // Predicated region
        $region133: #{autoencoder_forward.3} parent=87 // pred_check
          %p3437 = pneg %p414
        $region134: #{autoencoder_forward.3} parent=87 // pred_check_branch
          %3439 = sbr.rel (%p3437) target = $region136
        $region135: #{autoencoder_forward.3} parent=87 // pred_region
          _
        $region136: #{autoencoder_forward.3} parent=87 // pred_fallthru
          _
      $region88: #{autoencoder_forward.3} parent=5 // pred_fallthru
        _
      %p3440 = scmp.le.s32.totalorder 2, %s29
      // Predicated region
      $region137: #{autoencoder_forward.3} parent=5 // pred_check
        %p3441 = pneg %p3440
      $region138: #{autoencoder_forward.3} parent=5 // pred_check_branch
        %3443 = sbr.rel (%p3441) target = $region140
      $region139: #{autoencoder_forward.3} parent=5 // pred_region
        %s3444 = ssub.s32 %s29, 2
        // Predicated region
        $region141: #{autoencoder_forward.3} parent=139 // pred_check
          %p3445 = pneg %p420
        $region142: #{autoencoder_forward.3} parent=139 // pred_check_branch
          %3447 = sbr.rel (%p3445) target = $region144
        $region143: #{autoencoder_forward.3} parent=139 // pred_region
          %p3448 = scmp.lt.s32.totalorder %s35, 1
          %s3449 = scalar_select %p3448, %s35, 1
          %s3450 = smul.addr %s3449, 4
          %s3451 = smul.addr %s3450, 8
          %s3452 = scalar_lea.vmem %s17, %s3451
        $region144: #{autoencoder_forward.3} parent=139 // pred_fallthru
          _
      $region140: #{autoencoder_forward.3} parent=5 // pred_fallthru
        _
    $region6: #{autoencoder_forward.3} parent=1 // loop_footer
      %s33 = sadd.s32 1, %s29
    $region7: #{autoencoder_forward.3} parent=1 // loop_footer_branch
      %28 = sbr.rel target = $region3
    $region8: #{autoencoder_forward.3} parent=1 // loop_exit
      _
    %3453 = vsyncpa [#allocation4], 1
    %s3454 = scalar_lea.sflag [#allocation4], 1
    %3455 = vsyncpa %s3454, 1
    %3456 = vsyncpa [#allocation6], 1
    %3457 = vsyncpa [#allocation9], 1
    %3458 = vsyncpa [#allocation12], 1
    %3459 = vsyncpa [#allocation15], 1
    %3460 = vsyncpa [#allocation18], 1

</llo_original>
